<compile_context>
chip_gen: v7x
topology: tpu7x:2x2x1
jax: 0.10.0
libtpu: 0.0.40
codegen_flags: <defaults>
</compile_context>

<pallas_src>
import math
import numpy as np
import jax
import jax.numpy as jnp
from jax.experimental import pallas as pl
from jax.experimental.pallas import tpu as pltpu


# -----------------------------------------------------------------------------
# Kernel 1: avg_pool3d over the full (SL,H,W) window + L2 normalize over channels
#           + LSTM input projection (x @ Wih^T + (b_ih + b_hh)).
#   Each grid step processes the N clips of one batch element (lane-dense output).
#   in : feat (N, C, S) bf16, WihT (C, 4C) bf16, bias (1, 4C) f32
#   out: gx   (N, 4C)   f32   (gate pre-activations from the input path)
# -----------------------------------------------------------------------------
def pool_proj_kernel(feat_ref, wih_ref, bias_ref, gx_ref):
    x = feat_ref[...].astype(jnp.float32)                # f32 accumulation (cast is
    m = jnp.mean(x, axis=-1)                             # free filler under the DMA)
    ss = jnp.sum(m * m, axis=-1, keepdims=True)          # (N, 1)
    xn = m * jax.lax.rsqrt(jnp.maximum(ss, 1e-24))       # F.normalize(p=2, dim=1)
    gx = jnp.dot(xn.astype(jnp.bfloat16), wih_ref[...],
                 preferred_element_type=jnp.float32)     # (N, 4C)
    gx_ref[...] = gx + bias_ref[...]


# -----------------------------------------------------------------------------
# Kernel 2: single-layer LSTM recurrence (only h @ Whh per step on the serial
#           chain) fused with the head: BatchNorm1d (inference stats) +
#           Dropout(eval)=identity + Linear.  Single invocation, N unrolled.
#           PyTorch gate order: i, f, g, o.
# -----------------------------------------------------------------------------
def lstm_head_kernel(gx_ref, whh_ref, gamma_ref, beta_ref, mean_ref, var_ref,
                     w_ref, fcb_ref, logits_ref, ctx_ref):
    B, N, _ = gx_ref.shape
    hid = whh_ref.shape[0]

    gx = gx_ref[...]                                     # (B, N, 4C), ~32 KiB
    whh = whh_ref[...]                                   # (C, 4C) bf16, loaded once

    h_bf = jnp.zeros((B, hid), jnp.bfloat16)             # MXU-operand dtype carry
    h_f32 = jnp.zeros((B, hid), jnp.float32)
    c = jnp.zeros((B, hid), jnp.float32)

    # N is small & static: fully unrolled -> one basic block, no grid-step overhead.
    for t in range(N):
        gates = gx[:, t, :] + jnp.dot(h_bf, whh,
                                      preferred_element_type=jnp.float32)  # (B, 4C)
        i_g = jax.nn.sigmoid(gates[:, 0 * hid:1 * hid])
        f_g = jax.nn.sigmoid(gates[:, 1 * hid:2 * hid])
        g_g = jnp.tanh(gates[:, 2 * hid:3 * hid])
        o_g = jax.nn.sigmoid(gates[:, 3 * hid:4 * hid])
        c = f_g * c + i_g * g_g
        h_f32 = o_g * jnp.tanh(c)
        h_bf = h_f32.astype(jnp.bfloat16)                # cast folded into h update

    # BatchNorm1d (eval stats) + Dropout(eval)=identity + Linear head
    inv = jax.lax.rsqrt(var_ref[...] + 1e-5)
    xb = (h_f32 - mean_ref[...]) * inv * gamma_ref[...] + beta_ref[...]
    ctx_ref[...] = xb.astype(ctx_ref.dtype)
    logits_ref[...] = (jnp.dot(xb.astype(jnp.bfloat16), w_ref[...],
                               preferred_element_type=jnp.float32)
                       + fcb_ref[...])


# -----------------------------------------------------------------------------
# Parameter init (deterministic, synthetic — mirrors the module's shapes)
# -----------------------------------------------------------------------------
def init_params(key, hidden=256, num_class=101):
    ks = jax.random.split(key, 5)
    k = 1.0 / math.sqrt(hidden)
    w_ih = jax.random.uniform(ks[0], (4 * hidden, hidden), jnp.float32, -k, k)
    w_hh = jax.random.uniform(ks[1], (4 * hidden, hidden), jnp.float32, -k, k)
    b_ih = jax.random.uniform(ks[2], (4 * hidden,), jnp.float32, -k, k)
    b_hh = jax.random.uniform(ks[3], (4 * hidden,), jnp.float32, -k, k)
    # orthogonal init for the final Linear (num_class, hidden)
    a = jax.random.normal(ks[4], (hidden, num_class), jnp.float32)
    q, r = jnp.linalg.qr(a)
    q = q * jnp.sign(jnp.diagonal(r))[None, :]
    fc_w = q.T                                           # (num_class, hidden)
    fc_b = jnp.zeros((num_class,), jnp.float32)
    return dict(
        w_ih=w_ih, w_hh=w_hh, b_ih=b_ih, b_hh=b_hh,
        bn_gamma=jnp.ones((hidden,), jnp.float32),
        bn_beta=jnp.zeros((hidden,), jnp.float32),
        bn_mean=jnp.zeros((hidden,), jnp.float32),
        bn_var=jnp.ones((hidden,), jnp.float32),
        fc_w=fc_w, fc_b=fc_b,
    )


# -----------------------------------------------------------------------------
# Wrapper: (pool + normalize + input-proj)  ->  (LSTM recurrence + BN + FC)
# -----------------------------------------------------------------------------
def cycletime_forward(feat, params, B, N, num_class=101):
    BN, C, SL, H, W = feat.shape
    assert BN == B * N and C == 256
    S = SL * H * W
    # bf16 feature read: kernel 1 is pure HBM-bandwidth bound; in the real pipeline
    # the encoder would emit bf16 directly (the cast here stands in for that).
    feat_flat = feat.reshape(BN, C, S).astype(jnp.bfloat16)

    # weights as bf16 MXU operands (f32 accumulation)
    wih_t = params["w_ih"].T.astype(jnp.bfloat16)        # (C, 4C)
    whh_t = params["w_hh"].T.astype(jnp.bfloat16)        # (C, 4C)
    bias = (params["b_ih"] + params["b_hh"]).reshape(1, 4 * C).astype(jnp.float32)

    # --- pool + L2 normalize + input projection (N clips per grid step) ---------
    gx = pl.pallas_call(
        pool_proj_kernel,
        grid=(B,),
        in_specs=[pl.BlockSpec((N, C, S), lambda b: (b, 0, 0)),   # ~2.6 MiB/step bf16
                  pl.BlockSpec((C, 4 * C), lambda b: (0, 0)),
                  pl.BlockSpec((1, 4 * C), lambda b: (0, 0))],
        out_specs=pl.BlockSpec((None, N, 4 * C), lambda b: (b, 0, 0)),
        out_shape=jax.ShapeDtypeStruct((B, N, 4 * C), jnp.float32),
        compiler_params=pltpu.CompilerParams(
            dimension_semantics=("parallel",),
            vmem_limit_bytes=32 * 1024 * 1024),           # headroom on v5e's 16 MiB
    )(feat_flat, wih_t, bias)

    # --- head constants ----------------------------------------------------------
    ncp = ((num_class + 127) // 128) * 128               # lane-pad class dim
    w_pad = (jnp.zeros((C, ncp), jnp.float32)
             .at[:, :num_class].set(params["fc_w"].T)).astype(jnp.bfloat16)
    b_pad = jnp.zeros((1, ncp), jnp.float32).at[0, :num_class].set(params["fc_b"])
    gamma = params["bn_gamma"].reshape(1, C)
    beta = params["bn_beta"].reshape(1, C)
    mean = params["bn_mean"].reshape(1, C)
    var = params["bn_var"].reshape(1, C)

    # --- LSTM recurrence + fused BN/FC head: single invocation, everything in VMEM
    vm = pl.BlockSpec(memory_space=pltpu.MemorySpace.VMEM)
    logits_pad, ctx_bn = pl.pallas_call(
        lstm_head_kernel,
        in_specs=[vm, vm, vm, vm, vm, vm, vm, vm],
        out_specs=(vm, vm),
        out_shape=(jax.ShapeDtypeStruct((B, ncp), jnp.float32),
                   jax.ShapeDtypeStruct((B, C), jnp.float32)),
    )(gx, whh_t, gamma, beta, mean, var, w_pad, b_pad)

    return logits_pad[:, :num_class], ctx_bn


# -----------------------------------------------------------------------------
# Pure-JAX reference (f32, HIGHEST precision) for validation
# -----------------------------------------------------------------------------
def reference_forward(feat, params, B, N, num_class=101):
    hp = jax.lax.Precision.HIGHEST
    BN, C, SL, H, W = feat.shape
    m = feat.reshape(BN, C, -1).mean(-1)
    nrm = jnp.maximum(jnp.linalg.norm(m, axis=1, keepdims=True), 1e-12)
    x = (m / nrm).reshape(B, N, C)
    h = jnp.zeros((B, C), jnp.float32)
    c = jnp.zeros((B, C), jnp.float32)
    bias = params["b_ih"] + params["b_hh"]
    for t in range(N):
        g = (jnp.dot(x[:, t], params["w_ih"].T, precision=hp)
             + jnp.dot(h, params["w_hh"].T, precision=hp) + bias)
        i_g = jax.nn.sigmoid(g[:, :C]); f_g = jax.nn.sigmoid(g[:, C:2 * C])
        g_g = jnp.tanh(g[:, 2 * C:3 * C]); o_g = jax.nn.sigmoid(g[:, 3 * C:])
        c = f_g * c + i_g * g_g
        h = o_g * jnp.tanh(c)
    xb = ((h - params["bn_mean"]) / jnp.sqrt(params["bn_var"] + 1e-5)
          * params["bn_gamma"] + params["bn_beta"])
    logits = jnp.dot(xb, params["fc_w"].T, precision=hp) + params["fc_b"]
    return logits, xb


if __name__ == "__main__":
    B, N, C = 2, 4, 256
    SL, H, W = 5, 16, 16
    num_class = 101

    key = jax.random.PRNGKey(0)
    kf, kp = jax.random.split(key)
    # synthetic res4 features in place of encoderVideo(block) output
    feat = jax.random.normal(kf, (B * N, C, SL, H, W), dtype=jnp.float32)
    params = init_params(kp, hidden=C, num_class=num_class)

    logits, context = cycletime_forward(feat, params, B, N, num_class)
    jax.block_until_ready((logits, context))

    ref_logits, ref_context = reference_forward(feat, params, B, N, num_class)
    assert logits.shape == (B, num_class) and context.shape == (B, C)
    np.testing.assert_allclose(np.asarray(context), np.asarray(ref_context),
                               rtol=5e-3, atol=5e-3)
    np.testing.assert_allclose(np.asarray(logits), np.asarray(ref_logits),
                               rtol=5e-3, atol=5e-3)
    print("KERNEL_OK")
</pallas_src>

<mosaic_0001>
module attributes {stable_mosaic.version = 11 : i64} {
  func.func @pool_proj_kernel(%arg0: i32, %arg1: memref<4x256x1280xbf16, #tpu.memory_space<vmem>>, %arg2: memref<256x1024xbf16, #tpu.memory_space<vmem>>, %arg3: memref<1x1024xf32, #tpu.memory_space<vmem>>, %arg4: memref<1x4x1024xf32, #tpu.memory_space<vmem>>) attributes {dimension_semantics = [#tpu.dimension_semantics<parallel>], iteration_bounds = array<i64: 2>, scalar_prefetch = 0 : i64, scratch_operands = 0 : i64, tpu.core_type = #tpu.core_type<tc>, window_params = [{transform_indices = @transform_0, window_bounds = array<i64: 4, 256, 1280>}, {pipeline_mode = #tpu.pipeline_mode<synchronous>, transform_indices = @transform_1, window_bounds = array<i64: 256, 1024>}, {pipeline_mode = #tpu.pipeline_mode<synchronous>, transform_indices = @transform_2, window_bounds = array<i64: 1, 1024>}, {transform_indices = @transform_3, window_bounds = array<i64: 1, 4, 1024>}]} {
    %c0 = arith.constant 0 : index
    %c0_0 = arith.constant 0 : index
    %c0_1 = arith.constant 0 : index
    %0 = vector.load %arg1[%c0, %c0_0, %c0_1] : memref<4x256x1280xbf16, #tpu.memory_space<vmem>>, vector<4x256x1280xbf16>
    %1 = arith.extf %0 : vector<4x256x1280xbf16> to vector<4x256x1280xf32>
    %cst = arith.constant dense<0.000000e+00> : vector<4x256xf32>
    %2 = vector.multi_reduction <add>, %1, %cst [2] : vector<4x256x1280xf32> to vector<4x256xf32>
    %cst_2 = arith.constant 1.280000e+03 : f32
    %3 = vector.broadcast %cst_2 : f32 to vector<4x256xf32>
    %4 = arith.divf %2, %3 : vector<4x256xf32>
    %5 = arith.mulf %4, %4 : vector<4x256xf32>
    %cst_3 = arith.constant dense<0.000000e+00> : vector<4xf32>
    %6 = vector.multi_reduction <add>, %5, %cst_3 [1] : vector<4x256xf32> to vector<4xf32>
    %7 = vector.shape_cast %6 : vector<4xf32> to vector<4x1xf32>
    %cst_4 = arith.constant 1.000000e-24 : f32
    %8 = vector.broadcast %cst_4 : f32 to vector<4x1xf32>
    %9 = arith.maximumf %7, %8 : vector<4x1xf32>
    %10 = math.rsqrt %9 : vector<4x1xf32>
    %11 = vector.broadcast %10 : vector<4x1xf32> to vector<4x256xf32>
    %12 = arith.mulf %4, %11 : vector<4x256xf32>
    %13 = arith.truncf %12 : vector<4x256xf32> to vector<4x256xbf16>
    %c0_5 = arith.constant 0 : index
    %c0_6 = arith.constant 0 : index
    %14 = vector.load %arg2[%c0_5, %c0_6] : memref<256x1024xbf16, #tpu.memory_space<vmem>>, vector<256x1024xbf16>
    %cst_7 = arith.constant dense<0.000000e+00> : vector<4x1024xf32>
    %15 = tpu.matmul %13, %14, %cst_7 {dimension_numbers = #tpu.dot_dimension_numbers<[1], [0], [0], [1], [0, 0, 1, 1], [], []>} : vector<4x256xbf16>, vector<256x1024xbf16>, vector<4x1024xf32> -> vector<4x1024xf32>
    %c0_8 = arith.constant 0 : index
    %c0_9 = arith.constant 0 : index
    %16 = vector.load %arg3[%c0_8, %c0_9] : memref<1x1024xf32, #tpu.memory_space<vmem>>, vector<1x1024xf32>
    %17 = vector.broadcast %16 : vector<1x1024xf32> to vector<4x1024xf32>
    %18 = arith.addf %15, %17 : vector<4x1024xf32>
    %c0_10 = arith.constant 0 : index
    %c0_11 = arith.constant 0 : index
    %c0_12 = arith.constant 0 : index
    %19 = vector.load %arg4[%c0_10, %c0_11, %c0_12] : memref<1x4x1024xf32, #tpu.memory_space<vmem>>, vector<1x4x1024xf32>
    %20 = vector.shape_cast %19 : vector<1x4x1024xf32> to vector<4x1024xf32>
    %21 = vector.shape_cast %18 : vector<4x1024xf32> to vector<1x4x1024xf32>
    tpu.vector_store %arg4[%c0_10, %c0_11, %c0_12], %21 {strides = array<i32>} : memref<1x4x1024xf32, #tpu.memory_space<vmem>>, vector<1x4x1024xf32>,
    return
  }
  func.func @transform_0(%arg0: i32) -> (i32, i32, i32) {
    %c0_i32 = arith.constant 0 : i32
    %c0_i32_0 = arith.constant 0 : i32
    %c0_i32_1 = arith.constant 0 : i32
    return %arg0, %c0_i32, %c0_i32_0 : i32, i32, i32
  }
  func.func @transform_1(%arg0: i32) -> (i32, i32) {
    %c0_i32 = arith.constant 0 : i32
    %c0_i32_0 = arith.constant 0 : i32
    %c0_i32_1 = arith.constant 0 : i32
    return %c0_i32, %c0_i32_0 : i32, i32
  }
  func.func @transform_2(%arg0: i32) -> (i32, i32) {
    %c0_i32 = arith.constant 0 : i32
    %c0_i32_0 = arith.constant 0 : i32
    %c0_i32_1 = arith.constant 0 : i32
    return %c0_i32, %c0_i32_0 : i32, i32
  }
  func.func @transform_3(%arg0: i32) -> (i32, i32, i32) {
    %c0_i32 = arith.constant 0 : i32
    %c0_i32_0 = arith.constant 0 : i32
    %c0_i32_1 = arith.constant 0 : i32
    return %arg0, %c0_i32, %c0_i32_0 : i32, i32, i32
  }
}

</mosaic_0001>

<llo_original>
// kernel: tpu_custom_call.1
$region0: #{tpu_custom_call.1}
  #allocation0 [shape = 'u32[]', space=smem, size = 0x4, offset = 0x4, fixed_abs, tag = 'smem constant byte address 0x4 - core index']
  #allocation1 [shape = 'u32[144,128]{1,0:T(1,128)}', space=vmem, size = 0x12000, scoped, tag = 'internal scratch']
  %s0 = inlined_call_operand.hbm [shape: bf16[8,256,1280], index: 0, kind: input, shape index: {}]
  %s1 = inlined_call_operand.hbm [shape: bf16[256,1024], index: 1, kind: input, shape index: {}]
  %s2 = inlined_call_operand.hbm [shape: f32[1,1024], index: 2, kind: input, shape index: {}]
  %s3 = inlined_call_operand.hbm [shape: f32[2,4,1024], index: 3, kind: output, shape index: {}]
  %s4 = sld [smem:[#allocation0]]
  $region57: #{tpu_custom_call.1} parent=0
    _
  %s6 = ssub.s32 1, %s4
  %s7 = scalar_select 0, %s6, %s4
  $region1: #{tpu_custom_call.1} parent=0
    #allocation2 [shape = 'u8[5242880]{0}', space=vmem, size = 0x500000, scoped, tag = 'input window, operand 0']
    #allocation3 [shape = 's32[2]{0}', space=sflag, size = 0x8, scoped, tag = 'scoped memory for tpu_custom_call.1']
    #allocation4 [shape = 's32[2]{0}', space=sflag, size = 0x8, scoped, tag = 'scoped memory for tpu_custom_call.1']
    #allocation5 [shape = 'u8[524288]{0}', space=vmem, size = 0x80000, scoped, tag = 'input window, operand 1, single buffered']
    #allocation6 [shape = 's32[1]{0}', space=sflag, size = 0x4, scoped, tag = 'scoped memory for tpu_custom_call.1']
    #allocation7 [shape = 'u8[4096]{0}', space=vmem, size = 0x1000, scoped, tag = 'input window, operand 2, single buffered']
    #allocation8 [shape = 'u8[32768]{0}', space=vmem, size = 0x8000, scoped, tag = 'output window, operand 0']
    %8 = vsyncpa [#allocation3], 0
    %s9 = scalar_lea.sflag [#allocation3], 1
    %10 = vsyncpa %s9, 0
    %11 = vsyncpa [#allocation6], 0
    %12 = vsyncpa [#allocation4], 0
    %s13 = scalar_lea.sflag [#allocation4], 1
    %14 = vsyncpa %s13, 0
    loop: start=0, step=1, limit=4
    $region2: #{tpu_custom_call.1} parent=1 // loop_pre_header
      _
    $region3: #{tpu_custom_call.1} parent=1 // loop_header
      %s16 = sphi 0, %s20
      %p17 = scmp.ge.s32.totalorder %s16, 4
      %s26 = sphi 0, %s28
      %s29 = sphi 0, %s26
      %s30 = sphi 0, %s29
      %s46 = sphi 0, %s30
      %s50 = sphi 0, %s50
      %s52 = sphi 0, %s50
      %s53 = sphi 0, %s52
      %s67 = sphi 0, %s53
      %s71 = sphi 0, %s71
      %s73 = sphi 0, %s71
      %s74 = sphi 0, %s73
      %s88 = sphi 0, %s74
      %s94 = sphi 0, %s96
      %s97 = sphi 0, %s94
      %s98 = sphi 0, %s97
      %s114 = sphi 0, %s98
    $region4: #{tpu_custom_call.1} parent=1 // loop_header_branch
      %19 = sbr.rel (%p17) target = $region8
    $region5: #{tpu_custom_call.1} parent=1 // loop_body
      %s21 = ssub.s32 %s16, 1
      %s22 = ssub.s32 %s16, 2
      %s23 = sadd.s32 %s16, 1
      %s24 = ssub.s32 %s16, %s23
      %p25 = scmp.eq.s32.totalorder %s24, 0
      %s27 = sadd.s32 %s26, 1
      %s28 = scalar_select %p25, %s26, %s27
      %p31 = pneg %p25
      %p32 = scmp.eq.s32.totalorder %s16, 1
      %p33 = por %p31, %p32
      %p34 = scmp.ne.s32.totalorder %s26, %s29
      %p35 = scmp.eq.s32.totalorder %s16, 0
      %p36 = por %p34, %p35
      %p37 = scmp.ne.s32.totalorder %s26, %s29
      %p38 = scmp.eq.s32.totalorder %s21, 1
      %p39 = por %p37, %p38
      %p40 = scmp.ne.s32.totalorder %s29, %s30
      %p41 = scmp.eq.s32.totalorder %s21, 0
      %p42 = por %p40, %p41
      %p43 = scmp.ne.s32.totalorder %s29, %s30
      %p44 = scmp.eq.s32.totalorder %s22, 1
      %p45 = por %p43, %p44
      %p47 = scmp.ne.s32.totalorder %s30, %s46
      %p48 = scmp.eq.s32.totalorder %s22, 0
      %p49 = por %p47, %p48
      %s51 = sadd.s32 %s50, 1
      %p54 = scmp.eq.s32.totalorder %s16, 1
      %p55 = scmp.ne.s32.totalorder %s50, %s52
      %p56 = scmp.eq.s32.totalorder %s16, 0
      %p57 = por %p55, %p56
      %p58 = scmp.ne.s32.totalorder %s50, %s52
      %p59 = scmp.eq.s32.totalorder %s21, 1
      %p60 = por %p58, %p59
      %p61 = scmp.ne.s32.totalorder %s52, %s53
      %p62 = scmp.eq.s32.totalorder %s21, 0
      %p63 = por %p61, %p62
      %p64 = scmp.ne.s32.totalorder %s52, %s53
      %p65 = scmp.eq.s32.totalorder %s22, 1
      %p66 = por %p64, %p65
      %p68 = scmp.ne.s32.totalorder %s53, %s67
      %p69 = scmp.eq.s32.totalorder %s22, 0
      %p70 = por %p68, %p69
      %s72 = sadd.s32 %s71, 1
      %p75 = scmp.eq.s32.totalorder %s16, 1
      %p76 = scmp.ne.s32.totalorder %s71, %s73
      %p77 = scmp.eq.s32.totalorder %s16, 0
      %p78 = por %p76, %p77
      %p79 = scmp.ne.s32.totalorder %s71, %s73
      %p80 = scmp.eq.s32.totalorder %s21, 1
      %p81 = por %p79, %p80
      %p82 = scmp.ne.s32.totalorder %s73, %s74
      %p83 = scmp.eq.s32.totalorder %s21, 0
      %p84 = por %p82, %p83
      %p85 = scmp.ne.s32.totalorder %s73, %s74
      %p86 = scmp.eq.s32.totalorder %s22, 1
      %p87 = por %p85, %p86
      %p89 = scmp.ne.s32.totalorder %s74, %s88
      %p90 = scmp.eq.s32.totalorder %s22, 0
      %p91 = por %p89, %p90
      %s92 = ssub.s32 %s16, %s23
      %p93 = scmp.eq.s32.totalorder %s92, 0
      %s95 = sadd.s32 %s94, 1
      %s96 = scalar_select %p93, %s94, %s95
      %p99 = pneg %p93
      %p100 = scmp.eq.s32.totalorder %s16, 1
      %p101 = por %p99, %p100
      %p102 = scmp.ne.s32.totalorder %s94, %s97
      %p103 = scmp.eq.s32.totalorder %s16, 0
      %p104 = por %p102, %p103
      %p105 = scmp.ne.s32.totalorder %s94, %s97
      %p106 = scmp.eq.s32.totalorder %s21, 1
      %p107 = por %p105, %p106
      %p108 = scmp.ne.s32.totalorder %s97, %s98
      %p109 = scmp.eq.s32.totalorder %s21, 0
      %p110 = por %p108, %p109
      %p111 = scmp.ne.s32.totalorder %s97, %s98
      %p112 = scmp.eq.s32.totalorder %s22, 1
      %p113 = por %p111, %p112
      %p115 = scmp.ne.s32.totalorder %s98, %s114
      %p116 = scmp.eq.s32.totalorder %s22, 0
      %p117 = por %p115, %p116
      %p118 = scmp.le.s32.totalorder 1, %s16
      %p119 = scmp.lt.s32.totalorder %s16, 3
      %p120 = pnand %p118, %p119
      %p121 = pneg %p120
      // Predicated region
      $region9: #{tpu_custom_call.1} parent=5 // pred_check
        _
      $region10: #{tpu_custom_call.1} parent=5 // pred_check_branch
        %123 = sbr.rel (%p120) target = $region12
      $region11: #{tpu_custom_call.1} parent=5 // pred_region
        %s124 = ssub.s32 %s16, 1
        // Predicated region
        $region13: #{tpu_custom_call.1} parent=11 // pred_check
          %p125 = pneg %p63
        $region14: #{tpu_custom_call.1} parent=11 // pred_check_branch
          %127 = sbr.rel (%p125) target = $region16
        $region15: #{tpu_custom_call.1} parent=11 // pred_region
          %s129 = ssub.s32 16384, 16384
          %130 = vsyncadd [#allocation6], %s129
          %s131 = sshll.u32 [#allocation5], 4
          %s132 = int_to_ptr.vmem [resolvable:$true] %s131
          %137 = dma.hbm_to_vmem [thread:$0]  %s1, 16384, %s132, [#allocation6], 512, 512, 32
        $region16: #{tpu_custom_call.1} parent=11 // pred_fallthru
          _
        // Predicated region
        $region17: #{tpu_custom_call.1} parent=11 // pred_check
          %p138 = pneg %p84
        $region18: #{tpu_custom_call.1} parent=11 // pred_check_branch
          %140 = sbr.rel (%p138) target = $region20
        $region19: #{tpu_custom_call.1} parent=11 // pred_region
          %s142 = ssub.s32 128, 128
          %143 = vsyncadd [#allocation6], %s142
          %s145 = sshll.u32 [#allocation7], 4
          %s146 = int_to_ptr.vmem [resolvable:$true] %s145
          %148 = dma.hbm_to_vmem [thread:$0]  %s2, 128, %s146, [#allocation6]
        $region20: #{tpu_custom_call.1} parent=11 // pred_fallthru
          _
      $region12: #{tpu_custom_call.1} parent=5 // pred_fallthru
        _
      %p149 = scmp.lt.s32.totalorder %s16, 2
      // Predicated region
      $region21: #{tpu_custom_call.1} parent=5 // pred_check
        %p150 = pneg %p149
      $region22: #{tpu_custom_call.1} parent=5 // pred_check_branch
        %152 = sbr.rel (%p150) target = $region24
      $region23: #{tpu_custom_call.1} parent=5 // pred_region
        // Predicated region
        $region25: #{tpu_custom_call.1} parent=23 // pred_check
          %p153 = pneg %p36
        $region26: #{tpu_custom_call.1} parent=23 // pred_check_branch
          %155 = sbr.rel (%p153) target = $region28
        $region27: #{tpu_custom_call.1} parent=23 // pred_region
          %s156 = sand.u32 %s26, 1
          %s157 = scalar_lea.sflag [#allocation3], %s156
          %s158 = sand.u32 %s26, 1
          %s159 = smul.addr %s158, 5120
          %s160 = scalar_lea.vmem [#allocation2], %s159
          %s161 = smul.u32 4, %s16
          %s163 = ssub.s32 81920, 81920
          %164 = vsyncadd %s157, %s163
          %s165 = smul.addr %s161, 320
          %s166 = smul.addr %s165, 64
          %s167 = scalar_lea.hbm %s0, %s166
          %s168 = sshll.u32 %s160, 4
          %s169 = int_to_ptr.vmem [resolvable:$true] %s168
          %174 = dma.hbm_to_vmem [thread:$0]  %s167, 81920, %s169, %s157, 640, 640, 40
        $region28: #{tpu_custom_call.1} parent=23 // pred_fallthru
          _
      $region24: #{tpu_custom_call.1} parent=5 // pred_fallthru
        _
      %p175 = scmp.le.s32.totalorder 1, %s16
      %p176 = scmp.lt.s32.totalorder %s16, 3
      %p177 = pnand %p175, %p176
      %p178 = pneg %p177
      // Predicated region
      $region29: #{tpu_custom_call.1} parent=5 // pred_check
        _
      $region30: #{tpu_custom_call.1} parent=5 // pred_check_branch
        %180 = sbr.rel (%p177) target = $region32
      $region31: #{tpu_custom_call.1} parent=5 // pred_region
        %s181 = ssub.s32 %s16, 1
        %s182 = sand.u32 %s29, 1
        %s183 = scalar_lea.sflag [#allocation3], %s182
        %s184 = sand.u32 %s29, 1
        %s185 = smul.addr %s184, 5120
        %s186 = scalar_lea.vmem [#allocation2], %s185
        // Predicated region
        $region33: #{tpu_custom_call.1} parent=31 // pred_check
          %p187 = pneg %p42
        $region34: #{tpu_custom_call.1} parent=31 // pred_check_branch
          %189 = sbr.rel (%p187) target = $region36
        $region35: #{tpu_custom_call.1} parent=31 // pred_region
          %190 = dma.done %s183, 81920
        $region36: #{tpu_custom_call.1} parent=31 // pred_fallthru
          _
        // Predicated region
        $region37: #{tpu_custom_call.1} parent=31 // pred_check
          %p191 = pneg %p63
        $region38: #{tpu_custom_call.1} parent=31 // pred_check_branch
          %193 = sbr.rel (%p191) target = $region40
        $region39: #{tpu_custom_call.1} parent=31 // pred_region
          %194 = dma.done [#allocation6], 16384
        $region40: #{tpu_custom_call.1} parent=31 // pred_fallthru
          _
        // Predicated region
        $region41: #{tpu_custom_call.1} parent=31 // pred_check
          %p195 = pneg %p84
        $region42: #{tpu_custom_call.1} parent=31 // pred_check_branch
          %197 = sbr.rel (%p195) target = $region44
        $region43: #{tpu_custom_call.1} parent=31 // pred_region
          %198 = dma.done [#allocation6], 128
        $region44: #{tpu_custom_call.1} parent=31 // pred_fallthru
          _
        %s199 = sand.u32 %s29, 1
        %s200 = scalar_lea.sflag [#allocation3], %s199
        %s201 = sand.u32 %s29, 1
        %s202 = smul.addr %s201, 5120
        %s203 = scalar_lea.vmem [#allocation2], %s202
        %p204 = pneg %p42
        %p205 = pneg %p39
        %p206 = pneg %p63
        %p207 = pneg %p60
        %p208 = pneg %p84
        %p209 = pneg %p81
        %p210 = pneg %p110
        %p211 = pneg %p107
        %s212 = sand.u32 %s97, 1
        %s213 = scalar_lea.sflag [#allocation4], %s212
        %s214 = sand.u32 %s97, 1
        %s215 = smul.addr %s214, 32
        %s216 = scalar_lea.vmem [#allocation8], %s215
        %s217 = smul.u32 4, %s21
        %v218 = vld [vmem:[%s186] sm:$0xff]
        %v219 = vld [vmem:[%s186 + $0x8] sm:$0xff]
        %v220 = vld [vmem:[%s186 + $0x10] sm:$0xff]
        %v221 = vld [vmem:[%s186 + $0x18] sm:$0xff]
        %v222 = vld [vmem:[%s186 + $0x20] sm:$0xff]
        %v223 = vld [vmem:[%s186 + $0x28] sm:$0xff]
        %v224 = vld [vmem:[%s186 + $0x30] sm:$0xff]
        %v225 = vld [vmem:[%s186 + $0x38] sm:$0xff]
        %v226 = vld [vmem:[%s186 + $0x40] sm:$0xff]
        %v227 = vld [vmem:[%s186 + $0x48] sm:$0xff]
        %v228 = vld [vmem:[%s186 + $0x50] sm:$0xff]
        %v229 = vld [vmem:[%s186 + $0x58] sm:$0xff]
        %v230 = vld [vmem:[%s186 + $0x60] sm:$0xff]
        %v231 = vld [vmem:[%s186 + $0x68] sm:$0xff]
        %v232 = vld [vmem:[%s186 + $0x70] sm:$0xff]
        %v233 = vld [vmem:[%s186 + $0x78] sm:$0xff]
        %v234 = vld [vmem:[%s186 + $0x80] sm:$0xff]
        %v235 = vld [vmem:[%s186 + $0x88] sm:$0xff]
        %v236 = vld [vmem:[%s186 + $0x90] sm:$0xff]
        %v237 = vld [vmem:[%s186 + $0x98] sm:$0xff]
        %v238 = vld [vmem:[%s186 + $0xa0] sm:$0xff]
        %v239 = vld [vmem:[%s186 + $0xa8] sm:$0xff]
        %v240 = vld [vmem:[%s186 + $0xb0] sm:$0xff]
        %v241 = vld [vmem:[%s186 + $0xb8] sm:$0xff]
        %v242 = vld [vmem:[%s186 + $0xc0] sm:$0xff]
        %v243 = vld [vmem:[%s186 + $0xc8] sm:$0xff]
        %v244 = vld [vmem:[%s186 + $0xd0] sm:$0xff]
        %v245 = vld [vmem:[%s186 + $0xd8] sm:$0xff]
        %v246 = vld [vmem:[%s186 + $0xe0] sm:$0xff]
        %v247 = vld [vmem:[%s186 + $0xe8] sm:$0xff]
        %v248 = vld [vmem:[%s186 + $0xf0] sm:$0xff]
        %v249 = vld [vmem:[%s186 + $0xf8] sm:$0xff]
        %v250 = vld [vmem:[%s186 + $0x100] sm:$0xff]
        %v251 = vld [vmem:[%s186 + $0x108] sm:$0xff]
        %v252 = vld [vmem:[%s186 + $0x110] sm:$0xff]
        %v253 = vld [vmem:[%s186 + $0x118] sm:$0xff]
        %v254 = vld [vmem:[%s186 + $0x120] sm:$0xff]
        %v255 = vld [vmem:[%s186 + $0x128] sm:$0xff]
        %v256 = vld [vmem:[%s186 + $0x130] sm:$0xff]
        %v257 = vld [vmem:[%s186 + $0x138] sm:$0xff]
        %v258 = vld [vmem:[%s186 + $0x140] sm:$0xff]
        %v259 = vld [vmem:[%s186 + $0x148] sm:$0xff]
        %v260 = vld [vmem:[%s186 + $0x150] sm:$0xff]
        %v261 = vld [vmem:[%s186 + $0x158] sm:$0xff]
        %v262 = vld [vmem:[%s186 + $0x160] sm:$0xff]
        %v263 = vld [vmem:[%s186 + $0x168] sm:$0xff]
        %v264 = vld [vmem:[%s186 + $0x170] sm:$0xff]
        %v265 = vld [vmem:[%s186 + $0x178] sm:$0xff]
        %v266 = vld [vmem:[%s186 + $0x180] sm:$0xff]
        %v267 = vld [vmem:[%s186 + $0x188] sm:$0xff]
        %v268 = vld [vmem:[%s186 + $0x190] sm:$0xff]
        %v269 = vld [vmem:[%s186 + $0x198] sm:$0xff]
        %v270 = vld [vmem:[%s186 + $0x1a0] sm:$0xff]
        %v271 = vld [vmem:[%s186 + $0x1a8] sm:$0xff]
        %v272 = vld [vmem:[%s186 + $0x1b0] sm:$0xff]
        %v273 = vld [vmem:[%s186 + $0x1b8] sm:$0xff]
        %v274 = vld [vmem:[%s186 + $0x1c0] sm:$0xff]
        %v275 = vld [vmem:[%s186 + $0x1c8] sm:$0xff]
        %v276 = vld [vmem:[%s186 + $0x1d0] sm:$0xff]
        %v277 = vld [vmem:[%s186 + $0x1d8] sm:$0xff]
        %v278 = vld [vmem:[%s186 + $0x1e0] sm:$0xff]
        %v279 = vld [vmem:[%s186 + $0x1e8] sm:$0xff]
        %v280 = vld [vmem:[%s186 + $0x1f0] sm:$0xff]
        %v281 = vld [vmem:[%s186 + $0x1f8] sm:$0xff]
        %v282 = vld [vmem:[%s186 + $0x200] sm:$0xff]
        %v283 = vld [vmem:[%s186 + $0x208] sm:$0xff]
        %v284 = vld [vmem:[%s186 + $0x210] sm:$0xff]
        %v285 = vld [vmem:[%s186 + $0x218] sm:$0xff]
        %v286 = vld [vmem:[%s186 + $0x220] sm:$0xff]
        %v287 = vld [vmem:[%s186 + $0x228] sm:$0xff]
        %v288 = vld [vmem:[%s186 + $0x230] sm:$0xff]
        %v289 = vld [vmem:[%s186 + $0x238] sm:$0xff]
        %v290 = vld [vmem:[%s186 + $0x240] sm:$0xff]
        %v291 = vld [vmem:[%s186 + $0x248] sm:$0xff]
        %v292 = vld [vmem:[%s186 + $0x250] sm:$0xff]
        %v293 = vld [vmem:[%s186 + $0x258] sm:$0xff]
        %v294 = vld [vmem:[%s186 + $0x260] sm:$0xff]
        %v295 = vld [vmem:[%s186 + $0x268] sm:$0xff]
        %v296 = vld [vmem:[%s186 + $0x270] sm:$0xff]
        %v297 = vld [vmem:[%s186 + $0x278] sm:$0xff]
        %v298 = vld [vmem:[%s186 + $0x280] sm:$0xff]
        %v299 = vld [vmem:[%s186 + $0x288] sm:$0xff]
        %v300 = vld [vmem:[%s186 + $0x290] sm:$0xff]
        %v301 = vld [vmem:[%s186 + $0x298] sm:$0xff]
        %v302 = vld [vmem:[%s186 + $0x2a0] sm:$0xff]
        %v303 = vld [vmem:[%s186 + $0x2a8] sm:$0xff]
        %v304 = vld [vmem:[%s186 + $0x2b0] sm:$0xff]
        %v305 = vld [vmem:[%s186 + $0x2b8] sm:$0xff]
        %v306 = vld [vmem:[%s186 + $0x2c0] sm:$0xff]
        %v307 = vld [vmem:[%s186 + $0x2c8] sm:$0xff]
        %v308 = vld [vmem:[%s186 + $0x2d0] sm:$0xff]
        %v309 = vld [vmem:[%s186 + $0x2d8] sm:$0xff]
        %v310 = vld [vmem:[%s186 + $0x2e0] sm:$0xff]
        %v311 = vld [vmem:[%s186 + $0x2e8] sm:$0xff]
        %v312 = vld [vmem:[%s186 + $0x2f0] sm:$0xff]
        %v313 = vld [vmem:[%s186 + $0x2f8] sm:$0xff]
        %v314 = vld [vmem:[%s186 + $0x300] sm:$0xff]
        %v315 = vld [vmem:[%s186 + $0x308] sm:$0xff]
        %v316 = vld [vmem:[%s186 + $0x310] sm:$0xff]
        %v317 = vld [vmem:[%s186 + $0x318] sm:$0xff]
        %v318 = vld [vmem:[%s186 + $0x320] sm:$0xff]
        %v319 = vld [vmem:[%s186 + $0x328] sm:$0xff]
        %v320 = vld [vmem:[%s186 + $0x330] sm:$0xff]
        %v321 = vld [vmem:[%s186 + $0x338] sm:$0xff]
        %v322 = vld [vmem:[%s186 + $0x340] sm:$0xff]
        %v323 = vld [vmem:[%s186 + $0x348] sm:$0xff]
        %v324 = vld [vmem:[%s186 + $0x350] sm:$0xff]
        %v325 = vld [vmem:[%s186 + $0x358] sm:$0xff]
        %v326 = vld [vmem:[%s186 + $0x360] sm:$0xff]
        %v327 = vld [vmem:[%s186 + $0x368] sm:$0xff]
        %v328 = vld [vmem:[%s186 + $0x370] sm:$0xff]
        %v329 = vld [vmem:[%s186 + $0x378] sm:$0xff]
        %v330 = vld [vmem:[%s186 + $0x380] sm:$0xff]
        %v331 = vld [vmem:[%s186 + $0x388] sm:$0xff]
        %v332 = vld [vmem:[%s186 + $0x390] sm:$0xff]
        %v333 = vld [vmem:[%s186 + $0x398] sm:$0xff]
        %v334 = vld [vmem:[%s186 + $0x3a0] sm:$0xff]
        %v335 = vld [vmem:[%s186 + $0x3a8] sm:$0xff]
        %v336 = vld [vmem:[%s186 + $0x3b0] sm:$0xff]
        %v337 = vld [vmem:[%s186 + $0x3b8] sm:$0xff]
        %v338 = vld [vmem:[%s186 + $0x3c0] sm:$0xff]
        %v339 = vld [vmem:[%s186 + $0x3c8] sm:$0xff]
        %v340 = vld [vmem:[%s186 + $0x3d0] sm:$0xff]
        %v341 = vld [vmem:[%s186 + $0x3d8] sm:$0xff]
        %v342 = vld [vmem:[%s186 + $0x3e0] sm:$0xff]
        %v343 = vld [vmem:[%s186 + $0x3e8] sm:$0xff]
        %v344 = vld [vmem:[%s186 + $0x3f0] sm:$0xff]
        %v345 = vld [vmem:[%s186 + $0x3f8] sm:$0xff]
        %v346 = vld [vmem:[%s186 + $0x400] sm:$0xff]
        %v347 = vld [vmem:[%s186 + $0x408] sm:$0xff]
        %v348 = vld [vmem:[%s186 + $0x410] sm:$0xff]
        %v349 = vld [vmem:[%s186 + $0x418] sm:$0xff]
        %v350 = vld [vmem:[%s186 + $0x420] sm:$0xff]
        %v351 = vld [vmem:[%s186 + $0x428] sm:$0xff]
        %v352 = vld [vmem:[%s186 + $0x430] sm:$0xff]
        %v353 = vld [vmem:[%s186 + $0x438] sm:$0xff]
        %v354 = vld [vmem:[%s186 + $0x440] sm:$0xff]
        %v355 = vld [vmem:[%s186 + $0x448] sm:$0xff]
        %v356 = vld [vmem:[%s186 + $0x450] sm:$0xff]
        %v357 = vld [vmem:[%s186 + $0x458] sm:$0xff]
        %v358 = vld [vmem:[%s186 + $0x460] sm:$0xff]
        %v359 = vld [vmem:[%s186 + $0x468] sm:$0xff]
        %v360 = vld [vmem:[%s186 + $0x470] sm:$0xff]
        %v361 = vld [vmem:[%s186 + $0x478] sm:$0xff]
        %v362 = vld [vmem:[%s186 + $0x480] sm:$0xff]
        %v363 = vld [vmem:[%s186 + $0x488] sm:$0xff]
        %v364 = vld [vmem:[%s186 + $0x490] sm:$0xff]
        %v365 = vld [vmem:[%s186 + $0x498] sm:$0xff]
        %v366 = vld [vmem:[%s186 + $0x4a0] sm:$0xff]
        %v367 = vld [vmem:[%s186 + $0x4a8] sm:$0xff]
        %v368 = vld [vmem:[%s186 + $0x4b0] sm:$0xff]
        %v369 = vld [vmem:[%s186 + $0x4b8] sm:$0xff]
        %v370 = vld [vmem:[%s186 + $0x4c0] sm:$0xff]
        %v371 = vld [vmem:[%s186 + $0x4c8] sm:$0xff]
        %v372 = vld [vmem:[%s186 + $0x4d0] sm:$0xff]
        %v373 = vld [vmem:[%s186 + $0x4d8] sm:$0xff]
        %v374 = vld [vmem:[%s186 + $0x4e0] sm:$0xff]
        %v375 = vld [vmem:[%s186 + $0x4e8] sm:$0xff]
        %v376 = vld [vmem:[%s186 + $0x4f0] sm:$0xff]
        %v377 = vld [vmem:[%s186 + $0x4f8] sm:$0xff]
        %v378 = vld [vmem:[%s186 + $0x500] sm:$0xff]
        %v379 = vld [vmem:[%s186 + $0x508] sm:$0xff]
        %v380 = vld [vmem:[%s186 + $0x510] sm:$0xff]
        %v381 = vld [vmem:[%s186 + $0x518] sm:$0xff]
        %v382 = vld [vmem:[%s186 + $0x520] sm:$0xff]
        %v383 = vld [vmem:[%s186 + $0x528] sm:$0xff]
        %v384 = vld [vmem:[%s186 + $0x530] sm:$0xff]
        %v385 = vld [vmem:[%s186 + $0x538] sm:$0xff]
        %v386 = vld [vmem:[%s186 + $0x540] sm:$0xff]
        %v387 = vld [vmem:[%s186 + $0x548] sm:$0xff]
        %v388 = vld [vmem:[%s186 + $0x550] sm:$0xff]
        %v389 = vld [vmem:[%s186 + $0x558] sm:$0xff]
        %v390 = vld [vmem:[%s186 + $0x560] sm:$0xff]
        %v391 = vld [vmem:[%s186 + $0x568] sm:$0xff]
        %v392 = vld [vmem:[%s186 + $0x570] sm:$0xff]
        %v393 = vld [vmem:[%s186 + $0x578] sm:$0xff]
        %v394 = vld [vmem:[%s186 + $0x580] sm:$0xff]
        %v395 = vld [vmem:[%s186 + $0x588] sm:$0xff]
        %v396 = vld [vmem:[%s186 + $0x590] sm:$0xff]
        %v397 = vld [vmem:[%s186 + $0x598] sm:$0xff]
        %v398 = vld [vmem:[%s186 + $0x5a0] sm:$0xff]
        %v399 = vld [vmem:[%s186 + $0x5a8] sm:$0xff]
        %v400 = vld [vmem:[%s186 + $0x5b0] sm:$0xff]
        %v401 = vld [vmem:[%s186 + $0x5b8] sm:$0xff]
        %v402 = vld [vmem:[%s186 + $0x5c0] sm:$0xff]
        %v403 = vld [vmem:[%s186 + $0x5c8] sm:$0xff]
        %v404 = vld [vmem:[%s186 + $0x5d0] sm:$0xff]
        %v405 = vld [vmem:[%s186 + $0x5d8] sm:$0xff]
        %v406 = vld [vmem:[%s186 + $0x5e0] sm:$0xff]
        %v407 = vld [vmem:[%s186 + $0x5e8] sm:$0xff]
        %v408 = vld [vmem:[%s186 + $0x5f0] sm:$0xff]
        %v409 = vld [vmem:[%s186 + $0x5f8] sm:$0xff]
        %v410 = vld [vmem:[%s186 + $0x600] sm:$0xff]
        %v411 = vld [vmem:[%s186 + $0x608] sm:$0xff]
        %v412 = vld [vmem:[%s186 + $0x610] sm:$0xff]
        %v413 = vld [vmem:[%s186 + $0x618] sm:$0xff]
        %v414 = vld [vmem:[%s186 + $0x620] sm:$0xff]
        %v415 = vld [vmem:[%s186 + $0x628] sm:$0xff]
        %v416 = vld [vmem:[%s186 + $0x630] sm:$0xff]
        %v417 = vld [vmem:[%s186 + $0x638] sm:$0xff]
        %v418 = vld [vmem:[%s186 + $0x640] sm:$0xff]
        %v419 = vld [vmem:[%s186 + $0x648] sm:$0xff]
        %v420 = vld [vmem:[%s186 + $0x650] sm:$0xff]
        %v421 = vld [vmem:[%s186 + $0x658] sm:$0xff]
        %v422 = vld [vmem:[%s186 + $0x660] sm:$0xff]
        %v423 = vld [vmem:[%s186 + $0x668] sm:$0xff]
        %v424 = vld [vmem:[%s186 + $0x670] sm:$0xff]
        %v425 = vld [vmem:[%s186 + $0x678] sm:$0xff]
        %v426 = vld [vmem:[%s186 + $0x680] sm:$0xff]
        %v427 = vld [vmem:[%s186 + $0x688] sm:$0xff]
        %v428 = vld [vmem:[%s186 + $0x690] sm:$0xff]
        %v429 = vld [vmem:[%s186 + $0x698] sm:$0xff]
        %v430 = vld [vmem:[%s186 + $0x6a0] sm:$0xff]
        %v431 = vld [vmem:[%s186 + $0x6a8] sm:$0xff]
        %v432 = vld [vmem:[%s186 + $0x6b0] sm:$0xff]
        %v433 = vld [vmem:[%s186 + $0x6b8] sm:$0xff]
        %v434 = vld [vmem:[%s186 + $0x6c0] sm:$0xff]
        %v435 = vld [vmem:[%s186 + $0x6c8] sm:$0xff]
        %v436 = vld [vmem:[%s186 + $0x6d0] sm:$0xff]
        %v437 = vld [vmem:[%s186 + $0x6d8] sm:$0xff]
        %v438 = vld [vmem:[%s186 + $0x6e0] sm:$0xff]
        %v439 = vld [vmem:[%s186 + $0x6e8] sm:$0xff]
        %v440 = vld [vmem:[%s186 + $0x6f0] sm:$0xff]
        %v441 = vld [vmem:[%s186 + $0x6f8] sm:$0xff]
        %v442 = vld [vmem:[%s186 + $0x700] sm:$0xff]
        %v443 = vld [vmem:[%s186 + $0x708] sm:$0xff]
        %v444 = vld [vmem:[%s186 + $0x710] sm:$0xff]
        %v445 = vld [vmem:[%s186 + $0x718] sm:$0xff]
        %v446 = vld [vmem:[%s186 + $0x720] sm:$0xff]
        %v447 = vld [vmem:[%s186 + $0x728] sm:$0xff]
        %v448 = vld [vmem:[%s186 + $0x730] sm:$0xff]
        %v449 = vld [vmem:[%s186 + $0x738] sm:$0xff]
        %v450 = vld [vmem:[%s186 + $0x740] sm:$0xff]
        %v451 = vld [vmem:[%s186 + $0x748] sm:$0xff]
        %v452 = vld [vmem:[%s186 + $0x750] sm:$0xff]
        %v453 = vld [vmem:[%s186 + $0x758] sm:$0xff]
        %v454 = vld [vmem:[%s186 + $0x760] sm:$0xff]
        %v455 = vld [vmem:[%s186 + $0x768] sm:$0xff]
        %v456 = vld [vmem:[%s186 + $0x770] sm:$0xff]
        %v457 = vld [vmem:[%s186 + $0x778] sm:$0xff]
        %v458 = vld [vmem:[%s186 + $0x780] sm:$0xff]
        %v459 = vld [vmem:[%s186 + $0x788] sm:$0xff]
        %v460 = vld [vmem:[%s186 + $0x790] sm:$0xff]
        %v461 = vld [vmem:[%s186 + $0x798] sm:$0xff]
        %v462 = vld [vmem:[%s186 + $0x7a0] sm:$0xff]
        %v463 = vld [vmem:[%s186 + $0x7a8] sm:$0xff]
        %v464 = vld [vmem:[%s186 + $0x7b0] sm:$0xff]
        %v465 = vld [vmem:[%s186 + $0x7b8] sm:$0xff]
        %v466 = vld [vmem:[%s186 + $0x7c0] sm:$0xff]
        %v467 = vld [vmem:[%s186 + $0x7c8] sm:$0xff]
        %v468 = vld [vmem:[%s186 + $0x7d0] sm:$0xff]
        %v469 = vld [vmem:[%s186 + $0x7d8] sm:$0xff]
        %v470 = vld [vmem:[%s186 + $0x7e0] sm:$0xff]
        %v471 = vld [vmem:[%s186 + $0x7e8] sm:$0xff]
        %v472 = vld [vmem:[%s186 + $0x7f0] sm:$0xff]
        %v473 = vld [vmem:[%s186 + $0x7f8] sm:$0xff]
        %v474 = vld [vmem:[%s186 + $0x800] sm:$0xff]
        %v475 = vld [vmem:[%s186 + $0x808] sm:$0xff]
        %v476 = vld [vmem:[%s186 + $0x810] sm:$0xff]
        %v477 = vld [vmem:[%s186 + $0x818] sm:$0xff]
        %v478 = vld [vmem:[%s186 + $0x820] sm:$0xff]
        %v479 = vld [vmem:[%s186 + $0x828] sm:$0xff]
        %v480 = vld [vmem:[%s186 + $0x830] sm:$0xff]
        %v481 = vld [vmem:[%s186 + $0x838] sm:$0xff]
        %v482 = vld [vmem:[%s186 + $0x840] sm:$0xff]
        %v483 = vld [vmem:[%s186 + $0x848] sm:$0xff]
        %v484 = vld [vmem:[%s186 + $0x850] sm:$0xff]
        %v485 = vld [vmem:[%s186 + $0x858] sm:$0xff]
        %v486 = vld [vmem:[%s186 + $0x860] sm:$0xff]
        %v487 = vld [vmem:[%s186 + $0x868] sm:$0xff]
        %v488 = vld [vmem:[%s186 + $0x870] sm:$0xff]
        %v489 = vld [vmem:[%s186 + $0x878] sm:$0xff]
        %v490 = vld [vmem:[%s186 + $0x880] sm:$0xff]
        %v491 = vld [vmem:[%s186 + $0x888] sm:$0xff]
        %v492 = vld [vmem:[%s186 + $0x890] sm:$0xff]
        %v493 = vld [vmem:[%s186 + $0x898] sm:$0xff]
        %v494 = vld [vmem:[%s186 + $0x8a0] sm:$0xff]
        %v495 = vld [vmem:[%s186 + $0x8a8] sm:$0xff]
        %v496 = vld [vmem:[%s186 + $0x8b0] sm:$0xff]
        %v497 = vld [vmem:[%s186 + $0x8b8] sm:$0xff]
        %v498 = vld [vmem:[%s186 + $0x8c0] sm:$0xff]
        %v499 = vld [vmem:[%s186 + $0x8c8] sm:$0xff]
        %v500 = vld [vmem:[%s186 + $0x8d0] sm:$0xff]
        %v501 = vld [vmem:[%s186 + $0x8d8] sm:$0xff]
        %v502 = vld [vmem:[%s186 + $0x8e0] sm:$0xff]
        %v503 = vld [vmem:[%s186 + $0x8e8] sm:$0xff]
        %v504 = vld [vmem:[%s186 + $0x8f0] sm:$0xff]
        %v505 = vld [vmem:[%s186 + $0x8f8] sm:$0xff]
        %v506 = vld [vmem:[%s186 + $0x900] sm:$0xff]
        %v507 = vld [vmem:[%s186 + $0x908] sm:$0xff]
        %v508 = vld [vmem:[%s186 + $0x910] sm:$0xff]
        %v509 = vld [vmem:[%s186 + $0x918] sm:$0xff]
        %v510 = vld [vmem:[%s186 + $0x920] sm:$0xff]
        %v511 = vld [vmem:[%s186 + $0x928] sm:$0xff]
        %v512 = vld [vmem:[%s186 + $0x930] sm:$0xff]
        %v513 = vld [vmem:[%s186 + $0x938] sm:$0xff]
        %v514 = vld [vmem:[%s186 + $0x940] sm:$0xff]
        %v515 = vld [vmem:[%s186 + $0x948] sm:$0xff]
        %v516 = vld [vmem:[%s186 + $0x950] sm:$0xff]
        %v517 = vld [vmem:[%s186 + $0x958] sm:$0xff]
        %v518 = vld [vmem:[%s186 + $0x960] sm:$0xff]
        %v519 = vld [vmem:[%s186 + $0x968] sm:$0xff]
        %v520 = vld [vmem:[%s186 + $0x970] sm:$0xff]
        %v521 = vld [vmem:[%s186 + $0x978] sm:$0xff]
        %v522 = vld [vmem:[%s186 + $0x980] sm:$0xff]
        %v523 = vld [vmem:[%s186 + $0x988] sm:$0xff]
        %v524 = vld [vmem:[%s186 + $0x990] sm:$0xff]
        %v525 = vld [vmem:[%s186 + $0x998] sm:$0xff]
        %v526 = vld [vmem:[%s186 + $0x9a0] sm:$0xff]
        %v527 = vld [vmem:[%s186 + $0x9a8] sm:$0xff]
        %v528 = vld [vmem:[%s186 + $0x9b0] sm:$0xff]
        %v529 = vld [vmem:[%s186 + $0x9b8] sm:$0xff]
        %v530 = vld [vmem:[%s186 + $0x9c0] sm:$0xff]
        %v531 = vld [vmem:[%s186 + $0x9c8] sm:$0xff]
        %v532 = vld [vmem:[%s186 + $0x9d0] sm:$0xff]
        %v533 = vld [vmem:[%s186 + $0x9d8] sm:$0xff]
        %v534 = vld [vmem:[%s186 + $0x9e0] sm:$0xff]
        %v535 = vld [vmem:[%s186 + $0x9e8] sm:$0xff]
        %v536 = vld [vmem:[%s186 + $0x9f0] sm:$0xff]
        %v537 = vld [vmem:[%s186 + $0x9f8] sm:$0xff]
        %v538 = vld [vmem:[%s186 + $0xa00] sm:$0xff]
        %v539 = vld [vmem:[%s186 + $0xa08] sm:$0xff]
        %v540 = vld [vmem:[%s186 + $0xa10] sm:$0xff]
        %v541 = vld [vmem:[%s186 + $0xa18] sm:$0xff]
        %v542 = vld [vmem:[%s186 + $0xa20] sm:$0xff]
        %v543 = vld [vmem:[%s186 + $0xa28] sm:$0xff]
        %v544 = vld [vmem:[%s186 + $0xa30] sm:$0xff]
        %v545 = vld [vmem:[%s186 + $0xa38] sm:$0xff]
        %v546 = vld [vmem:[%s186 + $0xa40] sm:$0xff]
        %v547 = vld [vmem:[%s186 + $0xa48] sm:$0xff]
        %v548 = vld [vmem:[%s186 + $0xa50] sm:$0xff]
        %v549 = vld [vmem:[%s186 + $0xa58] sm:$0xff]
        %v550 = vld [vmem:[%s186 + $0xa60] sm:$0xff]
        %v551 = vld [vmem:[%s186 + $0xa68] sm:$0xff]
        %v552 = vld [vmem:[%s186 + $0xa70] sm:$0xff]
        %v553 = vld [vmem:[%s186 + $0xa78] sm:$0xff]
        %v554 = vld [vmem:[%s186 + $0xa80] sm:$0xff]
        %v555 = vld [vmem:[%s186 + $0xa88] sm:$0xff]
        %v556 = vld [vmem:[%s186 + $0xa90] sm:$0xff]
        %v557 = vld [vmem:[%s186 + $0xa98] sm:$0xff]
        %v558 = vld [vmem:[%s186 + $0xaa0] sm:$0xff]
        %v559 = vld [vmem:[%s186 + $0xaa8] sm:$0xff]
        %v560 = vld [vmem:[%s186 + $0xab0] sm:$0xff]
        %v561 = vld [vmem:[%s186 + $0xab8] sm:$0xff]
        %v562 = vld [vmem:[%s186 + $0xac0] sm:$0xff]
        %v563 = vld [vmem:[%s186 + $0xac8] sm:$0xff]
        %v564 = vld [vmem:[%s186 + $0xad0] sm:$0xff]
        %v565 = vld [vmem:[%s186 + $0xad8] sm:$0xff]
        %v566 = vld [vmem:[%s186 + $0xae0] sm:$0xff]
        %v567 = vld [vmem:[%s186 + $0xae8] sm:$0xff]
        %v568 = vld [vmem:[%s186 + $0xaf0] sm:$0xff]
        %v569 = vld [vmem:[%s186 + $0xaf8] sm:$0xff]
        %v570 = vld [vmem:[%s186 + $0xb00] sm:$0xff]
        %v571 = vld [vmem:[%s186 + $0xb08] sm:$0xff]
        %v572 = vld [vmem:[%s186 + $0xb10] sm:$0xff]
        %v573 = vld [vmem:[%s186 + $0xb18] sm:$0xff]
        %v574 = vld [vmem:[%s186 + $0xb20] sm:$0xff]
        %v575 = vld [vmem:[%s186 + $0xb28] sm:$0xff]
        %v576 = vld [vmem:[%s186 + $0xb30] sm:$0xff]
        %v577 = vld [vmem:[%s186 + $0xb38] sm:$0xff]
        %v578 = vld [vmem:[%s186 + $0xb40] sm:$0xff]
        %v579 = vld [vmem:[%s186 + $0xb48] sm:$0xff]
        %v580 = vld [vmem:[%s186 + $0xb50] sm:$0xff]
        %v581 = vld [vmem:[%s186 + $0xb58] sm:$0xff]
        %v582 = vld [vmem:[%s186 + $0xb60] sm:$0xff]
        %v583 = vld [vmem:[%s186 + $0xb68] sm:$0xff]
        %v584 = vld [vmem:[%s186 + $0xb70] sm:$0xff]
        %v585 = vld [vmem:[%s186 + $0xb78] sm:$0xff]
        %v586 = vld [vmem:[%s186 + $0xb80] sm:$0xff]
        %v587 = vld [vmem:[%s186 + $0xb88] sm:$0xff]
        %v588 = vld [vmem:[%s186 + $0xb90] sm:$0xff]
        %v589 = vld [vmem:[%s186 + $0xb98] sm:$0xff]
        %v590 = vld [vmem:[%s186 + $0xba0] sm:$0xff]
        %v591 = vld [vmem:[%s186 + $0xba8] sm:$0xff]
        %v592 = vld [vmem:[%s186 + $0xbb0] sm:$0xff]
        %v593 = vld [vmem:[%s186 + $0xbb8] sm:$0xff]
        %v594 = vld [vmem:[%s186 + $0xbc0] sm:$0xff]
        %v595 = vld [vmem:[%s186 + $0xbc8] sm:$0xff]
        %v596 = vld [vmem:[%s186 + $0xbd0] sm:$0xff]
        %v597 = vld [vmem:[%s186 + $0xbd8] sm:$0xff]
        %v598 = vld [vmem:[%s186 + $0xbe0] sm:$0xff]
        %v599 = vld [vmem:[%s186 + $0xbe8] sm:$0xff]
        %v600 = vld [vmem:[%s186 + $0xbf0] sm:$0xff]
        %v601 = vld [vmem:[%s186 + $0xbf8] sm:$0xff]
        %v602 = vld [vmem:[%s186 + $0xc00] sm:$0xff]
        %v603 = vld [vmem:[%s186 + $0xc08] sm:$0xff]
        %v604 = vld [vmem:[%s186 + $0xc10] sm:$0xff]
        %v605 = vld [vmem:[%s186 + $0xc18] sm:$0xff]
        %v606 = vld [vmem:[%s186 + $0xc20] sm:$0xff]
        %v607 = vld [vmem:[%s186 + $0xc28] sm:$0xff]
        %v608 = vld [vmem:[%s186 + $0xc30] sm:$0xff]
        %v609 = vld [vmem:[%s186 + $0xc38] sm:$0xff]
        %v610 = vld [vmem:[%s186 + $0xc40] sm:$0xff]
        %v611 = vld [vmem:[%s186 + $0xc48] sm:$0xff]
        %v612 = vld [vmem:[%s186 + $0xc50] sm:$0xff]
        %v613 = vld [vmem:[%s186 + $0xc58] sm:$0xff]
        %v614 = vld [vmem:[%s186 + $0xc60] sm:$0xff]
        %v615 = vld [vmem:[%s186 + $0xc68] sm:$0xff]
        %v616 = vld [vmem:[%s186 + $0xc70] sm:$0xff]
        %v617 = vld [vmem:[%s186 + $0xc78] sm:$0xff]
        %v618 = vld [vmem:[%s186 + $0xc80] sm:$0xff]
        %v619 = vld [vmem:[%s186 + $0xc88] sm:$0xff]
        %v620 = vld [vmem:[%s186 + $0xc90] sm:$0xff]
        %v621 = vld [vmem:[%s186 + $0xc98] sm:$0xff]
        %v622 = vld [vmem:[%s186 + $0xca0] sm:$0xff]
        %v623 = vld [vmem:[%s186 + $0xca8] sm:$0xff]
        %v624 = vld [vmem:[%s186 + $0xcb0] sm:$0xff]
        %v625 = vld [vmem:[%s186 + $0xcb8] sm:$0xff]
        %v626 = vld [vmem:[%s186 + $0xcc0] sm:$0xff]
        %v627 = vld [vmem:[%s186 + $0xcc8] sm:$0xff]
        %v628 = vld [vmem:[%s186 + $0xcd0] sm:$0xff]
        %v629 = vld [vmem:[%s186 + $0xcd8] sm:$0xff]
        %v630 = vld [vmem:[%s186 + $0xce0] sm:$0xff]
        %v631 = vld [vmem:[%s186 + $0xce8] sm:$0xff]
        %v632 = vld [vmem:[%s186 + $0xcf0] sm:$0xff]
        %v633 = vld [vmem:[%s186 + $0xcf8] sm:$0xff]
        %v634 = vld [vmem:[%s186 + $0xd00] sm:$0xff]
        %v635 = vld [vmem:[%s186 + $0xd08] sm:$0xff]
        %v636 = vld [vmem:[%s186 + $0xd10] sm:$0xff]
        %v637 = vld [vmem:[%s186 + $0xd18] sm:$0xff]
        %v638 = vld [vmem:[%s186 + $0xd20] sm:$0xff]
        %v639 = vld [vmem:[%s186 + $0xd28] sm:$0xff]
        %v640 = vld [vmem:[%s186 + $0xd30] sm:$0xff]
        %v641 = vld [vmem:[%s186 + $0xd38] sm:$0xff]
        %v642 = vld [vmem:[%s186 + $0xd40] sm:$0xff]
        %v643 = vld [vmem:[%s186 + $0xd48] sm:$0xff]
        %v644 = vld [vmem:[%s186 + $0xd50] sm:$0xff]
        %v645 = vld [vmem:[%s186 + $0xd58] sm:$0xff]
        %v646 = vld [vmem:[%s186 + $0xd60] sm:$0xff]
        %v647 = vld [vmem:[%s186 + $0xd68] sm:$0xff]
        %v648 = vld [vmem:[%s186 + $0xd70] sm:$0xff]
        %v649 = vld [vmem:[%s186 + $0xd78] sm:$0xff]
        %v650 = vld [vmem:[%s186 + $0xd80] sm:$0xff]
        %v651 = vld [vmem:[%s186 + $0xd88] sm:$0xff]
        %v652 = vld [vmem:[%s186 + $0xd90] sm:$0xff]
        %v653 = vld [vmem:[%s186 + $0xd98] sm:$0xff]
        %v654 = vld [vmem:[%s186 + $0xda0] sm:$0xff]
        %v655 = vld [vmem:[%s186 + $0xda8] sm:$0xff]
        %v656 = vld [vmem:[%s186 + $0xdb0] sm:$0xff]
        %v657 = vld [vmem:[%s186 + $0xdb8] sm:$0xff]
        %v658 = vld [vmem:[%s186 + $0xdc0] sm:$0xff]
        %v659 = vld [vmem:[%s186 + $0xdc8] sm:$0xff]
        %v660 = vld [vmem:[%s186 + $0xdd0] sm:$0xff]
        %v661 = vld [vmem:[%s186 + $0xdd8] sm:$0xff]
        %v662 = vld [vmem:[%s186 + $0xde0] sm:$0xff]
        %v663 = vld [vmem:[%s186 + $0xde8] sm:$0xff]
        %v664 = vld [vmem:[%s186 + $0xdf0] sm:$0xff]
        %v665 = vld [vmem:[%s186 + $0xdf8] sm:$0xff]
        %v666 = vld [vmem:[%s186 + $0xe00] sm:$0xff]
        %v667 = vld [vmem:[%s186 + $0xe08] sm:$0xff]
        %v668 = vld [vmem:[%s186 + $0xe10] sm:$0xff]
        %v669 = vld [vmem:[%s186 + $0xe18] sm:$0xff]
        %v670 = vld [vmem:[%s186 + $0xe20] sm:$0xff]
        %v671 = vld [vmem:[%s186 + $0xe28] sm:$0xff]
        %v672 = vld [vmem:[%s186 + $0xe30] sm:$0xff]
        %v673 = vld [vmem:[%s186 + $0xe38] sm:$0xff]
        %v674 = vld [vmem:[%s186 + $0xe40] sm:$0xff]
        %v675 = vld [vmem:[%s186 + $0xe48] sm:$0xff]
        %v676 = vld [vmem:[%s186 + $0xe50] sm:$0xff]
        %v677 = vld [vmem:[%s186 + $0xe58] sm:$0xff]
        %v678 = vld [vmem:[%s186 + $0xe60] sm:$0xff]
        %v679 = vld [vmem:[%s186 + $0xe68] sm:$0xff]
        %v680 = vld [vmem:[%s186 + $0xe70] sm:$0xff]
        %v681 = vld [vmem:[%s186 + $0xe78] sm:$0xff]
        %v682 = vld [vmem:[%s186 + $0xe80] sm:$0xff]
        %v683 = vld [vmem:[%s186 + $0xe88] sm:$0xff]
        %v684 = vld [vmem:[%s186 + $0xe90] sm:$0xff]
        %v685 = vld [vmem:[%s186 + $0xe98] sm:$0xff]
        %v686 = vld [vmem:[%s186 + $0xea0] sm:$0xff]
        %v687 = vld [vmem:[%s186 + $0xea8] sm:$0xff]
        %v688 = vld [vmem:[%s186 + $0xeb0] sm:$0xff]
        %v689 = vld [vmem:[%s186 + $0xeb8] sm:$0xff]
        %v690 = vld [vmem:[%s186 + $0xec0] sm:$0xff]
        %v691 = vld [vmem:[%s186 + $0xec8] sm:$0xff]
        %v692 = vld [vmem:[%s186 + $0xed0] sm:$0xff]
        %v693 = vld [vmem:[%s186 + $0xed8] sm:$0xff]
        %v694 = vld [vmem:[%s186 + $0xee0] sm:$0xff]
        %v695 = vld [vmem:[%s186 + $0xee8] sm:$0xff]
        %v696 = vld [vmem:[%s186 + $0xef0] sm:$0xff]
        %v697 = vld [vmem:[%s186 + $0xef8] sm:$0xff]
        %v698 = vld [vmem:[%s186 + $0xf00] sm:$0xff]
        %v699 = vld [vmem:[%s186 + $0xf08] sm:$0xff]
        %v700 = vld [vmem:[%s186 + $0xf10] sm:$0xff]
        %v701 = vld [vmem:[%s186 + $0xf18] sm:$0xff]
        %v702 = vld [vmem:[%s186 + $0xf20] sm:$0xff]
        %v703 = vld [vmem:[%s186 + $0xf28] sm:$0xff]
        %v704 = vld [vmem:[%s186 + $0xf30] sm:$0xff]
        %v705 = vld [vmem:[%s186 + $0xf38] sm:$0xff]
        %v706 = vld [vmem:[%s186 + $0xf40] sm:$0xff]
        %v707 = vld [vmem:[%s186 + $0xf48] sm:$0xff]
        %v708 = vld [vmem:[%s186 + $0xf50] sm:$0xff]
        %v709 = vld [vmem:[%s186 + $0xf58] sm:$0xff]
        %v710 = vld [vmem:[%s186 + $0xf60] sm:$0xff]
        %v711 = vld [vmem:[%s186 + $0xf68] sm:$0xff]
        %v712 = vld [vmem:[%s186 + $0xf70] sm:$0xff]
        %v713 = vld [vmem:[%s186 + $0xf78] sm:$0xff]
        %v714 = vld [vmem:[%s186 + $0xf80] sm:$0xff]
        %v715 = vld [vmem:[%s186 + $0xf88] sm:$0xff]
        %v716 = vld [vmem:[%s186 + $0xf90] sm:$0xff]
        %v717 = vld [vmem:[%s186 + $0xf98] sm:$0xff]
        %v718 = vld [vmem:[%s186 + $0xfa0] sm:$0xff]
        %v719 = vld [vmem:[%s186 + $0xfa8] sm:$0xff]
        %v720 = vld [vmem:[%s186 + $0xfb0] sm:$0xff]
        %v721 = vld [vmem:[%s186 + $0xfb8] sm:$0xff]
        %v722 = vld [vmem:[%s186 + $0xfc0] sm:$0xff]
        %v723 = vld [vmem:[%s186 + $0xfc8] sm:$0xff]
        %v724 = vld [vmem:[%s186 + $0xfd0] sm:$0xff]
        %v725 = vld [vmem:[%s186 + $0xfd8] sm:$0xff]
        %v726 = vld [vmem:[%s186 + $0xfe0] sm:$0xff]
        %v727 = vld [vmem:[%s186 + $0xfe8] sm:$0xff]
        %v728 = vld [vmem:[%s186 + $0xff0] sm:$0xff]
        %v729 = vld [vmem:[%s186 + $0xff8] sm:$0xff]
        %v730 = vld [vmem:[%s186 + $0x1000] sm:$0xff]
        %v731 = vld [vmem:[%s186 + $0x1008] sm:$0xff]
        %v732 = vld [vmem:[%s186 + $0x1010] sm:$0xff]
        %v733 = vld [vmem:[%s186 + $0x1018] sm:$0xff]
        %v734 = vld [vmem:[%s186 + $0x1020] sm:$0xff]
        %v735 = vld [vmem:[%s186 + $0x1028] sm:$0xff]
        %v736 = vld [vmem:[%s186 + $0x1030] sm:$0xff]
        %v737 = vld [vmem:[%s186 + $0x1038] sm:$0xff]
        %v738 = vld [vmem:[%s186 + $0x1040] sm:$0xff]
        %v739 = vld [vmem:[%s186 + $0x1048] sm:$0xff]
        %v740 = vld [vmem:[%s186 + $0x1050] sm:$0xff]
        %v741 = vld [vmem:[%s186 + $0x1058] sm:$0xff]
        %v742 = vld [vmem:[%s186 + $0x1060] sm:$0xff]
        %v743 = vld [vmem:[%s186 + $0x1068] sm:$0xff]
        %v744 = vld [vmem:[%s186 + $0x1070] sm:$0xff]
        %v745 = vld [vmem:[%s186 + $0x1078] sm:$0xff]
        %v746 = vld [vmem:[%s186 + $0x1080] sm:$0xff]
        %v747 = vld [vmem:[%s186 + $0x1088] sm:$0xff]
        %v748 = vld [vmem:[%s186 + $0x1090] sm:$0xff]
        %v749 = vld [vmem:[%s186 + $0x1098] sm:$0xff]
        %v750 = vld [vmem:[%s186 + $0x10a0] sm:$0xff]
        %v751 = vld [vmem:[%s186 + $0x10a8] sm:$0xff]
        %v752 = vld [vmem:[%s186 + $0x10b0] sm:$0xff]
        %v753 = vld [vmem:[%s186 + $0x10b8] sm:$0xff]
        %v754 = vld [vmem:[%s186 + $0x10c0] sm:$0xff]
        %v755 = vld [vmem:[%s186 + $0x10c8] sm:$0xff]
        %v756 = vld [vmem:[%s186 + $0x10d0] sm:$0xff]
        %v757 = vld [vmem:[%s186 + $0x10d8] sm:$0xff]
        %v758 = vld [vmem:[%s186 + $0x10e0] sm:$0xff]
        %v759 = vld [vmem:[%s186 + $0x10e8] sm:$0xff]
        %v760 = vld [vmem:[%s186 + $0x10f0] sm:$0xff]
        %v761 = vld [vmem:[%s186 + $0x10f8] sm:$0xff]
        %v762 = vld [vmem:[%s186 + $0x1100] sm:$0xff]
        %v763 = vld [vmem:[%s186 + $0x1108] sm:$0xff]
        %v764 = vld [vmem:[%s186 + $0x1110] sm:$0xff]
        %v765 = vld [vmem:[%s186 + $0x1118] sm:$0xff]
        %v766 = vld [vmem:[%s186 + $0x1120] sm:$0xff]
        %v767 = vld [vmem:[%s186 + $0x1128] sm:$0xff]
        %v768 = vld [vmem:[%s186 + $0x1130] sm:$0xff]
        %v769 = vld [vmem:[%s186 + $0x1138] sm:$0xff]
        %v770 = vld [vmem:[%s186 + $0x1140] sm:$0xff]
        %v771 = vld [vmem:[%s186 + $0x1148] sm:$0xff]
        %v772 = vld [vmem:[%s186 + $0x1150] sm:$0xff]
        %v773 = vld [vmem:[%s186 + $0x1158] sm:$0xff]
        %v774 = vld [vmem:[%s186 + $0x1160] sm:$0xff]
        %v775 = vld [vmem:[%s186 + $0x1168] sm:$0xff]
        %v776 = vld [vmem:[%s186 + $0x1170] sm:$0xff]
        %v777 = vld [vmem:[%s186 + $0x1178] sm:$0xff]
        %v778 = vld [vmem:[%s186 + $0x1180] sm:$0xff]
        %v779 = vld [vmem:[%s186 + $0x1188] sm:$0xff]
        %v780 = vld [vmem:[%s186 + $0x1190] sm:$0xff]
        %v781 = vld [vmem:[%s186 + $0x1198] sm:$0xff]
        %v782 = vld [vmem:[%s186 + $0x11a0] sm:$0xff]
        %v783 = vld [vmem:[%s186 + $0x11a8] sm:$0xff]
        %v784 = vld [vmem:[%s186 + $0x11b0] sm:$0xff]
        %v785 = vld [vmem:[%s186 + $0x11b8] sm:$0xff]
        %v786 = vld [vmem:[%s186 + $0x11c0] sm:$0xff]
        %v787 = vld [vmem:[%s186 + $0x11c8] sm:$0xff]
        %v788 = vld [vmem:[%s186 + $0x11d0] sm:$0xff]
        %v789 = vld [vmem:[%s186 + $0x11d8] sm:$0xff]
        %v790 = vld [vmem:[%s186 + $0x11e0] sm:$0xff]
        %v791 = vld [vmem:[%s186 + $0x11e8] sm:$0xff]
        %v792 = vld [vmem:[%s186 + $0x11f0] sm:$0xff]
        %v793 = vld [vmem:[%s186 + $0x11f8] sm:$0xff]
        %v794 = vld [vmem:[%s186 + $0x1200] sm:$0xff]
        %v795 = vld [vmem:[%s186 + $0x1208] sm:$0xff]
        %v796 = vld [vmem:[%s186 + $0x1210] sm:$0xff]
        %v797 = vld [vmem:[%s186 + $0x1218] sm:$0xff]
        %v798 = vld [vmem:[%s186 + $0x1220] sm:$0xff]
        %v799 = vld [vmem:[%s186 + $0x1228] sm:$0xff]
        %v800 = vld [vmem:[%s186 + $0x1230] sm:$0xff]
        %v801 = vld [vmem:[%s186 + $0x1238] sm:$0xff]
        %v802 = vld [vmem:[%s186 + $0x1240] sm:$0xff]
        %v803 = vld [vmem:[%s186 + $0x1248] sm:$0xff]
        %v804 = vld [vmem:[%s186 + $0x1250] sm:$0xff]
        %v805 = vld [vmem:[%s186 + $0x1258] sm:$0xff]
        %v806 = vld [vmem:[%s186 + $0x1260] sm:$0xff]
        %v807 = vld [vmem:[%s186 + $0x1268] sm:$0xff]
        %v808 = vld [vmem:[%s186 + $0x1270] sm:$0xff]
        %v809 = vld [vmem:[%s186 + $0x1278] sm:$0xff]
        %v810 = vld [vmem:[%s186 + $0x1280] sm:$0xff]
        %v811 = vld [vmem:[%s186 + $0x1288] sm:$0xff]
        %v812 = vld [vmem:[%s186 + $0x1290] sm:$0xff]
        %v813 = vld [vmem:[%s186 + $0x1298] sm:$0xff]
        %v814 = vld [vmem:[%s186 + $0x12a0] sm:$0xff]
        %v815 = vld [vmem:[%s186 + $0x12a8] sm:$0xff]
        %v816 = vld [vmem:[%s186 + $0x12b0] sm:$0xff]
        %v817 = vld [vmem:[%s186 + $0x12b8] sm:$0xff]
        %v818 = vld [vmem:[%s186 + $0x12c0] sm:$0xff]
        %v819 = vld [vmem:[%s186 + $0x12c8] sm:$0xff]
        %v820 = vld [vmem:[%s186 + $0x12d0] sm:$0xff]
        %v821 = vld [vmem:[%s186 + $0x12d8] sm:$0xff]
        %v822 = vld [vmem:[%s186 + $0x12e0] sm:$0xff]
        %v823 = vld [vmem:[%s186 + $0x12e8] sm:$0xff]
        %v824 = vld [vmem:[%s186 + $0x12f0] sm:$0xff]
        %v825 = vld [vmem:[%s186 + $0x12f8] sm:$0xff]
        %v826 = vld [vmem:[%s186 + $0x1300] sm:$0xff]
        %v827 = vld [vmem:[%s186 + $0x1308] sm:$0xff]
        %v828 = vld [vmem:[%s186 + $0x1310] sm:$0xff]
        %v829 = vld [vmem:[%s186 + $0x1318] sm:$0xff]
        %v830 = vld [vmem:[%s186 + $0x1320] sm:$0xff]
        %v831 = vld [vmem:[%s186 + $0x1328] sm:$0xff]
        %v832 = vld [vmem:[%s186 + $0x1330] sm:$0xff]
        %v833 = vld [vmem:[%s186 + $0x1338] sm:$0xff]
        %v834 = vld [vmem:[%s186 + $0x1340] sm:$0xff]
        %v835 = vld [vmem:[%s186 + $0x1348] sm:$0xff]
        %v836 = vld [vmem:[%s186 + $0x1350] sm:$0xff]
        %v837 = vld [vmem:[%s186 + $0x1358] sm:$0xff]
        %v838 = vld [vmem:[%s186 + $0x1360] sm:$0xff]
        %v839 = vld [vmem:[%s186 + $0x1368] sm:$0xff]
        %v840 = vld [vmem:[%s186 + $0x1370] sm:$0xff]
        %v841 = vld [vmem:[%s186 + $0x1378] sm:$0xff]
        %v842 = vld [vmem:[%s186 + $0x1380] sm:$0xff]
        %v843 = vld [vmem:[%s186 + $0x1388] sm:$0xff]
        %v844 = vld [vmem:[%s186 + $0x1390] sm:$0xff]
        %v845 = vld [vmem:[%s186 + $0x1398] sm:$0xff]
        %v846 = vld [vmem:[%s186 + $0x13a0] sm:$0xff]
        %v847 = vld [vmem:[%s186 + $0x13a8] sm:$0xff]
        %v848 = vld [vmem:[%s186 + $0x13b0] sm:$0xff]
        %v849 = vld [vmem:[%s186 + $0x13b8] sm:$0xff]
        %v850 = vld [vmem:[%s186 + $0x13c0] sm:$0xff]
        %v851 = vld [vmem:[%s186 + $0x13c8] sm:$0xff]
        %v852 = vld [vmem:[%s186 + $0x13d0] sm:$0xff]
        %v853 = vld [vmem:[%s186 + $0x13d8] sm:$0xff]
        %v854 = vld [vmem:[%s186 + $0x13e0] sm:$0xff]
        %v855 = vld [vmem:[%s186 + $0x13e8] sm:$0xff]
        %v856 = vld [vmem:[%s186 + $0x13f0] sm:$0xff]
        %v857 = vld [vmem:[%s186 + $0x13f8] sm:$0xff]
        %v858 = vunpack.c.l.bf16 %v218
        %v859 = vunpack.c.h.bf16 %v218
        %v860 = vunpack.c.l.bf16 %v219
        %v861 = vunpack.c.h.bf16 %v219
        %v862 = vunpack.c.l.bf16 %v220
        %v863 = vunpack.c.h.bf16 %v220
        %v864 = vunpack.c.l.bf16 %v221
        %v865 = vunpack.c.h.bf16 %v221
        %v866 = vunpack.c.l.bf16 %v222
        %v867 = vunpack.c.h.bf16 %v222
        %v868 = vunpack.c.l.bf16 %v223
        %v869 = vunpack.c.h.bf16 %v223
        %v870 = vunpack.c.l.bf16 %v224
        %v871 = vunpack.c.h.bf16 %v224
        %v872 = vunpack.c.l.bf16 %v225
        %v873 = vunpack.c.h.bf16 %v225
        %v874 = vunpack.c.l.bf16 %v226
        %v875 = vunpack.c.h.bf16 %v226
        %v876 = vunpack.c.l.bf16 %v227
        %v877 = vunpack.c.h.bf16 %v227
        %v878 = vunpack.c.l.bf16 %v228
        %v879 = vunpack.c.h.bf16 %v228
        %v880 = vunpack.c.l.bf16 %v229
        %v881 = vunpack.c.h.bf16 %v229
        %v882 = vunpack.c.l.bf16 %v230
        %v883 = vunpack.c.h.bf16 %v230
        %v884 = vunpack.c.l.bf16 %v231
        %v885 = vunpack.c.h.bf16 %v231
        %v886 = vunpack.c.l.bf16 %v232
        %v887 = vunpack.c.h.bf16 %v232
        %v888 = vunpack.c.l.bf16 %v233
        %v889 = vunpack.c.h.bf16 %v233
        %v890 = vunpack.c.l.bf16 %v234
        %v891 = vunpack.c.h.bf16 %v234
        %v892 = vunpack.c.l.bf16 %v235
        %v893 = vunpack.c.h.bf16 %v235
        %v894 = vunpack.c.l.bf16 %v236
        %v895 = vunpack.c.h.bf16 %v236
        %v896 = vunpack.c.l.bf16 %v237
        %v897 = vunpack.c.h.bf16 %v237
        %v898 = vunpack.c.l.bf16 %v238
        %v899 = vunpack.c.h.bf16 %v238
        %v900 = vunpack.c.l.bf16 %v239
        %v901 = vunpack.c.h.bf16 %v239
        %v902 = vunpack.c.l.bf16 %v240
        %v903 = vunpack.c.h.bf16 %v240
        %v904 = vunpack.c.l.bf16 %v241
        %v905 = vunpack.c.h.bf16 %v241
        %v906 = vunpack.c.l.bf16 %v242
        %v907 = vunpack.c.h.bf16 %v242
        %v908 = vunpack.c.l.bf16 %v243
        %v909 = vunpack.c.h.bf16 %v243
        %v910 = vunpack.c.l.bf16 %v244
        %v911 = vunpack.c.h.bf16 %v244
        %v912 = vunpack.c.l.bf16 %v245
        %v913 = vunpack.c.h.bf16 %v245
        %v914 = vunpack.c.l.bf16 %v246
        %v915 = vunpack.c.h.bf16 %v246
        %v916 = vunpack.c.l.bf16 %v247
        %v917 = vunpack.c.h.bf16 %v247
        %v918 = vunpack.c.l.bf16 %v248
        %v919 = vunpack.c.h.bf16 %v248
        %v920 = vunpack.c.l.bf16 %v249
        %v921 = vunpack.c.h.bf16 %v249
        %v922 = vunpack.c.l.bf16 %v250
        %v923 = vunpack.c.h.bf16 %v250
        %v924 = vunpack.c.l.bf16 %v251
        %v925 = vunpack.c.h.bf16 %v251
        %v926 = vunpack.c.l.bf16 %v252
        %v927 = vunpack.c.h.bf16 %v252
        %v928 = vunpack.c.l.bf16 %v253
        %v929 = vunpack.c.h.bf16 %v253
        %v930 = vunpack.c.l.bf16 %v254
        %v931 = vunpack.c.h.bf16 %v254
        %v932 = vunpack.c.l.bf16 %v255
        %v933 = vunpack.c.h.bf16 %v255
        %v934 = vunpack.c.l.bf16 %v256
        %v935 = vunpack.c.h.bf16 %v256
        %v936 = vunpack.c.l.bf16 %v257
        %v937 = vunpack.c.h.bf16 %v257
        %v938 = vunpack.c.l.bf16 %v258
        %v939 = vunpack.c.h.bf16 %v258
        %v940 = vunpack.c.l.bf16 %v259
        %v941 = vunpack.c.h.bf16 %v259
        %v942 = vunpack.c.l.bf16 %v260
        %v943 = vunpack.c.h.bf16 %v260
        %v944 = vunpack.c.l.bf16 %v261
        %v945 = vunpack.c.h.bf16 %v261
        %v946 = vunpack.c.l.bf16 %v262
        %v947 = vunpack.c.h.bf16 %v262
        %v948 = vunpack.c.l.bf16 %v263
        %v949 = vunpack.c.h.bf16 %v263
        %v950 = vunpack.c.l.bf16 %v264
        %v951 = vunpack.c.h.bf16 %v264
        %v952 = vunpack.c.l.bf16 %v265
        %v953 = vunpack.c.h.bf16 %v265
        %v954 = vunpack.c.l.bf16 %v266
        %v955 = vunpack.c.h.bf16 %v266
        %v956 = vunpack.c.l.bf16 %v267
        %v957 = vunpack.c.h.bf16 %v267
        %v958 = vunpack.c.l.bf16 %v268
        %v959 = vunpack.c.h.bf16 %v268
        %v960 = vunpack.c.l.bf16 %v269
        %v961 = vunpack.c.h.bf16 %v269
        %v962 = vunpack.c.l.bf16 %v270
        %v963 = vunpack.c.h.bf16 %v270
        %v964 = vunpack.c.l.bf16 %v271
        %v965 = vunpack.c.h.bf16 %v271
        %v966 = vunpack.c.l.bf16 %v272
        %v967 = vunpack.c.h.bf16 %v272
        %v968 = vunpack.c.l.bf16 %v273
        %v969 = vunpack.c.h.bf16 %v273
        %v970 = vunpack.c.l.bf16 %v274
        %v971 = vunpack.c.h.bf16 %v274
        %v972 = vunpack.c.l.bf16 %v275
        %v973 = vunpack.c.h.bf16 %v275
        %v974 = vunpack.c.l.bf16 %v276
        %v975 = vunpack.c.h.bf16 %v276
        %v976 = vunpack.c.l.bf16 %v277
        %v977 = vunpack.c.h.bf16 %v277
        %v978 = vunpack.c.l.bf16 %v278
        %v979 = vunpack.c.h.bf16 %v278
        %v980 = vunpack.c.l.bf16 %v279
        %v981 = vunpack.c.h.bf16 %v279
        %v982 = vunpack.c.l.bf16 %v280
        %v983 = vunpack.c.h.bf16 %v280
        %v984 = vunpack.c.l.bf16 %v281
        %v985 = vunpack.c.h.bf16 %v281
        %v986 = vunpack.c.l.bf16 %v282
        %v987 = vunpack.c.h.bf16 %v282
        %v988 = vunpack.c.l.bf16 %v283
        %v989 = vunpack.c.h.bf16 %v283
        %v990 = vunpack.c.l.bf16 %v284
        %v991 = vunpack.c.h.bf16 %v284
        %v992 = vunpack.c.l.bf16 %v285
        %v993 = vunpack.c.h.bf16 %v285
        %v994 = vunpack.c.l.bf16 %v286
        %v995 = vunpack.c.h.bf16 %v286
        %v996 = vunpack.c.l.bf16 %v287
        %v997 = vunpack.c.h.bf16 %v287
        %v998 = vunpack.c.l.bf16 %v288
        %v999 = vunpack.c.h.bf16 %v288
        %v1000 = vunpack.c.l.bf16 %v289
        %v1001 = vunpack.c.h.bf16 %v289
        %v1002 = vunpack.c.l.bf16 %v290
        %v1003 = vunpack.c.h.bf16 %v290
        %v1004 = vunpack.c.l.bf16 %v291
        %v1005 = vunpack.c.h.bf16 %v291
        %v1006 = vunpack.c.l.bf16 %v292
        %v1007 = vunpack.c.h.bf16 %v292
        %v1008 = vunpack.c.l.bf16 %v293
        %v1009 = vunpack.c.h.bf16 %v293
        %v1010 = vunpack.c.l.bf16 %v294
        %v1011 = vunpack.c.h.bf16 %v294
        %v1012 = vunpack.c.l.bf16 %v295
        %v1013 = vunpack.c.h.bf16 %v295
        %v1014 = vunpack.c.l.bf16 %v296
        %v1015 = vunpack.c.h.bf16 %v296
        %v1016 = vunpack.c.l.bf16 %v297
        %v1017 = vunpack.c.h.bf16 %v297
        %v1018 = vunpack.c.l.bf16 %v298
        %v1019 = vunpack.c.h.bf16 %v298
        %v1020 = vunpack.c.l.bf16 %v299
        %v1021 = vunpack.c.h.bf16 %v299
        %v1022 = vunpack.c.l.bf16 %v300
        %v1023 = vunpack.c.h.bf16 %v300
        %v1024 = vunpack.c.l.bf16 %v301
        %v1025 = vunpack.c.h.bf16 %v301
        %v1026 = vunpack.c.l.bf16 %v302
        %v1027 = vunpack.c.h.bf16 %v302
        %v1028 = vunpack.c.l.bf16 %v303
        %v1029 = vunpack.c.h.bf16 %v303
        %v1030 = vunpack.c.l.bf16 %v304
        %v1031 = vunpack.c.h.bf16 %v304
        %v1032 = vunpack.c.l.bf16 %v305
        %v1033 = vunpack.c.h.bf16 %v305
        %v1034 = vunpack.c.l.bf16 %v306
        %v1035 = vunpack.c.h.bf16 %v306
        %v1036 = vunpack.c.l.bf16 %v307
        %v1037 = vunpack.c.h.bf16 %v307
        %v1038 = vunpack.c.l.bf16 %v308
        %v1039 = vunpack.c.h.bf16 %v308
        %v1040 = vunpack.c.l.bf16 %v309
        %v1041 = vunpack.c.h.bf16 %v309
        %v1042 = vunpack.c.l.bf16 %v310
        %v1043 = vunpack.c.h.bf16 %v310
        %v1044 = vunpack.c.l.bf16 %v311
        %v1045 = vunpack.c.h.bf16 %v311
        %v1046 = vunpack.c.l.bf16 %v312
        %v1047 = vunpack.c.h.bf16 %v312
        %v1048 = vunpack.c.l.bf16 %v313
        %v1049 = vunpack.c.h.bf16 %v313
        %v1050 = vunpack.c.l.bf16 %v314
        %v1051 = vunpack.c.h.bf16 %v314
        %v1052 = vunpack.c.l.bf16 %v315
        %v1053 = vunpack.c.h.bf16 %v315
        %v1054 = vunpack.c.l.bf16 %v316
        %v1055 = vunpack.c.h.bf16 %v316
        %v1056 = vunpack.c.l.bf16 %v317
        %v1057 = vunpack.c.h.bf16 %v317
        %v1058 = vunpack.c.l.bf16 %v318
        %v1059 = vunpack.c.h.bf16 %v318
        %v1060 = vunpack.c.l.bf16 %v319
        %v1061 = vunpack.c.h.bf16 %v319
        %v1062 = vunpack.c.l.bf16 %v320
        %v1063 = vunpack.c.h.bf16 %v320
        %v1064 = vunpack.c.l.bf16 %v321
        %v1065 = vunpack.c.h.bf16 %v321
        %v1066 = vunpack.c.l.bf16 %v322
        %v1067 = vunpack.c.h.bf16 %v322
        %v1068 = vunpack.c.l.bf16 %v323
        %v1069 = vunpack.c.h.bf16 %v323
        %v1070 = vunpack.c.l.bf16 %v324
        %v1071 = vunpack.c.h.bf16 %v324
        %v1072 = vunpack.c.l.bf16 %v325
        %v1073 = vunpack.c.h.bf16 %v325
        %v1074 = vunpack.c.l.bf16 %v326
        %v1075 = vunpack.c.h.bf16 %v326
        %v1076 = vunpack.c.l.bf16 %v327
        %v1077 = vunpack.c.h.bf16 %v327
        %v1078 = vunpack.c.l.bf16 %v328
        %v1079 = vunpack.c.h.bf16 %v328
        %v1080 = vunpack.c.l.bf16 %v329
        %v1081 = vunpack.c.h.bf16 %v329
        %v1082 = vunpack.c.l.bf16 %v330
        %v1083 = vunpack.c.h.bf16 %v330
        %v1084 = vunpack.c.l.bf16 %v331
        %v1085 = vunpack.c.h.bf16 %v331
        %v1086 = vunpack.c.l.bf16 %v332
        %v1087 = vunpack.c.h.bf16 %v332
        %v1088 = vunpack.c.l.bf16 %v333
        %v1089 = vunpack.c.h.bf16 %v333
        %v1090 = vunpack.c.l.bf16 %v334
        %v1091 = vunpack.c.h.bf16 %v334
        %v1092 = vunpack.c.l.bf16 %v335
        %v1093 = vunpack.c.h.bf16 %v335
        %v1094 = vunpack.c.l.bf16 %v336
        %v1095 = vunpack.c.h.bf16 %v336
        %v1096 = vunpack.c.l.bf16 %v337
        %v1097 = vunpack.c.h.bf16 %v337
        %v1098 = vunpack.c.l.bf16 %v338
        %v1099 = vunpack.c.h.bf16 %v338
        %v1100 = vunpack.c.l.bf16 %v339
        %v1101 = vunpack.c.h.bf16 %v339
        %v1102 = vunpack.c.l.bf16 %v340
        %v1103 = vunpack.c.h.bf16 %v340
        %v1104 = vunpack.c.l.bf16 %v341
        %v1105 = vunpack.c.h.bf16 %v341
        %v1106 = vunpack.c.l.bf16 %v342
        %v1107 = vunpack.c.h.bf16 %v342
        %v1108 = vunpack.c.l.bf16 %v343
        %v1109 = vunpack.c.h.bf16 %v343
        %v1110 = vunpack.c.l.bf16 %v344
        %v1111 = vunpack.c.h.bf16 %v344
        %v1112 = vunpack.c.l.bf16 %v345
        %v1113 = vunpack.c.h.bf16 %v345
        %v1114 = vunpack.c.l.bf16 %v346
        %v1115 = vunpack.c.h.bf16 %v346
        %v1116 = vunpack.c.l.bf16 %v347
        %v1117 = vunpack.c.h.bf16 %v347
        %v1118 = vunpack.c.l.bf16 %v348
        %v1119 = vunpack.c.h.bf16 %v348
        %v1120 = vunpack.c.l.bf16 %v349
        %v1121 = vunpack.c.h.bf16 %v349
        %v1122 = vunpack.c.l.bf16 %v350
        %v1123 = vunpack.c.h.bf16 %v350
        %v1124 = vunpack.c.l.bf16 %v351
        %v1125 = vunpack.c.h.bf16 %v351
        %v1126 = vunpack.c.l.bf16 %v352
        %v1127 = vunpack.c.h.bf16 %v352
        %v1128 = vunpack.c.l.bf16 %v353
        %v1129 = vunpack.c.h.bf16 %v353
        %v1130 = vunpack.c.l.bf16 %v354
        %v1131 = vunpack.c.h.bf16 %v354
        %v1132 = vunpack.c.l.bf16 %v355
        %v1133 = vunpack.c.h.bf16 %v355
        %v1134 = vunpack.c.l.bf16 %v356
        %v1135 = vunpack.c.h.bf16 %v356
        %v1136 = vunpack.c.l.bf16 %v357
        %v1137 = vunpack.c.h.bf16 %v357
        %v1138 = vunpack.c.l.bf16 %v358
        %v1139 = vunpack.c.h.bf16 %v358
        %v1140 = vunpack.c.l.bf16 %v359
        %v1141 = vunpack.c.h.bf16 %v359
        %v1142 = vunpack.c.l.bf16 %v360
        %v1143 = vunpack.c.h.bf16 %v360
        %v1144 = vunpack.c.l.bf16 %v361
        %v1145 = vunpack.c.h.bf16 %v361
        %v1146 = vunpack.c.l.bf16 %v362
        %v1147 = vunpack.c.h.bf16 %v362
        %v1148 = vunpack.c.l.bf16 %v363
        %v1149 = vunpack.c.h.bf16 %v363
        %v1150 = vunpack.c.l.bf16 %v364
        %v1151 = vunpack.c.h.bf16 %v364
        %v1152 = vunpack.c.l.bf16 %v365
        %v1153 = vunpack.c.h.bf16 %v365
        %v1154 = vunpack.c.l.bf16 %v366
        %v1155 = vunpack.c.h.bf16 %v366
        %v1156 = vunpack.c.l.bf16 %v367
        %v1157 = vunpack.c.h.bf16 %v367
        %v1158 = vunpack.c.l.bf16 %v368
        %v1159 = vunpack.c.h.bf16 %v368
        %v1160 = vunpack.c.l.bf16 %v369
        %v1161 = vunpack.c.h.bf16 %v369
        %v1162 = vunpack.c.l.bf16 %v370
        %v1163 = vunpack.c.h.bf16 %v370
        %v1164 = vunpack.c.l.bf16 %v371
        %v1165 = vunpack.c.h.bf16 %v371
        %v1166 = vunpack.c.l.bf16 %v372
        %v1167 = vunpack.c.h.bf16 %v372
        %v1168 = vunpack.c.l.bf16 %v373
        %v1169 = vunpack.c.h.bf16 %v373
        %v1170 = vunpack.c.l.bf16 %v374
        %v1171 = vunpack.c.h.bf16 %v374
        %v1172 = vunpack.c.l.bf16 %v375
        %v1173 = vunpack.c.h.bf16 %v375
        %v1174 = vunpack.c.l.bf16 %v376
        %v1175 = vunpack.c.h.bf16 %v376
        %v1176 = vunpack.c.l.bf16 %v377
        %v1177 = vunpack.c.h.bf16 %v377
        %v1178 = vunpack.c.l.bf16 %v378
        %v1179 = vunpack.c.h.bf16 %v378
        %v1180 = vunpack.c.l.bf16 %v379
        %v1181 = vunpack.c.h.bf16 %v379
        %v1182 = vunpack.c.l.bf16 %v380
        %v1183 = vunpack.c.h.bf16 %v380
        %v1184 = vunpack.c.l.bf16 %v381
        %v1185 = vunpack.c.h.bf16 %v381
        %v1186 = vunpack.c.l.bf16 %v382
        %v1187 = vunpack.c.h.bf16 %v382
        %v1188 = vunpack.c.l.bf16 %v383
        %v1189 = vunpack.c.h.bf16 %v383
        %v1190 = vunpack.c.l.bf16 %v384
        %v1191 = vunpack.c.h.bf16 %v384
        %v1192 = vunpack.c.l.bf16 %v385
        %v1193 = vunpack.c.h.bf16 %v385
        %v1194 = vunpack.c.l.bf16 %v386
        %v1195 = vunpack.c.h.bf16 %v386
        %v1196 = vunpack.c.l.bf16 %v387
        %v1197 = vunpack.c.h.bf16 %v387
        %v1198 = vunpack.c.l.bf16 %v388
        %v1199 = vunpack.c.h.bf16 %v388
        %v1200 = vunpack.c.l.bf16 %v389
        %v1201 = vunpack.c.h.bf16 %v389
        %v1202 = vunpack.c.l.bf16 %v390
        %v1203 = vunpack.c.h.bf16 %v390
        %v1204 = vunpack.c.l.bf16 %v391
        %v1205 = vunpack.c.h.bf16 %v391
        %v1206 = vunpack.c.l.bf16 %v392
        %v1207 = vunpack.c.h.bf16 %v392
        %v1208 = vunpack.c.l.bf16 %v393
        %v1209 = vunpack.c.h.bf16 %v393
        %v1210 = vunpack.c.l.bf16 %v394
        %v1211 = vunpack.c.h.bf16 %v394
        %v1212 = vunpack.c.l.bf16 %v395
        %v1213 = vunpack.c.h.bf16 %v395
        %v1214 = vunpack.c.l.bf16 %v396
        %v1215 = vunpack.c.h.bf16 %v396
        %v1216 = vunpack.c.l.bf16 %v397
        %v1217 = vunpack.c.h.bf16 %v397
        %v1218 = vunpack.c.l.bf16 %v398
        %v1219 = vunpack.c.h.bf16 %v398
        %v1220 = vunpack.c.l.bf16 %v399
        %v1221 = vunpack.c.h.bf16 %v399
        %v1222 = vunpack.c.l.bf16 %v400
        %v1223 = vunpack.c.h.bf16 %v400
        %v1224 = vunpack.c.l.bf16 %v401
        %v1225 = vunpack.c.h.bf16 %v401
        %v1226 = vunpack.c.l.bf16 %v402
        %v1227 = vunpack.c.h.bf16 %v402
        %v1228 = vunpack.c.l.bf16 %v403
        %v1229 = vunpack.c.h.bf16 %v403
        %v1230 = vunpack.c.l.bf16 %v404
        %v1231 = vunpack.c.h.bf16 %v404
        %v1232 = vunpack.c.l.bf16 %v405
        %v1233 = vunpack.c.h.bf16 %v405
        %v1234 = vunpack.c.l.bf16 %v406
        %v1235 = vunpack.c.h.bf16 %v406
        %v1236 = vunpack.c.l.bf16 %v407
        %v1237 = vunpack.c.h.bf16 %v407
        %v1238 = vunpack.c.l.bf16 %v408
        %v1239 = vunpack.c.h.bf16 %v408
        %v1240 = vunpack.c.l.bf16 %v409
        %v1241 = vunpack.c.h.bf16 %v409
        %v1242 = vunpack.c.l.bf16 %v410
        %v1243 = vunpack.c.h.bf16 %v410
        %v1244 = vunpack.c.l.bf16 %v411
        %v1245 = vunpack.c.h.bf16 %v411
        %v1246 = vunpack.c.l.bf16 %v412
        %v1247 = vunpack.c.h.bf16 %v412
        %v1248 = vunpack.c.l.bf16 %v413
        %v1249 = vunpack.c.h.bf16 %v413
        %v1250 = vunpack.c.l.bf16 %v414
        %v1251 = vunpack.c.h.bf16 %v414
        %v1252 = vunpack.c.l.bf16 %v415
        %v1253 = vunpack.c.h.bf16 %v415
        %v1254 = vunpack.c.l.bf16 %v416
        %v1255 = vunpack.c.h.bf16 %v416
        %v1256 = vunpack.c.l.bf16 %v417
        %v1257 = vunpack.c.h.bf16 %v417
        %v1258 = vunpack.c.l.bf16 %v418
        %v1259 = vunpack.c.h.bf16 %v418
        %v1260 = vunpack.c.l.bf16 %v419
        %v1261 = vunpack.c.h.bf16 %v419
        %v1262 = vunpack.c.l.bf16 %v420
        %v1263 = vunpack.c.h.bf16 %v420
        %v1264 = vunpack.c.l.bf16 %v421
        %v1265 = vunpack.c.h.bf16 %v421
        %v1266 = vunpack.c.l.bf16 %v422
        %v1267 = vunpack.c.h.bf16 %v422
        %v1268 = vunpack.c.l.bf16 %v423
        %v1269 = vunpack.c.h.bf16 %v423
        %v1270 = vunpack.c.l.bf16 %v424
        %v1271 = vunpack.c.h.bf16 %v424
        %v1272 = vunpack.c.l.bf16 %v425
        %v1273 = vunpack.c.h.bf16 %v425
        %v1274 = vunpack.c.l.bf16 %v426
        %v1275 = vunpack.c.h.bf16 %v426
        %v1276 = vunpack.c.l.bf16 %v427
        %v1277 = vunpack.c.h.bf16 %v427
        %v1278 = vunpack.c.l.bf16 %v428
        %v1279 = vunpack.c.h.bf16 %v428
        %v1280 = vunpack.c.l.bf16 %v429
        %v1281 = vunpack.c.h.bf16 %v429
        %v1282 = vunpack.c.l.bf16 %v430
        %v1283 = vunpack.c.h.bf16 %v430
        %v1284 = vunpack.c.l.bf16 %v431
        %v1285 = vunpack.c.h.bf16 %v431
        %v1286 = vunpack.c.l.bf16 %v432
        %v1287 = vunpack.c.h.bf16 %v432
        %v1288 = vunpack.c.l.bf16 %v433
        %v1289 = vunpack.c.h.bf16 %v433
        %v1290 = vunpack.c.l.bf16 %v434
        %v1291 = vunpack.c.h.bf16 %v434
        %v1292 = vunpack.c.l.bf16 %v435
        %v1293 = vunpack.c.h.bf16 %v435
        %v1294 = vunpack.c.l.bf16 %v436
        %v1295 = vunpack.c.h.bf16 %v436
        %v1296 = vunpack.c.l.bf16 %v437
        %v1297 = vunpack.c.h.bf16 %v437
        %v1298 = vunpack.c.l.bf16 %v438
        %v1299 = vunpack.c.h.bf16 %v438
        %v1300 = vunpack.c.l.bf16 %v439
        %v1301 = vunpack.c.h.bf16 %v439
        %v1302 = vunpack.c.l.bf16 %v440
        %v1303 = vunpack.c.h.bf16 %v440
        %v1304 = vunpack.c.l.bf16 %v441
        %v1305 = vunpack.c.h.bf16 %v441
        %v1306 = vunpack.c.l.bf16 %v442
        %v1307 = vunpack.c.h.bf16 %v442
        %v1308 = vunpack.c.l.bf16 %v443
        %v1309 = vunpack.c.h.bf16 %v443
        %v1310 = vunpack.c.l.bf16 %v444
        %v1311 = vunpack.c.h.bf16 %v444
        %v1312 = vunpack.c.l.bf16 %v445
        %v1313 = vunpack.c.h.bf16 %v445
        %v1314 = vunpack.c.l.bf16 %v446
        %v1315 = vunpack.c.h.bf16 %v446
        %v1316 = vunpack.c.l.bf16 %v447
        %v1317 = vunpack.c.h.bf16 %v447
        %v1318 = vunpack.c.l.bf16 %v448
        %v1319 = vunpack.c.h.bf16 %v448
        %v1320 = vunpack.c.l.bf16 %v449
        %v1321 = vunpack.c.h.bf16 %v449
        %v1322 = vunpack.c.l.bf16 %v450
        %v1323 = vunpack.c.h.bf16 %v450
        %v1324 = vunpack.c.l.bf16 %v451
        %v1325 = vunpack.c.h.bf16 %v451
        %v1326 = vunpack.c.l.bf16 %v452
        %v1327 = vunpack.c.h.bf16 %v452
        %v1328 = vunpack.c.l.bf16 %v453
        %v1329 = vunpack.c.h.bf16 %v453
        %v1330 = vunpack.c.l.bf16 %v454
        %v1331 = vunpack.c.h.bf16 %v454
        %v1332 = vunpack.c.l.bf16 %v455
        %v1333 = vunpack.c.h.bf16 %v455
        %v1334 = vunpack.c.l.bf16 %v456
        %v1335 = vunpack.c.h.bf16 %v456
        %v1336 = vunpack.c.l.bf16 %v457
        %v1337 = vunpack.c.h.bf16 %v457
        %v1338 = vunpack.c.l.bf16 %v458
        %v1339 = vunpack.c.h.bf16 %v458
        %v1340 = vunpack.c.l.bf16 %v459
        %v1341 = vunpack.c.h.bf16 %v459
        %v1342 = vunpack.c.l.bf16 %v460
        %v1343 = vunpack.c.h.bf16 %v460
        %v1344 = vunpack.c.l.bf16 %v461
        %v1345 = vunpack.c.h.bf16 %v461
        %v1346 = vunpack.c.l.bf16 %v462
        %v1347 = vunpack.c.h.bf16 %v462
        %v1348 = vunpack.c.l.bf16 %v463
        %v1349 = vunpack.c.h.bf16 %v463
        %v1350 = vunpack.c.l.bf16 %v464
        %v1351 = vunpack.c.h.bf16 %v464
        %v1352 = vunpack.c.l.bf16 %v465
        %v1353 = vunpack.c.h.bf16 %v465
        %v1354 = vunpack.c.l.bf16 %v466
        %v1355 = vunpack.c.h.bf16 %v466
        %v1356 = vunpack.c.l.bf16 %v467
        %v1357 = vunpack.c.h.bf16 %v467
        %v1358 = vunpack.c.l.bf16 %v468
        %v1359 = vunpack.c.h.bf16 %v468
        %v1360 = vunpack.c.l.bf16 %v469
        %v1361 = vunpack.c.h.bf16 %v469
        %v1362 = vunpack.c.l.bf16 %v470
        %v1363 = vunpack.c.h.bf16 %v470
        %v1364 = vunpack.c.l.bf16 %v471
        %v1365 = vunpack.c.h.bf16 %v471
        %v1366 = vunpack.c.l.bf16 %v472
        %v1367 = vunpack.c.h.bf16 %v472
        %v1368 = vunpack.c.l.bf16 %v473
        %v1369 = vunpack.c.h.bf16 %v473
        %v1370 = vunpack.c.l.bf16 %v474
        %v1371 = vunpack.c.h.bf16 %v474
        %v1372 = vunpack.c.l.bf16 %v475
        %v1373 = vunpack.c.h.bf16 %v475
        %v1374 = vunpack.c.l.bf16 %v476
        %v1375 = vunpack.c.h.bf16 %v476
        %v1376 = vunpack.c.l.bf16 %v477
        %v1377 = vunpack.c.h.bf16 %v477
        %v1378 = vunpack.c.l.bf16 %v478
        %v1379 = vunpack.c.h.bf16 %v478
        %v1380 = vunpack.c.l.bf16 %v479
        %v1381 = vunpack.c.h.bf16 %v479
        %v1382 = vunpack.c.l.bf16 %v480
        %v1383 = vunpack.c.h.bf16 %v480
        %v1384 = vunpack.c.l.bf16 %v481
        %v1385 = vunpack.c.h.bf16 %v481
        %v1386 = vunpack.c.l.bf16 %v482
        %v1387 = vunpack.c.h.bf16 %v482
        %v1388 = vunpack.c.l.bf16 %v483
        %v1389 = vunpack.c.h.bf16 %v483
        %v1390 = vunpack.c.l.bf16 %v484
        %v1391 = vunpack.c.h.bf16 %v484
        %v1392 = vunpack.c.l.bf16 %v485
        %v1393 = vunpack.c.h.bf16 %v485
        %v1394 = vunpack.c.l.bf16 %v486
        %v1395 = vunpack.c.h.bf16 %v486
        %v1396 = vunpack.c.l.bf16 %v487
        %v1397 = vunpack.c.h.bf16 %v487
        %v1398 = vunpack.c.l.bf16 %v488
        %v1399 = vunpack.c.h.bf16 %v488
        %v1400 = vunpack.c.l.bf16 %v489
        %v1401 = vunpack.c.h.bf16 %v489
        %v1402 = vunpack.c.l.bf16 %v490
        %v1403 = vunpack.c.h.bf16 %v490
        %v1404 = vunpack.c.l.bf16 %v491
        %v1405 = vunpack.c.h.bf16 %v491
        %v1406 = vunpack.c.l.bf16 %v492
        %v1407 = vunpack.c.h.bf16 %v492
        %v1408 = vunpack.c.l.bf16 %v493
        %v1409 = vunpack.c.h.bf16 %v493
        %v1410 = vunpack.c.l.bf16 %v494
        %v1411 = vunpack.c.h.bf16 %v494
        %v1412 = vunpack.c.l.bf16 %v495
        %v1413 = vunpack.c.h.bf16 %v495
        %v1414 = vunpack.c.l.bf16 %v496
        %v1415 = vunpack.c.h.bf16 %v496
        %v1416 = vunpack.c.l.bf16 %v497
        %v1417 = vunpack.c.h.bf16 %v497
        %v1418 = vunpack.c.l.bf16 %v498
        %v1419 = vunpack.c.h.bf16 %v498
        %v1420 = vunpack.c.l.bf16 %v499
        %v1421 = vunpack.c.h.bf16 %v499
        %v1422 = vunpack.c.l.bf16 %v500
        %v1423 = vunpack.c.h.bf16 %v500
        %v1424 = vunpack.c.l.bf16 %v501
        %v1425 = vunpack.c.h.bf16 %v501
        %v1426 = vunpack.c.l.bf16 %v502
        %v1427 = vunpack.c.h.bf16 %v502
        %v1428 = vunpack.c.l.bf16 %v503
        %v1429 = vunpack.c.h.bf16 %v503
        %v1430 = vunpack.c.l.bf16 %v504
        %v1431 = vunpack.c.h.bf16 %v504
        %v1432 = vunpack.c.l.bf16 %v505
        %v1433 = vunpack.c.h.bf16 %v505
        %v1434 = vunpack.c.l.bf16 %v506
        %v1435 = vunpack.c.h.bf16 %v506
        %v1436 = vunpack.c.l.bf16 %v507
        %v1437 = vunpack.c.h.bf16 %v507
        %v1438 = vunpack.c.l.bf16 %v508
        %v1439 = vunpack.c.h.bf16 %v508
        %v1440 = vunpack.c.l.bf16 %v509
        %v1441 = vunpack.c.h.bf16 %v509
        %v1442 = vunpack.c.l.bf16 %v510
        %v1443 = vunpack.c.h.bf16 %v510
        %v1444 = vunpack.c.l.bf16 %v511
        %v1445 = vunpack.c.h.bf16 %v511
        %v1446 = vunpack.c.l.bf16 %v512
        %v1447 = vunpack.c.h.bf16 %v512
        %v1448 = vunpack.c.l.bf16 %v513
        %v1449 = vunpack.c.h.bf16 %v513
        %v1450 = vunpack.c.l.bf16 %v514
        %v1451 = vunpack.c.h.bf16 %v514
        %v1452 = vunpack.c.l.bf16 %v515
        %v1453 = vunpack.c.h.bf16 %v515
        %v1454 = vunpack.c.l.bf16 %v516
        %v1455 = vunpack.c.h.bf16 %v516
        %v1456 = vunpack.c.l.bf16 %v517
        %v1457 = vunpack.c.h.bf16 %v517
        %v1458 = vunpack.c.l.bf16 %v518
        %v1459 = vunpack.c.h.bf16 %v518
        %v1460 = vunpack.c.l.bf16 %v519
        %v1461 = vunpack.c.h.bf16 %v519
        %v1462 = vunpack.c.l.bf16 %v520
        %v1463 = vunpack.c.h.bf16 %v520
        %v1464 = vunpack.c.l.bf16 %v521
        %v1465 = vunpack.c.h.bf16 %v521
        %v1466 = vunpack.c.l.bf16 %v522
        %v1467 = vunpack.c.h.bf16 %v522
        %v1468 = vunpack.c.l.bf16 %v523
        %v1469 = vunpack.c.h.bf16 %v523
        %v1470 = vunpack.c.l.bf16 %v524
        %v1471 = vunpack.c.h.bf16 %v524
        %v1472 = vunpack.c.l.bf16 %v525
        %v1473 = vunpack.c.h.bf16 %v525
        %v1474 = vunpack.c.l.bf16 %v526
        %v1475 = vunpack.c.h.bf16 %v526
        %v1476 = vunpack.c.l.bf16 %v527
        %v1477 = vunpack.c.h.bf16 %v527
        %v1478 = vunpack.c.l.bf16 %v528
        %v1479 = vunpack.c.h.bf16 %v528
        %v1480 = vunpack.c.l.bf16 %v529
        %v1481 = vunpack.c.h.bf16 %v529
        %v1482 = vunpack.c.l.bf16 %v530
        %v1483 = vunpack.c.h.bf16 %v530
        %v1484 = vunpack.c.l.bf16 %v531
        %v1485 = vunpack.c.h.bf16 %v531
        %v1486 = vunpack.c.l.bf16 %v532
        %v1487 = vunpack.c.h.bf16 %v532
        %v1488 = vunpack.c.l.bf16 %v533
        %v1489 = vunpack.c.h.bf16 %v533
        %v1490 = vunpack.c.l.bf16 %v534
        %v1491 = vunpack.c.h.bf16 %v534
        %v1492 = vunpack.c.l.bf16 %v535
        %v1493 = vunpack.c.h.bf16 %v535
        %v1494 = vunpack.c.l.bf16 %v536
        %v1495 = vunpack.c.h.bf16 %v536
        %v1496 = vunpack.c.l.bf16 %v537
        %v1497 = vunpack.c.h.bf16 %v537
        %v1498 = vunpack.c.l.bf16 %v538
        %v1499 = vunpack.c.h.bf16 %v538
        %v1500 = vunpack.c.l.bf16 %v539
        %v1501 = vunpack.c.h.bf16 %v539
        %v1502 = vunpack.c.l.bf16 %v540
        %v1503 = vunpack.c.h.bf16 %v540
        %v1504 = vunpack.c.l.bf16 %v541
        %v1505 = vunpack.c.h.bf16 %v541
        %v1506 = vunpack.c.l.bf16 %v542
        %v1507 = vunpack.c.h.bf16 %v542
        %v1508 = vunpack.c.l.bf16 %v543
        %v1509 = vunpack.c.h.bf16 %v543
        %v1510 = vunpack.c.l.bf16 %v544
        %v1511 = vunpack.c.h.bf16 %v544
        %v1512 = vunpack.c.l.bf16 %v545
        %v1513 = vunpack.c.h.bf16 %v545
        %v1514 = vunpack.c.l.bf16 %v546
        %v1515 = vunpack.c.h.bf16 %v546
        %v1516 = vunpack.c.l.bf16 %v547
        %v1517 = vunpack.c.h.bf16 %v547
        %v1518 = vunpack.c.l.bf16 %v548
        %v1519 = vunpack.c.h.bf16 %v548
        %v1520 = vunpack.c.l.bf16 %v549
        %v1521 = vunpack.c.h.bf16 %v549
        %v1522 = vunpack.c.l.bf16 %v550
        %v1523 = vunpack.c.h.bf16 %v550
        %v1524 = vunpack.c.l.bf16 %v551
        %v1525 = vunpack.c.h.bf16 %v551
        %v1526 = vunpack.c.l.bf16 %v552
        %v1527 = vunpack.c.h.bf16 %v552
        %v1528 = vunpack.c.l.bf16 %v553
        %v1529 = vunpack.c.h.bf16 %v553
        %v1530 = vunpack.c.l.bf16 %v554
        %v1531 = vunpack.c.h.bf16 %v554
        %v1532 = vunpack.c.l.bf16 %v555
        %v1533 = vunpack.c.h.bf16 %v555
        %v1534 = vunpack.c.l.bf16 %v556
        %v1535 = vunpack.c.h.bf16 %v556
        %v1536 = vunpack.c.l.bf16 %v557
        %v1537 = vunpack.c.h.bf16 %v557
        %v1538 = vunpack.c.l.bf16 %v558
        %v1539 = vunpack.c.h.bf16 %v558
        %v1540 = vunpack.c.l.bf16 %v559
        %v1541 = vunpack.c.h.bf16 %v559
        %v1542 = vunpack.c.l.bf16 %v560
        %v1543 = vunpack.c.h.bf16 %v560
        %v1544 = vunpack.c.l.bf16 %v561
        %v1545 = vunpack.c.h.bf16 %v561
        %v1546 = vunpack.c.l.bf16 %v562
        %v1547 = vunpack.c.h.bf16 %v562
        %v1548 = vunpack.c.l.bf16 %v563
        %v1549 = vunpack.c.h.bf16 %v563
        %v1550 = vunpack.c.l.bf16 %v564
        %v1551 = vunpack.c.h.bf16 %v564
        %v1552 = vunpack.c.l.bf16 %v565
        %v1553 = vunpack.c.h.bf16 %v565
        %v1554 = vunpack.c.l.bf16 %v566
        %v1555 = vunpack.c.h.bf16 %v566
        %v1556 = vunpack.c.l.bf16 %v567
        %v1557 = vunpack.c.h.bf16 %v567
        %v1558 = vunpack.c.l.bf16 %v568
        %v1559 = vunpack.c.h.bf16 %v568
        %v1560 = vunpack.c.l.bf16 %v569
        %v1561 = vunpack.c.h.bf16 %v569
        %v1562 = vunpack.c.l.bf16 %v570
        %v1563 = vunpack.c.h.bf16 %v570
        %v1564 = vunpack.c.l.bf16 %v571
        %v1565 = vunpack.c.h.bf16 %v571
        %v1566 = vunpack.c.l.bf16 %v572
        %v1567 = vunpack.c.h.bf16 %v572
        %v1568 = vunpack.c.l.bf16 %v573
        %v1569 = vunpack.c.h.bf16 %v573
        %v1570 = vunpack.c.l.bf16 %v574
        %v1571 = vunpack.c.h.bf16 %v574
        %v1572 = vunpack.c.l.bf16 %v575
        %v1573 = vunpack.c.h.bf16 %v575
        %v1574 = vunpack.c.l.bf16 %v576
        %v1575 = vunpack.c.h.bf16 %v576
        %v1576 = vunpack.c.l.bf16 %v577
        %v1577 = vunpack.c.h.bf16 %v577
        %v1578 = vunpack.c.l.bf16 %v578
        %v1579 = vunpack.c.h.bf16 %v578
        %v1580 = vunpack.c.l.bf16 %v579
        %v1581 = vunpack.c.h.bf16 %v579
        %v1582 = vunpack.c.l.bf16 %v580
        %v1583 = vunpack.c.h.bf16 %v580
        %v1584 = vunpack.c.l.bf16 %v581
        %v1585 = vunpack.c.h.bf16 %v581
        %v1586 = vunpack.c.l.bf16 %v582
        %v1587 = vunpack.c.h.bf16 %v582
        %v1588 = vunpack.c.l.bf16 %v583
        %v1589 = vunpack.c.h.bf16 %v583
        %v1590 = vunpack.c.l.bf16 %v584
        %v1591 = vunpack.c.h.bf16 %v584
        %v1592 = vunpack.c.l.bf16 %v585
        %v1593 = vunpack.c.h.bf16 %v585
        %v1594 = vunpack.c.l.bf16 %v586
        %v1595 = vunpack.c.h.bf16 %v586
        %v1596 = vunpack.c.l.bf16 %v587
        %v1597 = vunpack.c.h.bf16 %v587
        %v1598 = vunpack.c.l.bf16 %v588
        %v1599 = vunpack.c.h.bf16 %v588
        %v1600 = vunpack.c.l.bf16 %v589
        %v1601 = vunpack.c.h.bf16 %v589
        %v1602 = vunpack.c.l.bf16 %v590
        %v1603 = vunpack.c.h.bf16 %v590
        %v1604 = vunpack.c.l.bf16 %v591
        %v1605 = vunpack.c.h.bf16 %v591
        %v1606 = vunpack.c.l.bf16 %v592
        %v1607 = vunpack.c.h.bf16 %v592
        %v1608 = vunpack.c.l.bf16 %v593
        %v1609 = vunpack.c.h.bf16 %v593
        %v1610 = vunpack.c.l.bf16 %v594
        %v1611 = vunpack.c.h.bf16 %v594
        %v1612 = vunpack.c.l.bf16 %v595
        %v1613 = vunpack.c.h.bf16 %v595
        %v1614 = vunpack.c.l.bf16 %v596
        %v1615 = vunpack.c.h.bf16 %v596
        %v1616 = vunpack.c.l.bf16 %v597
        %v1617 = vunpack.c.h.bf16 %v597
        %v1618 = vunpack.c.l.bf16 %v598
        %v1619 = vunpack.c.h.bf16 %v598
        %v1620 = vunpack.c.l.bf16 %v599
        %v1621 = vunpack.c.h.bf16 %v599
        %v1622 = vunpack.c.l.bf16 %v600
        %v1623 = vunpack.c.h.bf16 %v600
        %v1624 = vunpack.c.l.bf16 %v601
        %v1625 = vunpack.c.h.bf16 %v601
        %v1626 = vunpack.c.l.bf16 %v602
        %v1627 = vunpack.c.h.bf16 %v602
        %v1628 = vunpack.c.l.bf16 %v603
        %v1629 = vunpack.c.h.bf16 %v603
        %v1630 = vunpack.c.l.bf16 %v604
        %v1631 = vunpack.c.h.bf16 %v604
        %v1632 = vunpack.c.l.bf16 %v605
        %v1633 = vunpack.c.h.bf16 %v605
        %v1634 = vunpack.c.l.bf16 %v606
        %v1635 = vunpack.c.h.bf16 %v606
        %v1636 = vunpack.c.l.bf16 %v607
        %v1637 = vunpack.c.h.bf16 %v607
        %v1638 = vunpack.c.l.bf16 %v608
        %v1639 = vunpack.c.h.bf16 %v608
        %v1640 = vunpack.c.l.bf16 %v609
        %v1641 = vunpack.c.h.bf16 %v609
        %v1642 = vunpack.c.l.bf16 %v610
        %v1643 = vunpack.c.h.bf16 %v610
        %v1644 = vunpack.c.l.bf16 %v611
        %v1645 = vunpack.c.h.bf16 %v611
        %v1646 = vunpack.c.l.bf16 %v612
        %v1647 = vunpack.c.h.bf16 %v612
        %v1648 = vunpack.c.l.bf16 %v613
        %v1649 = vunpack.c.h.bf16 %v613
        %v1650 = vunpack.c.l.bf16 %v614
        %v1651 = vunpack.c.h.bf16 %v614
        %v1652 = vunpack.c.l.bf16 %v615
        %v1653 = vunpack.c.h.bf16 %v615
        %v1654 = vunpack.c.l.bf16 %v616
        %v1655 = vunpack.c.h.bf16 %v616
        %v1656 = vunpack.c.l.bf16 %v617
        %v1657 = vunpack.c.h.bf16 %v617
        %v1658 = vunpack.c.l.bf16 %v618
        %v1659 = vunpack.c.h.bf16 %v618
        %v1660 = vunpack.c.l.bf16 %v619
        %v1661 = vunpack.c.h.bf16 %v619
        %v1662 = vunpack.c.l.bf16 %v620
        %v1663 = vunpack.c.h.bf16 %v620
        %v1664 = vunpack.c.l.bf16 %v621
        %v1665 = vunpack.c.h.bf16 %v621
        %v1666 = vunpack.c.l.bf16 %v622
        %v1667 = vunpack.c.h.bf16 %v622
        %v1668 = vunpack.c.l.bf16 %v623
        %v1669 = vunpack.c.h.bf16 %v623
        %v1670 = vunpack.c.l.bf16 %v624
        %v1671 = vunpack.c.h.bf16 %v624
        %v1672 = vunpack.c.l.bf16 %v625
        %v1673 = vunpack.c.h.bf16 %v625
        %v1674 = vunpack.c.l.bf16 %v626
        %v1675 = vunpack.c.h.bf16 %v626
        %v1676 = vunpack.c.l.bf16 %v627
        %v1677 = vunpack.c.h.bf16 %v627
        %v1678 = vunpack.c.l.bf16 %v628
        %v1679 = vunpack.c.h.bf16 %v628
        %v1680 = vunpack.c.l.bf16 %v629
        %v1681 = vunpack.c.h.bf16 %v629
        %v1682 = vunpack.c.l.bf16 %v630
        %v1683 = vunpack.c.h.bf16 %v630
        %v1684 = vunpack.c.l.bf16 %v631
        %v1685 = vunpack.c.h.bf16 %v631
        %v1686 = vunpack.c.l.bf16 %v632
        %v1687 = vunpack.c.h.bf16 %v632
        %v1688 = vunpack.c.l.bf16 %v633
        %v1689 = vunpack.c.h.bf16 %v633
        %v1690 = vunpack.c.l.bf16 %v634
        %v1691 = vunpack.c.h.bf16 %v634
        %v1692 = vunpack.c.l.bf16 %v635
        %v1693 = vunpack.c.h.bf16 %v635
        %v1694 = vunpack.c.l.bf16 %v636
        %v1695 = vunpack.c.h.bf16 %v636
        %v1696 = vunpack.c.l.bf16 %v637
        %v1697 = vunpack.c.h.bf16 %v637
        %v1698 = vunpack.c.l.bf16 %v638
        %v1699 = vunpack.c.h.bf16 %v638
        %v1700 = vunpack.c.l.bf16 %v639
        %v1701 = vunpack.c.h.bf16 %v639
        %v1702 = vunpack.c.l.bf16 %v640
        %v1703 = vunpack.c.h.bf16 %v640
        %v1704 = vunpack.c.l.bf16 %v641
        %v1705 = vunpack.c.h.bf16 %v641
        %v1706 = vunpack.c.l.bf16 %v642
        %v1707 = vunpack.c.h.bf16 %v642
        %v1708 = vunpack.c.l.bf16 %v643
        %v1709 = vunpack.c.h.bf16 %v643
        %v1710 = vunpack.c.l.bf16 %v644
        %v1711 = vunpack.c.h.bf16 %v644
        %v1712 = vunpack.c.l.bf16 %v645
        %v1713 = vunpack.c.h.bf16 %v645
        %v1714 = vunpack.c.l.bf16 %v646
        %v1715 = vunpack.c.h.bf16 %v646
        %v1716 = vunpack.c.l.bf16 %v647
        %v1717 = vunpack.c.h.bf16 %v647
        %v1718 = vunpack.c.l.bf16 %v648
        %v1719 = vunpack.c.h.bf16 %v648
        %v1720 = vunpack.c.l.bf16 %v649
        %v1721 = vunpack.c.h.bf16 %v649
        %v1722 = vunpack.c.l.bf16 %v650
        %v1723 = vunpack.c.h.bf16 %v650
        %v1724 = vunpack.c.l.bf16 %v651
        %v1725 = vunpack.c.h.bf16 %v651
        %v1726 = vunpack.c.l.bf16 %v652
        %v1727 = vunpack.c.h.bf16 %v652
        %v1728 = vunpack.c.l.bf16 %v653
        %v1729 = vunpack.c.h.bf16 %v653
        %v1730 = vunpack.c.l.bf16 %v654
        %v1731 = vunpack.c.h.bf16 %v654
        %v1732 = vunpack.c.l.bf16 %v655
        %v1733 = vunpack.c.h.bf16 %v655
        %v1734 = vunpack.c.l.bf16 %v656
        %v1735 = vunpack.c.h.bf16 %v656
        %v1736 = vunpack.c.l.bf16 %v657
        %v1737 = vunpack.c.h.bf16 %v657
        %v1738 = vunpack.c.l.bf16 %v658
        %v1739 = vunpack.c.h.bf16 %v658
        %v1740 = vunpack.c.l.bf16 %v659
        %v1741 = vunpack.c.h.bf16 %v659
        %v1742 = vunpack.c.l.bf16 %v660
        %v1743 = vunpack.c.h.bf16 %v660
        %v1744 = vunpack.c.l.bf16 %v661
        %v1745 = vunpack.c.h.bf16 %v661
        %v1746 = vunpack.c.l.bf16 %v662
        %v1747 = vunpack.c.h.bf16 %v662
        %v1748 = vunpack.c.l.bf16 %v663
        %v1749 = vunpack.c.h.bf16 %v663
        %v1750 = vunpack.c.l.bf16 %v664
        %v1751 = vunpack.c.h.bf16 %v664
        %v1752 = vunpack.c.l.bf16 %v665
        %v1753 = vunpack.c.h.bf16 %v665
        %v1754 = vunpack.c.l.bf16 %v666
        %v1755 = vunpack.c.h.bf16 %v666
        %v1756 = vunpack.c.l.bf16 %v667
        %v1757 = vunpack.c.h.bf16 %v667
        %v1758 = vunpack.c.l.bf16 %v668
        %v1759 = vunpack.c.h.bf16 %v668
        %v1760 = vunpack.c.l.bf16 %v669
        %v1761 = vunpack.c.h.bf16 %v669
        %v1762 = vunpack.c.l.bf16 %v670
        %v1763 = vunpack.c.h.bf16 %v670
        %v1764 = vunpack.c.l.bf16 %v671
        %v1765 = vunpack.c.h.bf16 %v671
        %v1766 = vunpack.c.l.bf16 %v672
        %v1767 = vunpack.c.h.bf16 %v672
        %v1768 = vunpack.c.l.bf16 %v673
        %v1769 = vunpack.c.h.bf16 %v673
        %v1770 = vunpack.c.l.bf16 %v674
        %v1771 = vunpack.c.h.bf16 %v674
        %v1772 = vunpack.c.l.bf16 %v675
        %v1773 = vunpack.c.h.bf16 %v675
        %v1774 = vunpack.c.l.bf16 %v676
        %v1775 = vunpack.c.h.bf16 %v676
        %v1776 = vunpack.c.l.bf16 %v677
        %v1777 = vunpack.c.h.bf16 %v677
        %v1778 = vunpack.c.l.bf16 %v678
        %v1779 = vunpack.c.h.bf16 %v678
        %v1780 = vunpack.c.l.bf16 %v679
        %v1781 = vunpack.c.h.bf16 %v679
        %v1782 = vunpack.c.l.bf16 %v680
        %v1783 = vunpack.c.h.bf16 %v680
        %v1784 = vunpack.c.l.bf16 %v681
        %v1785 = vunpack.c.h.bf16 %v681
        %v1786 = vunpack.c.l.bf16 %v682
        %v1787 = vunpack.c.h.bf16 %v682
        %v1788 = vunpack.c.l.bf16 %v683
        %v1789 = vunpack.c.h.bf16 %v683
        %v1790 = vunpack.c.l.bf16 %v684
        %v1791 = vunpack.c.h.bf16 %v684
        %v1792 = vunpack.c.l.bf16 %v685
        %v1793 = vunpack.c.h.bf16 %v685
        %v1794 = vunpack.c.l.bf16 %v686
        %v1795 = vunpack.c.h.bf16 %v686
        %v1796 = vunpack.c.l.bf16 %v687
        %v1797 = vunpack.c.h.bf16 %v687
        %v1798 = vunpack.c.l.bf16 %v688
        %v1799 = vunpack.c.h.bf16 %v688
        %v1800 = vunpack.c.l.bf16 %v689
        %v1801 = vunpack.c.h.bf16 %v689
        %v1802 = vunpack.c.l.bf16 %v690
        %v1803 = vunpack.c.h.bf16 %v690
        %v1804 = vunpack.c.l.bf16 %v691
        %v1805 = vunpack.c.h.bf16 %v691
        %v1806 = vunpack.c.l.bf16 %v692
        %v1807 = vunpack.c.h.bf16 %v692
        %v1808 = vunpack.c.l.bf16 %v693
        %v1809 = vunpack.c.h.bf16 %v693
        %v1810 = vunpack.c.l.bf16 %v694
        %v1811 = vunpack.c.h.bf16 %v694
        %v1812 = vunpack.c.l.bf16 %v695
        %v1813 = vunpack.c.h.bf16 %v695
        %v1814 = vunpack.c.l.bf16 %v696
        %v1815 = vunpack.c.h.bf16 %v696
        %v1816 = vunpack.c.l.bf16 %v697
        %v1817 = vunpack.c.h.bf16 %v697
        %v1818 = vunpack.c.l.bf16 %v698
        %v1819 = vunpack.c.h.bf16 %v698
        %v1820 = vunpack.c.l.bf16 %v699
        %v1821 = vunpack.c.h.bf16 %v699
        %v1822 = vunpack.c.l.bf16 %v700
        %v1823 = vunpack.c.h.bf16 %v700
        %v1824 = vunpack.c.l.bf16 %v701
        %v1825 = vunpack.c.h.bf16 %v701
        %v1826 = vunpack.c.l.bf16 %v702
        %v1827 = vunpack.c.h.bf16 %v702
        %v1828 = vunpack.c.l.bf16 %v703
        %v1829 = vunpack.c.h.bf16 %v703
        %v1830 = vunpack.c.l.bf16 %v704
        %v1831 = vunpack.c.h.bf16 %v704
        %v1832 = vunpack.c.l.bf16 %v705
        %v1833 = vunpack.c.h.bf16 %v705
        %v1834 = vunpack.c.l.bf16 %v706
        %v1835 = vunpack.c.h.bf16 %v706
        %v1836 = vunpack.c.l.bf16 %v707
        %v1837 = vunpack.c.h.bf16 %v707
        %v1838 = vunpack.c.l.bf16 %v708
        %v1839 = vunpack.c.h.bf16 %v708
        %v1840 = vunpack.c.l.bf16 %v709
        %v1841 = vunpack.c.h.bf16 %v709
        %v1842 = vunpack.c.l.bf16 %v710
        %v1843 = vunpack.c.h.bf16 %v710
        %v1844 = vunpack.c.l.bf16 %v711
        %v1845 = vunpack.c.h.bf16 %v711
        %v1846 = vunpack.c.l.bf16 %v712
        %v1847 = vunpack.c.h.bf16 %v712
        %v1848 = vunpack.c.l.bf16 %v713
        %v1849 = vunpack.c.h.bf16 %v713
        %v1850 = vunpack.c.l.bf16 %v714
        %v1851 = vunpack.c.h.bf16 %v714
        %v1852 = vunpack.c.l.bf16 %v715
        %v1853 = vunpack.c.h.bf16 %v715
        %v1854 = vunpack.c.l.bf16 %v716
        %v1855 = vunpack.c.h.bf16 %v716
        %v1856 = vunpack.c.l.bf16 %v717
        %v1857 = vunpack.c.h.bf16 %v717
        %v1858 = vunpack.c.l.bf16 %v718
        %v1859 = vunpack.c.h.bf16 %v718
        %v1860 = vunpack.c.l.bf16 %v719
        %v1861 = vunpack.c.h.bf16 %v719
        %v1862 = vunpack.c.l.bf16 %v720
        %v1863 = vunpack.c.h.bf16 %v720
        %v1864 = vunpack.c.l.bf16 %v721
        %v1865 = vunpack.c.h.bf16 %v721
        %v1866 = vunpack.c.l.bf16 %v722
        %v1867 = vunpack.c.h.bf16 %v722
        %v1868 = vunpack.c.l.bf16 %v723
        %v1869 = vunpack.c.h.bf16 %v723
        %v1870 = vunpack.c.l.bf16 %v724
        %v1871 = vunpack.c.h.bf16 %v724
        %v1872 = vunpack.c.l.bf16 %v725
        %v1873 = vunpack.c.h.bf16 %v725
        %v1874 = vunpack.c.l.bf16 %v726
        %v1875 = vunpack.c.h.bf16 %v726
        %v1876 = vunpack.c.l.bf16 %v727
        %v1877 = vunpack.c.h.bf16 %v727
        %v1878 = vunpack.c.l.bf16 %v728
        %v1879 = vunpack.c.h.bf16 %v728
        %v1880 = vunpack.c.l.bf16 %v729
        %v1881 = vunpack.c.h.bf16 %v729
        %v1882 = vunpack.c.l.bf16 %v730
        %v1883 = vunpack.c.h.bf16 %v730
        %v1884 = vunpack.c.l.bf16 %v731
        %v1885 = vunpack.c.h.bf16 %v731
        %v1886 = vunpack.c.l.bf16 %v732
        %v1887 = vunpack.c.h.bf16 %v732
        %v1888 = vunpack.c.l.bf16 %v733
        %v1889 = vunpack.c.h.bf16 %v733
        %v1890 = vunpack.c.l.bf16 %v734
        %v1891 = vunpack.c.h.bf16 %v734
        %v1892 = vunpack.c.l.bf16 %v735
        %v1893 = vunpack.c.h.bf16 %v735
        %v1894 = vunpack.c.l.bf16 %v736
        %v1895 = vunpack.c.h.bf16 %v736
        %v1896 = vunpack.c.l.bf16 %v737
        %v1897 = vunpack.c.h.bf16 %v737
        %v1898 = vunpack.c.l.bf16 %v738
        %v1899 = vunpack.c.h.bf16 %v738
        %v1900 = vunpack.c.l.bf16 %v739
        %v1901 = vunpack.c.h.bf16 %v739
        %v1902 = vunpack.c.l.bf16 %v740
        %v1903 = vunpack.c.h.bf16 %v740
        %v1904 = vunpack.c.l.bf16 %v741
        %v1905 = vunpack.c.h.bf16 %v741
        %v1906 = vunpack.c.l.bf16 %v742
        %v1907 = vunpack.c.h.bf16 %v742
        %v1908 = vunpack.c.l.bf16 %v743
        %v1909 = vunpack.c.h.bf16 %v743
        %v1910 = vunpack.c.l.bf16 %v744
        %v1911 = vunpack.c.h.bf16 %v744
        %v1912 = vunpack.c.l.bf16 %v745
        %v1913 = vunpack.c.h.bf16 %v745
        %v1914 = vunpack.c.l.bf16 %v746
        %v1915 = vunpack.c.h.bf16 %v746
        %v1916 = vunpack.c.l.bf16 %v747
        %v1917 = vunpack.c.h.bf16 %v747
        %v1918 = vunpack.c.l.bf16 %v748
        %v1919 = vunpack.c.h.bf16 %v748
        %v1920 = vunpack.c.l.bf16 %v749
        %v1921 = vunpack.c.h.bf16 %v749
        %v1922 = vunpack.c.l.bf16 %v750
        %v1923 = vunpack.c.h.bf16 %v750
        %v1924 = vunpack.c.l.bf16 %v751
        %v1925 = vunpack.c.h.bf16 %v751
        %v1926 = vunpack.c.l.bf16 %v752
        %v1927 = vunpack.c.h.bf16 %v752
        %v1928 = vunpack.c.l.bf16 %v753
        %v1929 = vunpack.c.h.bf16 %v753
        %v1930 = vunpack.c.l.bf16 %v754
        %v1931 = vunpack.c.h.bf16 %v754
        %v1932 = vunpack.c.l.bf16 %v755
        %v1933 = vunpack.c.h.bf16 %v755
        %v1934 = vunpack.c.l.bf16 %v756
        %v1935 = vunpack.c.h.bf16 %v756
        %v1936 = vunpack.c.l.bf16 %v757
        %v1937 = vunpack.c.h.bf16 %v757
        %v1938 = vunpack.c.l.bf16 %v758
        %v1939 = vunpack.c.h.bf16 %v758
        %v1940 = vunpack.c.l.bf16 %v759
        %v1941 = vunpack.c.h.bf16 %v759
        %v1942 = vunpack.c.l.bf16 %v760
        %v1943 = vunpack.c.h.bf16 %v760
        %v1944 = vunpack.c.l.bf16 %v761
        %v1945 = vunpack.c.h.bf16 %v761
        %v1946 = vunpack.c.l.bf16 %v762
        %v1947 = vunpack.c.h.bf16 %v762
        %v1948 = vunpack.c.l.bf16 %v763
        %v1949 = vunpack.c.h.bf16 %v763
        %v1950 = vunpack.c.l.bf16 %v764
        %v1951 = vunpack.c.h.bf16 %v764
        %v1952 = vunpack.c.l.bf16 %v765
        %v1953 = vunpack.c.h.bf16 %v765
        %v1954 = vunpack.c.l.bf16 %v766
        %v1955 = vunpack.c.h.bf16 %v766
        %v1956 = vunpack.c.l.bf16 %v767
        %v1957 = vunpack.c.h.bf16 %v767
        %v1958 = vunpack.c.l.bf16 %v768
        %v1959 = vunpack.c.h.bf16 %v768
        %v1960 = vunpack.c.l.bf16 %v769
        %v1961 = vunpack.c.h.bf16 %v769
        %v1962 = vunpack.c.l.bf16 %v770
        %v1963 = vunpack.c.h.bf16 %v770
        %v1964 = vunpack.c.l.bf16 %v771
        %v1965 = vunpack.c.h.bf16 %v771
        %v1966 = vunpack.c.l.bf16 %v772
        %v1967 = vunpack.c.h.bf16 %v772
        %v1968 = vunpack.c.l.bf16 %v773
        %v1969 = vunpack.c.h.bf16 %v773
        %v1970 = vunpack.c.l.bf16 %v774
        %v1971 = vunpack.c.h.bf16 %v774
        %v1972 = vunpack.c.l.bf16 %v775
        %v1973 = vunpack.c.h.bf16 %v775
        %v1974 = vunpack.c.l.bf16 %v776
        %v1975 = vunpack.c.h.bf16 %v776
        %v1976 = vunpack.c.l.bf16 %v777
        %v1977 = vunpack.c.h.bf16 %v777
        %v1978 = vunpack.c.l.bf16 %v778
        %v1979 = vunpack.c.h.bf16 %v778
        %v1980 = vunpack.c.l.bf16 %v779
        %v1981 = vunpack.c.h.bf16 %v779
        %v1982 = vunpack.c.l.bf16 %v780
        %v1983 = vunpack.c.h.bf16 %v780
        %v1984 = vunpack.c.l.bf16 %v781
        %v1985 = vunpack.c.h.bf16 %v781
        %v1986 = vunpack.c.l.bf16 %v782
        %v1987 = vunpack.c.h.bf16 %v782
        %v1988 = vunpack.c.l.bf16 %v783
        %v1989 = vunpack.c.h.bf16 %v783
        %v1990 = vunpack.c.l.bf16 %v784
        %v1991 = vunpack.c.h.bf16 %v784
        %v1992 = vunpack.c.l.bf16 %v785
        %v1993 = vunpack.c.h.bf16 %v785
        %v1994 = vunpack.c.l.bf16 %v786
        %v1995 = vunpack.c.h.bf16 %v786
        %v1996 = vunpack.c.l.bf16 %v787
        %v1997 = vunpack.c.h.bf16 %v787
        %v1998 = vunpack.c.l.bf16 %v788
        %v1999 = vunpack.c.h.bf16 %v788
        %v2000 = vunpack.c.l.bf16 %v789
        %v2001 = vunpack.c.h.bf16 %v789
        %v2002 = vunpack.c.l.bf16 %v790
        %v2003 = vunpack.c.h.bf16 %v790
        %v2004 = vunpack.c.l.bf16 %v791
        %v2005 = vunpack.c.h.bf16 %v791
        %v2006 = vunpack.c.l.bf16 %v792
        %v2007 = vunpack.c.h.bf16 %v792
        %v2008 = vunpack.c.l.bf16 %v793
        %v2009 = vunpack.c.h.bf16 %v793
        %v2010 = vunpack.c.l.bf16 %v794
        %v2011 = vunpack.c.h.bf16 %v794
        %v2012 = vunpack.c.l.bf16 %v795
        %v2013 = vunpack.c.h.bf16 %v795
        %v2014 = vunpack.c.l.bf16 %v796
        %v2015 = vunpack.c.h.bf16 %v796
        %v2016 = vunpack.c.l.bf16 %v797
        %v2017 = vunpack.c.h.bf16 %v797
        %v2018 = vunpack.c.l.bf16 %v798
        %v2019 = vunpack.c.h.bf16 %v798
        %v2020 = vunpack.c.l.bf16 %v799
        %v2021 = vunpack.c.h.bf16 %v799
        %v2022 = vunpack.c.l.bf16 %v800
        %v2023 = vunpack.c.h.bf16 %v800
        %v2024 = vunpack.c.l.bf16 %v801
        %v2025 = vunpack.c.h.bf16 %v801
        %v2026 = vunpack.c.l.bf16 %v802
        %v2027 = vunpack.c.h.bf16 %v802
        %v2028 = vunpack.c.l.bf16 %v803
        %v2029 = vunpack.c.h.bf16 %v803
        %v2030 = vunpack.c.l.bf16 %v804
        %v2031 = vunpack.c.h.bf16 %v804
        %v2032 = vunpack.c.l.bf16 %v805
        %v2033 = vunpack.c.h.bf16 %v805
        %v2034 = vunpack.c.l.bf16 %v806
        %v2035 = vunpack.c.h.bf16 %v806
        %v2036 = vunpack.c.l.bf16 %v807
        %v2037 = vunpack.c.h.bf16 %v807
        %v2038 = vunpack.c.l.bf16 %v808
        %v2039 = vunpack.c.h.bf16 %v808
        %v2040 = vunpack.c.l.bf16 %v809
        %v2041 = vunpack.c.h.bf16 %v809
        %v2042 = vunpack.c.l.bf16 %v810
        %v2043 = vunpack.c.h.bf16 %v810
        %v2044 = vunpack.c.l.bf16 %v811
        %v2045 = vunpack.c.h.bf16 %v811
        %v2046 = vunpack.c.l.bf16 %v812
        %v2047 = vunpack.c.h.bf16 %v812
        %v2048 = vunpack.c.l.bf16 %v813
        %v2049 = vunpack.c.h.bf16 %v813
        %v2050 = vunpack.c.l.bf16 %v814
        %v2051 = vunpack.c.h.bf16 %v814
        %v2052 = vunpack.c.l.bf16 %v815
        %v2053 = vunpack.c.h.bf16 %v815
        %v2054 = vunpack.c.l.bf16 %v816
        %v2055 = vunpack.c.h.bf16 %v816
        %v2056 = vunpack.c.l.bf16 %v817
        %v2057 = vunpack.c.h.bf16 %v817
        %v2058 = vunpack.c.l.bf16 %v818
        %v2059 = vunpack.c.h.bf16 %v818
        %v2060 = vunpack.c.l.bf16 %v819
        %v2061 = vunpack.c.h.bf16 %v819
        %v2062 = vunpack.c.l.bf16 %v820
        %v2063 = vunpack.c.h.bf16 %v820
        %v2064 = vunpack.c.l.bf16 %v821
        %v2065 = vunpack.c.h.bf16 %v821
        %v2066 = vunpack.c.l.bf16 %v822
        %v2067 = vunpack.c.h.bf16 %v822
        %v2068 = vunpack.c.l.bf16 %v823
        %v2069 = vunpack.c.h.bf16 %v823
        %v2070 = vunpack.c.l.bf16 %v824
        %v2071 = vunpack.c.h.bf16 %v824
        %v2072 = vunpack.c.l.bf16 %v825
        %v2073 = vunpack.c.h.bf16 %v825
        %v2074 = vunpack.c.l.bf16 %v826
        %v2075 = vunpack.c.h.bf16 %v826
        %v2076 = vunpack.c.l.bf16 %v827
        %v2077 = vunpack.c.h.bf16 %v827
        %v2078 = vunpack.c.l.bf16 %v828
        %v2079 = vunpack.c.h.bf16 %v828
        %v2080 = vunpack.c.l.bf16 %v829
        %v2081 = vunpack.c.h.bf16 %v829
        %v2082 = vunpack.c.l.bf16 %v830
        %v2083 = vunpack.c.h.bf16 %v830
        %v2084 = vunpack.c.l.bf16 %v831
        %v2085 = vunpack.c.h.bf16 %v831
        %v2086 = vunpack.c.l.bf16 %v832
        %v2087 = vunpack.c.h.bf16 %v832
        %v2088 = vunpack.c.l.bf16 %v833
        %v2089 = vunpack.c.h.bf16 %v833
        %v2090 = vunpack.c.l.bf16 %v834
        %v2091 = vunpack.c.h.bf16 %v834
        %v2092 = vunpack.c.l.bf16 %v835
        %v2093 = vunpack.c.h.bf16 %v835
        %v2094 = vunpack.c.l.bf16 %v836
        %v2095 = vunpack.c.h.bf16 %v836
        %v2096 = vunpack.c.l.bf16 %v837
        %v2097 = vunpack.c.h.bf16 %v837
        %v2098 = vunpack.c.l.bf16 %v838
        %v2099 = vunpack.c.h.bf16 %v838
        %v2100 = vunpack.c.l.bf16 %v839
        %v2101 = vunpack.c.h.bf16 %v839
        %v2102 = vunpack.c.l.bf16 %v840
        %v2103 = vunpack.c.h.bf16 %v840
        %v2104 = vunpack.c.l.bf16 %v841
        %v2105 = vunpack.c.h.bf16 %v841
        %v2106 = vunpack.c.l.bf16 %v842
        %v2107 = vunpack.c.h.bf16 %v842
        %v2108 = vunpack.c.l.bf16 %v843
        %v2109 = vunpack.c.h.bf16 %v843
        %v2110 = vunpack.c.l.bf16 %v844
        %v2111 = vunpack.c.h.bf16 %v844
        %v2112 = vunpack.c.l.bf16 %v845
        %v2113 = vunpack.c.h.bf16 %v845
        %v2114 = vunpack.c.l.bf16 %v846
        %v2115 = vunpack.c.h.bf16 %v846
        %v2116 = vunpack.c.l.bf16 %v847
        %v2117 = vunpack.c.h.bf16 %v847
        %v2118 = vunpack.c.l.bf16 %v848
        %v2119 = vunpack.c.h.bf16 %v848
        %v2120 = vunpack.c.l.bf16 %v849
        %v2121 = vunpack.c.h.bf16 %v849
        %v2122 = vunpack.c.l.bf16 %v850
        %v2123 = vunpack.c.h.bf16 %v850
        %v2124 = vunpack.c.l.bf16 %v851
        %v2125 = vunpack.c.h.bf16 %v851
        %v2126 = vunpack.c.l.bf16 %v852
        %v2127 = vunpack.c.h.bf16 %v852
        %v2128 = vunpack.c.l.bf16 %v853
        %v2129 = vunpack.c.h.bf16 %v853
        %v2130 = vunpack.c.l.bf16 %v854
        %v2131 = vunpack.c.h.bf16 %v854
        %v2132 = vunpack.c.l.bf16 %v855
        %v2133 = vunpack.c.h.bf16 %v855
        %v2134 = vunpack.c.l.bf16 %v856
        %v2135 = vunpack.c.h.bf16 %v856
        %v2136 = vunpack.c.l.bf16 %v857
        %v2137 = vunpack.c.h.bf16 %v857
        %v2138 = vadd.f32 %v858, %v859
        %v2139 = vadd.f32 %v2138, %v860
        %v2140 = vadd.f32 %v2139, %v861
        %v2141 = vadd.f32 %v2140, %v862
        %v2142 = vadd.f32 %v2141, %v863
        %v2143 = vadd.f32 %v2142, %v864
        %v2144 = vadd.f32 %v2143, %v865
        %v2145 = vadd.f32 %v2144, %v866
        %v2146 = vadd.f32 %v2145, %v867
        %2147 = vadd.xlane.f32.xlu0 %v2146
        %v2148 = vpop.xlane.xlu0 %2147
        %v2149 = vadd.f32 %v868, %v869
        %v2150 = vadd.f32 %v2149, %v870
        %v2151 = vadd.f32 %v2150, %v871
        %v2152 = vadd.f32 %v2151, %v872
        %v2153 = vadd.f32 %v2152, %v873
        %v2154 = vadd.f32 %v2153, %v874
        %v2155 = vadd.f32 %v2154, %v875
        %v2156 = vadd.f32 %v2155, %v876
        %v2157 = vadd.f32 %v2156, %v877
        %2158 = vadd.xlane.f32.xlu0 %v2157
        %v2159 = vpop.xlane.xlu0 %2158
        %v2160 = vadd.f32 %v878, %v879
        %v2161 = vadd.f32 %v2160, %v880
        %v2162 = vadd.f32 %v2161, %v881
        %v2163 = vadd.f32 %v2162, %v882
        %v2164 = vadd.f32 %v2163, %v883
        %v2165 = vadd.f32 %v2164, %v884
        %v2166 = vadd.f32 %v2165, %v885
        %v2167 = vadd.f32 %v2166, %v886
        %v2168 = vadd.f32 %v2167, %v887
        %2169 = vadd.xlane.f32.xlu0 %v2168
        %v2170 = vpop.xlane.xlu0 %2169
        %v2171 = vadd.f32 %v888, %v889
        %v2172 = vadd.f32 %v2171, %v890
        %v2173 = vadd.f32 %v2172, %v891
        %v2174 = vadd.f32 %v2173, %v892
        %v2175 = vadd.f32 %v2174, %v893
        %v2176 = vadd.f32 %v2175, %v894
        %v2177 = vadd.f32 %v2176, %v895
        %v2178 = vadd.f32 %v2177, %v896
        %v2179 = vadd.f32 %v2178, %v897
        %2180 = vadd.xlane.f32.xlu0 %v2179
        %v2181 = vpop.xlane.xlu0 %2180
        %v2182 = vadd.f32 %v898, %v899
        %v2183 = vadd.f32 %v2182, %v900
        %v2184 = vadd.f32 %v2183, %v901
        %v2185 = vadd.f32 %v2184, %v902
        %v2186 = vadd.f32 %v2185, %v903
        %v2187 = vadd.f32 %v2186, %v904
        %v2188 = vadd.f32 %v2187, %v905
        %v2189 = vadd.f32 %v2188, %v906
        %v2190 = vadd.f32 %v2189, %v907
        %2191 = vadd.xlane.f32.xlu0 %v2190
        %v2192 = vpop.xlane.xlu0 %2191
        %v2193 = vadd.f32 %v908, %v909
        %v2194 = vadd.f32 %v2193, %v910
        %v2195 = vadd.f32 %v2194, %v911
        %v2196 = vadd.f32 %v2195, %v912
        %v2197 = vadd.f32 %v2196, %v913
        %v2198 = vadd.f32 %v2197, %v914
        %v2199 = vadd.f32 %v2198, %v915
        %v2200 = vadd.f32 %v2199, %v916
        %v2201 = vadd.f32 %v2200, %v917
        %2202 = vadd.xlane.f32.xlu0 %v2201
        %v2203 = vpop.xlane.xlu0 %2202
        %v2204 = vadd.f32 %v918, %v919
        %v2205 = vadd.f32 %v2204, %v920
        %v2206 = vadd.f32 %v2205, %v921
        %v2207 = vadd.f32 %v2206, %v922
        %v2208 = vadd.f32 %v2207, %v923
        %v2209 = vadd.f32 %v2208, %v924
        %v2210 = vadd.f32 %v2209, %v925
        %v2211 = vadd.f32 %v2210, %v926
        %v2212 = vadd.f32 %v2211, %v927
        %2213 = vadd.xlane.f32.xlu0 %v2212
        %v2214 = vpop.xlane.xlu0 %2213
        %v2215 = vadd.f32 %v928, %v929
        %v2216 = vadd.f32 %v2215, %v930
        %v2217 = vadd.f32 %v2216, %v931
        %v2218 = vadd.f32 %v2217, %v932
        %v2219 = vadd.f32 %v2218, %v933
        %v2220 = vadd.f32 %v2219, %v934
        %v2221 = vadd.f32 %v2220, %v935
        %v2222 = vadd.f32 %v2221, %v936
        %v2223 = vadd.f32 %v2222, %v937
        %2224 = vadd.xlane.f32.xlu0 %v2223
        %v2225 = vpop.xlane.xlu0 %2224
        %v2226 = vadd.f32 %v938, %v939
        %v2227 = vadd.f32 %v2226, %v940
        %v2228 = vadd.f32 %v2227, %v941
        %v2229 = vadd.f32 %v2228, %v942
        %v2230 = vadd.f32 %v2229, %v943
        %v2231 = vadd.f32 %v2230, %v944
        %v2232 = vadd.f32 %v2231, %v945
        %v2233 = vadd.f32 %v2232, %v946
        %v2234 = vadd.f32 %v2233, %v947
        %2235 = vadd.xlane.f32.xlu0 %v2234
        %v2236 = vpop.xlane.xlu0 %2235
        %v2237 = vadd.f32 %v948, %v949
        %v2238 = vadd.f32 %v2237, %v950
        %v2239 = vadd.f32 %v2238, %v951
        %v2240 = vadd.f32 %v2239, %v952
        %v2241 = vadd.f32 %v2240, %v953
        %v2242 = vadd.f32 %v2241, %v954
        %v2243 = vadd.f32 %v2242, %v955
        %v2244 = vadd.f32 %v2243, %v956
        %v2245 = vadd.f32 %v2244, %v957
        %2246 = vadd.xlane.f32.xlu0 %v2245
        %v2247 = vpop.xlane.xlu0 %2246
        %v2248 = vadd.f32 %v958, %v959
        %v2249 = vadd.f32 %v2248, %v960
        %v2250 = vadd.f32 %v2249, %v961
        %v2251 = vadd.f32 %v2250, %v962
        %v2252 = vadd.f32 %v2251, %v963
        %v2253 = vadd.f32 %v2252, %v964
        %v2254 = vadd.f32 %v2253, %v965
        %v2255 = vadd.f32 %v2254, %v966
        %v2256 = vadd.f32 %v2255, %v967
        %2257 = vadd.xlane.f32.xlu0 %v2256
        %v2258 = vpop.xlane.xlu0 %2257
        %v2259 = vadd.f32 %v968, %v969
        %v2260 = vadd.f32 %v2259, %v970
        %v2261 = vadd.f32 %v2260, %v971
        %v2262 = vadd.f32 %v2261, %v972
        %v2263 = vadd.f32 %v2262, %v973
        %v2264 = vadd.f32 %v2263, %v974
        %v2265 = vadd.f32 %v2264, %v975
        %v2266 = vadd.f32 %v2265, %v976
        %v2267 = vadd.f32 %v2266, %v977
        %2268 = vadd.xlane.f32.xlu0 %v2267
        %v2269 = vpop.xlane.xlu0 %2268
        %v2270 = vadd.f32 %v978, %v979
        %v2271 = vadd.f32 %v2270, %v980
        %v2272 = vadd.f32 %v2271, %v981
        %v2273 = vadd.f32 %v2272, %v982
        %v2274 = vadd.f32 %v2273, %v983
        %v2275 = vadd.f32 %v2274, %v984
        %v2276 = vadd.f32 %v2275, %v985
        %v2277 = vadd.f32 %v2276, %v986
        %v2278 = vadd.f32 %v2277, %v987
        %2279 = vadd.xlane.f32.xlu0 %v2278
        %v2280 = vpop.xlane.xlu0 %2279
        %v2281 = vadd.f32 %v988, %v989
        %v2282 = vadd.f32 %v2281, %v990
        %v2283 = vadd.f32 %v2282, %v991
        %v2284 = vadd.f32 %v2283, %v992
        %v2285 = vadd.f32 %v2284, %v993
        %v2286 = vadd.f32 %v2285, %v994
        %v2287 = vadd.f32 %v2286, %v995
        %v2288 = vadd.f32 %v2287, %v996
        %v2289 = vadd.f32 %v2288, %v997
        %2290 = vadd.xlane.f32.xlu0 %v2289
        %v2291 = vpop.xlane.xlu0 %2290
        %v2292 = vadd.f32 %v998, %v999
        %v2293 = vadd.f32 %v2292, %v1000
        %v2294 = vadd.f32 %v2293, %v1001
        %v2295 = vadd.f32 %v2294, %v1002
        %v2296 = vadd.f32 %v2295, %v1003
        %v2297 = vadd.f32 %v2296, %v1004
        %v2298 = vadd.f32 %v2297, %v1005
        %v2299 = vadd.f32 %v2298, %v1006
        %v2300 = vadd.f32 %v2299, %v1007
        %2301 = vadd.xlane.f32.xlu0 %v2300
        %v2302 = vpop.xlane.xlu0 %2301
        %v2303 = vadd.f32 %v1008, %v1009
        %v2304 = vadd.f32 %v2303, %v1010
        %v2305 = vadd.f32 %v2304, %v1011
        %v2306 = vadd.f32 %v2305, %v1012
        %v2307 = vadd.f32 %v2306, %v1013
        %v2308 = vadd.f32 %v2307, %v1014
        %v2309 = vadd.f32 %v2308, %v1015
        %v2310 = vadd.f32 %v2309, %v1016
        %v2311 = vadd.f32 %v2310, %v1017
        %2312 = vadd.xlane.f32.xlu0 %v2311
        %v2313 = vpop.xlane.xlu0 %2312
        %v2314 = vadd.f32 %v1018, %v1019
        %v2315 = vadd.f32 %v2314, %v1020
        %v2316 = vadd.f32 %v2315, %v1021
        %v2317 = vadd.f32 %v2316, %v1022
        %v2318 = vadd.f32 %v2317, %v1023
        %v2319 = vadd.f32 %v2318, %v1024
        %v2320 = vadd.f32 %v2319, %v1025
        %v2321 = vadd.f32 %v2320, %v1026
        %v2322 = vadd.f32 %v2321, %v1027
        %2323 = vadd.xlane.f32.xlu0 %v2322
        %v2324 = vpop.xlane.xlu0 %2323
        %v2325 = vadd.f32 %v1028, %v1029
        %v2326 = vadd.f32 %v2325, %v1030
        %v2327 = vadd.f32 %v2326, %v1031
        %v2328 = vadd.f32 %v2327, %v1032
        %v2329 = vadd.f32 %v2328, %v1033
        %v2330 = vadd.f32 %v2329, %v1034
        %v2331 = vadd.f32 %v2330, %v1035
        %v2332 = vadd.f32 %v2331, %v1036
        %v2333 = vadd.f32 %v2332, %v1037
        %2334 = vadd.xlane.f32.xlu0 %v2333
        %v2335 = vpop.xlane.xlu0 %2334
        %v2336 = vadd.f32 %v1038, %v1039
        %v2337 = vadd.f32 %v2336, %v1040
        %v2338 = vadd.f32 %v2337, %v1041
        %v2339 = vadd.f32 %v2338, %v1042
        %v2340 = vadd.f32 %v2339, %v1043
        %v2341 = vadd.f32 %v2340, %v1044
        %v2342 = vadd.f32 %v2341, %v1045
        %v2343 = vadd.f32 %v2342, %v1046
        %v2344 = vadd.f32 %v2343, %v1047
        %2345 = vadd.xlane.f32.xlu0 %v2344
        %v2346 = vpop.xlane.xlu0 %2345
        %v2347 = vadd.f32 %v1048, %v1049
        %v2348 = vadd.f32 %v2347, %v1050
        %v2349 = vadd.f32 %v2348, %v1051
        %v2350 = vadd.f32 %v2349, %v1052
        %v2351 = vadd.f32 %v2350, %v1053
        %v2352 = vadd.f32 %v2351, %v1054
        %v2353 = vadd.f32 %v2352, %v1055
        %v2354 = vadd.f32 %v2353, %v1056
        %v2355 = vadd.f32 %v2354, %v1057
        %2356 = vadd.xlane.f32.xlu0 %v2355
        %v2357 = vpop.xlane.xlu0 %2356
        %v2358 = vadd.f32 %v1058, %v1059
        %v2359 = vadd.f32 %v2358, %v1060
        %v2360 = vadd.f32 %v2359, %v1061
        %v2361 = vadd.f32 %v2360, %v1062
        %v2362 = vadd.f32 %v2361, %v1063
        %v2363 = vadd.f32 %v2362, %v1064
        %v2364 = vadd.f32 %v2363, %v1065
        %v2365 = vadd.f32 %v2364, %v1066
        %v2366 = vadd.f32 %v2365, %v1067
        %2367 = vadd.xlane.f32.xlu0 %v2366
        %v2368 = vpop.xlane.xlu0 %2367
        %v2369 = vadd.f32 %v1068, %v1069
        %v2370 = vadd.f32 %v2369, %v1070
        %v2371 = vadd.f32 %v2370, %v1071
        %v2372 = vadd.f32 %v2371, %v1072
        %v2373 = vadd.f32 %v2372, %v1073
        %v2374 = vadd.f32 %v2373, %v1074
        %v2375 = vadd.f32 %v2374, %v1075
        %v2376 = vadd.f32 %v2375, %v1076
        %v2377 = vadd.f32 %v2376, %v1077
        %2378 = vadd.xlane.f32.xlu0 %v2377
        %v2379 = vpop.xlane.xlu0 %2378
        %v2380 = vadd.f32 %v1078, %v1079
        %v2381 = vadd.f32 %v2380, %v1080
        %v2382 = vadd.f32 %v2381, %v1081
        %v2383 = vadd.f32 %v2382, %v1082
        %v2384 = vadd.f32 %v2383, %v1083
        %v2385 = vadd.f32 %v2384, %v1084
        %v2386 = vadd.f32 %v2385, %v1085
        %v2387 = vadd.f32 %v2386, %v1086
        %v2388 = vadd.f32 %v2387, %v1087
        %2389 = vadd.xlane.f32.xlu0 %v2388
        %v2390 = vpop.xlane.xlu0 %2389
        %v2391 = vadd.f32 %v1088, %v1089
        %v2392 = vadd.f32 %v2391, %v1090
        %v2393 = vadd.f32 %v2392, %v1091
        %v2394 = vadd.f32 %v2393, %v1092
        %v2395 = vadd.f32 %v2394, %v1093
        %v2396 = vadd.f32 %v2395, %v1094
        %v2397 = vadd.f32 %v2396, %v1095
        %v2398 = vadd.f32 %v2397, %v1096
        %v2399 = vadd.f32 %v2398, %v1097
        %2400 = vadd.xlane.f32.xlu0 %v2399
        %v2401 = vpop.xlane.xlu0 %2400
        %v2402 = vadd.f32 %v1098, %v1099
        %v2403 = vadd.f32 %v2402, %v1100
        %v2404 = vadd.f32 %v2403, %v1101
        %v2405 = vadd.f32 %v2404, %v1102
        %v2406 = vadd.f32 %v2405, %v1103
        %v2407 = vadd.f32 %v2406, %v1104
        %v2408 = vadd.f32 %v2407, %v1105
        %v2409 = vadd.f32 %v2408, %v1106
        %v2410 = vadd.f32 %v2409, %v1107
        %2411 = vadd.xlane.f32.xlu0 %v2410
        %v2412 = vpop.xlane.xlu0 %2411
        %v2413 = vadd.f32 %v1108, %v1109
        %v2414 = vadd.f32 %v2413, %v1110
        %v2415 = vadd.f32 %v2414, %v1111
        %v2416 = vadd.f32 %v2415, %v1112
        %v2417 = vadd.f32 %v2416, %v1113
        %v2418 = vadd.f32 %v2417, %v1114
        %v2419 = vadd.f32 %v2418, %v1115
        %v2420 = vadd.f32 %v2419, %v1116
        %v2421 = vadd.f32 %v2420, %v1117
        %2422 = vadd.xlane.f32.xlu0 %v2421
        %v2423 = vpop.xlane.xlu0 %2422
        %v2424 = vadd.f32 %v1118, %v1119
        %v2425 = vadd.f32 %v2424, %v1120
        %v2426 = vadd.f32 %v2425, %v1121
        %v2427 = vadd.f32 %v2426, %v1122
        %v2428 = vadd.f32 %v2427, %v1123
        %v2429 = vadd.f32 %v2428, %v1124
        %v2430 = vadd.f32 %v2429, %v1125
        %v2431 = vadd.f32 %v2430, %v1126
        %v2432 = vadd.f32 %v2431, %v1127
        %2433 = vadd.xlane.f32.xlu0 %v2432
        %v2434 = vpop.xlane.xlu0 %2433
        %v2435 = vadd.f32 %v1128, %v1129
        %v2436 = vadd.f32 %v2435, %v1130
        %v2437 = vadd.f32 %v2436, %v1131
        %v2438 = vadd.f32 %v2437, %v1132
        %v2439 = vadd.f32 %v2438, %v1133
        %v2440 = vadd.f32 %v2439, %v1134
        %v2441 = vadd.f32 %v2440, %v1135
        %v2442 = vadd.f32 %v2441, %v1136
        %v2443 = vadd.f32 %v2442, %v1137
        %2444 = vadd.xlane.f32.xlu0 %v2443
        %v2445 = vpop.xlane.xlu0 %2444
        %v2446 = vadd.f32 %v1138, %v1139
        %v2447 = vadd.f32 %v2446, %v1140
        %v2448 = vadd.f32 %v2447, %v1141
        %v2449 = vadd.f32 %v2448, %v1142
        %v2450 = vadd.f32 %v2449, %v1143
        %v2451 = vadd.f32 %v2450, %v1144
        %v2452 = vadd.f32 %v2451, %v1145
        %v2453 = vadd.f32 %v2452, %v1146
        %v2454 = vadd.f32 %v2453, %v1147
        %2455 = vadd.xlane.f32.xlu0 %v2454
        %v2456 = vpop.xlane.xlu0 %2455
        %v2457 = vadd.f32 %v1148, %v1149
        %v2458 = vadd.f32 %v2457, %v1150
        %v2459 = vadd.f32 %v2458, %v1151
        %v2460 = vadd.f32 %v2459, %v1152
        %v2461 = vadd.f32 %v2460, %v1153
        %v2462 = vadd.f32 %v2461, %v1154
        %v2463 = vadd.f32 %v2462, %v1155
        %v2464 = vadd.f32 %v2463, %v1156
        %v2465 = vadd.f32 %v2464, %v1157
        %2466 = vadd.xlane.f32.xlu0 %v2465
        %v2467 = vpop.xlane.xlu0 %2466
        %v2468 = vadd.f32 %v1158, %v1159
        %v2469 = vadd.f32 %v2468, %v1160
        %v2470 = vadd.f32 %v2469, %v1161
        %v2471 = vadd.f32 %v2470, %v1162
        %v2472 = vadd.f32 %v2471, %v1163
        %v2473 = vadd.f32 %v2472, %v1164
        %v2474 = vadd.f32 %v2473, %v1165
        %v2475 = vadd.f32 %v2474, %v1166
        %v2476 = vadd.f32 %v2475, %v1167
        %2477 = vadd.xlane.f32.xlu0 %v2476
        %v2478 = vpop.xlane.xlu0 %2477
        %v2479 = vadd.f32 %v1168, %v1169
        %v2480 = vadd.f32 %v2479, %v1170
        %v2481 = vadd.f32 %v2480, %v1171
        %v2482 = vadd.f32 %v2481, %v1172
        %v2483 = vadd.f32 %v2482, %v1173
        %v2484 = vadd.f32 %v2483, %v1174
        %v2485 = vadd.f32 %v2484, %v1175
        %v2486 = vadd.f32 %v2485, %v1176
        %v2487 = vadd.f32 %v2486, %v1177
        %2488 = vadd.xlane.f32.xlu0 %v2487
        %v2489 = vpop.xlane.xlu0 %2488
        %v2490 = vadd.f32 %v1178, %v1179
        %v2491 = vadd.f32 %v2490, %v1180
        %v2492 = vadd.f32 %v2491, %v1181
        %v2493 = vadd.f32 %v2492, %v1182
        %v2494 = vadd.f32 %v2493, %v1183
        %v2495 = vadd.f32 %v2494, %v1184
        %v2496 = vadd.f32 %v2495, %v1185
        %v2497 = vadd.f32 %v2496, %v1186
        %v2498 = vadd.f32 %v2497, %v1187
        %2499 = vadd.xlane.f32.xlu0 %v2498
        %v2500 = vpop.xlane.xlu0 %2499
        %v2501 = vadd.f32 %v1188, %v1189
        %v2502 = vadd.f32 %v2501, %v1190
        %v2503 = vadd.f32 %v2502, %v1191
        %v2504 = vadd.f32 %v2503, %v1192
        %v2505 = vadd.f32 %v2504, %v1193
        %v2506 = vadd.f32 %v2505, %v1194
        %v2507 = vadd.f32 %v2506, %v1195
        %v2508 = vadd.f32 %v2507, %v1196
        %v2509 = vadd.f32 %v2508, %v1197
        %2510 = vadd.xlane.f32.xlu0 %v2509
        %v2511 = vpop.xlane.xlu0 %2510
        %v2512 = vadd.f32 %v1198, %v1199
        %v2513 = vadd.f32 %v2512, %v1200
        %v2514 = vadd.f32 %v2513, %v1201
        %v2515 = vadd.f32 %v2514, %v1202
        %v2516 = vadd.f32 %v2515, %v1203
        %v2517 = vadd.f32 %v2516, %v1204
        %v2518 = vadd.f32 %v2517, %v1205
        %v2519 = vadd.f32 %v2518, %v1206
        %v2520 = vadd.f32 %v2519, %v1207
        %2521 = vadd.xlane.f32.xlu0 %v2520
        %v2522 = vpop.xlane.xlu0 %2521
        %v2523 = vadd.f32 %v1208, %v1209
        %v2524 = vadd.f32 %v2523, %v1210
        %v2525 = vadd.f32 %v2524, %v1211
        %v2526 = vadd.f32 %v2525, %v1212
        %v2527 = vadd.f32 %v2526, %v1213
        %v2528 = vadd.f32 %v2527, %v1214
        %v2529 = vadd.f32 %v2528, %v1215
        %v2530 = vadd.f32 %v2529, %v1216
        %v2531 = vadd.f32 %v2530, %v1217
        %2532 = vadd.xlane.f32.xlu0 %v2531
        %v2533 = vpop.xlane.xlu0 %2532
        %v2534 = vadd.f32 %v1218, %v1219
        %v2535 = vadd.f32 %v2534, %v1220
        %v2536 = vadd.f32 %v2535, %v1221
        %v2537 = vadd.f32 %v2536, %v1222
        %v2538 = vadd.f32 %v2537, %v1223
        %v2539 = vadd.f32 %v2538, %v1224
        %v2540 = vadd.f32 %v2539, %v1225
        %v2541 = vadd.f32 %v2540, %v1226
        %v2542 = vadd.f32 %v2541, %v1227
        %2543 = vadd.xlane.f32.xlu0 %v2542
        %v2544 = vpop.xlane.xlu0 %2543
        %v2545 = vadd.f32 %v1228, %v1229
        %v2546 = vadd.f32 %v2545, %v1230
        %v2547 = vadd.f32 %v2546, %v1231
        %v2548 = vadd.f32 %v2547, %v1232
        %v2549 = vadd.f32 %v2548, %v1233
        %v2550 = vadd.f32 %v2549, %v1234
        %v2551 = vadd.f32 %v2550, %v1235
        %v2552 = vadd.f32 %v2551, %v1236
        %v2553 = vadd.f32 %v2552, %v1237
        %2554 = vadd.xlane.f32.xlu0 %v2553
        %v2555 = vpop.xlane.xlu0 %2554
        %v2556 = vadd.f32 %v1238, %v1239
        %v2557 = vadd.f32 %v2556, %v1240
        %v2558 = vadd.f32 %v2557, %v1241
        %v2559 = vadd.f32 %v2558, %v1242
        %v2560 = vadd.f32 %v2559, %v1243
        %v2561 = vadd.f32 %v2560, %v1244
        %v2562 = vadd.f32 %v2561, %v1245
        %v2563 = vadd.f32 %v2562, %v1246
        %v2564 = vadd.f32 %v2563, %v1247
        %2565 = vadd.xlane.f32.xlu0 %v2564
        %v2566 = vpop.xlane.xlu0 %2565
        %v2567 = vadd.f32 %v1248, %v1249
        %v2568 = vadd.f32 %v2567, %v1250
        %v2569 = vadd.f32 %v2568, %v1251
        %v2570 = vadd.f32 %v2569, %v1252
        %v2571 = vadd.f32 %v2570, %v1253
        %v2572 = vadd.f32 %v2571, %v1254
        %v2573 = vadd.f32 %v2572, %v1255
        %v2574 = vadd.f32 %v2573, %v1256
        %v2575 = vadd.f32 %v2574, %v1257
        %2576 = vadd.xlane.f32.xlu0 %v2575
        %v2577 = vpop.xlane.xlu0 %2576
        %v2578 = vadd.f32 %v1258, %v1259
        %v2579 = vadd.f32 %v2578, %v1260
        %v2580 = vadd.f32 %v2579, %v1261
        %v2581 = vadd.f32 %v2580, %v1262
        %v2582 = vadd.f32 %v2581, %v1263
        %v2583 = vadd.f32 %v2582, %v1264
        %v2584 = vadd.f32 %v2583, %v1265
        %v2585 = vadd.f32 %v2584, %v1266
        %v2586 = vadd.f32 %v2585, %v1267
        %2587 = vadd.xlane.f32.xlu0 %v2586
        %v2588 = vpop.xlane.xlu0 %2587
        %v2589 = vadd.f32 %v1268, %v1269
        %v2590 = vadd.f32 %v2589, %v1270
        %v2591 = vadd.f32 %v2590, %v1271
        %v2592 = vadd.f32 %v2591, %v1272
        %v2593 = vadd.f32 %v2592, %v1273
        %v2594 = vadd.f32 %v2593, %v1274
        %v2595 = vadd.f32 %v2594, %v1275
        %v2596 = vadd.f32 %v2595, %v1276
        %v2597 = vadd.f32 %v2596, %v1277
        %2598 = vadd.xlane.f32.xlu0 %v2597
        %v2599 = vpop.xlane.xlu0 %2598
        %v2600 = vadd.f32 %v1278, %v1279
        %v2601 = vadd.f32 %v2600, %v1280
        %v2602 = vadd.f32 %v2601, %v1281
        %v2603 = vadd.f32 %v2602, %v1282
        %v2604 = vadd.f32 %v2603, %v1283
        %v2605 = vadd.f32 %v2604, %v1284
        %v2606 = vadd.f32 %v2605, %v1285
        %v2607 = vadd.f32 %v2606, %v1286
        %v2608 = vadd.f32 %v2607, %v1287
        %2609 = vadd.xlane.f32.xlu0 %v2608
        %v2610 = vpop.xlane.xlu0 %2609
        %v2611 = vadd.f32 %v1288, %v1289
        %v2612 = vadd.f32 %v2611, %v1290
        %v2613 = vadd.f32 %v2612, %v1291
        %v2614 = vadd.f32 %v2613, %v1292
        %v2615 = vadd.f32 %v2614, %v1293
        %v2616 = vadd.f32 %v2615, %v1294
        %v2617 = vadd.f32 %v2616, %v1295
        %v2618 = vadd.f32 %v2617, %v1296
        %v2619 = vadd.f32 %v2618, %v1297
        %2620 = vadd.xlane.f32.xlu0 %v2619
        %v2621 = vpop.xlane.xlu0 %2620
        %v2622 = vadd.f32 %v1298, %v1299
        %v2623 = vadd.f32 %v2622, %v1300
        %v2624 = vadd.f32 %v2623, %v1301
        %v2625 = vadd.f32 %v2624, %v1302
        %v2626 = vadd.f32 %v2625, %v1303
        %v2627 = vadd.f32 %v2626, %v1304
        %v2628 = vadd.f32 %v2627, %v1305
        %v2629 = vadd.f32 %v2628, %v1306
        %v2630 = vadd.f32 %v2629, %v1307
        %2631 = vadd.xlane.f32.xlu0 %v2630
        %v2632 = vpop.xlane.xlu0 %2631
        %v2633 = vadd.f32 %v1308, %v1309
        %v2634 = vadd.f32 %v2633, %v1310
        %v2635 = vadd.f32 %v2634, %v1311
        %v2636 = vadd.f32 %v2635, %v1312
        %v2637 = vadd.f32 %v2636, %v1313
        %v2638 = vadd.f32 %v2637, %v1314
        %v2639 = vadd.f32 %v2638, %v1315
        %v2640 = vadd.f32 %v2639, %v1316
        %v2641 = vadd.f32 %v2640, %v1317
        %2642 = vadd.xlane.f32.xlu0 %v2641
        %v2643 = vpop.xlane.xlu0 %2642
        %v2644 = vadd.f32 %v1318, %v1319
        %v2645 = vadd.f32 %v2644, %v1320
        %v2646 = vadd.f32 %v2645, %v1321
        %v2647 = vadd.f32 %v2646, %v1322
        %v2648 = vadd.f32 %v2647, %v1323
        %v2649 = vadd.f32 %v2648, %v1324
        %v2650 = vadd.f32 %v2649, %v1325
        %v2651 = vadd.f32 %v2650, %v1326
        %v2652 = vadd.f32 %v2651, %v1327
        %2653 = vadd.xlane.f32.xlu0 %v2652
        %v2654 = vpop.xlane.xlu0 %2653
        %v2655 = vadd.f32 %v1328, %v1329
        %v2656 = vadd.f32 %v2655, %v1330
        %v2657 = vadd.f32 %v2656, %v1331
        %v2658 = vadd.f32 %v2657, %v1332
        %v2659 = vadd.f32 %v2658, %v1333
        %v2660 = vadd.f32 %v2659, %v1334
        %v2661 = vadd.f32 %v2660, %v1335
        %v2662 = vadd.f32 %v2661, %v1336
        %v2663 = vadd.f32 %v2662, %v1337
        %2664 = vadd.xlane.f32.xlu0 %v2663
        %v2665 = vpop.xlane.xlu0 %2664
        %v2666 = vadd.f32 %v1338, %v1339
        %v2667 = vadd.f32 %v2666, %v1340
        %v2668 = vadd.f32 %v2667, %v1341
        %v2669 = vadd.f32 %v2668, %v1342
        %v2670 = vadd.f32 %v2669, %v1343
        %v2671 = vadd.f32 %v2670, %v1344
        %v2672 = vadd.f32 %v2671, %v1345
        %v2673 = vadd.f32 %v2672, %v1346
        %v2674 = vadd.f32 %v2673, %v1347
        %2675 = vadd.xlane.f32.xlu0 %v2674
        %v2676 = vpop.xlane.xlu0 %2675
        %v2677 = vadd.f32 %v1348, %v1349
        %v2678 = vadd.f32 %v2677, %v1350
        %v2679 = vadd.f32 %v2678, %v1351
        %v2680 = vadd.f32 %v2679, %v1352
        %v2681 = vadd.f32 %v2680, %v1353
        %v2682 = vadd.f32 %v2681, %v1354
        %v2683 = vadd.f32 %v2682, %v1355
        %v2684 = vadd.f32 %v2683, %v1356
        %v2685 = vadd.f32 %v2684, %v1357
        %2686 = vadd.xlane.f32.xlu0 %v2685
        %v2687 = vpop.xlane.xlu0 %2686
        %v2688 = vadd.f32 %v1358, %v1359
        %v2689 = vadd.f32 %v2688, %v1360
        %v2690 = vadd.f32 %v2689, %v1361
        %v2691 = vadd.f32 %v2690, %v1362
        %v2692 = vadd.f32 %v2691, %v1363
        %v2693 = vadd.f32 %v2692, %v1364
        %v2694 = vadd.f32 %v2693, %v1365
        %v2695 = vadd.f32 %v2694, %v1366
        %v2696 = vadd.f32 %v2695, %v1367
        %2697 = vadd.xlane.f32.xlu0 %v2696
        %v2698 = vpop.xlane.xlu0 %2697
        %v2699 = vadd.f32 %v1368, %v1369
        %v2700 = vadd.f32 %v2699, %v1370
        %v2701 = vadd.f32 %v2700, %v1371
        %v2702 = vadd.f32 %v2701, %v1372
        %v2703 = vadd.f32 %v2702, %v1373
        %v2704 = vadd.f32 %v2703, %v1374
        %v2705 = vadd.f32 %v2704, %v1375
        %v2706 = vadd.f32 %v2705, %v1376
        %v2707 = vadd.f32 %v2706, %v1377
        %2708 = vadd.xlane.f32.xlu0 %v2707
        %v2709 = vpop.xlane.xlu0 %2708
        %v2710 = vadd.f32 %v1378, %v1379
        %v2711 = vadd.f32 %v2710, %v1380
        %v2712 = vadd.f32 %v2711, %v1381
        %v2713 = vadd.f32 %v2712, %v1382
        %v2714 = vadd.f32 %v2713, %v1383
        %v2715 = vadd.f32 %v2714, %v1384
        %v2716 = vadd.f32 %v2715, %v1385
        %v2717 = vadd.f32 %v2716, %v1386
        %v2718 = vadd.f32 %v2717, %v1387
        %2719 = vadd.xlane.f32.xlu0 %v2718
        %v2720 = vpop.xlane.xlu0 %2719
        %v2721 = vadd.f32 %v1388, %v1389
        %v2722 = vadd.f32 %v2721, %v1390
        %v2723 = vadd.f32 %v2722, %v1391
        %v2724 = vadd.f32 %v2723, %v1392
        %v2725 = vadd.f32 %v2724, %v1393
        %v2726 = vadd.f32 %v2725, %v1394
        %v2727 = vadd.f32 %v2726, %v1395
        %v2728 = vadd.f32 %v2727, %v1396
        %v2729 = vadd.f32 %v2728, %v1397
        %2730 = vadd.xlane.f32.xlu0 %v2729
        %v2731 = vpop.xlane.xlu0 %2730
        %v2732 = vadd.f32 %v1398, %v1399
        %v2733 = vadd.f32 %v2732, %v1400
        %v2734 = vadd.f32 %v2733, %v1401
        %v2735 = vadd.f32 %v2734, %v1402
        %v2736 = vadd.f32 %v2735, %v1403
        %v2737 = vadd.f32 %v2736, %v1404
        %v2738 = vadd.f32 %v2737, %v1405
        %v2739 = vadd.f32 %v2738, %v1406
        %v2740 = vadd.f32 %v2739, %v1407
        %2741 = vadd.xlane.f32.xlu0 %v2740
        %v2742 = vpop.xlane.xlu0 %2741
        %v2743 = vadd.f32 %v1408, %v1409
        %v2744 = vadd.f32 %v2743, %v1410
        %v2745 = vadd.f32 %v2744, %v1411
        %v2746 = vadd.f32 %v2745, %v1412
        %v2747 = vadd.f32 %v2746, %v1413
        %v2748 = vadd.f32 %v2747, %v1414
        %v2749 = vadd.f32 %v2748, %v1415
        %v2750 = vadd.f32 %v2749, %v1416
        %v2751 = vadd.f32 %v2750, %v1417
        %2752 = vadd.xlane.f32.xlu0 %v2751
        %v2753 = vpop.xlane.xlu0 %2752
        %v2754 = vadd.f32 %v1418, %v1419
        %v2755 = vadd.f32 %v2754, %v1420
        %v2756 = vadd.f32 %v2755, %v1421
        %v2757 = vadd.f32 %v2756, %v1422
        %v2758 = vadd.f32 %v2757, %v1423
        %v2759 = vadd.f32 %v2758, %v1424
        %v2760 = vadd.f32 %v2759, %v1425
        %v2761 = vadd.f32 %v2760, %v1426
        %v2762 = vadd.f32 %v2761, %v1427
        %2763 = vadd.xlane.f32.xlu0 %v2762
        %v2764 = vpop.xlane.xlu0 %2763
        %v2765 = vadd.f32 %v1428, %v1429
        %v2766 = vadd.f32 %v2765, %v1430
        %v2767 = vadd.f32 %v2766, %v1431
        %v2768 = vadd.f32 %v2767, %v1432
        %v2769 = vadd.f32 %v2768, %v1433
        %v2770 = vadd.f32 %v2769, %v1434
        %v2771 = vadd.f32 %v2770, %v1435
        %v2772 = vadd.f32 %v2771, %v1436
        %v2773 = vadd.f32 %v2772, %v1437
        %2774 = vadd.xlane.f32.xlu0 %v2773
        %v2775 = vpop.xlane.xlu0 %2774
        %v2776 = vadd.f32 %v1438, %v1439
        %v2777 = vadd.f32 %v2776, %v1440
        %v2778 = vadd.f32 %v2777, %v1441
        %v2779 = vadd.f32 %v2778, %v1442
        %v2780 = vadd.f32 %v2779, %v1443
        %v2781 = vadd.f32 %v2780, %v1444
        %v2782 = vadd.f32 %v2781, %v1445
        %v2783 = vadd.f32 %v2782, %v1446
        %v2784 = vadd.f32 %v2783, %v1447
        %2785 = vadd.xlane.f32.xlu0 %v2784
        %v2786 = vpop.xlane.xlu0 %2785
        %v2787 = vadd.f32 %v1448, %v1449
        %v2788 = vadd.f32 %v2787, %v1450
        %v2789 = vadd.f32 %v2788, %v1451
        %v2790 = vadd.f32 %v2789, %v1452
        %v2791 = vadd.f32 %v2790, %v1453
        %v2792 = vadd.f32 %v2791, %v1454
        %v2793 = vadd.f32 %v2792, %v1455
        %v2794 = vadd.f32 %v2793, %v1456
        %v2795 = vadd.f32 %v2794, %v1457
        %2796 = vadd.xlane.f32.xlu0 %v2795
        %v2797 = vpop.xlane.xlu0 %2796
        %v2798 = vadd.f32 %v1458, %v1459
        %v2799 = vadd.f32 %v2798, %v1460
        %v2800 = vadd.f32 %v2799, %v1461
        %v2801 = vadd.f32 %v2800, %v1462
        %v2802 = vadd.f32 %v2801, %v1463
        %v2803 = vadd.f32 %v2802, %v1464
        %v2804 = vadd.f32 %v2803, %v1465
        %v2805 = vadd.f32 %v2804, %v1466
        %v2806 = vadd.f32 %v2805, %v1467
        %2807 = vadd.xlane.f32.xlu0 %v2806
        %v2808 = vpop.xlane.xlu0 %2807
        %v2809 = vadd.f32 %v1468, %v1469
        %v2810 = vadd.f32 %v2809, %v1470
        %v2811 = vadd.f32 %v2810, %v1471
        %v2812 = vadd.f32 %v2811, %v1472
        %v2813 = vadd.f32 %v2812, %v1473
        %v2814 = vadd.f32 %v2813, %v1474
        %v2815 = vadd.f32 %v2814, %v1475
        %v2816 = vadd.f32 %v2815, %v1476
        %v2817 = vadd.f32 %v2816, %v1477
        %2818 = vadd.xlane.f32.xlu0 %v2817
        %v2819 = vpop.xlane.xlu0 %2818
        %v2820 = vadd.f32 %v1478, %v1479
        %v2821 = vadd.f32 %v2820, %v1480
        %v2822 = vadd.f32 %v2821, %v1481
        %v2823 = vadd.f32 %v2822, %v1482
        %v2824 = vadd.f32 %v2823, %v1483
        %v2825 = vadd.f32 %v2824, %v1484
        %v2826 = vadd.f32 %v2825, %v1485
        %v2827 = vadd.f32 %v2826, %v1486
        %v2828 = vadd.f32 %v2827, %v1487
        %2829 = vadd.xlane.f32.xlu0 %v2828
        %v2830 = vpop.xlane.xlu0 %2829
        %v2831 = vadd.f32 %v1488, %v1489
        %v2832 = vadd.f32 %v2831, %v1490
        %v2833 = vadd.f32 %v2832, %v1491
        %v2834 = vadd.f32 %v2833, %v1492
        %v2835 = vadd.f32 %v2834, %v1493
        %v2836 = vadd.f32 %v2835, %v1494
        %v2837 = vadd.f32 %v2836, %v1495
        %v2838 = vadd.f32 %v2837, %v1496
        %v2839 = vadd.f32 %v2838, %v1497
        %2840 = vadd.xlane.f32.xlu0 %v2839
        %v2841 = vpop.xlane.xlu0 %2840
        %v2842 = vadd.f32 %v1498, %v1499
        %v2843 = vadd.f32 %v2842, %v1500
        %v2844 = vadd.f32 %v2843, %v1501
        %v2845 = vadd.f32 %v2844, %v1502
        %v2846 = vadd.f32 %v2845, %v1503
        %v2847 = vadd.f32 %v2846, %v1504
        %v2848 = vadd.f32 %v2847, %v1505
        %v2849 = vadd.f32 %v2848, %v1506
        %v2850 = vadd.f32 %v2849, %v1507
        %2851 = vadd.xlane.f32.xlu0 %v2850
        %v2852 = vpop.xlane.xlu0 %2851
        %v2853 = vadd.f32 %v1508, %v1509
        %v2854 = vadd.f32 %v2853, %v1510
        %v2855 = vadd.f32 %v2854, %v1511
        %v2856 = vadd.f32 %v2855, %v1512
        %v2857 = vadd.f32 %v2856, %v1513
        %v2858 = vadd.f32 %v2857, %v1514
        %v2859 = vadd.f32 %v2858, %v1515
        %v2860 = vadd.f32 %v2859, %v1516
        %v2861 = vadd.f32 %v2860, %v1517
        %2862 = vadd.xlane.f32.xlu0 %v2861
        %v2863 = vpop.xlane.xlu0 %2862
        %v2864 = vadd.f32 %v1518, %v1519
        %v2865 = vadd.f32 %v2864, %v1520
        %v2866 = vadd.f32 %v2865, %v1521
        %v2867 = vadd.f32 %v2866, %v1522
        %v2868 = vadd.f32 %v2867, %v1523
        %v2869 = vadd.f32 %v2868, %v1524
        %v2870 = vadd.f32 %v2869, %v1525
        %v2871 = vadd.f32 %v2870, %v1526
        %v2872 = vadd.f32 %v2871, %v1527
        %2873 = vadd.xlane.f32.xlu0 %v2872
        %v2874 = vpop.xlane.xlu0 %2873
        %v2875 = vadd.f32 %v1528, %v1529
        %v2876 = vadd.f32 %v2875, %v1530
        %v2877 = vadd.f32 %v2876, %v1531
        %v2878 = vadd.f32 %v2877, %v1532
        %v2879 = vadd.f32 %v2878, %v1533
        %v2880 = vadd.f32 %v2879, %v1534
        %v2881 = vadd.f32 %v2880, %v1535
        %v2882 = vadd.f32 %v2881, %v1536
        %v2883 = vadd.f32 %v2882, %v1537
        %2884 = vadd.xlane.f32.xlu0 %v2883
        %v2885 = vpop.xlane.xlu0 %2884
        %v2886 = vadd.f32 %v1538, %v1539
        %v2887 = vadd.f32 %v2886, %v1540
        %v2888 = vadd.f32 %v2887, %v1541
        %v2889 = vadd.f32 %v2888, %v1542
        %v2890 = vadd.f32 %v2889, %v1543
        %v2891 = vadd.f32 %v2890, %v1544
        %v2892 = vadd.f32 %v2891, %v1545
        %v2893 = vadd.f32 %v2892, %v1546
        %v2894 = vadd.f32 %v2893, %v1547
        %2895 = vadd.xlane.f32.xlu0 %v2894
        %v2896 = vpop.xlane.xlu0 %2895
        %v2897 = vadd.f32 %v1548, %v1549
        %v2898 = vadd.f32 %v2897, %v1550
        %v2899 = vadd.f32 %v2898, %v1551
        %v2900 = vadd.f32 %v2899, %v1552
        %v2901 = vadd.f32 %v2900, %v1553
        %v2902 = vadd.f32 %v2901, %v1554
        %v2903 = vadd.f32 %v2902, %v1555
        %v2904 = vadd.f32 %v2903, %v1556
        %v2905 = vadd.f32 %v2904, %v1557
        %2906 = vadd.xlane.f32.xlu0 %v2905
        %v2907 = vpop.xlane.xlu0 %2906
        %v2908 = vadd.f32 %v1558, %v1559
        %v2909 = vadd.f32 %v2908, %v1560
        %v2910 = vadd.f32 %v2909, %v1561
        %v2911 = vadd.f32 %v2910, %v1562
        %v2912 = vadd.f32 %v2911, %v1563
        %v2913 = vadd.f32 %v2912, %v1564
        %v2914 = vadd.f32 %v2913, %v1565
        %v2915 = vadd.f32 %v2914, %v1566
        %v2916 = vadd.f32 %v2915, %v1567
        %2917 = vadd.xlane.f32.xlu0 %v2916
        %v2918 = vpop.xlane.xlu0 %2917
        %v2919 = vadd.f32 %v1568, %v1569
        %v2920 = vadd.f32 %v2919, %v1570
        %v2921 = vadd.f32 %v2920, %v1571
        %v2922 = vadd.f32 %v2921, %v1572
        %v2923 = vadd.f32 %v2922, %v1573
        %v2924 = vadd.f32 %v2923, %v1574
        %v2925 = vadd.f32 %v2924, %v1575
        %v2926 = vadd.f32 %v2925, %v1576
        %v2927 = vadd.f32 %v2926, %v1577
        %2928 = vadd.xlane.f32.xlu0 %v2927
        %v2929 = vpop.xlane.xlu0 %2928
        %v2930 = vadd.f32 %v1578, %v1579
        %v2931 = vadd.f32 %v2930, %v1580
        %v2932 = vadd.f32 %v2931, %v1581
        %v2933 = vadd.f32 %v2932, %v1582
        %v2934 = vadd.f32 %v2933, %v1583
        %v2935 = vadd.f32 %v2934, %v1584
        %v2936 = vadd.f32 %v2935, %v1585
        %v2937 = vadd.f32 %v2936, %v1586
        %v2938 = vadd.f32 %v2937, %v1587
        %2939 = vadd.xlane.f32.xlu0 %v2938
        %v2940 = vpop.xlane.xlu0 %2939
        %v2941 = vadd.f32 %v1588, %v1589
        %v2942 = vadd.f32 %v2941, %v1590
        %v2943 = vadd.f32 %v2942, %v1591
        %v2944 = vadd.f32 %v2943, %v1592
        %v2945 = vadd.f32 %v2944, %v1593
        %v2946 = vadd.f32 %v2945, %v1594
        %v2947 = vadd.f32 %v2946, %v1595
        %v2948 = vadd.f32 %v2947, %v1596
        %v2949 = vadd.f32 %v2948, %v1597
        %2950 = vadd.xlane.f32.xlu0 %v2949
        %v2951 = vpop.xlane.xlu0 %2950
        %v2952 = vadd.f32 %v1598, %v1599
        %v2953 = vadd.f32 %v2952, %v1600
        %v2954 = vadd.f32 %v2953, %v1601
        %v2955 = vadd.f32 %v2954, %v1602
        %v2956 = vadd.f32 %v2955, %v1603
        %v2957 = vadd.f32 %v2956, %v1604
        %v2958 = vadd.f32 %v2957, %v1605
        %v2959 = vadd.f32 %v2958, %v1606
        %v2960 = vadd.f32 %v2959, %v1607
        %2961 = vadd.xlane.f32.xlu0 %v2960
        %v2962 = vpop.xlane.xlu0 %2961
        %v2963 = vadd.f32 %v1608, %v1609
        %v2964 = vadd.f32 %v2963, %v1610
        %v2965 = vadd.f32 %v2964, %v1611
        %v2966 = vadd.f32 %v2965, %v1612
        %v2967 = vadd.f32 %v2966, %v1613
        %v2968 = vadd.f32 %v2967, %v1614
        %v2969 = vadd.f32 %v2968, %v1615
        %v2970 = vadd.f32 %v2969, %v1616
        %v2971 = vadd.f32 %v2970, %v1617
        %2972 = vadd.xlane.f32.xlu0 %v2971
        %v2973 = vpop.xlane.xlu0 %2972
        %v2974 = vadd.f32 %v1618, %v1619
        %v2975 = vadd.f32 %v2974, %v1620
        %v2976 = vadd.f32 %v2975, %v1621
        %v2977 = vadd.f32 %v2976, %v1622
        %v2978 = vadd.f32 %v2977, %v1623
        %v2979 = vadd.f32 %v2978, %v1624
        %v2980 = vadd.f32 %v2979, %v1625
        %v2981 = vadd.f32 %v2980, %v1626
        %v2982 = vadd.f32 %v2981, %v1627
        %2983 = vadd.xlane.f32.xlu0 %v2982
        %v2984 = vpop.xlane.xlu0 %2983
        %v2985 = vadd.f32 %v1628, %v1629
        %v2986 = vadd.f32 %v2985, %v1630
        %v2987 = vadd.f32 %v2986, %v1631
        %v2988 = vadd.f32 %v2987, %v1632
        %v2989 = vadd.f32 %v2988, %v1633
        %v2990 = vadd.f32 %v2989, %v1634
        %v2991 = vadd.f32 %v2990, %v1635
        %v2992 = vadd.f32 %v2991, %v1636
        %v2993 = vadd.f32 %v2992, %v1637
        %2994 = vadd.xlane.f32.xlu0 %v2993
        %v2995 = vpop.xlane.xlu0 %2994
        %v2996 = vadd.f32 %v1638, %v1639
        %v2997 = vadd.f32 %v2996, %v1640
        %v2998 = vadd.f32 %v2997, %v1641
        %v2999 = vadd.f32 %v2998, %v1642
        %v3000 = vadd.f32 %v2999, %v1643
        %v3001 = vadd.f32 %v3000, %v1644
        %v3002 = vadd.f32 %v3001, %v1645
        %v3003 = vadd.f32 %v3002, %v1646
        %v3004 = vadd.f32 %v3003, %v1647
        %3005 = vadd.xlane.f32.xlu0 %v3004
        %v3006 = vpop.xlane.xlu0 %3005
        %v3007 = vadd.f32 %v1648, %v1649
        %v3008 = vadd.f32 %v3007, %v1650
        %v3009 = vadd.f32 %v3008, %v1651
        %v3010 = vadd.f32 %v3009, %v1652
        %v3011 = vadd.f32 %v3010, %v1653
        %v3012 = vadd.f32 %v3011, %v1654
        %v3013 = vadd.f32 %v3012, %v1655
        %v3014 = vadd.f32 %v3013, %v1656
        %v3015 = vadd.f32 %v3014, %v1657
        %3016 = vadd.xlane.f32.xlu0 %v3015
        %v3017 = vpop.xlane.xlu0 %3016
        %v3018 = vadd.f32 %v1658, %v1659
        %v3019 = vadd.f32 %v3018, %v1660
        %v3020 = vadd.f32 %v3019, %v1661
        %v3021 = vadd.f32 %v3020, %v1662
        %v3022 = vadd.f32 %v3021, %v1663
        %v3023 = vadd.f32 %v3022, %v1664
        %v3024 = vadd.f32 %v3023, %v1665
        %v3025 = vadd.f32 %v3024, %v1666
        %v3026 = vadd.f32 %v3025, %v1667
        %3027 = vadd.xlane.f32.xlu0 %v3026
        %v3028 = vpop.xlane.xlu0 %3027
        %v3029 = vadd.f32 %v1668, %v1669
        %v3030 = vadd.f32 %v3029, %v1670
        %v3031 = vadd.f32 %v3030, %v1671
        %v3032 = vadd.f32 %v3031, %v1672
        %v3033 = vadd.f32 %v3032, %v1673
        %v3034 = vadd.f32 %v3033, %v1674
        %v3035 = vadd.f32 %v3034, %v1675
        %v3036 = vadd.f32 %v3035, %v1676
        %v3037 = vadd.f32 %v3036, %v1677
        %3038 = vadd.xlane.f32.xlu0 %v3037
        %v3039 = vpop.xlane.xlu0 %3038
        %v3040 = vadd.f32 %v1678, %v1679
        %v3041 = vadd.f32 %v3040, %v1680
        %v3042 = vadd.f32 %v3041, %v1681
        %v3043 = vadd.f32 %v3042, %v1682
        %v3044 = vadd.f32 %v3043, %v1683
        %v3045 = vadd.f32 %v3044, %v1684
        %v3046 = vadd.f32 %v3045, %v1685
        %v3047 = vadd.f32 %v3046, %v1686
        %v3048 = vadd.f32 %v3047, %v1687
        %3049 = vadd.xlane.f32.xlu0 %v3048
        %v3050 = vpop.xlane.xlu0 %3049
        %v3051 = vadd.f32 %v1688, %v1689
        %v3052 = vadd.f32 %v3051, %v1690
        %v3053 = vadd.f32 %v3052, %v1691
        %v3054 = vadd.f32 %v3053, %v1692
        %v3055 = vadd.f32 %v3054, %v1693
        %v3056 = vadd.f32 %v3055, %v1694
        %v3057 = vadd.f32 %v3056, %v1695
        %v3058 = vadd.f32 %v3057, %v1696
        %v3059 = vadd.f32 %v3058, %v1697
        %3060 = vadd.xlane.f32.xlu0 %v3059
        %v3061 = vpop.xlane.xlu0 %3060
        %v3062 = vadd.f32 %v1698, %v1699
        %v3063 = vadd.f32 %v3062, %v1700
        %v3064 = vadd.f32 %v3063, %v1701
        %v3065 = vadd.f32 %v3064, %v1702
        %v3066 = vadd.f32 %v3065, %v1703
        %v3067 = vadd.f32 %v3066, %v1704
        %v3068 = vadd.f32 %v3067, %v1705
        %v3069 = vadd.f32 %v3068, %v1706
        %v3070 = vadd.f32 %v3069, %v1707
        %3071 = vadd.xlane.f32.xlu0 %v3070
        %v3072 = vpop.xlane.xlu0 %3071
        %v3073 = vadd.f32 %v1708, %v1709
        %v3074 = vadd.f32 %v3073, %v1710
        %v3075 = vadd.f32 %v3074, %v1711
        %v3076 = vadd.f32 %v3075, %v1712
        %v3077 = vadd.f32 %v3076, %v1713
        %v3078 = vadd.f32 %v3077, %v1714
        %v3079 = vadd.f32 %v3078, %v1715
        %v3080 = vadd.f32 %v3079, %v1716
        %v3081 = vadd.f32 %v3080, %v1717
        %3082 = vadd.xlane.f32.xlu0 %v3081
        %v3083 = vpop.xlane.xlu0 %3082
        %v3084 = vadd.f32 %v1718, %v1719
        %v3085 = vadd.f32 %v3084, %v1720
        %v3086 = vadd.f32 %v3085, %v1721
        %v3087 = vadd.f32 %v3086, %v1722
        %v3088 = vadd.f32 %v3087, %v1723
        %v3089 = vadd.f32 %v3088, %v1724
        %v3090 = vadd.f32 %v3089, %v1725
        %v3091 = vadd.f32 %v3090, %v1726
        %v3092 = vadd.f32 %v3091, %v1727
        %3093 = vadd.xlane.f32.xlu0 %v3092
        %v3094 = vpop.xlane.xlu0 %3093
        %v3095 = vadd.f32 %v1728, %v1729
        %v3096 = vadd.f32 %v3095, %v1730
        %v3097 = vadd.f32 %v3096, %v1731
        %v3098 = vadd.f32 %v3097, %v1732
        %v3099 = vadd.f32 %v3098, %v1733
        %v3100 = vadd.f32 %v3099, %v1734
        %v3101 = vadd.f32 %v3100, %v1735
        %v3102 = vadd.f32 %v3101, %v1736
        %v3103 = vadd.f32 %v3102, %v1737
        %3104 = vadd.xlane.f32.xlu0 %v3103
        %v3105 = vpop.xlane.xlu0 %3104
        %v3106 = vadd.f32 %v1738, %v1739
        %v3107 = vadd.f32 %v3106, %v1740
        %v3108 = vadd.f32 %v3107, %v1741
        %v3109 = vadd.f32 %v3108, %v1742
        %v3110 = vadd.f32 %v3109, %v1743
        %v3111 = vadd.f32 %v3110, %v1744
        %v3112 = vadd.f32 %v3111, %v1745
        %v3113 = vadd.f32 %v3112, %v1746
        %v3114 = vadd.f32 %v3113, %v1747
        %3115 = vadd.xlane.f32.xlu0 %v3114
        %v3116 = vpop.xlane.xlu0 %3115
        %v3117 = vadd.f32 %v1748, %v1749
        %v3118 = vadd.f32 %v3117, %v1750
        %v3119 = vadd.f32 %v3118, %v1751
        %v3120 = vadd.f32 %v3119, %v1752
        %v3121 = vadd.f32 %v3120, %v1753
        %v3122 = vadd.f32 %v3121, %v1754
        %v3123 = vadd.f32 %v3122, %v1755
        %v3124 = vadd.f32 %v3123, %v1756
        %v3125 = vadd.f32 %v3124, %v1757
        %3126 = vadd.xlane.f32.xlu0 %v3125
        %v3127 = vpop.xlane.xlu0 %3126
        %v3128 = vadd.f32 %v1758, %v1759
        %v3129 = vadd.f32 %v3128, %v1760
        %v3130 = vadd.f32 %v3129, %v1761
        %v3131 = vadd.f32 %v3130, %v1762
        %v3132 = vadd.f32 %v3131, %v1763
        %v3133 = vadd.f32 %v3132, %v1764
        %v3134 = vadd.f32 %v3133, %v1765
        %v3135 = vadd.f32 %v3134, %v1766
        %v3136 = vadd.f32 %v3135, %v1767
        %3137 = vadd.xlane.f32.xlu0 %v3136
        %v3138 = vpop.xlane.xlu0 %3137
        %v3139 = vadd.f32 %v1768, %v1769
        %v3140 = vadd.f32 %v3139, %v1770
        %v3141 = vadd.f32 %v3140, %v1771
        %v3142 = vadd.f32 %v3141, %v1772
        %v3143 = vadd.f32 %v3142, %v1773
        %v3144 = vadd.f32 %v3143, %v1774
        %v3145 = vadd.f32 %v3144, %v1775
        %v3146 = vadd.f32 %v3145, %v1776
        %v3147 = vadd.f32 %v3146, %v1777
        %3148 = vadd.xlane.f32.xlu0 %v3147
        %v3149 = vpop.xlane.xlu0 %3148
        %v3150 = vadd.f32 %v1778, %v1779
        %v3151 = vadd.f32 %v3150, %v1780
        %v3152 = vadd.f32 %v3151, %v1781
        %v3153 = vadd.f32 %v3152, %v1782
        %v3154 = vadd.f32 %v3153, %v1783
        %v3155 = vadd.f32 %v3154, %v1784
        %v3156 = vadd.f32 %v3155, %v1785
        %v3157 = vadd.f32 %v3156, %v1786
        %v3158 = vadd.f32 %v3157, %v1787
        %3159 = vadd.xlane.f32.xlu0 %v3158
        %v3160 = vpop.xlane.xlu0 %3159
        %v3161 = vadd.f32 %v1788, %v1789
        %v3162 = vadd.f32 %v3161, %v1790
        %v3163 = vadd.f32 %v3162, %v1791
        %v3164 = vadd.f32 %v3163, %v1792
        %v3165 = vadd.f32 %v3164, %v1793
        %v3166 = vadd.f32 %v3165, %v1794
        %v3167 = vadd.f32 %v3166, %v1795
        %v3168 = vadd.f32 %v3167, %v1796
        %v3169 = vadd.f32 %v3168, %v1797
        %3170 = vadd.xlane.f32.xlu0 %v3169
        %v3171 = vpop.xlane.xlu0 %3170
        %v3172 = vadd.f32 %v1798, %v1799
        %v3173 = vadd.f32 %v3172, %v1800
        %v3174 = vadd.f32 %v3173, %v1801
        %v3175 = vadd.f32 %v3174, %v1802
        %v3176 = vadd.f32 %v3175, %v1803
        %v3177 = vadd.f32 %v3176, %v1804
        %v3178 = vadd.f32 %v3177, %v1805
        %v3179 = vadd.f32 %v3178, %v1806
        %v3180 = vadd.f32 %v3179, %v1807
        %3181 = vadd.xlane.f32.xlu0 %v3180
        %v3182 = vpop.xlane.xlu0 %3181
        %v3183 = vadd.f32 %v1808, %v1809
        %v3184 = vadd.f32 %v3183, %v1810
        %v3185 = vadd.f32 %v3184, %v1811
        %v3186 = vadd.f32 %v3185, %v1812
        %v3187 = vadd.f32 %v3186, %v1813
        %v3188 = vadd.f32 %v3187, %v1814
        %v3189 = vadd.f32 %v3188, %v1815
        %v3190 = vadd.f32 %v3189, %v1816
        %v3191 = vadd.f32 %v3190, %v1817
        %3192 = vadd.xlane.f32.xlu0 %v3191
        %v3193 = vpop.xlane.xlu0 %3192
        %v3194 = vadd.f32 %v1818, %v1819
        %v3195 = vadd.f32 %v3194, %v1820
        %v3196 = vadd.f32 %v3195, %v1821
        %v3197 = vadd.f32 %v3196, %v1822
        %v3198 = vadd.f32 %v3197, %v1823
        %v3199 = vadd.f32 %v3198, %v1824
        %v3200 = vadd.f32 %v3199, %v1825
        %v3201 = vadd.f32 %v3200, %v1826
        %v3202 = vadd.f32 %v3201, %v1827
        %3203 = vadd.xlane.f32.xlu0 %v3202
        %v3204 = vpop.xlane.xlu0 %3203
        %v3205 = vadd.f32 %v1828, %v1829
        %v3206 = vadd.f32 %v3205, %v1830
        %v3207 = vadd.f32 %v3206, %v1831
        %v3208 = vadd.f32 %v3207, %v1832
        %v3209 = vadd.f32 %v3208, %v1833
        %v3210 = vadd.f32 %v3209, %v1834
        %v3211 = vadd.f32 %v3210, %v1835
        %v3212 = vadd.f32 %v3211, %v1836
        %v3213 = vadd.f32 %v3212, %v1837
        %3214 = vadd.xlane.f32.xlu0 %v3213
        %v3215 = vpop.xlane.xlu0 %3214
        %v3216 = vadd.f32 %v1838, %v1839
        %v3217 = vadd.f32 %v3216, %v1840
        %v3218 = vadd.f32 %v3217, %v1841
        %v3219 = vadd.f32 %v3218, %v1842
        %v3220 = vadd.f32 %v3219, %v1843
        %v3221 = vadd.f32 %v3220, %v1844
        %v3222 = vadd.f32 %v3221, %v1845
        %v3223 = vadd.f32 %v3222, %v1846
        %v3224 = vadd.f32 %v3223, %v1847
        %3225 = vadd.xlane.f32.xlu0 %v3224
        %v3226 = vpop.xlane.xlu0 %3225
        %v3227 = vadd.f32 %v1848, %v1849
        %v3228 = vadd.f32 %v3227, %v1850
        %v3229 = vadd.f32 %v3228, %v1851
        %v3230 = vadd.f32 %v3229, %v1852
        %v3231 = vadd.f32 %v3230, %v1853
        %v3232 = vadd.f32 %v3231, %v1854
        %v3233 = vadd.f32 %v3232, %v1855
        %v3234 = vadd.f32 %v3233, %v1856
        %v3235 = vadd.f32 %v3234, %v1857
        %3236 = vadd.xlane.f32.xlu0 %v3235
        %v3237 = vpop.xlane.xlu0 %3236
        %v3238 = vadd.f32 %v1858, %v1859
        %v3239 = vadd.f32 %v3238, %v1860
        %v3240 = vadd.f32 %v3239, %v1861
        %v3241 = vadd.f32 %v3240, %v1862
        %v3242 = vadd.f32 %v3241, %v1863
        %v3243 = vadd.f32 %v3242, %v1864
        %v3244 = vadd.f32 %v3243, %v1865
        %v3245 = vadd.f32 %v3244, %v1866
        %v3246 = vadd.f32 %v3245, %v1867
        %3247 = vadd.xlane.f32.xlu0 %v3246
        %v3248 = vpop.xlane.xlu0 %3247
        %v3249 = vadd.f32 %v1868, %v1869
        %v3250 = vadd.f32 %v3249, %v1870
        %v3251 = vadd.f32 %v3250, %v1871
        %v3252 = vadd.f32 %v3251, %v1872
        %v3253 = vadd.f32 %v3252, %v1873
        %v3254 = vadd.f32 %v3253, %v1874
        %v3255 = vadd.f32 %v3254, %v1875
        %v3256 = vadd.f32 %v3255, %v1876
        %v3257 = vadd.f32 %v3256, %v1877
        %3258 = vadd.xlane.f32.xlu0 %v3257
        %v3259 = vpop.xlane.xlu0 %3258
        %v3260 = vadd.f32 %v1878, %v1879
        %v3261 = vadd.f32 %v3260, %v1880
        %v3262 = vadd.f32 %v3261, %v1881
        %v3263 = vadd.f32 %v3262, %v1882
        %v3264 = vadd.f32 %v3263, %v1883
        %v3265 = vadd.f32 %v3264, %v1884
        %v3266 = vadd.f32 %v3265, %v1885
        %v3267 = vadd.f32 %v3266, %v1886
        %v3268 = vadd.f32 %v3267, %v1887
        %3269 = vadd.xlane.f32.xlu0 %v3268
        %v3270 = vpop.xlane.xlu0 %3269
        %v3271 = vadd.f32 %v1888, %v1889
        %v3272 = vadd.f32 %v3271, %v1890
        %v3273 = vadd.f32 %v3272, %v1891
        %v3274 = vadd.f32 %v3273, %v1892
        %v3275 = vadd.f32 %v3274, %v1893
        %v3276 = vadd.f32 %v3275, %v1894
        %v3277 = vadd.f32 %v3276, %v1895
        %v3278 = vadd.f32 %v3277, %v1896
        %v3279 = vadd.f32 %v3278, %v1897
        %3280 = vadd.xlane.f32.xlu0 %v3279
        %v3281 = vpop.xlane.xlu0 %3280
        %v3282 = vadd.f32 %v1898, %v1899
        %v3283 = vadd.f32 %v3282, %v1900
        %v3284 = vadd.f32 %v3283, %v1901
        %v3285 = vadd.f32 %v3284, %v1902
        %v3286 = vadd.f32 %v3285, %v1903
        %v3287 = vadd.f32 %v3286, %v1904
        %v3288 = vadd.f32 %v3287, %v1905
        %v3289 = vadd.f32 %v3288, %v1906
        %v3290 = vadd.f32 %v3289, %v1907
        %3291 = vadd.xlane.f32.xlu0 %v3290
        %v3292 = vpop.xlane.xlu0 %3291
        %v3293 = vadd.f32 %v1908, %v1909
        %v3294 = vadd.f32 %v3293, %v1910
        %v3295 = vadd.f32 %v3294, %v1911
        %v3296 = vadd.f32 %v3295, %v1912
        %v3297 = vadd.f32 %v3296, %v1913
        %v3298 = vadd.f32 %v3297, %v1914
        %v3299 = vadd.f32 %v3298, %v1915
        %v3300 = vadd.f32 %v3299, %v1916
        %v3301 = vadd.f32 %v3300, %v1917
        %3302 = vadd.xlane.f32.xlu0 %v3301
        %v3303 = vpop.xlane.xlu0 %3302
        %v3304 = vadd.f32 %v1918, %v1919
        %v3305 = vadd.f32 %v3304, %v1920
        %v3306 = vadd.f32 %v3305, %v1921
        %v3307 = vadd.f32 %v3306, %v1922
        %v3308 = vadd.f32 %v3307, %v1923
        %v3309 = vadd.f32 %v3308, %v1924
        %v3310 = vadd.f32 %v3309, %v1925
        %v3311 = vadd.f32 %v3310, %v1926
        %v3312 = vadd.f32 %v3311, %v1927
        %3313 = vadd.xlane.f32.xlu0 %v3312
        %v3314 = vpop.xlane.xlu0 %3313
        %v3315 = vadd.f32 %v1928, %v1929
        %v3316 = vadd.f32 %v3315, %v1930
        %v3317 = vadd.f32 %v3316, %v1931
        %v3318 = vadd.f32 %v3317, %v1932
        %v3319 = vadd.f32 %v3318, %v1933
        %v3320 = vadd.f32 %v3319, %v1934
        %v3321 = vadd.f32 %v3320, %v1935
        %v3322 = vadd.f32 %v3321, %v1936
        %v3323 = vadd.f32 %v3322, %v1937
        %3324 = vadd.xlane.f32.xlu0 %v3323
        %v3325 = vpop.xlane.xlu0 %3324
        %v3326 = vadd.f32 %v1938, %v1939
        %v3327 = vadd.f32 %v3326, %v1940
        %v3328 = vadd.f32 %v3327, %v1941
        %v3329 = vadd.f32 %v3328, %v1942
        %v3330 = vadd.f32 %v3329, %v1943
        %v3331 = vadd.f32 %v3330, %v1944
        %v3332 = vadd.f32 %v3331, %v1945
        %v3333 = vadd.f32 %v3332, %v1946
        %v3334 = vadd.f32 %v3333, %v1947
        %3335 = vadd.xlane.f32.xlu0 %v3334
        %v3336 = vpop.xlane.xlu0 %3335
        %v3337 = vadd.f32 %v1948, %v1949
        %v3338 = vadd.f32 %v3337, %v1950
        %v3339 = vadd.f32 %v3338, %v1951
        %v3340 = vadd.f32 %v3339, %v1952
        %v3341 = vadd.f32 %v3340, %v1953
        %v3342 = vadd.f32 %v3341, %v1954
        %v3343 = vadd.f32 %v3342, %v1955
        %v3344 = vadd.f32 %v3343, %v1956
        %v3345 = vadd.f32 %v3344, %v1957
        %3346 = vadd.xlane.f32.xlu0 %v3345
        %v3347 = vpop.xlane.xlu0 %3346
        %v3348 = vadd.f32 %v1958, %v1959
        %v3349 = vadd.f32 %v3348, %v1960
        %v3350 = vadd.f32 %v3349, %v1961
        %v3351 = vadd.f32 %v3350, %v1962
        %v3352 = vadd.f32 %v3351, %v1963
        %v3353 = vadd.f32 %v3352, %v1964
        %v3354 = vadd.f32 %v3353, %v1965
        %v3355 = vadd.f32 %v3354, %v1966
        %v3356 = vadd.f32 %v3355, %v1967
        %3357 = vadd.xlane.f32.xlu0 %v3356
        %v3358 = vpop.xlane.xlu0 %3357
        %v3359 = vadd.f32 %v1968, %v1969
        %v3360 = vadd.f32 %v3359, %v1970
        %v3361 = vadd.f32 %v3360, %v1971
        %v3362 = vadd.f32 %v3361, %v1972
        %v3363 = vadd.f32 %v3362, %v1973
        %v3364 = vadd.f32 %v3363, %v1974
        %v3365 = vadd.f32 %v3364, %v1975
        %v3366 = vadd.f32 %v3365, %v1976
        %v3367 = vadd.f32 %v3366, %v1977
        %3368 = vadd.xlane.f32.xlu0 %v3367
        %v3369 = vpop.xlane.xlu0 %3368
        %v3370 = vadd.f32 %v1978, %v1979
        %v3371 = vadd.f32 %v3370, %v1980
        %v3372 = vadd.f32 %v3371, %v1981
        %v3373 = vadd.f32 %v3372, %v1982
        %v3374 = vadd.f32 %v3373, %v1983
        %v3375 = vadd.f32 %v3374, %v1984
        %v3376 = vadd.f32 %v3375, %v1985
        %v3377 = vadd.f32 %v3376, %v1986
        %v3378 = vadd.f32 %v3377, %v1987
        %3379 = vadd.xlane.f32.xlu0 %v3378
        %v3380 = vpop.xlane.xlu0 %3379
        %v3381 = vadd.f32 %v1988, %v1989
        %v3382 = vadd.f32 %v3381, %v1990
        %v3383 = vadd.f32 %v3382, %v1991
        %v3384 = vadd.f32 %v3383, %v1992
        %v3385 = vadd.f32 %v3384, %v1993
        %v3386 = vadd.f32 %v3385, %v1994
        %v3387 = vadd.f32 %v3386, %v1995
        %v3388 = vadd.f32 %v3387, %v1996
        %v3389 = vadd.f32 %v3388, %v1997
        %3390 = vadd.xlane.f32.xlu0 %v3389
        %v3391 = vpop.xlane.xlu0 %3390
        %v3392 = vadd.f32 %v1998, %v1999
        %v3393 = vadd.f32 %v3392, %v2000
        %v3394 = vadd.f32 %v3393, %v2001
        %v3395 = vadd.f32 %v3394, %v2002
        %v3396 = vadd.f32 %v3395, %v2003
        %v3397 = vadd.f32 %v3396, %v2004
        %v3398 = vadd.f32 %v3397, %v2005
        %v3399 = vadd.f32 %v3398, %v2006
        %v3400 = vadd.f32 %v3399, %v2007
        %3401 = vadd.xlane.f32.xlu0 %v3400
        %v3402 = vpop.xlane.xlu0 %3401
        %v3403 = vadd.f32 %v2008, %v2009
        %v3404 = vadd.f32 %v3403, %v2010
        %v3405 = vadd.f32 %v3404, %v2011
        %v3406 = vadd.f32 %v3405, %v2012
        %v3407 = vadd.f32 %v3406, %v2013
        %v3408 = vadd.f32 %v3407, %v2014
        %v3409 = vadd.f32 %v3408, %v2015
        %v3410 = vadd.f32 %v3409, %v2016
        %v3411 = vadd.f32 %v3410, %v2017
        %3412 = vadd.xlane.f32.xlu0 %v3411
        %v3413 = vpop.xlane.xlu0 %3412
        %v3414 = vadd.f32 %v2018, %v2019
        %v3415 = vadd.f32 %v3414, %v2020
        %v3416 = vadd.f32 %v3415, %v2021
        %v3417 = vadd.f32 %v3416, %v2022
        %v3418 = vadd.f32 %v3417, %v2023
        %v3419 = vadd.f32 %v3418, %v2024
        %v3420 = vadd.f32 %v3419, %v2025
        %v3421 = vadd.f32 %v3420, %v2026
        %v3422 = vadd.f32 %v3421, %v2027
        %3423 = vadd.xlane.f32.xlu0 %v3422
        %v3424 = vpop.xlane.xlu0 %3423
        %v3425 = vadd.f32 %v2028, %v2029
        %v3426 = vadd.f32 %v3425, %v2030
        %v3427 = vadd.f32 %v3426, %v2031
        %v3428 = vadd.f32 %v3427, %v2032
        %v3429 = vadd.f32 %v3428, %v2033
        %v3430 = vadd.f32 %v3429, %v2034
        %v3431 = vadd.f32 %v3430, %v2035
        %v3432 = vadd.f32 %v3431, %v2036
        %v3433 = vadd.f32 %v3432, %v2037
        %3434 = vadd.xlane.f32.xlu0 %v3433
        %v3435 = vpop.xlane.xlu0 %3434
        %v3436 = vadd.f32 %v2038, %v2039
        %v3437 = vadd.f32 %v3436, %v2040
        %v3438 = vadd.f32 %v3437, %v2041
        %v3439 = vadd.f32 %v3438, %v2042
        %v3440 = vadd.f32 %v3439, %v2043
        %v3441 = vadd.f32 %v3440, %v2044
        %v3442 = vadd.f32 %v3441, %v2045
        %v3443 = vadd.f32 %v3442, %v2046
        %v3444 = vadd.f32 %v3443, %v2047
        %3445 = vadd.xlane.f32.xlu0 %v3444
        %v3446 = vpop.xlane.xlu0 %3445
        %v3447 = vadd.f32 %v2048, %v2049
        %v3448 = vadd.f32 %v3447, %v2050
        %v3449 = vadd.f32 %v3448, %v2051
        %v3450 = vadd.f32 %v3449, %v2052
        %v3451 = vadd.f32 %v3450, %v2053
        %v3452 = vadd.f32 %v3451, %v2054
        %v3453 = vadd.f32 %v3452, %v2055
        %v3454 = vadd.f32 %v3453, %v2056
        %v3455 = vadd.f32 %v3454, %v2057
        %3456 = vadd.xlane.f32.xlu0 %v3455
        %v3457 = vpop.xlane.xlu0 %3456
        %v3458 = vadd.f32 %v2058, %v2059
        %v3459 = vadd.f32 %v3458, %v2060
        %v3460 = vadd.f32 %v3459, %v2061
        %v3461 = vadd.f32 %v3460, %v2062
        %v3462 = vadd.f32 %v3461, %v2063
        %v3463 = vadd.f32 %v3462, %v2064
        %v3464 = vadd.f32 %v3463, %v2065
        %v3465 = vadd.f32 %v3464, %v2066
        %v3466 = vadd.f32 %v3465, %v2067
        %3467 = vadd.xlane.f32.xlu0 %v3466
        %v3468 = vpop.xlane.xlu0 %3467
        %v3469 = vadd.f32 %v2068, %v2069
        %v3470 = vadd.f32 %v3469, %v2070
        %v3471 = vadd.f32 %v3470, %v2071
        %v3472 = vadd.f32 %v3471, %v2072
        %v3473 = vadd.f32 %v3472, %v2073
        %v3474 = vadd.f32 %v3473, %v2074
        %v3475 = vadd.f32 %v3474, %v2075
        %v3476 = vadd.f32 %v3475, %v2076
        %v3477 = vadd.f32 %v3476, %v2077
        %3478 = vadd.xlane.f32.xlu0 %v3477
        %v3479 = vpop.xlane.xlu0 %3478
        %v3480 = vadd.f32 %v2078, %v2079
        %v3481 = vadd.f32 %v3480, %v2080
        %v3482 = vadd.f32 %v3481, %v2081
        %v3483 = vadd.f32 %v3482, %v2082
        %v3484 = vadd.f32 %v3483, %v2083
        %v3485 = vadd.f32 %v3484, %v2084
        %v3486 = vadd.f32 %v3485, %v2085
        %v3487 = vadd.f32 %v3486, %v2086
        %v3488 = vadd.f32 %v3487, %v2087
        %3489 = vadd.xlane.f32.xlu0 %v3488
        %v3490 = vpop.xlane.xlu0 %3489
        %v3491 = vadd.f32 %v2088, %v2089
        %v3492 = vadd.f32 %v3491, %v2090
        %v3493 = vadd.f32 %v3492, %v2091
        %v3494 = vadd.f32 %v3493, %v2092
        %v3495 = vadd.f32 %v3494, %v2093
        %v3496 = vadd.f32 %v3495, %v2094
        %v3497 = vadd.f32 %v3496, %v2095
        %v3498 = vadd.f32 %v3497, %v2096
        %v3499 = vadd.f32 %v3498, %v2097
        %3500 = vadd.xlane.f32.xlu0 %v3499
        %v3501 = vpop.xlane.xlu0 %3500
        %v3502 = vadd.f32 %v2098, %v2099
        %v3503 = vadd.f32 %v3502, %v2100
        %v3504 = vadd.f32 %v3503, %v2101
        %v3505 = vadd.f32 %v3504, %v2102
        %v3506 = vadd.f32 %v3505, %v2103
        %v3507 = vadd.f32 %v3506, %v2104
        %v3508 = vadd.f32 %v3507, %v2105
        %v3509 = vadd.f32 %v3508, %v2106
        %v3510 = vadd.f32 %v3509, %v2107
        %3511 = vadd.xlane.f32.xlu0 %v3510
        %v3512 = vpop.xlane.xlu0 %3511
        %v3513 = vadd.f32 %v2108, %v2109
        %v3514 = vadd.f32 %v3513, %v2110
        %v3515 = vadd.f32 %v3514, %v2111
        %v3516 = vadd.f32 %v3515, %v2112
        %v3517 = vadd.f32 %v3516, %v2113
        %v3518 = vadd.f32 %v3517, %v2114
        %v3519 = vadd.f32 %v3518, %v2115
        %v3520 = vadd.f32 %v3519, %v2116
        %v3521 = vadd.f32 %v3520, %v2117
        %3522 = vadd.xlane.f32.xlu0 %v3521
        %v3523 = vpop.xlane.xlu0 %3522
        %v3524 = vadd.f32 %v2118, %v2119
        %v3525 = vadd.f32 %v3524, %v2120
        %v3526 = vadd.f32 %v3525, %v2121
        %v3527 = vadd.f32 %v3526, %v2122
        %v3528 = vadd.f32 %v3527, %v2123
        %v3529 = vadd.f32 %v3528, %v2124
        %v3530 = vadd.f32 %v3529, %v2125
        %v3531 = vadd.f32 %v3530, %v2126
        %v3532 = vadd.f32 %v3531, %v2127
        %3533 = vadd.xlane.f32.xlu0 %v3532
        %v3534 = vpop.xlane.xlu0 %3533
        %v3535 = vadd.f32 %v2128, %v2129
        %v3536 = vadd.f32 %v3535, %v2130
        %v3537 = vadd.f32 %v3536, %v2131
        %v3538 = vadd.f32 %v3537, %v2132
        %v3539 = vadd.f32 %v3538, %v2133
        %v3540 = vadd.f32 %v3539, %v2134
        %v3541 = vadd.f32 %v3540, %v2135
        %v3542 = vadd.f32 %v3541, %v2136
        %v3543 = vadd.f32 %v3542, %v2137
        %3544 = vadd.xlane.f32.xlu0 %v3543
        %v3545 = vpop.xlane.xlu0 %3544
        %v3546 = vrcp.pop 1280.0
        %v3547 = vmul.f32 %v2148, %v3546
        %v3548 = vmul.f32 %v2159, %v3546
        %v3549 = vmul.f32 %v2170, %v3546
        %v3550 = vmul.f32 %v2181, %v3546
        %v3551 = vmul.f32 %v2192, %v3546
        %v3552 = vmul.f32 %v2203, %v3546
        %v3553 = vmul.f32 %v2214, %v3546
        %v3554 = vmul.f32 %v2225, %v3546
        %v3555 = vmul.f32 %v2236, %v3546
        %v3556 = vmul.f32 %v2247, %v3546
        %v3557 = vmul.f32 %v2258, %v3546
        %v3558 = vmul.f32 %v2269, %v3546
        %v3559 = vmul.f32 %v2280, %v3546
        %v3560 = vmul.f32 %v2291, %v3546
        %v3561 = vmul.f32 %v2302, %v3546
        %v3562 = vmul.f32 %v2313, %v3546
        %v3563 = vmul.f32 %v2324, %v3546
        %v3564 = vmul.f32 %v2335, %v3546
        %v3565 = vmul.f32 %v2346, %v3546
        %v3566 = vmul.f32 %v2357, %v3546
        %v3567 = vmul.f32 %v2368, %v3546
        %v3568 = vmul.f32 %v2379, %v3546
        %v3569 = vmul.f32 %v2390, %v3546
        %v3570 = vmul.f32 %v2401, %v3546
        %v3571 = vmul.f32 %v2412, %v3546
        %v3572 = vmul.f32 %v2423, %v3546
        %v3573 = vmul.f32 %v2434, %v3546
        %v3574 = vmul.f32 %v2445, %v3546
        %v3575 = vmul.f32 %v2456, %v3546
        %v3576 = vmul.f32 %v2467, %v3546
        %v3577 = vmul.f32 %v2478, %v3546
        %v3578 = vmul.f32 %v2489, %v3546
        %v3579 = vmul.f32 %v2500, %v3546
        %v3580 = vmul.f32 %v2511, %v3546
        %v3581 = vmul.f32 %v2522, %v3546
        %v3582 = vmul.f32 %v2533, %v3546
        %v3583 = vmul.f32 %v2544, %v3546
        %v3584 = vmul.f32 %v2555, %v3546
        %v3585 = vmul.f32 %v2566, %v3546
        %v3586 = vmul.f32 %v2577, %v3546
        %v3587 = vmul.f32 %v2588, %v3546
        %v3588 = vmul.f32 %v2599, %v3546
        %v3589 = vmul.f32 %v2610, %v3546
        %v3590 = vmul.f32 %v2621, %v3546
        %v3591 = vmul.f32 %v2632, %v3546
        %v3592 = vmul.f32 %v2643, %v3546
        %v3593 = vmul.f32 %v2654, %v3546
        %v3594 = vmul.f32 %v2665, %v3546
        %v3595 = vmul.f32 %v2676, %v3546
        %v3596 = vmul.f32 %v2687, %v3546
        %v3597 = vmul.f32 %v2698, %v3546
        %v3598 = vmul.f32 %v2709, %v3546
        %v3599 = vmul.f32 %v2720, %v3546
        %v3600 = vmul.f32 %v2731, %v3546
        %v3601 = vmul.f32 %v2742, %v3546
        %v3602 = vmul.f32 %v2753, %v3546
        %v3603 = vmul.f32 %v2764, %v3546
        %v3604 = vmul.f32 %v2775, %v3546
        %v3605 = vmul.f32 %v2786, %v3546
        %v3606 = vmul.f32 %v2797, %v3546
        %v3607 = vmul.f32 %v2808, %v3546
        %v3608 = vmul.f32 %v2819, %v3546
        %v3609 = vmul.f32 %v2830, %v3546
        %v3610 = vmul.f32 %v2841, %v3546
        %v3611 = vmul.f32 %v2852, %v3546
        %v3612 = vmul.f32 %v2863, %v3546
        %v3613 = vmul.f32 %v2874, %v3546
        %v3614 = vmul.f32 %v2885, %v3546
        %v3615 = vmul.f32 %v2896, %v3546
        %v3616 = vmul.f32 %v2907, %v3546
        %v3617 = vmul.f32 %v2918, %v3546
        %v3618 = vmul.f32 %v2929, %v3546
        %v3619 = vmul.f32 %v2940, %v3546
        %v3620 = vmul.f32 %v2951, %v3546
        %v3621 = vmul.f32 %v2962, %v3546
        %v3622 = vmul.f32 %v2973, %v3546
        %v3623 = vmul.f32 %v2984, %v3546
        %v3624 = vmul.f32 %v2995, %v3546
        %v3625 = vmul.f32 %v3006, %v3546
        %v3626 = vmul.f32 %v3017, %v3546
        %v3627 = vmul.f32 %v3028, %v3546
        %v3628 = vmul.f32 %v3039, %v3546
        %v3629 = vmul.f32 %v3050, %v3546
        %v3630 = vmul.f32 %v3061, %v3546
        %v3631 = vmul.f32 %v3072, %v3546
        %v3632 = vmul.f32 %v3083, %v3546
        %v3633 = vmul.f32 %v3094, %v3546
        %v3634 = vmul.f32 %v3105, %v3546
        %v3635 = vmul.f32 %v3116, %v3546
        %v3636 = vmul.f32 %v3127, %v3546
        %v3637 = vmul.f32 %v3138, %v3546
        %v3638 = vmul.f32 %v3149, %v3546
        %v3639 = vmul.f32 %v3160, %v3546
        %v3640 = vmul.f32 %v3171, %v3546
        %v3641 = vmul.f32 %v3182, %v3546
        %v3642 = vmul.f32 %v3193, %v3546
        %v3643 = vmul.f32 %v3204, %v3546
        %v3644 = vmul.f32 %v3215, %v3546
        %v3645 = vmul.f32 %v3226, %v3546
        %v3646 = vmul.f32 %v3237, %v3546
        %v3647 = vmul.f32 %v3248, %v3546
        %v3648 = vmul.f32 %v3259, %v3546
        %v3649 = vmul.f32 %v3270, %v3546
        %v3650 = vmul.f32 %v3281, %v3546
        %v3651 = vmul.f32 %v3292, %v3546
        %v3652 = vmul.f32 %v3303, %v3546
        %v3653 = vmul.f32 %v3314, %v3546
        %v3654 = vmul.f32 %v3325, %v3546
        %v3655 = vmul.f32 %v3336, %v3546
        %v3656 = vmul.f32 %v3347, %v3546
        %v3657 = vmul.f32 %v3358, %v3546
        %v3658 = vmul.f32 %v3369, %v3546
        %v3659 = vmul.f32 %v3380, %v3546
        %v3660 = vmul.f32 %v3391, %v3546
        %v3661 = vmul.f32 %v3402, %v3546
        %v3662 = vmul.f32 %v3413, %v3546
        %v3663 = vmul.f32 %v3424, %v3546
        %v3664 = vmul.f32 %v3435, %v3546
        %v3665 = vmul.f32 %v3446, %v3546
        %v3666 = vmul.f32 %v3457, %v3546
        %v3667 = vmul.f32 %v3468, %v3546
        %v3668 = vmul.f32 %v3479, %v3546
        %v3669 = vmul.f32 %v3490, %v3546
        %v3670 = vmul.f32 %v3501, %v3546
        %v3671 = vmul.f32 %v3512, %v3546
        %v3672 = vmul.f32 %v3523, %v3546
        %v3673 = vmul.f32 %v3534, %v3546
        %v3674 = vmul.f32 %v3545, %v3546
        %v3675 = vmul.f32 %v3547, %v3547
        %v3676 = vmul.f32 %v3548, %v3548
        %v3677 = vmul.f32 %v3549, %v3549
        %v3678 = vmul.f32 %v3550, %v3550
        %v3679 = vmul.f32 %v3551, %v3551
        %v3680 = vmul.f32 %v3552, %v3552
        %v3681 = vmul.f32 %v3553, %v3553
        %v3682 = vmul.f32 %v3554, %v3554
        %v3683 = vmul.f32 %v3555, %v3555
        %v3684 = vmul.f32 %v3556, %v3556
        %v3685 = vmul.f32 %v3557, %v3557
        %v3686 = vmul.f32 %v3558, %v3558
        %v3687 = vmul.f32 %v3559, %v3559
        %v3688 = vmul.f32 %v3560, %v3560
        %v3689 = vmul.f32 %v3561, %v3561
        %v3690 = vmul.f32 %v3562, %v3562
        %v3691 = vmul.f32 %v3563, %v3563
        %v3692 = vmul.f32 %v3564, %v3564
        %v3693 = vmul.f32 %v3565, %v3565
        %v3694 = vmul.f32 %v3566, %v3566
        %v3695 = vmul.f32 %v3567, %v3567
        %v3696 = vmul.f32 %v3568, %v3568
        %v3697 = vmul.f32 %v3569, %v3569
        %v3698 = vmul.f32 %v3570, %v3570
        %v3699 = vmul.f32 %v3571, %v3571
        %v3700 = vmul.f32 %v3572, %v3572
        %v3701 = vmul.f32 %v3573, %v3573
        %v3702 = vmul.f32 %v3574, %v3574
        %v3703 = vmul.f32 %v3575, %v3575
        %v3704 = vmul.f32 %v3576, %v3576
        %v3705 = vmul.f32 %v3577, %v3577
        %v3706 = vmul.f32 %v3578, %v3578
        %v3707 = vmul.f32 %v3579, %v3579
        %v3708 = vmul.f32 %v3580, %v3580
        %v3709 = vmul.f32 %v3581, %v3581
        %v3710 = vmul.f32 %v3582, %v3582
        %v3711 = vmul.f32 %v3583, %v3583
        %v3712 = vmul.f32 %v3584, %v3584
        %v3713 = vmul.f32 %v3585, %v3585
        %v3714 = vmul.f32 %v3586, %v3586
        %v3715 = vmul.f32 %v3587, %v3587
        %v3716 = vmul.f32 %v3588, %v3588
        %v3717 = vmul.f32 %v3589, %v3589
        %v3718 = vmul.f32 %v3590, %v3590
        %v3719 = vmul.f32 %v3591, %v3591
        %v3720 = vmul.f32 %v3592, %v3592
        %v3721 = vmul.f32 %v3593, %v3593
        %v3722 = vmul.f32 %v3594, %v3594
        %v3723 = vmul.f32 %v3595, %v3595
        %v3724 = vmul.f32 %v3596, %v3596
        %v3725 = vmul.f32 %v3597, %v3597
        %v3726 = vmul.f32 %v3598, %v3598
        %v3727 = vmul.f32 %v3599, %v3599
        %v3728 = vmul.f32 %v3600, %v3600
        %v3729 = vmul.f32 %v3601, %v3601
        %v3730 = vmul.f32 %v3602, %v3602
        %v3731 = vmul.f32 %v3603, %v3603
        %v3732 = vmul.f32 %v3604, %v3604
        %v3733 = vmul.f32 %v3605, %v3605
        %v3734 = vmul.f32 %v3606, %v3606
        %v3735 = vmul.f32 %v3607, %v3607
        %v3736 = vmul.f32 %v3608, %v3608
        %v3737 = vmul.f32 %v3609, %v3609
        %v3738 = vmul.f32 %v3610, %v3610
        %v3739 = vmul.f32 %v3611, %v3611
        %v3740 = vmul.f32 %v3612, %v3612
        %v3741 = vmul.f32 %v3613, %v3613
        %v3742 = vmul.f32 %v3614, %v3614
        %v3743 = vmul.f32 %v3615, %v3615
        %v3744 = vmul.f32 %v3616, %v3616
        %v3745 = vmul.f32 %v3617, %v3617
        %v3746 = vmul.f32 %v3618, %v3618
        %v3747 = vmul.f32 %v3619, %v3619
        %v3748 = vmul.f32 %v3620, %v3620
        %v3749 = vmul.f32 %v3621, %v3621
        %v3750 = vmul.f32 %v3622, %v3622
        %v3751 = vmul.f32 %v3623, %v3623
        %v3752 = vmul.f32 %v3624, %v3624
        %v3753 = vmul.f32 %v3625, %v3625
        %v3754 = vmul.f32 %v3626, %v3626
        %v3755 = vmul.f32 %v3627, %v3627
        %v3756 = vmul.f32 %v3628, %v3628
        %v3757 = vmul.f32 %v3629, %v3629
        %v3758 = vmul.f32 %v3630, %v3630
        %v3759 = vmul.f32 %v3631, %v3631
        %v3760 = vmul.f32 %v3632, %v3632
        %v3761 = vmul.f32 %v3633, %v3633
        %v3762 = vmul.f32 %v3634, %v3634
        %v3763 = vmul.f32 %v3635, %v3635
        %v3764 = vmul.f32 %v3636, %v3636
        %v3765 = vmul.f32 %v3637, %v3637
        %v3766 = vmul.f32 %v3638, %v3638
        %v3767 = vmul.f32 %v3639, %v3639
        %v3768 = vmul.f32 %v3640, %v3640
        %v3769 = vmul.f32 %v3641, %v3641
        %v3770 = vmul.f32 %v3642, %v3642
        %v3771 = vmul.f32 %v3643, %v3643
        %v3772 = vmul.f32 %v3644, %v3644
        %v3773 = vmul.f32 %v3645, %v3645
        %v3774 = vmul.f32 %v3646, %v3646
        %v3775 = vmul.f32 %v3647, %v3647
        %v3776 = vmul.f32 %v3648, %v3648
        %v3777 = vmul.f32 %v3649, %v3649
        %v3778 = vmul.f32 %v3650, %v3650
        %v3779 = vmul.f32 %v3651, %v3651
        %v3780 = vmul.f32 %v3652, %v3652
        %v3781 = vmul.f32 %v3653, %v3653
        %v3782 = vmul.f32 %v3654, %v3654
        %v3783 = vmul.f32 %v3655, %v3655
        %v3784 = vmul.f32 %v3656, %v3656
        %v3785 = vmul.f32 %v3657, %v3657
        %v3786 = vmul.f32 %v3658, %v3658
        %v3787 = vmul.f32 %v3659, %v3659
        %v3788 = vmul.f32 %v3660, %v3660
        %v3789 = vmul.f32 %v3661, %v3661
        %v3790 = vmul.f32 %v3662, %v3662
        %v3791 = vmul.f32 %v3663, %v3663
        %v3792 = vmul.f32 %v3664, %v3664
        %v3793 = vmul.f32 %v3665, %v3665
        %v3794 = vmul.f32 %v3666, %v3666
        %v3795 = vmul.f32 %v3667, %v3667
        %v3796 = vmul.f32 %v3668, %v3668
        %v3797 = vmul.f32 %v3669, %v3669
        %v3798 = vmul.f32 %v3670, %v3670
        %v3799 = vmul.f32 %v3671, %v3671
        %v3800 = vmul.f32 %v3672, %v3672
        %v3801 = vmul.f32 %v3673, %v3673
        %v3802 = vmul.f32 %v3674, %v3674
        %v3931 = vlaneseq
        %v3932 = vand.u32 %v3931, 127
        %v3933 = vlaneseq
        %v3934 = vshrl.u32 %v3933, 7
        %v3935 = vsub.s32 %v3932, %v3934
        %v3936 = vrot.slane %v3675, %v3935
        %v3937 = vadd.s32 %v3932, 4294967288
        %v3938 = vlaneseq
        %v3939 = vshrl.u32 %v3938, 7
        %v3940 = vsub.s32 %v3937, %v3939
        %v3941 = vrot.slane %v3676, %v3940
        %vm3942 = vcmask 130112
        %v3943 = vsel %vm3942, %v3941, %v3936
        %v3944 = vadd.s32 %v3932, 4294967280
        %v3945 = vlaneseq
        %v3946 = vshrl.u32 %v3945, 7
        %v3947 = vsub.s32 %v3944, %v3946
        %v3948 = vrot.slane %v3677, %v3947
        %vm3949 = vcmask 195712
        %v3950 = vsel %vm3949, %v3948, %v3943
        %v3951 = vadd.s32 %v3932, 4294967272
        %v3952 = vlaneseq
        %v3953 = vshrl.u32 %v3952, 7
        %v3954 = vsub.s32 %v3951, %v3953
        %v3955 = vrot.slane %v3678, %v3954
        %vm3956 = vcmask 261312
        %v3957 = vsel %vm3956, %v3955, %v3950
        %v3958 = vadd.s32 %v3932, 4294967264
        %v3959 = vlaneseq
        %v3960 = vshrl.u32 %v3959, 7
        %v3961 = vsub.s32 %v3958, %v3960
        %v3962 = vrot.slane %v3679, %v3961
        %vm3963 = vcmask 326912
        %v3964 = vsel %vm3963, %v3962, %v3957
        %v3965 = vadd.s32 %v3932, 4294967256
        %v3966 = vlaneseq
        %v3967 = vshrl.u32 %v3966, 7
        %v3968 = vsub.s32 %v3965, %v3967
        %v3969 = vrot.slane %v3680, %v3968
        %vm3970 = vcmask 392512
        %v3971 = vsel %vm3970, %v3969, %v3964
        %v3972 = vadd.s32 %v3932, 4294967248
        %v3973 = vlaneseq
        %v3974 = vshrl.u32 %v3973, 7
        %v3975 = vsub.s32 %v3972, %v3974
        %v3976 = vrot.slane %v3681, %v3975
        %vm3977 = vcmask 458112
        %v3978 = vsel %vm3977, %v3976, %v3971
        %v3979 = vadd.s32 %v3932, 4294967240
        %v3980 = vlaneseq
        %v3981 = vshrl.u32 %v3980, 7
        %v3982 = vsub.s32 %v3979, %v3981
        %v3983 = vrot.slane %v3682, %v3982
        %vm3984 = vcmask 523712
        %v3985 = vsel %vm3984, %v3983, %v3978
        %v3986 = vadd.s32 %v3932, 4294967232
        %v3987 = vlaneseq
        %v3988 = vshrl.u32 %v3987, 7
        %v3989 = vsub.s32 %v3986, %v3988
        %v3990 = vrot.slane %v3683, %v3989
        %vm3991 = vcmask 589312
        %v3992 = vsel %vm3991, %v3990, %v3985
        %v3993 = vadd.s32 %v3932, 4294967224
        %v3994 = vlaneseq
        %v3995 = vshrl.u32 %v3994, 7
        %v3996 = vsub.s32 %v3993, %v3995
        %v3997 = vrot.slane %v3684, %v3996
        %vm3998 = vcmask 654912
        %v3999 = vsel %vm3998, %v3997, %v3992
        %v4000 = vadd.s32 %v3932, 4294967216
        %v4001 = vlaneseq
        %v4002 = vshrl.u32 %v4001, 7
        %v4003 = vsub.s32 %v4000, %v4002
        %v4004 = vrot.slane %v3685, %v4003
        %vm4005 = vcmask 720512
        %v4006 = vsel %vm4005, %v4004, %v3999
        %v4007 = vadd.s32 %v3932, 4294967208
        %v4008 = vlaneseq
        %v4009 = vshrl.u32 %v4008, 7
        %v4010 = vsub.s32 %v4007, %v4009
        %v4011 = vrot.slane %v3686, %v4010
        %vm4012 = vcmask 786112
        %v4013 = vsel %vm4012, %v4011, %v4006
        %v4014 = vadd.s32 %v3932, 4294967200
        %v4015 = vlaneseq
        %v4016 = vshrl.u32 %v4015, 7
        %v4017 = vsub.s32 %v4014, %v4016
        %v4018 = vrot.slane %v3687, %v4017
        %vm4019 = vcmask 851712
        %v4020 = vsel %vm4019, %v4018, %v4013
        %v4021 = vadd.s32 %v3932, 4294967192
        %v4022 = vlaneseq
        %v4023 = vshrl.u32 %v4022, 7
        %v4024 = vsub.s32 %v4021, %v4023
        %v4025 = vrot.slane %v3688, %v4024
        %vm4026 = vcmask 917312
        %v4027 = vsel %vm4026, %v4025, %v4020
        %v4028 = vadd.s32 %v3932, 4294967184
        %v4029 = vlaneseq
        %v4030 = vshrl.u32 %v4029, 7
        %v4031 = vsub.s32 %v4028, %v4030
        %v4032 = vrot.slane %v3689, %v4031
        %vm4033 = vcmask 982912
        %v4034 = vsel %vm4033, %v4032, %v4027
        %v4035 = vadd.s32 %v3932, 4294967176
        %v4036 = vlaneseq
        %v4037 = vshrl.u32 %v4036, 7
        %v4038 = vsub.s32 %v4035, %v4037
        %v4039 = vrot.slane %v3690, %v4038
        %vm4040 = vcmask 1048512
        %v4041 = vsel %vm4040, %v4039, %v4034
        %v4042 = vlaneseq
        %v4043 = vshrl.u32 %v4042, 7
        %v4044 = vsub.s32 %v3932, %v4043
        %v4045 = vrot.slane %v3691, %v4044
        %v4046 = vlaneseq
        %v4047 = vshrl.u32 %v4046, 7
        %v4048 = vsub.s32 %v3937, %v4047
        %v4049 = vrot.slane %v3692, %v4048
        %v4050 = vsel %vm3942, %v4049, %v4045
        %v4051 = vlaneseq
        %v4052 = vshrl.u32 %v4051, 7
        %v4053 = vsub.s32 %v3944, %v4052
        %v4054 = vrot.slane %v3693, %v4053
        %v4055 = vsel %vm3949, %v4054, %v4050
        %v4056 = vlaneseq
        %v4057 = vshrl.u32 %v4056, 7
        %v4058 = vsub.s32 %v3951, %v4057
        %v4059 = vrot.slane %v3694, %v4058
        %v4060 = vsel %vm3956, %v4059, %v4055
        %v4061 = vlaneseq
        %v4062 = vshrl.u32 %v4061, 7
        %v4063 = vsub.s32 %v3958, %v4062
        %v4064 = vrot.slane %v3695, %v4063
        %v4065 = vsel %vm3963, %v4064, %v4060
        %v4066 = vlaneseq
        %v4067 = vshrl.u32 %v4066, 7
        %v4068 = vsub.s32 %v3965, %v4067
        %v4069 = vrot.slane %v3696, %v4068
        %v4070 = vsel %vm3970, %v4069, %v4065
        %v4071 = vlaneseq
        %v4072 = vshrl.u32 %v4071, 7
        %v4073 = vsub.s32 %v3972, %v4072
        %v4074 = vrot.slane %v3697, %v4073
        %v4075 = vsel %vm3977, %v4074, %v4070
        %v4076 = vlaneseq
        %v4077 = vshrl.u32 %v4076, 7
        %v4078 = vsub.s32 %v3979, %v4077
        %v4079 = vrot.slane %v3698, %v4078
        %v4080 = vsel %vm3984, %v4079, %v4075
        %v4081 = vlaneseq
        %v4082 = vshrl.u32 %v4081, 7
        %v4083 = vsub.s32 %v3986, %v4082
        %v4084 = vrot.slane %v3699, %v4083
        %v4085 = vsel %vm3991, %v4084, %v4080
        %v4086 = vlaneseq
        %v4087 = vshrl.u32 %v4086, 7
        %v4088 = vsub.s32 %v3993, %v4087
        %v4089 = vrot.slane %v3700, %v4088
        %v4090 = vsel %vm3998, %v4089, %v4085
        %v4091 = vlaneseq
        %v4092 = vshrl.u32 %v4091, 7
        %v4093 = vsub.s32 %v4000, %v4092
        %v4094 = vrot.slane %v3701, %v4093
        %v4095 = vsel %vm4005, %v4094, %v4090
        %v4096 = vlaneseq
        %v4097 = vshrl.u32 %v4096, 7
        %v4098 = vsub.s32 %v4007, %v4097
        %v4099 = vrot.slane %v3702, %v4098
        %v4100 = vsel %vm4012, %v4099, %v4095
        %v4101 = vlaneseq
        %v4102 = vshrl.u32 %v4101, 7
        %v4103 = vsub.s32 %v4014, %v4102
        %v4104 = vrot.slane %v3703, %v4103
        %v4105 = vsel %vm4019, %v4104, %v4100
        %v4106 = vlaneseq
        %v4107 = vshrl.u32 %v4106, 7
        %v4108 = vsub.s32 %v4021, %v4107
        %v4109 = vrot.slane %v3704, %v4108
        %v4110 = vsel %vm4026, %v4109, %v4105
        %v4111 = vlaneseq
        %v4112 = vshrl.u32 %v4111, 7
        %v4113 = vsub.s32 %v4028, %v4112
        %v4114 = vrot.slane %v3705, %v4113
        %v4115 = vsel %vm4033, %v4114, %v4110
        %v4116 = vlaneseq
        %v4117 = vshrl.u32 %v4116, 7
        %v4118 = vsub.s32 %v4035, %v4117
        %v4119 = vrot.slane %v3706, %v4118
        %v4120 = vsel %vm4040, %v4119, %v4115
        %v4121 = vlaneseq
        %v4122 = vshrl.u32 %v4121, 7
        %v4123 = vsub.s32 %v3932, %v4122
        %v4124 = vrot.slane %v3707, %v4123
        %v4125 = vlaneseq
        %v4126 = vshrl.u32 %v4125, 7
        %v4127 = vsub.s32 %v3937, %v4126
        %v4128 = vrot.slane %v3708, %v4127
        %v4129 = vsel %vm3942, %v4128, %v4124
        %v4130 = vlaneseq
        %v4131 = vshrl.u32 %v4130, 7
        %v4132 = vsub.s32 %v3944, %v4131
        %v4133 = vrot.slane %v3709, %v4132
        %v4134 = vsel %vm3949, %v4133, %v4129
        %v4135 = vlaneseq
        %v4136 = vshrl.u32 %v4135, 7
        %v4137 = vsub.s32 %v3951, %v4136
        %v4138 = vrot.slane %v3710, %v4137
        %v4139 = vsel %vm3956, %v4138, %v4134
        %v4140 = vlaneseq
        %v4141 = vshrl.u32 %v4140, 7
        %v4142 = vsub.s32 %v3958, %v4141
        %v4143 = vrot.slane %v3711, %v4142
        %v4144 = vsel %vm3963, %v4143, %v4139
        %v4145 = vlaneseq
        %v4146 = vshrl.u32 %v4145, 7
        %v4147 = vsub.s32 %v3965, %v4146
        %v4148 = vrot.slane %v3712, %v4147
        %v4149 = vsel %vm3970, %v4148, %v4144
        %v4150 = vlaneseq
        %v4151 = vshrl.u32 %v4150, 7
        %v4152 = vsub.s32 %v3972, %v4151
        %v4153 = vrot.slane %v3713, %v4152
        %v4154 = vsel %vm3977, %v4153, %v4149
        %v4155 = vlaneseq
        %v4156 = vshrl.u32 %v4155, 7
        %v4157 = vsub.s32 %v3979, %v4156
        %v4158 = vrot.slane %v3714, %v4157
        %v4159 = vsel %vm3984, %v4158, %v4154
        %v4160 = vlaneseq
        %v4161 = vshrl.u32 %v4160, 7
        %v4162 = vsub.s32 %v3986, %v4161
        %v4163 = vrot.slane %v3715, %v4162
        %v4164 = vsel %vm3991, %v4163, %v4159
        %v4165 = vlaneseq
        %v4166 = vshrl.u32 %v4165, 7
        %v4167 = vsub.s32 %v3993, %v4166
        %v4168 = vrot.slane %v3716, %v4167
        %v4169 = vsel %vm3998, %v4168, %v4164
        %v4170 = vlaneseq
        %v4171 = vshrl.u32 %v4170, 7
        %v4172 = vsub.s32 %v4000, %v4171
        %v4173 = vrot.slane %v3717, %v4172
        %v4174 = vsel %vm4005, %v4173, %v4169
        %v4175 = vlaneseq
        %v4176 = vshrl.u32 %v4175, 7
        %v4177 = vsub.s32 %v4007, %v4176
        %v4178 = vrot.slane %v3718, %v4177
        %v4179 = vsel %vm4012, %v4178, %v4174
        %v4180 = vlaneseq
        %v4181 = vshrl.u32 %v4180, 7
        %v4182 = vsub.s32 %v4014, %v4181
        %v4183 = vrot.slane %v3719, %v4182
        %v4184 = vsel %vm4019, %v4183, %v4179
        %v4185 = vlaneseq
        %v4186 = vshrl.u32 %v4185, 7
        %v4187 = vsub.s32 %v4021, %v4186
        %v4188 = vrot.slane %v3720, %v4187
        %v4189 = vsel %vm4026, %v4188, %v4184
        %v4190 = vlaneseq
        %v4191 = vshrl.u32 %v4190, 7
        %v4192 = vsub.s32 %v4028, %v4191
        %v4193 = vrot.slane %v3721, %v4192
        %v4194 = vsel %vm4033, %v4193, %v4189
        %v4195 = vlaneseq
        %v4196 = vshrl.u32 %v4195, 7
        %v4197 = vsub.s32 %v4035, %v4196
        %v4198 = vrot.slane %v3722, %v4197
        %v4199 = vsel %vm4040, %v4198, %v4194
        %v4200 = vlaneseq
        %v4201 = vshrl.u32 %v4200, 7
        %v4202 = vsub.s32 %v3932, %v4201
        %v4203 = vrot.slane %v3723, %v4202
        %v4204 = vlaneseq
        %v4205 = vshrl.u32 %v4204, 7
        %v4206 = vsub.s32 %v3937, %v4205
        %v4207 = vrot.slane %v3724, %v4206
        %v4208 = vsel %vm3942, %v4207, %v4203
        %v4209 = vlaneseq
        %v4210 = vshrl.u32 %v4209, 7
        %v4211 = vsub.s32 %v3944, %v4210
        %v4212 = vrot.slane %v3725, %v4211
        %v4213 = vsel %vm3949, %v4212, %v4208
        %v4214 = vlaneseq
        %v4215 = vshrl.u32 %v4214, 7
        %v4216 = vsub.s32 %v3951, %v4215
        %v4217 = vrot.slane %v3726, %v4216
        %v4218 = vsel %vm3956, %v4217, %v4213
        %v4219 = vlaneseq
        %v4220 = vshrl.u32 %v4219, 7
        %v4221 = vsub.s32 %v3958, %v4220
        %v4222 = vrot.slane %v3727, %v4221
        %v4223 = vsel %vm3963, %v4222, %v4218
        %v4224 = vlaneseq
        %v4225 = vshrl.u32 %v4224, 7
        %v4226 = vsub.s32 %v3965, %v4225
        %v4227 = vrot.slane %v3728, %v4226
        %v4228 = vsel %vm3970, %v4227, %v4223
        %v4229 = vlaneseq
        %v4230 = vshrl.u32 %v4229, 7
        %v4231 = vsub.s32 %v3972, %v4230
        %v4232 = vrot.slane %v3729, %v4231
        %v4233 = vsel %vm3977, %v4232, %v4228
        %v4234 = vlaneseq
        %v4235 = vshrl.u32 %v4234, 7
        %v4236 = vsub.s32 %v3979, %v4235
        %v4237 = vrot.slane %v3730, %v4236
        %v4238 = vsel %vm3984, %v4237, %v4233
        %v4239 = vlaneseq
        %v4240 = vshrl.u32 %v4239, 7
        %v4241 = vsub.s32 %v3986, %v4240
        %v4242 = vrot.slane %v3731, %v4241
        %v4243 = vsel %vm3991, %v4242, %v4238
        %v4244 = vlaneseq
        %v4245 = vshrl.u32 %v4244, 7
        %v4246 = vsub.s32 %v3993, %v4245
        %v4247 = vrot.slane %v3732, %v4246
        %v4248 = vsel %vm3998, %v4247, %v4243
        %v4249 = vlaneseq
        %v4250 = vshrl.u32 %v4249, 7
        %v4251 = vsub.s32 %v4000, %v4250
        %v4252 = vrot.slane %v3733, %v4251
        %v4253 = vsel %vm4005, %v4252, %v4248
        %v4254 = vlaneseq
        %v4255 = vshrl.u32 %v4254, 7
        %v4256 = vsub.s32 %v4007, %v4255
        %v4257 = vrot.slane %v3734, %v4256
        %v4258 = vsel %vm4012, %v4257, %v4253
        %v4259 = vlaneseq
        %v4260 = vshrl.u32 %v4259, 7
        %v4261 = vsub.s32 %v4014, %v4260
        %v4262 = vrot.slane %v3735, %v4261
        %v4263 = vsel %vm4019, %v4262, %v4258
        %v4264 = vlaneseq
        %v4265 = vshrl.u32 %v4264, 7
        %v4266 = vsub.s32 %v4021, %v4265
        %v4267 = vrot.slane %v3736, %v4266
        %v4268 = vsel %vm4026, %v4267, %v4263
        %v4269 = vlaneseq
        %v4270 = vshrl.u32 %v4269, 7
        %v4271 = vsub.s32 %v4028, %v4270
        %v4272 = vrot.slane %v3737, %v4271
        %v4273 = vsel %vm4033, %v4272, %v4268
        %v4274 = vlaneseq
        %v4275 = vshrl.u32 %v4274, 7
        %v4276 = vsub.s32 %v4035, %v4275
        %v4277 = vrot.slane %v3738, %v4276
        %v4278 = vsel %vm4040, %v4277, %v4273
        %v4279 = vlaneseq
        %v4280 = vshrl.u32 %v4279, 7
        %v4281 = vsub.s32 %v3932, %v4280
        %v4282 = vrot.slane %v3739, %v4281
        %v4283 = vlaneseq
        %v4284 = vshrl.u32 %v4283, 7
        %v4285 = vsub.s32 %v3937, %v4284
        %v4286 = vrot.slane %v3740, %v4285
        %v4287 = vsel %vm3942, %v4286, %v4282
        %v4288 = vlaneseq
        %v4289 = vshrl.u32 %v4288, 7
        %v4290 = vsub.s32 %v3944, %v4289
        %v4291 = vrot.slane %v3741, %v4290
        %v4292 = vsel %vm3949, %v4291, %v4287
        %v4293 = vlaneseq
        %v4294 = vshrl.u32 %v4293, 7
        %v4295 = vsub.s32 %v3951, %v4294
        %v4296 = vrot.slane %v3742, %v4295
        %v4297 = vsel %vm3956, %v4296, %v4292
        %v4298 = vlaneseq
        %v4299 = vshrl.u32 %v4298, 7
        %v4300 = vsub.s32 %v3958, %v4299
        %v4301 = vrot.slane %v3743, %v4300
        %v4302 = vsel %vm3963, %v4301, %v4297
        %v4303 = vlaneseq
        %v4304 = vshrl.u32 %v4303, 7
        %v4305 = vsub.s32 %v3965, %v4304
        %v4306 = vrot.slane %v3744, %v4305
        %v4307 = vsel %vm3970, %v4306, %v4302
        %v4308 = vlaneseq
        %v4309 = vshrl.u32 %v4308, 7
        %v4310 = vsub.s32 %v3972, %v4309
        %v4311 = vrot.slane %v3745, %v4310
        %v4312 = vsel %vm3977, %v4311, %v4307
        %v4313 = vlaneseq
        %v4314 = vshrl.u32 %v4313, 7
        %v4315 = vsub.s32 %v3979, %v4314
        %v4316 = vrot.slane %v3746, %v4315
        %v4317 = vsel %vm3984, %v4316, %v4312
        %v4318 = vlaneseq
        %v4319 = vshrl.u32 %v4318, 7
        %v4320 = vsub.s32 %v3986, %v4319
        %v4321 = vrot.slane %v3747, %v4320
        %v4322 = vsel %vm3991, %v4321, %v4317
        %v4323 = vlaneseq
        %v4324 = vshrl.u32 %v4323, 7
        %v4325 = vsub.s32 %v3993, %v4324
        %v4326 = vrot.slane %v3748, %v4325
        %v4327 = vsel %vm3998, %v4326, %v4322
        %v4328 = vlaneseq
        %v4329 = vshrl.u32 %v4328, 7
        %v4330 = vsub.s32 %v4000, %v4329
        %v4331 = vrot.slane %v3749, %v4330
        %v4332 = vsel %vm4005, %v4331, %v4327
        %v4333 = vlaneseq
        %v4334 = vshrl.u32 %v4333, 7
        %v4335 = vsub.s32 %v4007, %v4334
        %v4336 = vrot.slane %v3750, %v4335
        %v4337 = vsel %vm4012, %v4336, %v4332
        %v4338 = vlaneseq
        %v4339 = vshrl.u32 %v4338, 7
        %v4340 = vsub.s32 %v4014, %v4339
        %v4341 = vrot.slane %v3751, %v4340
        %v4342 = vsel %vm4019, %v4341, %v4337
        %v4343 = vlaneseq
        %v4344 = vshrl.u32 %v4343, 7
        %v4345 = vsub.s32 %v4021, %v4344
        %v4346 = vrot.slane %v3752, %v4345
        %v4347 = vsel %vm4026, %v4346, %v4342
        %v4348 = vlaneseq
        %v4349 = vshrl.u32 %v4348, 7
        %v4350 = vsub.s32 %v4028, %v4349
        %v4351 = vrot.slane %v3753, %v4350
        %v4352 = vsel %vm4033, %v4351, %v4347
        %v4353 = vlaneseq
        %v4354 = vshrl.u32 %v4353, 7
        %v4355 = vsub.s32 %v4035, %v4354
        %v4356 = vrot.slane %v3754, %v4355
        %v4357 = vsel %vm4040, %v4356, %v4352
        %v4358 = vlaneseq
        %v4359 = vshrl.u32 %v4358, 7
        %v4360 = vsub.s32 %v3932, %v4359
        %v4361 = vrot.slane %v3755, %v4360
        %v4362 = vlaneseq
        %v4363 = vshrl.u32 %v4362, 7
        %v4364 = vsub.s32 %v3937, %v4363
        %v4365 = vrot.slane %v3756, %v4364
        %v4366 = vsel %vm3942, %v4365, %v4361
        %v4367 = vlaneseq
        %v4368 = vshrl.u32 %v4367, 7
        %v4369 = vsub.s32 %v3944, %v4368
        %v4370 = vrot.slane %v3757, %v4369
        %v4371 = vsel %vm3949, %v4370, %v4366
        %v4372 = vlaneseq
        %v4373 = vshrl.u32 %v4372, 7
        %v4374 = vsub.s32 %v3951, %v4373
        %v4375 = vrot.slane %v3758, %v4374
        %v4376 = vsel %vm3956, %v4375, %v4371
        %v4377 = vlaneseq
        %v4378 = vshrl.u32 %v4377, 7
        %v4379 = vsub.s32 %v3958, %v4378
        %v4380 = vrot.slane %v3759, %v4379
        %v4381 = vsel %vm3963, %v4380, %v4376
        %v4382 = vlaneseq
        %v4383 = vshrl.u32 %v4382, 7
        %v4384 = vsub.s32 %v3965, %v4383
        %v4385 = vrot.slane %v3760, %v4384
        %v4386 = vsel %vm3970, %v4385, %v4381
        %v4387 = vlaneseq
        %v4388 = vshrl.u32 %v4387, 7
        %v4389 = vsub.s32 %v3972, %v4388
        %v4390 = vrot.slane %v3761, %v4389
        %v4391 = vsel %vm3977, %v4390, %v4386
        %v4392 = vlaneseq
        %v4393 = vshrl.u32 %v4392, 7
        %v4394 = vsub.s32 %v3979, %v4393
        %v4395 = vrot.slane %v3762, %v4394
        %v4396 = vsel %vm3984, %v4395, %v4391
        %v4397 = vlaneseq
        %v4398 = vshrl.u32 %v4397, 7
        %v4399 = vsub.s32 %v3986, %v4398
        %v4400 = vrot.slane %v3763, %v4399
        %v4401 = vsel %vm3991, %v4400, %v4396
        %v4402 = vlaneseq
        %v4403 = vshrl.u32 %v4402, 7
        %v4404 = vsub.s32 %v3993, %v4403
        %v4405 = vrot.slane %v3764, %v4404
        %v4406 = vsel %vm3998, %v4405, %v4401
        %v4407 = vlaneseq
        %v4408 = vshrl.u32 %v4407, 7
        %v4409 = vsub.s32 %v4000, %v4408
        %v4410 = vrot.slane %v3765, %v4409
        %v4411 = vsel %vm4005, %v4410, %v4406
        %v4412 = vlaneseq
        %v4413 = vshrl.u32 %v4412, 7
        %v4414 = vsub.s32 %v4007, %v4413
        %v4415 = vrot.slane %v3766, %v4414
        %v4416 = vsel %vm4012, %v4415, %v4411
        %v4417 = vlaneseq
        %v4418 = vshrl.u32 %v4417, 7
        %v4419 = vsub.s32 %v4014, %v4418
        %v4420 = vrot.slane %v3767, %v4419
        %v4421 = vsel %vm4019, %v4420, %v4416
        %v4422 = vlaneseq
        %v4423 = vshrl.u32 %v4422, 7
        %v4424 = vsub.s32 %v4021, %v4423
        %v4425 = vrot.slane %v3768, %v4424
        %v4426 = vsel %vm4026, %v4425, %v4421
        %v4427 = vlaneseq
        %v4428 = vshrl.u32 %v4427, 7
        %v4429 = vsub.s32 %v4028, %v4428
        %v4430 = vrot.slane %v3769, %v4429
        %v4431 = vsel %vm4033, %v4430, %v4426
        %v4432 = vlaneseq
        %v4433 = vshrl.u32 %v4432, 7
        %v4434 = vsub.s32 %v4035, %v4433
        %v4435 = vrot.slane %v3770, %v4434
        %v4436 = vsel %vm4040, %v4435, %v4431
        %v4437 = vlaneseq
        %v4438 = vshrl.u32 %v4437, 7
        %v4439 = vsub.s32 %v3932, %v4438
        %v4440 = vrot.slane %v3771, %v4439
        %v4441 = vlaneseq
        %v4442 = vshrl.u32 %v4441, 7
        %v4443 = vsub.s32 %v3937, %v4442
        %v4444 = vrot.slane %v3772, %v4443
        %v4445 = vsel %vm3942, %v4444, %v4440
        %v4446 = vlaneseq
        %v4447 = vshrl.u32 %v4446, 7
        %v4448 = vsub.s32 %v3944, %v4447
        %v4449 = vrot.slane %v3773, %v4448
        %v4450 = vsel %vm3949, %v4449, %v4445
        %v4451 = vlaneseq
        %v4452 = vshrl.u32 %v4451, 7
        %v4453 = vsub.s32 %v3951, %v4452
        %v4454 = vrot.slane %v3774, %v4453
        %v4455 = vsel %vm3956, %v4454, %v4450
        %v4456 = vlaneseq
        %v4457 = vshrl.u32 %v4456, 7
        %v4458 = vsub.s32 %v3958, %v4457
        %v4459 = vrot.slane %v3775, %v4458
        %v4460 = vsel %vm3963, %v4459, %v4455
        %v4461 = vlaneseq
        %v4462 = vshrl.u32 %v4461, 7
        %v4463 = vsub.s32 %v3965, %v4462
        %v4464 = vrot.slane %v3776, %v4463
        %v4465 = vsel %vm3970, %v4464, %v4460
        %v4466 = vlaneseq
        %v4467 = vshrl.u32 %v4466, 7
        %v4468 = vsub.s32 %v3972, %v4467
        %v4469 = vrot.slane %v3777, %v4468
        %v4470 = vsel %vm3977, %v4469, %v4465
        %v4471 = vlaneseq
        %v4472 = vshrl.u32 %v4471, 7
        %v4473 = vsub.s32 %v3979, %v4472
        %v4474 = vrot.slane %v3778, %v4473
        %v4475 = vsel %vm3984, %v4474, %v4470
        %v4476 = vlaneseq
        %v4477 = vshrl.u32 %v4476, 7
        %v4478 = vsub.s32 %v3986, %v4477
        %v4479 = vrot.slane %v3779, %v4478
        %v4480 = vsel %vm3991, %v4479, %v4475
        %v4481 = vlaneseq
        %v4482 = vshrl.u32 %v4481, 7
        %v4483 = vsub.s32 %v3993, %v4482
        %v4484 = vrot.slane %v3780, %v4483
        %v4485 = vsel %vm3998, %v4484, %v4480
        %v4486 = vlaneseq
        %v4487 = vshrl.u32 %v4486, 7
        %v4488 = vsub.s32 %v4000, %v4487
        %v4489 = vrot.slane %v3781, %v4488
        %v4490 = vsel %vm4005, %v4489, %v4485
        %v4491 = vlaneseq
        %v4492 = vshrl.u32 %v4491, 7
        %v4493 = vsub.s32 %v4007, %v4492
        %v4494 = vrot.slane %v3782, %v4493
        %v4495 = vsel %vm4012, %v4494, %v4490
        %v4496 = vlaneseq
        %v4497 = vshrl.u32 %v4496, 7
        %v4498 = vsub.s32 %v4014, %v4497
        %v4499 = vrot.slane %v3783, %v4498
        %v4500 = vsel %vm4019, %v4499, %v4495
        %v4501 = vlaneseq
        %v4502 = vshrl.u32 %v4501, 7
        %v4503 = vsub.s32 %v4021, %v4502
        %v4504 = vrot.slane %v3784, %v4503
        %v4505 = vsel %vm4026, %v4504, %v4500
        %v4506 = vlaneseq
        %v4507 = vshrl.u32 %v4506, 7
        %v4508 = vsub.s32 %v4028, %v4507
        %v4509 = vrot.slane %v3785, %v4508
        %v4510 = vsel %vm4033, %v4509, %v4505
        %v4511 = vlaneseq
        %v4512 = vshrl.u32 %v4511, 7
        %v4513 = vsub.s32 %v4035, %v4512
        %v4514 = vrot.slane %v3786, %v4513
        %v4515 = vsel %vm4040, %v4514, %v4510
        %v4516 = vlaneseq
        %v4517 = vshrl.u32 %v4516, 7
        %v4518 = vsub.s32 %v3932, %v4517
        %v4519 = vrot.slane %v3787, %v4518
        %v4520 = vlaneseq
        %v4521 = vshrl.u32 %v4520, 7
        %v4522 = vsub.s32 %v3937, %v4521
        %v4523 = vrot.slane %v3788, %v4522
        %v4524 = vsel %vm3942, %v4523, %v4519
        %v4525 = vlaneseq
        %v4526 = vshrl.u32 %v4525, 7
        %v4527 = vsub.s32 %v3944, %v4526
        %v4528 = vrot.slane %v3789, %v4527
        %v4529 = vsel %vm3949, %v4528, %v4524
        %v4530 = vlaneseq
        %v4531 = vshrl.u32 %v4530, 7
        %v4532 = vsub.s32 %v3951, %v4531
        %v4533 = vrot.slane %v3790, %v4532
        %v4534 = vsel %vm3956, %v4533, %v4529
        %v4535 = vlaneseq
        %v4536 = vshrl.u32 %v4535, 7
        %v4537 = vsub.s32 %v3958, %v4536
        %v4538 = vrot.slane %v3791, %v4537
        %v4539 = vsel %vm3963, %v4538, %v4534
        %v4540 = vlaneseq
        %v4541 = vshrl.u32 %v4540, 7
        %v4542 = vsub.s32 %v3965, %v4541
        %v4543 = vrot.slane %v3792, %v4542
        %v4544 = vsel %vm3970, %v4543, %v4539
        %v4545 = vlaneseq
        %v4546 = vshrl.u32 %v4545, 7
        %v4547 = vsub.s32 %v3972, %v4546
        %v4548 = vrot.slane %v3793, %v4547
        %v4549 = vsel %vm3977, %v4548, %v4544
        %v4550 = vlaneseq
        %v4551 = vshrl.u32 %v4550, 7
        %v4552 = vsub.s32 %v3979, %v4551
        %v4553 = vrot.slane %v3794, %v4552
        %v4554 = vsel %vm3984, %v4553, %v4549
        %v4555 = vlaneseq
        %v4556 = vshrl.u32 %v4555, 7
        %v4557 = vsub.s32 %v3986, %v4556
        %v4558 = vrot.slane %v3795, %v4557
        %v4559 = vsel %vm3991, %v4558, %v4554
        %v4560 = vlaneseq
        %v4561 = vshrl.u32 %v4560, 7
        %v4562 = vsub.s32 %v3993, %v4561
        %v4563 = vrot.slane %v3796, %v4562
        %v4564 = vsel %vm3998, %v4563, %v4559
        %v4565 = vlaneseq
        %v4566 = vshrl.u32 %v4565, 7
        %v4567 = vsub.s32 %v4000, %v4566
        %v4568 = vrot.slane %v3797, %v4567
        %v4569 = vsel %vm4005, %v4568, %v4564
        %v4570 = vlaneseq
        %v4571 = vshrl.u32 %v4570, 7
        %v4572 = vsub.s32 %v4007, %v4571
        %v4573 = vrot.slane %v3798, %v4572
        %v4574 = vsel %vm4012, %v4573, %v4569
        %v4575 = vlaneseq
        %v4576 = vshrl.u32 %v4575, 7
        %v4577 = vsub.s32 %v4014, %v4576
        %v4578 = vrot.slane %v3799, %v4577
        %v4579 = vsel %vm4019, %v4578, %v4574
        %v4580 = vlaneseq
        %v4581 = vshrl.u32 %v4580, 7
        %v4582 = vsub.s32 %v4021, %v4581
        %v4583 = vrot.slane %v3800, %v4582
        %v4584 = vsel %vm4026, %v4583, %v4579
        %v4585 = vlaneseq
        %v4586 = vshrl.u32 %v4585, 7
        %v4587 = vsub.s32 %v4028, %v4586
        %v4588 = vrot.slane %v3801, %v4587
        %v4589 = vsel %vm4033, %v4588, %v4584
        %v4590 = vlaneseq
        %v4591 = vshrl.u32 %v4590, 7
        %v4592 = vsub.s32 %v4035, %v4591
        %v4593 = vrot.slane %v3802, %v4592
        %v4594 = vsel %vm4040, %v4593, %v4589
        %vm4595 = vcmask 1041409
        %v4596 = vsel %vm4595, %v4199, %v4041
        %vm4597 = vcmask 1042434
        %v4598 = vsel %vm4597, %v4357, %v4596
        %vm4599 = vcmask 1043459
        %v4600 = vsel %vm4599, %v4515, %v4598
        %v4601 = vsel %vm4595, %v4278, %v4120
        %v4602 = vsel %vm4597, %v4436, %v4601
        %v4603 = vsel %vm4599, %v4594, %v4602
        %vm4606 = vcmask 1043456
        %v4607 = vsel %vm4606, %v4600, 0.0
        %v4608 = vsel %vm4606, %v4603, 0.0
        %v4609 = vadd.f32 %v4607, %v4608
        %4610 = vadd.xlane.f32.xlu0 %v4609
        %v4611 = vpop.xlane.xlu0 %4610
        %v4612 = vmax.f32 %v4611, 1e-24
        %v4613 = vrsqrt.pop %v4612
        %v4615 = vlaneseq
        %v4616 = vshrl.u32 %v4615, 7
        %v4617 = vsub.s32 0, %v4616
        %v4618 = vrot.slane %v4613, %v4617
        %v4619 = vlaneseq
        %v4620 = vshrl.u32 %v4619, 7
        %v4621 = vsub.s32 1, %v4620
        %v4622 = vrot.slane %v4613, %v4621
        %v4623 = vlaneseq
        %v4624 = vshrl.u32 %v4623, 7
        %v4625 = vsub.s32 2, %v4624
        %v4626 = vrot.slane %v4613, %v4625
        %v4627 = vlaneseq
        %v4628 = vshrl.u32 %v4627, 7
        %v4629 = vsub.s32 3, %v4628
        %v4630 = vrot.slane %v4613, %v4629
        %v4635 = vmul.f32 %v3547, %v4618
        %v4636 = vmul.f32 %v3548, %v4618
        %v4637 = vmul.f32 %v3549, %v4618
        %v4638 = vmul.f32 %v3550, %v4618
        %v4639 = vmul.f32 %v3551, %v4618
        %v4640 = vmul.f32 %v3552, %v4618
        %v4641 = vmul.f32 %v3553, %v4618
        %v4642 = vmul.f32 %v3554, %v4618
        %v4643 = vmul.f32 %v3555, %v4618
        %v4644 = vmul.f32 %v3556, %v4618
        %v4645 = vmul.f32 %v3557, %v4618
        %v4646 = vmul.f32 %v3558, %v4618
        %v4647 = vmul.f32 %v3559, %v4618
        %v4648 = vmul.f32 %v3560, %v4618
        %v4649 = vmul.f32 %v3561, %v4618
        %v4650 = vmul.f32 %v3562, %v4618
        %v4651 = vmul.f32 %v3563, %v4618
        %v4652 = vmul.f32 %v3564, %v4618
        %v4653 = vmul.f32 %v3565, %v4618
        %v4654 = vmul.f32 %v3566, %v4618
        %v4655 = vmul.f32 %v3567, %v4618
        %v4656 = vmul.f32 %v3568, %v4618
        %v4657 = vmul.f32 %v3569, %v4618
        %v4658 = vmul.f32 %v3570, %v4618
        %v4659 = vmul.f32 %v3571, %v4618
        %v4660 = vmul.f32 %v3572, %v4618
        %v4661 = vmul.f32 %v3573, %v4618
        %v4662 = vmul.f32 %v3574, %v4618
        %v4663 = vmul.f32 %v3575, %v4618
        %v4664 = vmul.f32 %v3576, %v4618
        %v4665 = vmul.f32 %v3577, %v4618
        %v4666 = vmul.f32 %v3578, %v4618
        %v4667 = vmul.f32 %v3579, %v4622
        %v4668 = vmul.f32 %v3580, %v4622
        %v4669 = vmul.f32 %v3581, %v4622
        %v4670 = vmul.f32 %v3582, %v4622
        %v4671 = vmul.f32 %v3583, %v4622
        %v4672 = vmul.f32 %v3584, %v4622
        %v4673 = vmul.f32 %v3585, %v4622
        %v4674 = vmul.f32 %v3586, %v4622
        %v4675 = vmul.f32 %v3587, %v4622
        %v4676 = vmul.f32 %v3588, %v4622
        %v4677 = vmul.f32 %v3589, %v4622
        %v4678 = vmul.f32 %v3590, %v4622
        %v4679 = vmul.f32 %v3591, %v4622
        %v4680 = vmul.f32 %v3592, %v4622
        %v4681 = vmul.f32 %v3593, %v4622
        %v4682 = vmul.f32 %v3594, %v4622
        %v4683 = vmul.f32 %v3595, %v4622
        %v4684 = vmul.f32 %v3596, %v4622
        %v4685 = vmul.f32 %v3597, %v4622
        %v4686 = vmul.f32 %v3598, %v4622
        %v4687 = vmul.f32 %v3599, %v4622
        %v4688 = vmul.f32 %v3600, %v4622
        %v4689 = vmul.f32 %v3601, %v4622
        %v4690 = vmul.f32 %v3602, %v4622
        %v4691 = vmul.f32 %v3603, %v4622
        %v4692 = vmul.f32 %v3604, %v4622
        %v4693 = vmul.f32 %v3605, %v4622
        %v4694 = vmul.f32 %v3606, %v4622
        %v4695 = vmul.f32 %v3607, %v4622
        %v4696 = vmul.f32 %v3608, %v4622
        %v4697 = vmul.f32 %v3609, %v4622
        %v4698 = vmul.f32 %v3610, %v4622
        %v4699 = vmul.f32 %v3611, %v4626
        %v4700 = vmul.f32 %v3612, %v4626
        %v4701 = vmul.f32 %v3613, %v4626
        %v4702 = vmul.f32 %v3614, %v4626
        %v4703 = vmul.f32 %v3615, %v4626
        %v4704 = vmul.f32 %v3616, %v4626
        %v4705 = vmul.f32 %v3617, %v4626
        %v4706 = vmul.f32 %v3618, %v4626
        %v4707 = vmul.f32 %v3619, %v4626
        %v4708 = vmul.f32 %v3620, %v4626
        %v4709 = vmul.f32 %v3621, %v4626
        %v4710 = vmul.f32 %v3622, %v4626
        %v4711 = vmul.f32 %v3623, %v4626
        %v4712 = vmul.f32 %v3624, %v4626
        %v4713 = vmul.f32 %v3625, %v4626
        %v4714 = vmul.f32 %v3626, %v4626
        %v4715 = vmul.f32 %v3627, %v4626
        %v4716 = vmul.f32 %v3628, %v4626
        %v4717 = vmul.f32 %v3629, %v4626
        %v4718 = vmul.f32 %v3630, %v4626
        %v4719 = vmul.f32 %v3631, %v4626
        %v4720 = vmul.f32 %v3632, %v4626
        %v4721 = vmul.f32 %v3633, %v4626
        %v4722 = vmul.f32 %v3634, %v4626
        %v4723 = vmul.f32 %v3635, %v4626
        %v4724 = vmul.f32 %v3636, %v4626
        %v4725 = vmul.f32 %v3637, %v4626
        %v4726 = vmul.f32 %v3638, %v4626
        %v4727 = vmul.f32 %v3639, %v4626
        %v4728 = vmul.f32 %v3640, %v4626
        %v4729 = vmul.f32 %v3641, %v4626
        %v4730 = vmul.f32 %v3642, %v4626
        %v4731 = vmul.f32 %v3643, %v4630
        %v4732 = vmul.f32 %v3644, %v4630
        %v4733 = vmul.f32 %v3645, %v4630
        %v4734 = vmul.f32 %v3646, %v4630
        %v4735 = vmul.f32 %v3647, %v4630
        %v4736 = vmul.f32 %v3648, %v4630
        %v4737 = vmul.f32 %v3649, %v4630
        %v4738 = vmul.f32 %v3650, %v4630
        %v4739 = vmul.f32 %v3651, %v4630
        %v4740 = vmul.f32 %v3652, %v4630
        %v4741 = vmul.f32 %v3653, %v4630
        %v4742 = vmul.f32 %v3654, %v4630
        %v4743 = vmul.f32 %v3655, %v4630
        %v4744 = vmul.f32 %v3656, %v4630
        %v4745 = vmul.f32 %v3657, %v4630
        %v4746 = vmul.f32 %v3658, %v4630
        %v4747 = vmul.f32 %v3659, %v4630
        %v4748 = vmul.f32 %v3660, %v4630
        %v4749 = vmul.f32 %v3661, %v4630
        %v4750 = vmul.f32 %v3662, %v4630
        %v4751 = vmul.f32 %v3663, %v4630
        %v4752 = vmul.f32 %v3664, %v4630
        %v4753 = vmul.f32 %v3665, %v4630
        %v4754 = vmul.f32 %v3666, %v4630
        %v4755 = vmul.f32 %v3667, %v4630
        %v4756 = vmul.f32 %v3668, %v4630
        %v4757 = vmul.f32 %v3669, %v4630
        %v4758 = vmul.f32 %v3670, %v4630
        %v4759 = vmul.f32 %v3671, %v4630
        %v4760 = vmul.f32 %v3672, %v4630
        %v4761 = vmul.f32 %v3673, %v4630
        %v4762 = vmul.f32 %v3674, %v4630
        %v4763 = vpack.c.bf16 %v4636, %v4635
        %v4764 = vpack.c.bf16 %v4638, %v4637
        %v4765 = vpack.c.bf16 %v4640, %v4639
        %v4766 = vpack.c.bf16 %v4642, %v4641
        %v4767 = vpack.c.bf16 %v4644, %v4643
        %v4768 = vpack.c.bf16 %v4646, %v4645
        %v4769 = vpack.c.bf16 %v4648, %v4647
        %v4770 = vpack.c.bf16 %v4650, %v4649
        %v4771 = vpack.c.bf16 %v4652, %v4651
        %v4772 = vpack.c.bf16 %v4654, %v4653
        %v4773 = vpack.c.bf16 %v4656, %v4655
        %v4774 = vpack.c.bf16 %v4658, %v4657
        %v4775 = vpack.c.bf16 %v4660, %v4659
        %v4776 = vpack.c.bf16 %v4662, %v4661
        %v4777 = vpack.c.bf16 %v4664, %v4663
        %v4778 = vpack.c.bf16 %v4666, %v4665
        %v4779 = vpack.c.bf16 %v4668, %v4667
        %v4780 = vpack.c.bf16 %v4670, %v4669
        %v4781 = vpack.c.bf16 %v4672, %v4671
        %v4782 = vpack.c.bf16 %v4674, %v4673
        %v4783 = vpack.c.bf16 %v4676, %v4675
        %v4784 = vpack.c.bf16 %v4678, %v4677
        %v4785 = vpack.c.bf16 %v4680, %v4679
        %v4786 = vpack.c.bf16 %v4682, %v4681
        %v4787 = vpack.c.bf16 %v4684, %v4683
        %v4788 = vpack.c.bf16 %v4686, %v4685
        %v4789 = vpack.c.bf16 %v4688, %v4687
        %v4790 = vpack.c.bf16 %v4690, %v4689
        %v4791 = vpack.c.bf16 %v4692, %v4691
        %v4792 = vpack.c.bf16 %v4694, %v4693
        %v4793 = vpack.c.bf16 %v4696, %v4695
        %v4794 = vpack.c.bf16 %v4698, %v4697
        %v4795 = vpack.c.bf16 %v4700, %v4699
        %v4796 = vpack.c.bf16 %v4702, %v4701
        %v4797 = vpack.c.bf16 %v4704, %v4703
        %v4798 = vpack.c.bf16 %v4706, %v4705
        %v4799 = vpack.c.bf16 %v4708, %v4707
        %v4800 = vpack.c.bf16 %v4710, %v4709
        %v4801 = vpack.c.bf16 %v4712, %v4711
        %v4802 = vpack.c.bf16 %v4714, %v4713
        %v4803 = vpack.c.bf16 %v4716, %v4715
        %v4804 = vpack.c.bf16 %v4718, %v4717
        %v4805 = vpack.c.bf16 %v4720, %v4719
        %v4806 = vpack.c.bf16 %v4722, %v4721
        %v4807 = vpack.c.bf16 %v4724, %v4723
        %v4808 = vpack.c.bf16 %v4726, %v4725
        %v4809 = vpack.c.bf16 %v4728, %v4727
        %v4810 = vpack.c.bf16 %v4730, %v4729
        %v4811 = vpack.c.bf16 %v4732, %v4731
        %v4812 = vpack.c.bf16 %v4734, %v4733
        %v4813 = vpack.c.bf16 %v4736, %v4735
        %v4814 = vpack.c.bf16 %v4738, %v4737
        %v4815 = vpack.c.bf16 %v4740, %v4739
        %v4816 = vpack.c.bf16 %v4742, %v4741
        %v4817 = vpack.c.bf16 %v4744, %v4743
        %v4818 = vpack.c.bf16 %v4746, %v4745
        %v4819 = vpack.c.bf16 %v4748, %v4747
        %v4820 = vpack.c.bf16 %v4750, %v4749
        %v4821 = vpack.c.bf16 %v4752, %v4751
        %v4822 = vpack.c.bf16 %v4754, %v4753
        %v4823 = vpack.c.bf16 %v4756, %v4755
        %v4824 = vpack.c.bf16 %v4758, %v4757
        %v4825 = vpack.c.bf16 %v4760, %v4759
        %v4826 = vpack.c.bf16 %v4762, %v4761
        %v4827 = vld [vmem:[#allocation5] sm:$0xff]
        %v4828 = vld [vmem:[#allocation5 + $0x8] sm:$0xff]
        %v4829 = vld [vmem:[#allocation5 + $0x10] sm:$0xff]
        %v4830 = vld [vmem:[#allocation5 + $0x18] sm:$0xff]
        %v4831 = vld [vmem:[#allocation5 + $0x20] sm:$0xff]
        %v4832 = vld [vmem:[#allocation5 + $0x28] sm:$0xff]
        %v4833 = vld [vmem:[#allocation5 + $0x30] sm:$0xff]
        %v4834 = vld [vmem:[#allocation5 + $0x38] sm:$0xff]
        %v4835 = vld [vmem:[#allocation5 + $0x40] sm:$0xff]
        %v4836 = vld [vmem:[#allocation5 + $0x48] sm:$0xff]
        %v4837 = vld [vmem:[#allocation5 + $0x50] sm:$0xff]
        %v4838 = vld [vmem:[#allocation5 + $0x58] sm:$0xff]
        %v4839 = vld [vmem:[#allocation5 + $0x60] sm:$0xff]
        %v4840 = vld [vmem:[#allocation5 + $0x68] sm:$0xff]
        %v4841 = vld [vmem:[#allocation5 + $0x70] sm:$0xff]
        %v4842 = vld [vmem:[#allocation5 + $0x78] sm:$0xff]
        %v4843 = vld [vmem:[#allocation5 + $0x80] sm:$0xff]
        %v4844 = vld [vmem:[#allocation5 + $0x88] sm:$0xff]
        %v4845 = vld [vmem:[#allocation5 + $0x90] sm:$0xff]
        %v4846 = vld [vmem:[#allocation5 + $0x98] sm:$0xff]
        %v4847 = vld [vmem:[#allocation5 + $0xa0] sm:$0xff]
        %v4848 = vld [vmem:[#allocation5 + $0xa8] sm:$0xff]
        %v4849 = vld [vmem:[#allocation5 + $0xb0] sm:$0xff]
        %v4850 = vld [vmem:[#allocation5 + $0xb8] sm:$0xff]
        %v4851 = vld [vmem:[#allocation5 + $0xc0] sm:$0xff]
        %v4852 = vld [vmem:[#allocation5 + $0xc8] sm:$0xff]
        %v4853 = vld [vmem:[#allocation5 + $0xd0] sm:$0xff]
        %v4854 = vld [vmem:[#allocation5 + $0xd8] sm:$0xff]
        %v4855 = vld [vmem:[#allocation5 + $0xe0] sm:$0xff]
        %v4856 = vld [vmem:[#allocation5 + $0xe8] sm:$0xff]
        %v4857 = vld [vmem:[#allocation5 + $0xf0] sm:$0xff]
        %v4858 = vld [vmem:[#allocation5 + $0xf8] sm:$0xff]
        %v4859 = vld [vmem:[#allocation5 + $0x100] sm:$0xff]
        %v4860 = vld [vmem:[#allocation5 + $0x108] sm:$0xff]
        %v4861 = vld [vmem:[#allocation5 + $0x110] sm:$0xff]
        %v4862 = vld [vmem:[#allocation5 + $0x118] sm:$0xff]
        %v4863 = vld [vmem:[#allocation5 + $0x120] sm:$0xff]
        %v4864 = vld [vmem:[#allocation5 + $0x128] sm:$0xff]
        %v4865 = vld [vmem:[#allocation5 + $0x130] sm:$0xff]
        %v4866 = vld [vmem:[#allocation5 + $0x138] sm:$0xff]
        %v4867 = vld [vmem:[#allocation5 + $0x140] sm:$0xff]
        %v4868 = vld [vmem:[#allocation5 + $0x148] sm:$0xff]
        %v4869 = vld [vmem:[#allocation5 + $0x150] sm:$0xff]
        %v4870 = vld [vmem:[#allocation5 + $0x158] sm:$0xff]
        %v4871 = vld [vmem:[#allocation5 + $0x160] sm:$0xff]
        %v4872 = vld [vmem:[#allocation5 + $0x168] sm:$0xff]
        %v4873 = vld [vmem:[#allocation5 + $0x170] sm:$0xff]
        %v4874 = vld [vmem:[#allocation5 + $0x178] sm:$0xff]
        %v4875 = vld [vmem:[#allocation5 + $0x180] sm:$0xff]
        %v4876 = vld [vmem:[#allocation5 + $0x188] sm:$0xff]
        %v4877 = vld [vmem:[#allocation5 + $0x190] sm:$0xff]
        %v4878 = vld [vmem:[#allocation5 + $0x198] sm:$0xff]
        %v4879 = vld [vmem:[#allocation5 + $0x1a0] sm:$0xff]
        %v4880 = vld [vmem:[#allocation5 + $0x1a8] sm:$0xff]
        %v4881 = vld [vmem:[#allocation5 + $0x1b0] sm:$0xff]
        %v4882 = vld [vmem:[#allocation5 + $0x1b8] sm:$0xff]
        %v4883 = vld [vmem:[#allocation5 + $0x1c0] sm:$0xff]
        %v4884 = vld [vmem:[#allocation5 + $0x1c8] sm:$0xff]
        %v4885 = vld [vmem:[#allocation5 + $0x1d0] sm:$0xff]
        %v4886 = vld [vmem:[#allocation5 + $0x1d8] sm:$0xff]
        %v4887 = vld [vmem:[#allocation5 + $0x1e0] sm:$0xff]
        %v4888 = vld [vmem:[#allocation5 + $0x1e8] sm:$0xff]
        %v4889 = vld [vmem:[#allocation5 + $0x1f0] sm:$0xff]
        %v4890 = vld [vmem:[#allocation5 + $0x1f8] sm:$0xff]
        %v4891 = vld [vmem:[#allocation5 + $0x200] sm:$0xff]
        %v4892 = vld [vmem:[#allocation5 + $0x208] sm:$0xff]
        %v4893 = vld [vmem:[#allocation5 + $0x210] sm:$0xff]
        %v4894 = vld [vmem:[#allocation5 + $0x218] sm:$0xff]
        %v4895 = vld [vmem:[#allocation5 + $0x220] sm:$0xff]
        %v4896 = vld [vmem:[#allocation5 + $0x228] sm:$0xff]
        %v4897 = vld [vmem:[#allocation5 + $0x230] sm:$0xff]
        %v4898 = vld [vmem:[#allocation5 + $0x238] sm:$0xff]
        %v4899 = vld [vmem:[#allocation5 + $0x240] sm:$0xff]
        %v4900 = vld [vmem:[#allocation5 + $0x248] sm:$0xff]
        %v4901 = vld [vmem:[#allocation5 + $0x250] sm:$0xff]
        %v4902 = vld [vmem:[#allocation5 + $0x258] sm:$0xff]
        %v4903 = vld [vmem:[#allocation5 + $0x260] sm:$0xff]
        %v4904 = vld [vmem:[#allocation5 + $0x268] sm:$0xff]
        %v4905 = vld [vmem:[#allocation5 + $0x270] sm:$0xff]
        %v4906 = vld [vmem:[#allocation5 + $0x278] sm:$0xff]
        %v4907 = vld [vmem:[#allocation5 + $0x280] sm:$0xff]
        %v4908 = vld [vmem:[#allocation5 + $0x288] sm:$0xff]
        %v4909 = vld [vmem:[#allocation5 + $0x290] sm:$0xff]
        %v4910 = vld [vmem:[#allocation5 + $0x298] sm:$0xff]
        %v4911 = vld [vmem:[#allocation5 + $0x2a0] sm:$0xff]
        %v4912 = vld [vmem:[#allocation5 + $0x2a8] sm:$0xff]
        %v4913 = vld [vmem:[#allocation5 + $0x2b0] sm:$0xff]
        %v4914 = vld [vmem:[#allocation5 + $0x2b8] sm:$0xff]
        %v4915 = vld [vmem:[#allocation5 + $0x2c0] sm:$0xff]
        %v4916 = vld [vmem:[#allocation5 + $0x2c8] sm:$0xff]
        %v4917 = vld [vmem:[#allocation5 + $0x2d0] sm:$0xff]
        %v4918 = vld [vmem:[#allocation5 + $0x2d8] sm:$0xff]
        %v4919 = vld [vmem:[#allocation5 + $0x2e0] sm:$0xff]
        %v4920 = vld [vmem:[#allocation5 + $0x2e8] sm:$0xff]
        %v4921 = vld [vmem:[#allocation5 + $0x2f0] sm:$0xff]
        %v4922 = vld [vmem:[#allocation5 + $0x2f8] sm:$0xff]
        %v4923 = vld [vmem:[#allocation5 + $0x300] sm:$0xff]
        %v4924 = vld [vmem:[#allocation5 + $0x308] sm:$0xff]
        %v4925 = vld [vmem:[#allocation5 + $0x310] sm:$0xff]
        %v4926 = vld [vmem:[#allocation5 + $0x318] sm:$0xff]
        %v4927 = vld [vmem:[#allocation5 + $0x320] sm:$0xff]
        %v4928 = vld [vmem:[#allocation5 + $0x328] sm:$0xff]
        %v4929 = vld [vmem:[#allocation5 + $0x330] sm:$0xff]
        %v4930 = vld [vmem:[#allocation5 + $0x338] sm:$0xff]
        %v4931 = vld [vmem:[#allocation5 + $0x340] sm:$0xff]
        %v4932 = vld [vmem:[#allocation5 + $0x348] sm:$0xff]
        %v4933 = vld [vmem:[#allocation5 + $0x350] sm:$0xff]
        %v4934 = vld [vmem:[#allocation5 + $0x358] sm:$0xff]
        %v4935 = vld [vmem:[#allocation5 + $0x360] sm:$0xff]
        %v4936 = vld [vmem:[#allocation5 + $0x368] sm:$0xff]
        %v4937 = vld [vmem:[#allocation5 + $0x370] sm:$0xff]
        %v4938 = vld [vmem:[#allocation5 + $0x378] sm:$0xff]
        %v4939 = vld [vmem:[#allocation5 + $0x380] sm:$0xff]
        %v4940 = vld [vmem:[#allocation5 + $0x388] sm:$0xff]
        %v4941 = vld [vmem:[#allocation5 + $0x390] sm:$0xff]
        %v4942 = vld [vmem:[#allocation5 + $0x398] sm:$0xff]
        %v4943 = vld [vmem:[#allocation5 + $0x3a0] sm:$0xff]
        %v4944 = vld [vmem:[#allocation5 + $0x3a8] sm:$0xff]
        %v4945 = vld [vmem:[#allocation5 + $0x3b0] sm:$0xff]
        %v4946 = vld [vmem:[#allocation5 + $0x3b8] sm:$0xff]
        %v4947 = vld [vmem:[#allocation5 + $0x3c0] sm:$0xff]
        %v4948 = vld [vmem:[#allocation5 + $0x3c8] sm:$0xff]
        %v4949 = vld [vmem:[#allocation5 + $0x3d0] sm:$0xff]
        %v4950 = vld [vmem:[#allocation5 + $0x3d8] sm:$0xff]
        %v4951 = vld [vmem:[#allocation5 + $0x3e0] sm:$0xff]
        %v4952 = vld [vmem:[#allocation5 + $0x3e8] sm:$0xff]
        %v4953 = vld [vmem:[#allocation5 + $0x3f0] sm:$0xff]
        %v4954 = vld [vmem:[#allocation5 + $0x3f8] sm:$0xff]
        %v4955 = vld [vmem:[#allocation7] sm:$0xff]
        %v4957 = vlaneseq
        %v4958 = vshrl.u32 %v4957, 7
        %v4959 = vsub.s32 0, %v4958
        %v4960 = vrot.slane %v4955, %v4959
        %v4961 = vlaneseq
        %v4962 = vshrl.u32 %v4961, 7
        %v4963 = vsub.s32 1, %v4962
        %v4964 = vrot.slane %v4955, %v4963
        %v4965 = vlaneseq
        %v4966 = vshrl.u32 %v4965, 7
        %v4967 = vsub.s32 2, %v4966
        %v4968 = vrot.slane %v4955, %v4967
        %v4969 = vlaneseq
        %v4970 = vshrl.u32 %v4969, 7
        %v4971 = vsub.s32 3, %v4970
        %v4972 = vrot.slane %v4955, %v4971
        %v4973 = vlaneseq
        %v4974 = vshrl.u32 %v4973, 7
        %v4975 = vsub.s32 4, %v4974
        %v4976 = vrot.slane %v4955, %v4975
        %v4977 = vlaneseq
        %v4978 = vshrl.u32 %v4977, 7
        %v4979 = vsub.s32 5, %v4978
        %v4980 = vrot.slane %v4955, %v4979
        %v4981 = vlaneseq
        %v4982 = vshrl.u32 %v4981, 7
        %v4983 = vsub.s32 6, %v4982
        %v4984 = vrot.slane %v4955, %v4983
        %v4985 = vlaneseq
        %v4986 = vshrl.u32 %v4985, 7
        %v4987 = vsub.s32 7, %v4986
        %v4988 = vrot.slane %v4955, %v4987
        %v5061 = vunpack.c.l.b16 %v4763
        %v5062 = vunpack.c.h.b16 %v4763
        %v5063 = vunpack.c.l.b16 %v4764
        %v5064 = vunpack.c.h.b16 %v4764
        %v5065 = vunpack.c.l.b16 %v4765
        %v5066 = vunpack.c.h.b16 %v4765
        %v5067 = vunpack.c.l.b16 %v4766
        %v5068 = vunpack.c.h.b16 %v4766
        %v5069 = vunpack.c.l.b16 %v4767
        %v5070 = vunpack.c.h.b16 %v4767
        %v5071 = vunpack.c.l.b16 %v4768
        %v5072 = vunpack.c.h.b16 %v4768
        %v5073 = vunpack.c.l.b16 %v4769
        %v5074 = vunpack.c.h.b16 %v4769
        %v5075 = vunpack.c.l.b16 %v4770
        %v5076 = vunpack.c.h.b16 %v4770
        %v5077 = vunpack.c.l.b16 %v4771
        %v5078 = vunpack.c.h.b16 %v4771
        %v5079 = vunpack.c.l.b16 %v4772
        %v5080 = vunpack.c.h.b16 %v4772
        %v5081 = vunpack.c.l.b16 %v4773
        %v5082 = vunpack.c.h.b16 %v4773
        %v5083 = vunpack.c.l.b16 %v4774
        %v5084 = vunpack.c.h.b16 %v4774
        %v5085 = vunpack.c.l.b16 %v4775
        %v5086 = vunpack.c.h.b16 %v4775
        %v5087 = vunpack.c.l.b16 %v4776
        %v5088 = vunpack.c.h.b16 %v4776
        %v5089 = vunpack.c.l.b16 %v4777
        %v5090 = vunpack.c.h.b16 %v4777
        %v5091 = vunpack.c.l.b16 %v4778
        %v5092 = vunpack.c.h.b16 %v4778
        %v5093 = vunpack.c.l.b16 %v4779
        %v5094 = vunpack.c.h.b16 %v4779
        %v5095 = vunpack.c.l.b16 %v4780
        %v5096 = vunpack.c.h.b16 %v4780
        %v5097 = vunpack.c.l.b16 %v4781
        %v5098 = vunpack.c.h.b16 %v4781
        %v5099 = vunpack.c.l.b16 %v4782
        %v5100 = vunpack.c.h.b16 %v4782
        %v5101 = vunpack.c.l.b16 %v4783
        %v5102 = vunpack.c.h.b16 %v4783
        %v5103 = vunpack.c.l.b16 %v4784
        %v5104 = vunpack.c.h.b16 %v4784
        %v5105 = vunpack.c.l.b16 %v4785
        %v5106 = vunpack.c.h.b16 %v4785
        %v5107 = vunpack.c.l.b16 %v4786
        %v5108 = vunpack.c.h.b16 %v4786
        %v5109 = vunpack.c.l.b16 %v4787
        %v5110 = vunpack.c.h.b16 %v4787
        %v5111 = vunpack.c.l.b16 %v4788
        %v5112 = vunpack.c.h.b16 %v4788
        %v5113 = vunpack.c.l.b16 %v4789
        %v5114 = vunpack.c.h.b16 %v4789
        %v5115 = vunpack.c.l.b16 %v4790
        %v5116 = vunpack.c.h.b16 %v4790
        %v5117 = vunpack.c.l.b16 %v4791
        %v5118 = vunpack.c.h.b16 %v4791
        %v5119 = vunpack.c.l.b16 %v4792
        %v5120 = vunpack.c.h.b16 %v4792
        %v5121 = vunpack.c.l.b16 %v4793
        %v5122 = vunpack.c.h.b16 %v4793
        %v5123 = vunpack.c.l.b16 %v4794
        %v5124 = vunpack.c.h.b16 %v4794
        %v5125 = vunpack.c.l.b16 %v4795
        %v5126 = vunpack.c.h.b16 %v4795
        %v5127 = vunpack.c.l.b16 %v4796
        %v5128 = vunpack.c.h.b16 %v4796
        %v5129 = vunpack.c.l.b16 %v4797
        %v5130 = vunpack.c.h.b16 %v4797
        %v5131 = vunpack.c.l.b16 %v4798
        %v5132 = vunpack.c.h.b16 %v4798
        %v5133 = vunpack.c.l.b16 %v4799
        %v5134 = vunpack.c.h.b16 %v4799
        %v5135 = vunpack.c.l.b16 %v4800
        %v5136 = vunpack.c.h.b16 %v4800
        %v5137 = vunpack.c.l.b16 %v4801
        %v5138 = vunpack.c.h.b16 %v4801
        %v5139 = vunpack.c.l.b16 %v4802
        %v5140 = vunpack.c.h.b16 %v4802
        %v5141 = vunpack.c.l.b16 %v4803
        %v5142 = vunpack.c.h.b16 %v4803
        %v5143 = vunpack.c.l.b16 %v4804
        %v5144 = vunpack.c.h.b16 %v4804
        %v5145 = vunpack.c.l.b16 %v4805
        %v5146 = vunpack.c.h.b16 %v4805
        %v5147 = vunpack.c.l.b16 %v4806
        %v5148 = vunpack.c.h.b16 %v4806
        %v5149 = vunpack.c.l.b16 %v4807
        %v5150 = vunpack.c.h.b16 %v4807
        %v5151 = vunpack.c.l.b16 %v4808
        %v5152 = vunpack.c.h.b16 %v4808
        %v5153 = vunpack.c.l.b16 %v4809
        %v5154 = vunpack.c.h.b16 %v4809
        %v5155 = vunpack.c.l.b16 %v4810
        %v5156 = vunpack.c.h.b16 %v4810
        %v5157 = vunpack.c.l.b16 %v4811
        %v5158 = vunpack.c.h.b16 %v4811
        %v5159 = vunpack.c.l.b16 %v4812
        %v5160 = vunpack.c.h.b16 %v4812
        %v5161 = vunpack.c.l.b16 %v4813
        %v5162 = vunpack.c.h.b16 %v4813
        %v5163 = vunpack.c.l.b16 %v4814
        %v5164 = vunpack.c.h.b16 %v4814
        %v5165 = vunpack.c.l.b16 %v4815
        %v5166 = vunpack.c.h.b16 %v4815
        %v5167 = vunpack.c.l.b16 %v4816
        %v5168 = vunpack.c.h.b16 %v4816
        %v5169 = vunpack.c.l.b16 %v4817
        %v5170 = vunpack.c.h.b16 %v4817
        %v5171 = vunpack.c.l.b16 %v4818
        %v5172 = vunpack.c.h.b16 %v4818
        %v5173 = vunpack.c.l.b16 %v4819
        %v5174 = vunpack.c.h.b16 %v4819
        %v5175 = vunpack.c.l.b16 %v4820
        %v5176 = vunpack.c.h.b16 %v4820
        %v5177 = vunpack.c.l.b16 %v4821
        %v5178 = vunpack.c.h.b16 %v4821
        %v5179 = vunpack.c.l.b16 %v4822
        %v5180 = vunpack.c.h.b16 %v4822
        %v5181 = vunpack.c.l.b16 %v4823
        %v5182 = vunpack.c.h.b16 %v4823
        %v5183 = vunpack.c.l.b16 %v4824
        %v5184 = vunpack.c.h.b16 %v4824
        %v5185 = vunpack.c.l.b16 %v4825
        %v5186 = vunpack.c.h.b16 %v4825
        %v5187 = vunpack.c.l.b16 %v4826
        %v5188 = vunpack.c.h.b16 %v4826
        %5189 = vset.pattern.permute.xlu0 0
        %5190 = vperm.xlu0 %5189, %v5061
        %v5191 = vpop.permute.xlu0 %5190
        %5192 = vset.pattern.permute.xlu0 0
        %5193 = vperm.xlu0 %5192, %v5062
        %v5194 = vpop.permute.xlu0 %5193
        %5195 = vset.pattern.permute.xlu0 0
        %5196 = vperm.xlu0 %5195, %v5063
        %v5197 = vpop.permute.xlu0 %5196
        %5198 = vset.pattern.permute.xlu0 0
        %5199 = vperm.xlu0 %5198, %v5064
        %v5200 = vpop.permute.xlu0 %5199
        %5201 = vset.pattern.permute.xlu0 0
        %5202 = vperm.xlu0 %5201, %v5065
        %v5203 = vpop.permute.xlu0 %5202
        %5204 = vset.pattern.permute.xlu0 0
        %5205 = vperm.xlu0 %5204, %v5066
        %v5206 = vpop.permute.xlu0 %5205
        %5207 = vset.pattern.permute.xlu0 0
        %5208 = vperm.xlu0 %5207, %v5067
        %v5209 = vpop.permute.xlu0 %5208
        %5210 = vset.pattern.permute.xlu0 0
        %5211 = vperm.xlu0 %5210, %v5068
        %v5212 = vpop.permute.xlu0 %5211
        %5213 = vset.pattern.permute.xlu0 0
        %5214 = vperm.xlu0 %5213, %v5069
        %v5215 = vpop.permute.xlu0 %5214
        %5216 = vset.pattern.permute.xlu0 0
        %5217 = vperm.xlu0 %5216, %v5070
        %v5218 = vpop.permute.xlu0 %5217
        %5219 = vset.pattern.permute.xlu0 0
        %5220 = vperm.xlu0 %5219, %v5071
        %v5221 = vpop.permute.xlu0 %5220
        %5222 = vset.pattern.permute.xlu0 0
        %5223 = vperm.xlu0 %5222, %v5072
        %v5224 = vpop.permute.xlu0 %5223
        %5225 = vset.pattern.permute.xlu0 0
        %5226 = vperm.xlu0 %5225, %v5073
        %v5227 = vpop.permute.xlu0 %5226
        %5228 = vset.pattern.permute.xlu0 0
        %5229 = vperm.xlu0 %5228, %v5074
        %v5230 = vpop.permute.xlu0 %5229
        %5231 = vset.pattern.permute.xlu0 0
        %5232 = vperm.xlu0 %5231, %v5075
        %v5233 = vpop.permute.xlu0 %5232
        %5234 = vset.pattern.permute.xlu0 0
        %5235 = vperm.xlu0 %5234, %v5076
        %v5236 = vpop.permute.xlu0 %5235
        %5237 = vset.pattern.permute.xlu0 0
        %5238 = vperm.xlu0 %5237, %v5077
        %v5239 = vpop.permute.xlu0 %5238
        %5240 = vset.pattern.permute.xlu0 0
        %5241 = vperm.xlu0 %5240, %v5078
        %v5242 = vpop.permute.xlu0 %5241
        %5243 = vset.pattern.permute.xlu0 0
        %5244 = vperm.xlu0 %5243, %v5079
        %v5245 = vpop.permute.xlu0 %5244
        %5246 = vset.pattern.permute.xlu0 0
        %5247 = vperm.xlu0 %5246, %v5080
        %v5248 = vpop.permute.xlu0 %5247
        %5249 = vset.pattern.permute.xlu0 0
        %5250 = vperm.xlu0 %5249, %v5081
        %v5251 = vpop.permute.xlu0 %5250
        %5252 = vset.pattern.permute.xlu0 0
        %5253 = vperm.xlu0 %5252, %v5082
        %v5254 = vpop.permute.xlu0 %5253
        %5255 = vset.pattern.permute.xlu0 0
        %5256 = vperm.xlu0 %5255, %v5083
        %v5257 = vpop.permute.xlu0 %5256
        %5258 = vset.pattern.permute.xlu0 0
        %5259 = vperm.xlu0 %5258, %v5084
        %v5260 = vpop.permute.xlu0 %5259
        %5261 = vset.pattern.permute.xlu0 0
        %5262 = vperm.xlu0 %5261, %v5085
        %v5263 = vpop.permute.xlu0 %5262
        %5264 = vset.pattern.permute.xlu0 0
        %5265 = vperm.xlu0 %5264, %v5086
        %v5266 = vpop.permute.xlu0 %5265
        %5267 = vset.pattern.permute.xlu0 0
        %5268 = vperm.xlu0 %5267, %v5087
        %v5269 = vpop.permute.xlu0 %5268
        %5270 = vset.pattern.permute.xlu0 0
        %5271 = vperm.xlu0 %5270, %v5088
        %v5272 = vpop.permute.xlu0 %5271
        %5273 = vset.pattern.permute.xlu0 0
        %5274 = vperm.xlu0 %5273, %v5089
        %v5275 = vpop.permute.xlu0 %5274
        %5276 = vset.pattern.permute.xlu0 0
        %5277 = vperm.xlu0 %5276, %v5090
        %v5278 = vpop.permute.xlu0 %5277
        %5279 = vset.pattern.permute.xlu0 0
        %5280 = vperm.xlu0 %5279, %v5091
        %v5281 = vpop.permute.xlu0 %5280
        %5282 = vset.pattern.permute.xlu0 0
        %5283 = vperm.xlu0 %5282, %v5092
        %v5284 = vpop.permute.xlu0 %5283
        %5285 = vset.pattern.permute.xlu0 0
        %5286 = vperm.xlu0 %5285, %v5093
        %v5287 = vpop.permute.xlu0 %5286
        %5288 = vset.pattern.permute.xlu0 0
        %5289 = vperm.xlu0 %5288, %v5094
        %v5290 = vpop.permute.xlu0 %5289
        %5291 = vset.pattern.permute.xlu0 0
        %5292 = vperm.xlu0 %5291, %v5095
        %v5293 = vpop.permute.xlu0 %5292
        %5294 = vset.pattern.permute.xlu0 0
        %5295 = vperm.xlu0 %5294, %v5096
        %v5296 = vpop.permute.xlu0 %5295
        %5297 = vset.pattern.permute.xlu0 0
        %5298 = vperm.xlu0 %5297, %v5097
        %v5299 = vpop.permute.xlu0 %5298
        %5300 = vset.pattern.permute.xlu0 0
        %5301 = vperm.xlu0 %5300, %v5098
        %v5302 = vpop.permute.xlu0 %5301
        %5303 = vset.pattern.permute.xlu0 0
        %5304 = vperm.xlu0 %5303, %v5099
        %v5305 = vpop.permute.xlu0 %5304
        %5306 = vset.pattern.permute.xlu0 0
        %5307 = vperm.xlu0 %5306, %v5100
        %v5308 = vpop.permute.xlu0 %5307
        %5309 = vset.pattern.permute.xlu0 0
        %5310 = vperm.xlu0 %5309, %v5101
        %v5311 = vpop.permute.xlu0 %5310
        %5312 = vset.pattern.permute.xlu0 0
        %5313 = vperm.xlu0 %5312, %v5102
        %v5314 = vpop.permute.xlu0 %5313
        %5315 = vset.pattern.permute.xlu0 0
        %5316 = vperm.xlu0 %5315, %v5103
        %v5317 = vpop.permute.xlu0 %5316
        %5318 = vset.pattern.permute.xlu0 0
        %5319 = vperm.xlu0 %5318, %v5104
        %v5320 = vpop.permute.xlu0 %5319
        %5321 = vset.pattern.permute.xlu0 0
        %5322 = vperm.xlu0 %5321, %v5105
        %v5323 = vpop.permute.xlu0 %5322
        %5324 = vset.pattern.permute.xlu0 0
        %5325 = vperm.xlu0 %5324, %v5106
        %v5326 = vpop.permute.xlu0 %5325
        %5327 = vset.pattern.permute.xlu0 0
        %5328 = vperm.xlu0 %5327, %v5107
        %v5329 = vpop.permute.xlu0 %5328
        %5330 = vset.pattern.permute.xlu0 0
        %5331 = vperm.xlu0 %5330, %v5108
        %v5332 = vpop.permute.xlu0 %5331
        %5333 = vset.pattern.permute.xlu0 0
        %5334 = vperm.xlu0 %5333, %v5109
        %v5335 = vpop.permute.xlu0 %5334
        %5336 = vset.pattern.permute.xlu0 0
        %5337 = vperm.xlu0 %5336, %v5110
        %v5338 = vpop.permute.xlu0 %5337
        %5339 = vset.pattern.permute.xlu0 0
        %5340 = vperm.xlu0 %5339, %v5111
        %v5341 = vpop.permute.xlu0 %5340
        %5342 = vset.pattern.permute.xlu0 0
        %5343 = vperm.xlu0 %5342, %v5112
        %v5344 = vpop.permute.xlu0 %5343
        %5345 = vset.pattern.permute.xlu0 0
        %5346 = vperm.xlu0 %5345, %v5113
        %v5347 = vpop.permute.xlu0 %5346
        %5348 = vset.pattern.permute.xlu0 0
        %5349 = vperm.xlu0 %5348, %v5114
        %v5350 = vpop.permute.xlu0 %5349
        %5351 = vset.pattern.permute.xlu0 0
        %5352 = vperm.xlu0 %5351, %v5115
        %v5353 = vpop.permute.xlu0 %5352
        %5354 = vset.pattern.permute.xlu0 0
        %5355 = vperm.xlu0 %5354, %v5116
        %v5356 = vpop.permute.xlu0 %5355
        %5357 = vset.pattern.permute.xlu0 0
        %5358 = vperm.xlu0 %5357, %v5117
        %v5359 = vpop.permute.xlu0 %5358
        %5360 = vset.pattern.permute.xlu0 0
        %5361 = vperm.xlu0 %5360, %v5118
        %v5362 = vpop.permute.xlu0 %5361
        %5363 = vset.pattern.permute.xlu0 0
        %5364 = vperm.xlu0 %5363, %v5119
        %v5365 = vpop.permute.xlu0 %5364
        %5366 = vset.pattern.permute.xlu0 0
        %5367 = vperm.xlu0 %5366, %v5120
        %v5368 = vpop.permute.xlu0 %5367
        %5369 = vset.pattern.permute.xlu0 0
        %5370 = vperm.xlu0 %5369, %v5121
        %v5371 = vpop.permute.xlu0 %5370
        %5372 = vset.pattern.permute.xlu0 0
        %5373 = vperm.xlu0 %5372, %v5122
        %v5374 = vpop.permute.xlu0 %5373
        %5375 = vset.pattern.permute.xlu0 0
        %5376 = vperm.xlu0 %5375, %v5123
        %v5377 = vpop.permute.xlu0 %5376
        %5378 = vset.pattern.permute.xlu0 0
        %5379 = vperm.xlu0 %5378, %v5124
        %v5380 = vpop.permute.xlu0 %5379
        %5381 = vset.pattern.permute.xlu0 0
        %5382 = vperm.xlu0 %5381, %v5125
        %v5383 = vpop.permute.xlu0 %5382
        %5384 = vset.pattern.permute.xlu0 0
        %5385 = vperm.xlu0 %5384, %v5126
        %v5386 = vpop.permute.xlu0 %5385
        %5387 = vset.pattern.permute.xlu0 0
        %5388 = vperm.xlu0 %5387, %v5127
        %v5389 = vpop.permute.xlu0 %5388
        %5390 = vset.pattern.permute.xlu0 0
        %5391 = vperm.xlu0 %5390, %v5128
        %v5392 = vpop.permute.xlu0 %5391
        %5393 = vset.pattern.permute.xlu0 0
        %5394 = vperm.xlu0 %5393, %v5129
        %v5395 = vpop.permute.xlu0 %5394
        %5396 = vset.pattern.permute.xlu0 0
        %5397 = vperm.xlu0 %5396, %v5130
        %v5398 = vpop.permute.xlu0 %5397
        %5399 = vset.pattern.permute.xlu0 0
        %5400 = vperm.xlu0 %5399, %v5131
        %v5401 = vpop.permute.xlu0 %5400
        %5402 = vset.pattern.permute.xlu0 0
        %5403 = vperm.xlu0 %5402, %v5132
        %v5404 = vpop.permute.xlu0 %5403
        %5405 = vset.pattern.permute.xlu0 0
        %5406 = vperm.xlu0 %5405, %v5133
        %v5407 = vpop.permute.xlu0 %5406
        %5408 = vset.pattern.permute.xlu0 0
        %5409 = vperm.xlu0 %5408, %v5134
        %v5410 = vpop.permute.xlu0 %5409
        %5411 = vset.pattern.permute.xlu0 0
        %5412 = vperm.xlu0 %5411, %v5135
        %v5413 = vpop.permute.xlu0 %5412
        %5414 = vset.pattern.permute.xlu0 0
        %5415 = vperm.xlu0 %5414, %v5136
        %v5416 = vpop.permute.xlu0 %5415
        %5417 = vset.pattern.permute.xlu0 0
        %5418 = vperm.xlu0 %5417, %v5137
        %v5419 = vpop.permute.xlu0 %5418
        %5420 = vset.pattern.permute.xlu0 0
        %5421 = vperm.xlu0 %5420, %v5138
        %v5422 = vpop.permute.xlu0 %5421
        %5423 = vset.pattern.permute.xlu0 0
        %5424 = vperm.xlu0 %5423, %v5139
        %v5425 = vpop.permute.xlu0 %5424
        %5426 = vset.pattern.permute.xlu0 0
        %5427 = vperm.xlu0 %5426, %v5140
        %v5428 = vpop.permute.xlu0 %5427
        %5429 = vset.pattern.permute.xlu0 0
        %5430 = vperm.xlu0 %5429, %v5141
        %v5431 = vpop.permute.xlu0 %5430
        %5432 = vset.pattern.permute.xlu0 0
        %5433 = vperm.xlu0 %5432, %v5142
        %v5434 = vpop.permute.xlu0 %5433
        %5435 = vset.pattern.permute.xlu0 0
        %5436 = vperm.xlu0 %5435, %v5143
        %v5437 = vpop.permute.xlu0 %5436
        %5438 = vset.pattern.permute.xlu0 0
        %5439 = vperm.xlu0 %5438, %v5144
        %v5440 = vpop.permute.xlu0 %5439
        %5441 = vset.pattern.permute.xlu0 0
        %5442 = vperm.xlu0 %5441, %v5145
        %v5443 = vpop.permute.xlu0 %5442
        %5444 = vset.pattern.permute.xlu0 0
        %5445 = vperm.xlu0 %5444, %v5146
        %v5446 = vpop.permute.xlu0 %5445
        %5447 = vset.pattern.permute.xlu0 0
        %5448 = vperm.xlu0 %5447, %v5147
        %v5449 = vpop.permute.xlu0 %5448
        %5450 = vset.pattern.permute.xlu0 0
        %5451 = vperm.xlu0 %5450, %v5148
        %v5452 = vpop.permute.xlu0 %5451
        %5453 = vset.pattern.permute.xlu0 0
        %5454 = vperm.xlu0 %5453, %v5149
        %v5455 = vpop.permute.xlu0 %5454
        %5456 = vset.pattern.permute.xlu0 0
        %5457 = vperm.xlu0 %5456, %v5150
        %v5458 = vpop.permute.xlu0 %5457
        %5459 = vset.pattern.permute.xlu0 0
        %5460 = vperm.xlu0 %5459, %v5151
        %v5461 = vpop.permute.xlu0 %5460
        %5462 = vset.pattern.permute.xlu0 0
        %5463 = vperm.xlu0 %5462, %v5152
        %v5464 = vpop.permute.xlu0 %5463
        %5465 = vset.pattern.permute.xlu0 0
        %5466 = vperm.xlu0 %5465, %v5153
        %v5467 = vpop.permute.xlu0 %5466
        %5468 = vset.pattern.permute.xlu0 0
        %5469 = vperm.xlu0 %5468, %v5154
        %v5470 = vpop.permute.xlu0 %5469
        %5471 = vset.pattern.permute.xlu0 0
        %5472 = vperm.xlu0 %5471, %v5155
        %v5473 = vpop.permute.xlu0 %5472
        %5474 = vset.pattern.permute.xlu0 0
        %5475 = vperm.xlu0 %5474, %v5156
        %v5476 = vpop.permute.xlu0 %5475
        %5477 = vset.pattern.permute.xlu0 0
        %5478 = vperm.xlu0 %5477, %v5157
        %v5479 = vpop.permute.xlu0 %5478
        %5480 = vset.pattern.permute.xlu0 0
        %5481 = vperm.xlu0 %5480, %v5158
        %v5482 = vpop.permute.xlu0 %5481
        %5483 = vset.pattern.permute.xlu0 0
        %5484 = vperm.xlu0 %5483, %v5159
        %v5485 = vpop.permute.xlu0 %5484
        %5486 = vset.pattern.permute.xlu0 0
        %5487 = vperm.xlu0 %5486, %v5160
        %v5488 = vpop.permute.xlu0 %5487
        %5489 = vset.pattern.permute.xlu0 0
        %5490 = vperm.xlu0 %5489, %v5161
        %v5491 = vpop.permute.xlu0 %5490
        %5492 = vset.pattern.permute.xlu0 0
        %5493 = vperm.xlu0 %5492, %v5162
        %v5494 = vpop.permute.xlu0 %5493
        %5495 = vset.pattern.permute.xlu0 0
        %5496 = vperm.xlu0 %5495, %v5163
        %v5497 = vpop.permute.xlu0 %5496
        %5498 = vset.pattern.permute.xlu0 0
        %5499 = vperm.xlu0 %5498, %v5164
        %v5500 = vpop.permute.xlu0 %5499
        %5501 = vset.pattern.permute.xlu0 0
        %5502 = vperm.xlu0 %5501, %v5165
        %v5503 = vpop.permute.xlu0 %5502
        %5504 = vset.pattern.permute.xlu0 0
        %5505 = vperm.xlu0 %5504, %v5166
        %v5506 = vpop.permute.xlu0 %5505
        %5507 = vset.pattern.permute.xlu0 0
        %5508 = vperm.xlu0 %5507, %v5167
        %v5509 = vpop.permute.xlu0 %5508
        %5510 = vset.pattern.permute.xlu0 0
        %5511 = vperm.xlu0 %5510, %v5168
        %v5512 = vpop.permute.xlu0 %5511
        %5513 = vset.pattern.permute.xlu0 0
        %5514 = vperm.xlu0 %5513, %v5169
        %v5515 = vpop.permute.xlu0 %5514
        %5516 = vset.pattern.permute.xlu0 0
        %5517 = vperm.xlu0 %5516, %v5170
        %v5518 = vpop.permute.xlu0 %5517
        %5519 = vset.pattern.permute.xlu0 0
        %5520 = vperm.xlu0 %5519, %v5171
        %v5521 = vpop.permute.xlu0 %5520
        %5522 = vset.pattern.permute.xlu0 0
        %5523 = vperm.xlu0 %5522, %v5172
        %v5524 = vpop.permute.xlu0 %5523
        %5525 = vset.pattern.permute.xlu0 0
        %5526 = vperm.xlu0 %5525, %v5173
        %v5527 = vpop.permute.xlu0 %5526
        %5528 = vset.pattern.permute.xlu0 0
        %5529 = vperm.xlu0 %5528, %v5174
        %v5530 = vpop.permute.xlu0 %5529
        %5531 = vset.pattern.permute.xlu0 0
        %5532 = vperm.xlu0 %5531, %v5175
        %v5533 = vpop.permute.xlu0 %5532
        %5534 = vset.pattern.permute.xlu0 0
        %5535 = vperm.xlu0 %5534, %v5176
        %v5536 = vpop.permute.xlu0 %5535
        %5537 = vset.pattern.permute.xlu0 0
        %5538 = vperm.xlu0 %5537, %v5177
        %v5539 = vpop.permute.xlu0 %5538
        %5540 = vset.pattern.permute.xlu0 0
        %5541 = vperm.xlu0 %5540, %v5178
        %v5542 = vpop.permute.xlu0 %5541
        %5543 = vset.pattern.permute.xlu0 0
        %5544 = vperm.xlu0 %5543, %v5179
        %v5545 = vpop.permute.xlu0 %5544
        %5546 = vset.pattern.permute.xlu0 0
        %5547 = vperm.xlu0 %5546, %v5180
        %v5548 = vpop.permute.xlu0 %5547
        %5549 = vset.pattern.permute.xlu0 0
        %5550 = vperm.xlu0 %5549, %v5181
        %v5551 = vpop.permute.xlu0 %5550
        %5552 = vset.pattern.permute.xlu0 0
        %5553 = vperm.xlu0 %5552, %v5182
        %v5554 = vpop.permute.xlu0 %5553
        %5555 = vset.pattern.permute.xlu0 0
        %5556 = vperm.xlu0 %5555, %v5183
        %v5557 = vpop.permute.xlu0 %5556
        %5558 = vset.pattern.permute.xlu0 0
        %5559 = vperm.xlu0 %5558, %v5184
        %v5560 = vpop.permute.xlu0 %5559
        %5561 = vset.pattern.permute.xlu0 0
        %5562 = vperm.xlu0 %5561, %v5185
        %v5563 = vpop.permute.xlu0 %5562
        %5564 = vset.pattern.permute.xlu0 0
        %5565 = vperm.xlu0 %5564, %v5186
        %v5566 = vpop.permute.xlu0 %5565
        %5567 = vset.pattern.permute.xlu0 0
        %5568 = vperm.xlu0 %5567, %v5187
        %v5569 = vpop.permute.xlu0 %5568
        %5570 = vset.pattern.permute.xlu0 0
        %5571 = vperm.xlu0 %5570, %v5188
        %v5572 = vpop.permute.xlu0 %5571
        %v5573 = vlaneseq
        %v5574 = vshrl.u32 %v5573, 7
        %v5575 = vsub.s32 %v3932, %v5574
        %v5576 = vrot.slane %v5191, %v5575
        %v5577 = vlaneseq
        %v5578 = vshrl.u32 %v5577, 7
        %v5579 = vsub.s32 %v3937, %v5578
        %v5580 = vrot.slane %v5194, %v5579
        %v5581 = vsel %vm3942, %v5580, %v5576
        %v5582 = vlaneseq
        %v5583 = vshrl.u32 %v5582, 7
        %v5584 = vsub.s32 %v3944, %v5583
        %v5585 = vrot.slane %v5197, %v5584
        %v5586 = vsel %vm3949, %v5585, %v5581
        %v5587 = vlaneseq
        %v5588 = vshrl.u32 %v5587, 7
        %v5589 = vsub.s32 %v3951, %v5588
        %v5590 = vrot.slane %v5200, %v5589
        %v5591 = vsel %vm3956, %v5590, %v5586
        %v5592 = vlaneseq
        %v5593 = vshrl.u32 %v5592, 7
        %v5594 = vsub.s32 %v3958, %v5593
        %v5595 = vrot.slane %v5203, %v5594
        %v5596 = vsel %vm3963, %v5595, %v5591
        %v5597 = vlaneseq
        %v5598 = vshrl.u32 %v5597, 7
        %v5599 = vsub.s32 %v3965, %v5598
        %v5600 = vrot.slane %v5206, %v5599
        %v5601 = vsel %vm3970, %v5600, %v5596
        %v5602 = vlaneseq
        %v5603 = vshrl.u32 %v5602, 7
        %v5604 = vsub.s32 %v3972, %v5603
        %v5605 = vrot.slane %v5209, %v5604
        %v5606 = vsel %vm3977, %v5605, %v5601
        %v5607 = vlaneseq
        %v5608 = vshrl.u32 %v5607, 7
        %v5609 = vsub.s32 %v3979, %v5608
        %v5610 = vrot.slane %v5212, %v5609
        %v5611 = vsel %vm3984, %v5610, %v5606
        %v5612 = vlaneseq
        %v5613 = vshrl.u32 %v5612, 7
        %v5614 = vsub.s32 %v3986, %v5613
        %v5615 = vrot.slane %v5215, %v5614
        %v5616 = vsel %vm3991, %v5615, %v5611
        %v5617 = vlaneseq
        %v5618 = vshrl.u32 %v5617, 7
        %v5619 = vsub.s32 %v3993, %v5618
        %v5620 = vrot.slane %v5218, %v5619
        %v5621 = vsel %vm3998, %v5620, %v5616
        %v5622 = vlaneseq
        %v5623 = vshrl.u32 %v5622, 7
        %v5624 = vsub.s32 %v4000, %v5623
        %v5625 = vrot.slane %v5221, %v5624
        %v5626 = vsel %vm4005, %v5625, %v5621
        %v5627 = vlaneseq
        %v5628 = vshrl.u32 %v5627, 7
        %v5629 = vsub.s32 %v4007, %v5628
        %v5630 = vrot.slane %v5224, %v5629
        %v5631 = vsel %vm4012, %v5630, %v5626
        %v5632 = vlaneseq
        %v5633 = vshrl.u32 %v5632, 7
        %v5634 = vsub.s32 %v4014, %v5633
        %v5635 = vrot.slane %v5227, %v5634
        %v5636 = vsel %vm4019, %v5635, %v5631
        %v5637 = vlaneseq
        %v5638 = vshrl.u32 %v5637, 7
        %v5639 = vsub.s32 %v4021, %v5638
        %v5640 = vrot.slane %v5230, %v5639
        %v5641 = vsel %vm4026, %v5640, %v5636
        %v5642 = vlaneseq
        %v5643 = vshrl.u32 %v5642, 7
        %v5644 = vsub.s32 %v4028, %v5643
        %v5645 = vrot.slane %v5233, %v5644
        %v5646 = vsel %vm4033, %v5645, %v5641
        %v5647 = vlaneseq
        %v5648 = vshrl.u32 %v5647, 7
        %v5649 = vsub.s32 %v4035, %v5648
        %v5650 = vrot.slane %v5236, %v5649
        %v5651 = vsel %vm4040, %v5650, %v5646
        %v5652 = vlaneseq
        %v5653 = vshrl.u32 %v5652, 7
        %v5654 = vsub.s32 %v3932, %v5653
        %v5655 = vrot.slane %v5239, %v5654
        %v5656 = vlaneseq
        %v5657 = vshrl.u32 %v5656, 7
        %v5658 = vsub.s32 %v3937, %v5657
        %v5659 = vrot.slane %v5242, %v5658
        %v5660 = vsel %vm3942, %v5659, %v5655
        %v5661 = vlaneseq
        %v5662 = vshrl.u32 %v5661, 7
        %v5663 = vsub.s32 %v3944, %v5662
        %v5664 = vrot.slane %v5245, %v5663
        %v5665 = vsel %vm3949, %v5664, %v5660
        %v5666 = vlaneseq
        %v5667 = vshrl.u32 %v5666, 7
        %v5668 = vsub.s32 %v3951, %v5667
        %v5669 = vrot.slane %v5248, %v5668
        %v5670 = vsel %vm3956, %v5669, %v5665
        %v5671 = vlaneseq
        %v5672 = vshrl.u32 %v5671, 7
        %v5673 = vsub.s32 %v3958, %v5672
        %v5674 = vrot.slane %v5251, %v5673
        %v5675 = vsel %vm3963, %v5674, %v5670
        %v5676 = vlaneseq
        %v5677 = vshrl.u32 %v5676, 7
        %v5678 = vsub.s32 %v3965, %v5677
        %v5679 = vrot.slane %v5254, %v5678
        %v5680 = vsel %vm3970, %v5679, %v5675
        %v5681 = vlaneseq
        %v5682 = vshrl.u32 %v5681, 7
        %v5683 = vsub.s32 %v3972, %v5682
        %v5684 = vrot.slane %v5257, %v5683
        %v5685 = vsel %vm3977, %v5684, %v5680
        %v5686 = vlaneseq
        %v5687 = vshrl.u32 %v5686, 7
        %v5688 = vsub.s32 %v3979, %v5687
        %v5689 = vrot.slane %v5260, %v5688
        %v5690 = vsel %vm3984, %v5689, %v5685
        %v5691 = vlaneseq
        %v5692 = vshrl.u32 %v5691, 7
        %v5693 = vsub.s32 %v3986, %v5692
        %v5694 = vrot.slane %v5263, %v5693
        %v5695 = vsel %vm3991, %v5694, %v5690
        %v5696 = vlaneseq
        %v5697 = vshrl.u32 %v5696, 7
        %v5698 = vsub.s32 %v3993, %v5697
        %v5699 = vrot.slane %v5266, %v5698
        %v5700 = vsel %vm3998, %v5699, %v5695
        %v5701 = vlaneseq
        %v5702 = vshrl.u32 %v5701, 7
        %v5703 = vsub.s32 %v4000, %v5702
        %v5704 = vrot.slane %v5269, %v5703
        %v5705 = vsel %vm4005, %v5704, %v5700
        %v5706 = vlaneseq
        %v5707 = vshrl.u32 %v5706, 7
        %v5708 = vsub.s32 %v4007, %v5707
        %v5709 = vrot.slane %v5272, %v5708
        %v5710 = vsel %vm4012, %v5709, %v5705
        %v5711 = vlaneseq
        %v5712 = vshrl.u32 %v5711, 7
        %v5713 = vsub.s32 %v4014, %v5712
        %v5714 = vrot.slane %v5275, %v5713
        %v5715 = vsel %vm4019, %v5714, %v5710
        %v5716 = vlaneseq
        %v5717 = vshrl.u32 %v5716, 7
        %v5718 = vsub.s32 %v4021, %v5717
        %v5719 = vrot.slane %v5278, %v5718
        %v5720 = vsel %vm4026, %v5719, %v5715
        %v5721 = vlaneseq
        %v5722 = vshrl.u32 %v5721, 7
        %v5723 = vsub.s32 %v4028, %v5722
        %v5724 = vrot.slane %v5281, %v5723
        %v5725 = vsel %vm4033, %v5724, %v5720
        %v5726 = vlaneseq
        %v5727 = vshrl.u32 %v5726, 7
        %v5728 = vsub.s32 %v4035, %v5727
        %v5729 = vrot.slane %v5284, %v5728
        %v5730 = vsel %vm4040, %v5729, %v5725
        %v5731 = vlaneseq
        %v5732 = vshrl.u32 %v5731, 7
        %v5733 = vsub.s32 %v3932, %v5732
        %v5734 = vrot.slane %v5287, %v5733
        %v5735 = vlaneseq
        %v5736 = vshrl.u32 %v5735, 7
        %v5737 = vsub.s32 %v3937, %v5736
        %v5738 = vrot.slane %v5290, %v5737
        %v5739 = vsel %vm3942, %v5738, %v5734
        %v5740 = vlaneseq
        %v5741 = vshrl.u32 %v5740, 7
        %v5742 = vsub.s32 %v3944, %v5741
        %v5743 = vrot.slane %v5293, %v5742
        %v5744 = vsel %vm3949, %v5743, %v5739
        %v5745 = vlaneseq
        %v5746 = vshrl.u32 %v5745, 7
        %v5747 = vsub.s32 %v3951, %v5746
        %v5748 = vrot.slane %v5296, %v5747
        %v5749 = vsel %vm3956, %v5748, %v5744
        %v5750 = vlaneseq
        %v5751 = vshrl.u32 %v5750, 7
        %v5752 = vsub.s32 %v3958, %v5751
        %v5753 = vrot.slane %v5299, %v5752
        %v5754 = vsel %vm3963, %v5753, %v5749
        %v5755 = vlaneseq
        %v5756 = vshrl.u32 %v5755, 7
        %v5757 = vsub.s32 %v3965, %v5756
        %v5758 = vrot.slane %v5302, %v5757
        %v5759 = vsel %vm3970, %v5758, %v5754
        %v5760 = vlaneseq
        %v5761 = vshrl.u32 %v5760, 7
        %v5762 = vsub.s32 %v3972, %v5761
        %v5763 = vrot.slane %v5305, %v5762
        %v5764 = vsel %vm3977, %v5763, %v5759
        %v5765 = vlaneseq
        %v5766 = vshrl.u32 %v5765, 7
        %v5767 = vsub.s32 %v3979, %v5766
        %v5768 = vrot.slane %v5308, %v5767
        %v5769 = vsel %vm3984, %v5768, %v5764
        %v5770 = vlaneseq
        %v5771 = vshrl.u32 %v5770, 7
        %v5772 = vsub.s32 %v3986, %v5771
        %v5773 = vrot.slane %v5311, %v5772
        %v5774 = vsel %vm3991, %v5773, %v5769
        %v5775 = vlaneseq
        %v5776 = vshrl.u32 %v5775, 7
        %v5777 = vsub.s32 %v3993, %v5776
        %v5778 = vrot.slane %v5314, %v5777
        %v5779 = vsel %vm3998, %v5778, %v5774
        %v5780 = vlaneseq
        %v5781 = vshrl.u32 %v5780, 7
        %v5782 = vsub.s32 %v4000, %v5781
        %v5783 = vrot.slane %v5317, %v5782
        %v5784 = vsel %vm4005, %v5783, %v5779
        %v5785 = vlaneseq
        %v5786 = vshrl.u32 %v5785, 7
        %v5787 = vsub.s32 %v4007, %v5786
        %v5788 = vrot.slane %v5320, %v5787
        %v5789 = vsel %vm4012, %v5788, %v5784
        %v5790 = vlaneseq
        %v5791 = vshrl.u32 %v5790, 7
        %v5792 = vsub.s32 %v4014, %v5791
        %v5793 = vrot.slane %v5323, %v5792
        %v5794 = vsel %vm4019, %v5793, %v5789
        %v5795 = vlaneseq
        %v5796 = vshrl.u32 %v5795, 7
        %v5797 = vsub.s32 %v4021, %v5796
        %v5798 = vrot.slane %v5326, %v5797
        %v5799 = vsel %vm4026, %v5798, %v5794
        %v5800 = vlaneseq
        %v5801 = vshrl.u32 %v5800, 7
        %v5802 = vsub.s32 %v4028, %v5801
        %v5803 = vrot.slane %v5329, %v5802
        %v5804 = vsel %vm4033, %v5803, %v5799
        %v5805 = vlaneseq
        %v5806 = vshrl.u32 %v5805, 7
        %v5807 = vsub.s32 %v4035, %v5806
        %v5808 = vrot.slane %v5332, %v5807
        %v5809 = vsel %vm4040, %v5808, %v5804
        %v5810 = vlaneseq
        %v5811 = vshrl.u32 %v5810, 7
        %v5812 = vsub.s32 %v3932, %v5811
        %v5813 = vrot.slane %v5335, %v5812
        %v5814 = vlaneseq
        %v5815 = vshrl.u32 %v5814, 7
        %v5816 = vsub.s32 %v3937, %v5815
        %v5817 = vrot.slane %v5338, %v5816
        %v5818 = vsel %vm3942, %v5817, %v5813
        %v5819 = vlaneseq
        %v5820 = vshrl.u32 %v5819, 7
        %v5821 = vsub.s32 %v3944, %v5820
        %v5822 = vrot.slane %v5341, %v5821
        %v5823 = vsel %vm3949, %v5822, %v5818
        %v5824 = vlaneseq
        %v5825 = vshrl.u32 %v5824, 7
        %v5826 = vsub.s32 %v3951, %v5825
        %v5827 = vrot.slane %v5344, %v5826
        %v5828 = vsel %vm3956, %v5827, %v5823
        %v5829 = vlaneseq
        %v5830 = vshrl.u32 %v5829, 7
        %v5831 = vsub.s32 %v3958, %v5830
        %v5832 = vrot.slane %v5347, %v5831
        %v5833 = vsel %vm3963, %v5832, %v5828
        %v5834 = vlaneseq
        %v5835 = vshrl.u32 %v5834, 7
        %v5836 = vsub.s32 %v3965, %v5835
        %v5837 = vrot.slane %v5350, %v5836
        %v5838 = vsel %vm3970, %v5837, %v5833
        %v5839 = vlaneseq
        %v5840 = vshrl.u32 %v5839, 7
        %v5841 = vsub.s32 %v3972, %v5840
        %v5842 = vrot.slane %v5353, %v5841
        %v5843 = vsel %vm3977, %v5842, %v5838
        %v5844 = vlaneseq
        %v5845 = vshrl.u32 %v5844, 7
        %v5846 = vsub.s32 %v3979, %v5845
        %v5847 = vrot.slane %v5356, %v5846
        %v5848 = vsel %vm3984, %v5847, %v5843
        %v5849 = vlaneseq
        %v5850 = vshrl.u32 %v5849, 7
        %v5851 = vsub.s32 %v3986, %v5850
        %v5852 = vrot.slane %v5359, %v5851
        %v5853 = vsel %vm3991, %v5852, %v5848
        %v5854 = vlaneseq
        %v5855 = vshrl.u32 %v5854, 7
        %v5856 = vsub.s32 %v3993, %v5855
        %v5857 = vrot.slane %v5362, %v5856
        %v5858 = vsel %vm3998, %v5857, %v5853
        %v5859 = vlaneseq
        %v5860 = vshrl.u32 %v5859, 7
        %v5861 = vsub.s32 %v4000, %v5860
        %v5862 = vrot.slane %v5365, %v5861
        %v5863 = vsel %vm4005, %v5862, %v5858
        %v5864 = vlaneseq
        %v5865 = vshrl.u32 %v5864, 7
        %v5866 = vsub.s32 %v4007, %v5865
        %v5867 = vrot.slane %v5368, %v5866
        %v5868 = vsel %vm4012, %v5867, %v5863
        %v5869 = vlaneseq
        %v5870 = vshrl.u32 %v5869, 7
        %v5871 = vsub.s32 %v4014, %v5870
        %v5872 = vrot.slane %v5371, %v5871
        %v5873 = vsel %vm4019, %v5872, %v5868
        %v5874 = vlaneseq
        %v5875 = vshrl.u32 %v5874, 7
        %v5876 = vsub.s32 %v4021, %v5875
        %v5877 = vrot.slane %v5374, %v5876
        %v5878 = vsel %vm4026, %v5877, %v5873
        %v5879 = vlaneseq
        %v5880 = vshrl.u32 %v5879, 7
        %v5881 = vsub.s32 %v4028, %v5880
        %v5882 = vrot.slane %v5377, %v5881
        %v5883 = vsel %vm4033, %v5882, %v5878
        %v5884 = vlaneseq
        %v5885 = vshrl.u32 %v5884, 7
        %v5886 = vsub.s32 %v4035, %v5885
        %v5887 = vrot.slane %v5380, %v5886
        %v5888 = vsel %vm4040, %v5887, %v5883
        %v5889 = vlaneseq
        %v5890 = vshrl.u32 %v5889, 7
        %v5891 = vsub.s32 %v3932, %v5890
        %v5892 = vrot.slane %v5383, %v5891
        %v5893 = vlaneseq
        %v5894 = vshrl.u32 %v5893, 7
        %v5895 = vsub.s32 %v3937, %v5894
        %v5896 = vrot.slane %v5386, %v5895
        %v5897 = vsel %vm3942, %v5896, %v5892
        %v5898 = vlaneseq
        %v5899 = vshrl.u32 %v5898, 7
        %v5900 = vsub.s32 %v3944, %v5899
        %v5901 = vrot.slane %v5389, %v5900
        %v5902 = vsel %vm3949, %v5901, %v5897
        %v5903 = vlaneseq
        %v5904 = vshrl.u32 %v5903, 7
        %v5905 = vsub.s32 %v3951, %v5904
        %v5906 = vrot.slane %v5392, %v5905
        %v5907 = vsel %vm3956, %v5906, %v5902
        %v5908 = vlaneseq
        %v5909 = vshrl.u32 %v5908, 7
        %v5910 = vsub.s32 %v3958, %v5909
        %v5911 = vrot.slane %v5395, %v5910
        %v5912 = vsel %vm3963, %v5911, %v5907
        %v5913 = vlaneseq
        %v5914 = vshrl.u32 %v5913, 7
        %v5915 = vsub.s32 %v3965, %v5914
        %v5916 = vrot.slane %v5398, %v5915
        %v5917 = vsel %vm3970, %v5916, %v5912
        %v5918 = vlaneseq
        %v5919 = vshrl.u32 %v5918, 7
        %v5920 = vsub.s32 %v3972, %v5919
        %v5921 = vrot.slane %v5401, %v5920
        %v5922 = vsel %vm3977, %v5921, %v5917
        %v5923 = vlaneseq
        %v5924 = vshrl.u32 %v5923, 7
        %v5925 = vsub.s32 %v3979, %v5924
        %v5926 = vrot.slane %v5404, %v5925
        %v5927 = vsel %vm3984, %v5926, %v5922
        %v5928 = vlaneseq
        %v5929 = vshrl.u32 %v5928, 7
        %v5930 = vsub.s32 %v3986, %v5929
        %v5931 = vrot.slane %v5407, %v5930
        %v5932 = vsel %vm3991, %v5931, %v5927
        %v5933 = vlaneseq
        %v5934 = vshrl.u32 %v5933, 7
        %v5935 = vsub.s32 %v3993, %v5934
        %v5936 = vrot.slane %v5410, %v5935
        %v5937 = vsel %vm3998, %v5936, %v5932
        %v5938 = vlaneseq
        %v5939 = vshrl.u32 %v5938, 7
        %v5940 = vsub.s32 %v4000, %v5939
        %v5941 = vrot.slane %v5413, %v5940
        %v5942 = vsel %vm4005, %v5941, %v5937
        %v5943 = vlaneseq
        %v5944 = vshrl.u32 %v5943, 7
        %v5945 = vsub.s32 %v4007, %v5944
        %v5946 = vrot.slane %v5416, %v5945
        %v5947 = vsel %vm4012, %v5946, %v5942
        %v5948 = vlaneseq
        %v5949 = vshrl.u32 %v5948, 7
        %v5950 = vsub.s32 %v4014, %v5949
        %v5951 = vrot.slane %v5419, %v5950
        %v5952 = vsel %vm4019, %v5951, %v5947
        %v5953 = vlaneseq
        %v5954 = vshrl.u32 %v5953, 7
        %v5955 = vsub.s32 %v4021, %v5954
        %v5956 = vrot.slane %v5422, %v5955
        %v5957 = vsel %vm4026, %v5956, %v5952
        %v5958 = vlaneseq
        %v5959 = vshrl.u32 %v5958, 7
        %v5960 = vsub.s32 %v4028, %v5959
        %v5961 = vrot.slane %v5425, %v5960
        %v5962 = vsel %vm4033, %v5961, %v5957
        %v5963 = vlaneseq
        %v5964 = vshrl.u32 %v5963, 7
        %v5965 = vsub.s32 %v4035, %v5964
        %v5966 = vrot.slane %v5428, %v5965
        %v5967 = vsel %vm4040, %v5966, %v5962
        %v5968 = vlaneseq
        %v5969 = vshrl.u32 %v5968, 7
        %v5970 = vsub.s32 %v3932, %v5969
        %v5971 = vrot.slane %v5431, %v5970
        %v5972 = vlaneseq
        %v5973 = vshrl.u32 %v5972, 7
        %v5974 = vsub.s32 %v3937, %v5973
        %v5975 = vrot.slane %v5434, %v5974
        %v5976 = vsel %vm3942, %v5975, %v5971
        %v5977 = vlaneseq
        %v5978 = vshrl.u32 %v5977, 7
        %v5979 = vsub.s32 %v3944, %v5978
        %v5980 = vrot.slane %v5437, %v5979
        %v5981 = vsel %vm3949, %v5980, %v5976
        %v5982 = vlaneseq
        %v5983 = vshrl.u32 %v5982, 7
        %v5984 = vsub.s32 %v3951, %v5983
        %v5985 = vrot.slane %v5440, %v5984
        %v5986 = vsel %vm3956, %v5985, %v5981
        %v5987 = vlaneseq
        %v5988 = vshrl.u32 %v5987, 7
        %v5989 = vsub.s32 %v3958, %v5988
        %v5990 = vrot.slane %v5443, %v5989
        %v5991 = vsel %vm3963, %v5990, %v5986
        %v5992 = vlaneseq
        %v5993 = vshrl.u32 %v5992, 7
        %v5994 = vsub.s32 %v3965, %v5993
        %v5995 = vrot.slane %v5446, %v5994
        %v5996 = vsel %vm3970, %v5995, %v5991
        %v5997 = vlaneseq
        %v5998 = vshrl.u32 %v5997, 7
        %v5999 = vsub.s32 %v3972, %v5998
        %v6000 = vrot.slane %v5449, %v5999
        %v6001 = vsel %vm3977, %v6000, %v5996
        %v6002 = vlaneseq
        %v6003 = vshrl.u32 %v6002, 7
        %v6004 = vsub.s32 %v3979, %v6003
        %v6005 = vrot.slane %v5452, %v6004
        %v6006 = vsel %vm3984, %v6005, %v6001
        %v6007 = vlaneseq
        %v6008 = vshrl.u32 %v6007, 7
        %v6009 = vsub.s32 %v3986, %v6008
        %v6010 = vrot.slane %v5455, %v6009
        %v6011 = vsel %vm3991, %v6010, %v6006
        %v6012 = vlaneseq
        %v6013 = vshrl.u32 %v6012, 7
        %v6014 = vsub.s32 %v3993, %v6013
        %v6015 = vrot.slane %v5458, %v6014
        %v6016 = vsel %vm3998, %v6015, %v6011
        %v6017 = vlaneseq
        %v6018 = vshrl.u32 %v6017, 7
        %v6019 = vsub.s32 %v4000, %v6018
        %v6020 = vrot.slane %v5461, %v6019
        %v6021 = vsel %vm4005, %v6020, %v6016
        %v6022 = vlaneseq
        %v6023 = vshrl.u32 %v6022, 7
        %v6024 = vsub.s32 %v4007, %v6023
        %v6025 = vrot.slane %v5464, %v6024
        %v6026 = vsel %vm4012, %v6025, %v6021
        %v6027 = vlaneseq
        %v6028 = vshrl.u32 %v6027, 7
        %v6029 = vsub.s32 %v4014, %v6028
        %v6030 = vrot.slane %v5467, %v6029
        %v6031 = vsel %vm4019, %v6030, %v6026
        %v6032 = vlaneseq
        %v6033 = vshrl.u32 %v6032, 7
        %v6034 = vsub.s32 %v4021, %v6033
        %v6035 = vrot.slane %v5470, %v6034
        %v6036 = vsel %vm4026, %v6035, %v6031
        %v6037 = vlaneseq
        %v6038 = vshrl.u32 %v6037, 7
        %v6039 = vsub.s32 %v4028, %v6038
        %v6040 = vrot.slane %v5473, %v6039
        %v6041 = vsel %vm4033, %v6040, %v6036
        %v6042 = vlaneseq
        %v6043 = vshrl.u32 %v6042, 7
        %v6044 = vsub.s32 %v4035, %v6043
        %v6045 = vrot.slane %v5476, %v6044
        %v6046 = vsel %vm4040, %v6045, %v6041
        %v6047 = vlaneseq
        %v6048 = vshrl.u32 %v6047, 7
        %v6049 = vsub.s32 %v3932, %v6048
        %v6050 = vrot.slane %v5479, %v6049
        %v6051 = vlaneseq
        %v6052 = vshrl.u32 %v6051, 7
        %v6053 = vsub.s32 %v3937, %v6052
        %v6054 = vrot.slane %v5482, %v6053
        %v6055 = vsel %vm3942, %v6054, %v6050
        %v6056 = vlaneseq
        %v6057 = vshrl.u32 %v6056, 7
        %v6058 = vsub.s32 %v3944, %v6057
        %v6059 = vrot.slane %v5485, %v6058
        %v6060 = vsel %vm3949, %v6059, %v6055
        %v6061 = vlaneseq
        %v6062 = vshrl.u32 %v6061, 7
        %v6063 = vsub.s32 %v3951, %v6062
        %v6064 = vrot.slane %v5488, %v6063
        %v6065 = vsel %vm3956, %v6064, %v6060
        %v6066 = vlaneseq
        %v6067 = vshrl.u32 %v6066, 7
        %v6068 = vsub.s32 %v3958, %v6067
        %v6069 = vrot.slane %v5491, %v6068
        %v6070 = vsel %vm3963, %v6069, %v6065
        %v6071 = vlaneseq
        %v6072 = vshrl.u32 %v6071, 7
        %v6073 = vsub.s32 %v3965, %v6072
        %v6074 = vrot.slane %v5494, %v6073
        %v6075 = vsel %vm3970, %v6074, %v6070
        %v6076 = vlaneseq
        %v6077 = vshrl.u32 %v6076, 7
        %v6078 = vsub.s32 %v3972, %v6077
        %v6079 = vrot.slane %v5497, %v6078
        %v6080 = vsel %vm3977, %v6079, %v6075
        %v6081 = vlaneseq
        %v6082 = vshrl.u32 %v6081, 7
        %v6083 = vsub.s32 %v3979, %v6082
        %v6084 = vrot.slane %v5500, %v6083
        %v6085 = vsel %vm3984, %v6084, %v6080
        %v6086 = vlaneseq
        %v6087 = vshrl.u32 %v6086, 7
        %v6088 = vsub.s32 %v3986, %v6087
        %v6089 = vrot.slane %v5503, %v6088
        %v6090 = vsel %vm3991, %v6089, %v6085
        %v6091 = vlaneseq
        %v6092 = vshrl.u32 %v6091, 7
        %v6093 = vsub.s32 %v3993, %v6092
        %v6094 = vrot.slane %v5506, %v6093
        %v6095 = vsel %vm3998, %v6094, %v6090
        %v6096 = vlaneseq
        %v6097 = vshrl.u32 %v6096, 7
        %v6098 = vsub.s32 %v4000, %v6097
        %v6099 = vrot.slane %v5509, %v6098
        %v6100 = vsel %vm4005, %v6099, %v6095
        %v6101 = vlaneseq
        %v6102 = vshrl.u32 %v6101, 7
        %v6103 = vsub.s32 %v4007, %v6102
        %v6104 = vrot.slane %v5512, %v6103
        %v6105 = vsel %vm4012, %v6104, %v6100
        %v6106 = vlaneseq
        %v6107 = vshrl.u32 %v6106, 7
        %v6108 = vsub.s32 %v4014, %v6107
        %v6109 = vrot.slane %v5515, %v6108
        %v6110 = vsel %vm4019, %v6109, %v6105
        %v6111 = vlaneseq
        %v6112 = vshrl.u32 %v6111, 7
        %v6113 = vsub.s32 %v4021, %v6112
        %v6114 = vrot.slane %v5518, %v6113
        %v6115 = vsel %vm4026, %v6114, %v6110
        %v6116 = vlaneseq
        %v6117 = vshrl.u32 %v6116, 7
        %v6118 = vsub.s32 %v4028, %v6117
        %v6119 = vrot.slane %v5521, %v6118
        %v6120 = vsel %vm4033, %v6119, %v6115
        %v6121 = vlaneseq
        %v6122 = vshrl.u32 %v6121, 7
        %v6123 = vsub.s32 %v4035, %v6122
        %v6124 = vrot.slane %v5524, %v6123
        %v6125 = vsel %vm4040, %v6124, %v6120
        %v6126 = vlaneseq
        %v6127 = vshrl.u32 %v6126, 7
        %v6128 = vsub.s32 %v3932, %v6127
        %v6129 = vrot.slane %v5527, %v6128
        %v6130 = vlaneseq
        %v6131 = vshrl.u32 %v6130, 7
        %v6132 = vsub.s32 %v3937, %v6131
        %v6133 = vrot.slane %v5530, %v6132
        %v6134 = vsel %vm3942, %v6133, %v6129
        %v6135 = vlaneseq
        %v6136 = vshrl.u32 %v6135, 7
        %v6137 = vsub.s32 %v3944, %v6136
        %v6138 = vrot.slane %v5533, %v6137
        %v6139 = vsel %vm3949, %v6138, %v6134
        %v6140 = vlaneseq
        %v6141 = vshrl.u32 %v6140, 7
        %v6142 = vsub.s32 %v3951, %v6141
        %v6143 = vrot.slane %v5536, %v6142
        %v6144 = vsel %vm3956, %v6143, %v6139
        %v6145 = vlaneseq
        %v6146 = vshrl.u32 %v6145, 7
        %v6147 = vsub.s32 %v3958, %v6146
        %v6148 = vrot.slane %v5539, %v6147
        %v6149 = vsel %vm3963, %v6148, %v6144
        %v6150 = vlaneseq
        %v6151 = vshrl.u32 %v6150, 7
        %v6152 = vsub.s32 %v3965, %v6151
        %v6153 = vrot.slane %v5542, %v6152
        %v6154 = vsel %vm3970, %v6153, %v6149
        %v6155 = vlaneseq
        %v6156 = vshrl.u32 %v6155, 7
        %v6157 = vsub.s32 %v3972, %v6156
        %v6158 = vrot.slane %v5545, %v6157
        %v6159 = vsel %vm3977, %v6158, %v6154
        %v6160 = vlaneseq
        %v6161 = vshrl.u32 %v6160, 7
        %v6162 = vsub.s32 %v3979, %v6161
        %v6163 = vrot.slane %v5548, %v6162
        %v6164 = vsel %vm3984, %v6163, %v6159
        %v6165 = vlaneseq
        %v6166 = vshrl.u32 %v6165, 7
        %v6167 = vsub.s32 %v3986, %v6166
        %v6168 = vrot.slane %v5551, %v6167
        %v6169 = vsel %vm3991, %v6168, %v6164
        %v6170 = vlaneseq
        %v6171 = vshrl.u32 %v6170, 7
        %v6172 = vsub.s32 %v3993, %v6171
        %v6173 = vrot.slane %v5554, %v6172
        %v6174 = vsel %vm3998, %v6173, %v6169
        %v6175 = vlaneseq
        %v6176 = vshrl.u32 %v6175, 7
        %v6177 = vsub.s32 %v4000, %v6176
        %v6178 = vrot.slane %v5557, %v6177
        %v6179 = vsel %vm4005, %v6178, %v6174
        %v6180 = vlaneseq
        %v6181 = vshrl.u32 %v6180, 7
        %v6182 = vsub.s32 %v4007, %v6181
        %v6183 = vrot.slane %v5560, %v6182
        %v6184 = vsel %vm4012, %v6183, %v6179
        %v6185 = vlaneseq
        %v6186 = vshrl.u32 %v6185, 7
        %v6187 = vsub.s32 %v4014, %v6186
        %v6188 = vrot.slane %v5563, %v6187
        %v6189 = vsel %vm4019, %v6188, %v6184
        %v6190 = vlaneseq
        %v6191 = vshrl.u32 %v6190, 7
        %v6192 = vsub.s32 %v4021, %v6191
        %v6193 = vrot.slane %v5566, %v6192
        %v6194 = vsel %vm4026, %v6193, %v6189
        %v6195 = vlaneseq
        %v6196 = vshrl.u32 %v6195, 7
        %v6197 = vsub.s32 %v4028, %v6196
        %v6198 = vrot.slane %v5569, %v6197
        %v6199 = vsel %vm4033, %v6198, %v6194
        %v6200 = vlaneseq
        %v6201 = vshrl.u32 %v6200, 7
        %v6202 = vsub.s32 %v4035, %v6201
        %v6203 = vrot.slane %v5572, %v6202
        %v6204 = vsel %vm4040, %v6203, %v6199
        %v6205 = vsel %vm4595, %v5809, %v5651
        %v6206 = vsel %vm4597, %v5967, %v6205
        %v6207 = vsel %vm4599, %v6125, %v6206
        %v6208 = vsel %vm4595, %v5888, %v5730
        %v6209 = vsel %vm4597, %v6046, %v6208
        %v6210 = vsel %vm4599, %v6204, %v6209
        %v6211 = vpack.c.b16 %v6207, %v6207
        %v6212 = vpack.c.b16 %v6210, %v6210
        %v6343 = vunpack.c.l.b16 %v4827
        %v6344 = vunpack.c.h.b16 %v4827
        %v6345 = vunpack.c.l.b16 %v4828
        %v6346 = vunpack.c.h.b16 %v4828
        %v6347 = vunpack.c.l.b16 %v4829
        %v6348 = vunpack.c.h.b16 %v4829
        %v6349 = vunpack.c.l.b16 %v4830
        %v6350 = vunpack.c.h.b16 %v4830
        %v6351 = vunpack.c.l.b16 %v4831
        %v6352 = vunpack.c.h.b16 %v4831
        %v6353 = vunpack.c.l.b16 %v4832
        %v6354 = vunpack.c.h.b16 %v4832
        %v6355 = vunpack.c.l.b16 %v4833
        %v6356 = vunpack.c.h.b16 %v4833
        %v6357 = vunpack.c.l.b16 %v4834
        %v6358 = vunpack.c.h.b16 %v4834
        %v6359 = vunpack.c.l.b16 %v4835
        %v6360 = vunpack.c.h.b16 %v4835
        %v6361 = vunpack.c.l.b16 %v4836
        %v6362 = vunpack.c.h.b16 %v4836
        %v6363 = vunpack.c.l.b16 %v4837
        %v6364 = vunpack.c.h.b16 %v4837
        %v6365 = vunpack.c.l.b16 %v4838
        %v6366 = vunpack.c.h.b16 %v4838
        %v6367 = vunpack.c.l.b16 %v4839
        %v6368 = vunpack.c.h.b16 %v4839
        %v6369 = vunpack.c.l.b16 %v4840
        %v6370 = vunpack.c.h.b16 %v4840
        %v6371 = vunpack.c.l.b16 %v4841
        %v6372 = vunpack.c.h.b16 %v4841
        %v6373 = vunpack.c.l.b16 %v4842
        %v6374 = vunpack.c.h.b16 %v4842
        %v6375 = vunpack.c.l.b16 %v4843
        %v6376 = vunpack.c.h.b16 %v4843
        %v6377 = vunpack.c.l.b16 %v4844
        %v6378 = vunpack.c.h.b16 %v4844
        %v6379 = vunpack.c.l.b16 %v4845
        %v6380 = vunpack.c.h.b16 %v4845
        %v6381 = vunpack.c.l.b16 %v4846
        %v6382 = vunpack.c.h.b16 %v4846
        %v6383 = vunpack.c.l.b16 %v4847
        %v6384 = vunpack.c.h.b16 %v4847
        %v6385 = vunpack.c.l.b16 %v4848
        %v6386 = vunpack.c.h.b16 %v4848
        %v6387 = vunpack.c.l.b16 %v4849
        %v6388 = vunpack.c.h.b16 %v4849
        %v6389 = vunpack.c.l.b16 %v4850
        %v6390 = vunpack.c.h.b16 %v4850
        %v6391 = vunpack.c.l.b16 %v4851
        %v6392 = vunpack.c.h.b16 %v4851
        %v6393 = vunpack.c.l.b16 %v4852
        %v6394 = vunpack.c.h.b16 %v4852
        %v6395 = vunpack.c.l.b16 %v4853
        %v6396 = vunpack.c.h.b16 %v4853
        %v6397 = vunpack.c.l.b16 %v4854
        %v6398 = vunpack.c.h.b16 %v4854
        %v6399 = vunpack.c.l.b16 %v4855
        %v6400 = vunpack.c.h.b16 %v4855
        %v6401 = vunpack.c.l.b16 %v4856
        %v6402 = vunpack.c.h.b16 %v4856
        %v6403 = vunpack.c.l.b16 %v4857
        %v6404 = vunpack.c.h.b16 %v4857
        %v6405 = vunpack.c.l.b16 %v4858
        %v6406 = vunpack.c.h.b16 %v4858
        %v6407 = vunpack.c.l.b16 %v4859
        %v6408 = vunpack.c.h.b16 %v4859
        %v6409 = vunpack.c.l.b16 %v4860
        %v6410 = vunpack.c.h.b16 %v4860
        %v6411 = vunpack.c.l.b16 %v4861
        %v6412 = vunpack.c.h.b16 %v4861
        %v6413 = vunpack.c.l.b16 %v4862
        %v6414 = vunpack.c.h.b16 %v4862
        %v6415 = vunpack.c.l.b16 %v4863
        %v6416 = vunpack.c.h.b16 %v4863
        %v6417 = vunpack.c.l.b16 %v4864
        %v6418 = vunpack.c.h.b16 %v4864
        %v6419 = vunpack.c.l.b16 %v4865
        %v6420 = vunpack.c.h.b16 %v4865
        %v6421 = vunpack.c.l.b16 %v4866
        %v6422 = vunpack.c.h.b16 %v4866
        %v6423 = vunpack.c.l.b16 %v4867
        %v6424 = vunpack.c.h.b16 %v4867
        %v6425 = vunpack.c.l.b16 %v4868
        %v6426 = vunpack.c.h.b16 %v4868
        %v6427 = vunpack.c.l.b16 %v4869
        %v6428 = vunpack.c.h.b16 %v4869
        %v6429 = vunpack.c.l.b16 %v4870
        %v6430 = vunpack.c.h.b16 %v4870
        %v6431 = vunpack.c.l.b16 %v4871
        %v6432 = vunpack.c.h.b16 %v4871
        %v6433 = vunpack.c.l.b16 %v4872
        %v6434 = vunpack.c.h.b16 %v4872
        %v6435 = vunpack.c.l.b16 %v4873
        %v6436 = vunpack.c.h.b16 %v4873
        %v6437 = vunpack.c.l.b16 %v4874
        %v6438 = vunpack.c.h.b16 %v4874
        %v6439 = vunpack.c.l.b16 %v4875
        %v6440 = vunpack.c.h.b16 %v4875
        %v6441 = vunpack.c.l.b16 %v4876
        %v6442 = vunpack.c.h.b16 %v4876
        %v6443 = vunpack.c.l.b16 %v4877
        %v6444 = vunpack.c.h.b16 %v4877
        %v6445 = vunpack.c.l.b16 %v4878
        %v6446 = vunpack.c.h.b16 %v4878
        %v6447 = vunpack.c.l.b16 %v4879
        %v6448 = vunpack.c.h.b16 %v4879
        %v6449 = vunpack.c.l.b16 %v4880
        %v6450 = vunpack.c.h.b16 %v4880
        %v6451 = vunpack.c.l.b16 %v4881
        %v6452 = vunpack.c.h.b16 %v4881
        %v6453 = vunpack.c.l.b16 %v4882
        %v6454 = vunpack.c.h.b16 %v4882
        %v6455 = vunpack.c.l.b16 %v4883
        %v6456 = vunpack.c.h.b16 %v4883
        %v6457 = vunpack.c.l.b16 %v4884
        %v6458 = vunpack.c.h.b16 %v4884
        %v6459 = vunpack.c.l.b16 %v4885
        %v6460 = vunpack.c.h.b16 %v4885
        %v6461 = vunpack.c.l.b16 %v4886
        %v6462 = vunpack.c.h.b16 %v4886
        %v6463 = vunpack.c.l.b16 %v4887
        %v6464 = vunpack.c.h.b16 %v4887
        %v6465 = vunpack.c.l.b16 %v4888
        %v6466 = vunpack.c.h.b16 %v4888
        %v6467 = vunpack.c.l.b16 %v4889
        %v6468 = vunpack.c.h.b16 %v4889
        %v6469 = vunpack.c.l.b16 %v4890
        %v6470 = vunpack.c.h.b16 %v4890
        %v6471 = vunpack.c.l.b16 %v4891
        %v6472 = vunpack.c.h.b16 %v4891
        %v6473 = vunpack.c.l.b16 %v4892
        %v6474 = vunpack.c.h.b16 %v4892
        %v6475 = vunpack.c.l.b16 %v4893
        %v6476 = vunpack.c.h.b16 %v4893
        %v6477 = vunpack.c.l.b16 %v4894
        %v6478 = vunpack.c.h.b16 %v4894
        %v6479 = vunpack.c.l.b16 %v4895
        %v6480 = vunpack.c.h.b16 %v4895
        %v6481 = vunpack.c.l.b16 %v4896
        %v6482 = vunpack.c.h.b16 %v4896
        %v6483 = vunpack.c.l.b16 %v4897
        %v6484 = vunpack.c.h.b16 %v4897
        %v6485 = vunpack.c.l.b16 %v4898
        %v6486 = vunpack.c.h.b16 %v4898
        %v6487 = vunpack.c.l.b16 %v4899
        %v6488 = vunpack.c.h.b16 %v4899
        %v6489 = vunpack.c.l.b16 %v4900
        %v6490 = vunpack.c.h.b16 %v4900
        %v6491 = vunpack.c.l.b16 %v4901
        %v6492 = vunpack.c.h.b16 %v4901
        %v6493 = vunpack.c.l.b16 %v4902
        %v6494 = vunpack.c.h.b16 %v4902
        %v6495 = vunpack.c.l.b16 %v4903
        %v6496 = vunpack.c.h.b16 %v4903
        %v6497 = vunpack.c.l.b16 %v4904
        %v6498 = vunpack.c.h.b16 %v4904
        %v6499 = vunpack.c.l.b16 %v4905
        %v6500 = vunpack.c.h.b16 %v4905
        %v6501 = vunpack.c.l.b16 %v4906
        %v6502 = vunpack.c.h.b16 %v4906
        %v6503 = vunpack.c.l.b16 %v4907
        %v6504 = vunpack.c.h.b16 %v4907
        %v6505 = vunpack.c.l.b16 %v4908
        %v6506 = vunpack.c.h.b16 %v4908
        %v6507 = vunpack.c.l.b16 %v4909
        %v6508 = vunpack.c.h.b16 %v4909
        %v6509 = vunpack.c.l.b16 %v4910
        %v6510 = vunpack.c.h.b16 %v4910
        %v6511 = vunpack.c.l.b16 %v4911
        %v6512 = vunpack.c.h.b16 %v4911
        %v6513 = vunpack.c.l.b16 %v4912
        %v6514 = vunpack.c.h.b16 %v4912
        %v6515 = vunpack.c.l.b16 %v4913
        %v6516 = vunpack.c.h.b16 %v4913
        %v6517 = vunpack.c.l.b16 %v4914
        %v6518 = vunpack.c.h.b16 %v4914
        %v6519 = vunpack.c.l.b16 %v4915
        %v6520 = vunpack.c.h.b16 %v4915
        %v6521 = vunpack.c.l.b16 %v4916
        %v6522 = vunpack.c.h.b16 %v4916
        %v6523 = vunpack.c.l.b16 %v4917
        %v6524 = vunpack.c.h.b16 %v4917
        %v6525 = vunpack.c.l.b16 %v4918
        %v6526 = vunpack.c.h.b16 %v4918
        %v6527 = vunpack.c.l.b16 %v4919
        %v6528 = vunpack.c.h.b16 %v4919
        %v6529 = vunpack.c.l.b16 %v4920
        %v6530 = vunpack.c.h.b16 %v4920
        %v6531 = vunpack.c.l.b16 %v4921
        %v6532 = vunpack.c.h.b16 %v4921
        %v6533 = vunpack.c.l.b16 %v4922
        %v6534 = vunpack.c.h.b16 %v4922
        %v6535 = vunpack.c.l.b16 %v4923
        %v6536 = vunpack.c.h.b16 %v4923
        %v6537 = vunpack.c.l.b16 %v4924
        %v6538 = vunpack.c.h.b16 %v4924
        %v6539 = vunpack.c.l.b16 %v4925
        %v6540 = vunpack.c.h.b16 %v4925
        %v6541 = vunpack.c.l.b16 %v4926
        %v6542 = vunpack.c.h.b16 %v4926
        %v6543 = vunpack.c.l.b16 %v4927
        %v6544 = vunpack.c.h.b16 %v4927
        %v6545 = vunpack.c.l.b16 %v4928
        %v6546 = vunpack.c.h.b16 %v4928
        %v6547 = vunpack.c.l.b16 %v4929
        %v6548 = vunpack.c.h.b16 %v4929
        %v6549 = vunpack.c.l.b16 %v4930
        %v6550 = vunpack.c.h.b16 %v4930
        %v6551 = vunpack.c.l.b16 %v4931
        %v6552 = vunpack.c.h.b16 %v4931
        %v6553 = vunpack.c.l.b16 %v4932
        %v6554 = vunpack.c.h.b16 %v4932
        %v6555 = vunpack.c.l.b16 %v4933
        %v6556 = vunpack.c.h.b16 %v4933
        %v6557 = vunpack.c.l.b16 %v4934
        %v6558 = vunpack.c.h.b16 %v4934
        %v6559 = vunpack.c.l.b16 %v4935
        %v6560 = vunpack.c.h.b16 %v4935
        %v6561 = vunpack.c.l.b16 %v4936
        %v6562 = vunpack.c.h.b16 %v4936
        %v6563 = vunpack.c.l.b16 %v4937
        %v6564 = vunpack.c.h.b16 %v4937
        %v6565 = vunpack.c.l.b16 %v4938
        %v6566 = vunpack.c.h.b16 %v4938
        %v6567 = vunpack.c.l.b16 %v4939
        %v6568 = vunpack.c.h.b16 %v4939
        %v6569 = vunpack.c.l.b16 %v4940
        %v6570 = vunpack.c.h.b16 %v4940
        %v6571 = vunpack.c.l.b16 %v4941
        %v6572 = vunpack.c.h.b16 %v4941
        %v6573 = vunpack.c.l.b16 %v4942
        %v6574 = vunpack.c.h.b16 %v4942
        %v6575 = vunpack.c.l.b16 %v4943
        %v6576 = vunpack.c.h.b16 %v4943
        %v6577 = vunpack.c.l.b16 %v4944
        %v6578 = vunpack.c.h.b16 %v4944
        %v6579 = vunpack.c.l.b16 %v4945
        %v6580 = vunpack.c.h.b16 %v4945
        %v6581 = vunpack.c.l.b16 %v4946
        %v6582 = vunpack.c.h.b16 %v4946
        %v6583 = vunpack.c.l.b16 %v4947
        %v6584 = vunpack.c.h.b16 %v4947
        %v6585 = vunpack.c.l.b16 %v4948
        %v6586 = vunpack.c.h.b16 %v4948
        %v6587 = vunpack.c.l.b16 %v4949
        %v6588 = vunpack.c.h.b16 %v4949
        %v6589 = vunpack.c.l.b16 %v4950
        %v6590 = vunpack.c.h.b16 %v4950
        %v6591 = vunpack.c.l.b16 %v4951
        %v6592 = vunpack.c.h.b16 %v4951
        %v6593 = vunpack.c.l.b16 %v4952
        %v6594 = vunpack.c.h.b16 %v4952
        %v6595 = vunpack.c.l.b16 %v4953
        %v6596 = vunpack.c.h.b16 %v4953
        %v6597 = vunpack.c.l.b16 %v4954
        %v6598 = vunpack.c.h.b16 %v4954
        %v6599 = vpack.c.b16 %v6351, %v6343
        %v6600 = vpack.c.b16 %v6352, %v6344
        %v6601 = vpack.c.b16 %v6353, %v6345
        %v6602 = vpack.c.b16 %v6354, %v6346
        %v6603 = vpack.c.b16 %v6355, %v6347
        %v6604 = vpack.c.b16 %v6356, %v6348
        %v6605 = vpack.c.b16 %v6357, %v6349
        %v6606 = vpack.c.b16 %v6358, %v6350
        %v6607 = vpack.c.b16 %v6367, %v6359
        %v6608 = vpack.c.b16 %v6368, %v6360
        %v6609 = vpack.c.b16 %v6369, %v6361
        %v6610 = vpack.c.b16 %v6370, %v6362
        %v6611 = vpack.c.b16 %v6371, %v6363
        %v6612 = vpack.c.b16 %v6372, %v6364
        %v6613 = vpack.c.b16 %v6373, %v6365
        %v6614 = vpack.c.b16 %v6374, %v6366
        %v6615 = vpack.c.b16 %v6383, %v6375
        %v6616 = vpack.c.b16 %v6384, %v6376
        %v6617 = vpack.c.b16 %v6385, %v6377
        %v6618 = vpack.c.b16 %v6386, %v6378
        %v6619 = vpack.c.b16 %v6387, %v6379
        %v6620 = vpack.c.b16 %v6388, %v6380
        %v6621 = vpack.c.b16 %v6389, %v6381
        %v6622 = vpack.c.b16 %v6390, %v6382
        %v6623 = vpack.c.b16 %v6399, %v6391
        %v6624 = vpack.c.b16 %v6400, %v6392
        %v6625 = vpack.c.b16 %v6401, %v6393
        %v6626 = vpack.c.b16 %v6402, %v6394
        %v6627 = vpack.c.b16 %v6403, %v6395
        %v6628 = vpack.c.b16 %v6404, %v6396
        %v6629 = vpack.c.b16 %v6405, %v6397
        %v6630 = vpack.c.b16 %v6406, %v6398
        %v6631 = vpack.c.b16 %v6415, %v6407
        %v6632 = vpack.c.b16 %v6416, %v6408
        %v6633 = vpack.c.b16 %v6417, %v6409
        %v6634 = vpack.c.b16 %v6418, %v6410
        %v6635 = vpack.c.b16 %v6419, %v6411
        %v6636 = vpack.c.b16 %v6420, %v6412
        %v6637 = vpack.c.b16 %v6421, %v6413
        %v6638 = vpack.c.b16 %v6422, %v6414
        %v6639 = vpack.c.b16 %v6431, %v6423
        %v6640 = vpack.c.b16 %v6432, %v6424
        %v6641 = vpack.c.b16 %v6433, %v6425
        %v6642 = vpack.c.b16 %v6434, %v6426
        %v6643 = vpack.c.b16 %v6435, %v6427
        %v6644 = vpack.c.b16 %v6436, %v6428
        %v6645 = vpack.c.b16 %v6437, %v6429
        %v6646 = vpack.c.b16 %v6438, %v6430
        %v6647 = vpack.c.b16 %v6447, %v6439
        %v6648 = vpack.c.b16 %v6448, %v6440
        %v6649 = vpack.c.b16 %v6449, %v6441
        %v6650 = vpack.c.b16 %v6450, %v6442
        %v6651 = vpack.c.b16 %v6451, %v6443
        %v6652 = vpack.c.b16 %v6452, %v6444
        %v6653 = vpack.c.b16 %v6453, %v6445
        %v6654 = vpack.c.b16 %v6454, %v6446
        %v6655 = vpack.c.b16 %v6463, %v6455
        %v6656 = vpack.c.b16 %v6464, %v6456
        %v6657 = vpack.c.b16 %v6465, %v6457
        %v6658 = vpack.c.b16 %v6466, %v6458
        %v6659 = vpack.c.b16 %v6467, %v6459
        %v6660 = vpack.c.b16 %v6468, %v6460
        %v6661 = vpack.c.b16 %v6469, %v6461
        %v6662 = vpack.c.b16 %v6470, %v6462
        %v6663 = vpack.c.b16 %v6479, %v6471
        %v6664 = vpack.c.b16 %v6480, %v6472
        %v6665 = vpack.c.b16 %v6481, %v6473
        %v6666 = vpack.c.b16 %v6482, %v6474
        %v6667 = vpack.c.b16 %v6483, %v6475
        %v6668 = vpack.c.b16 %v6484, %v6476
        %v6669 = vpack.c.b16 %v6485, %v6477
        %v6670 = vpack.c.b16 %v6486, %v6478
        %v6671 = vpack.c.b16 %v6495, %v6487
        %v6672 = vpack.c.b16 %v6496, %v6488
        %v6673 = vpack.c.b16 %v6497, %v6489
        %v6674 = vpack.c.b16 %v6498, %v6490
        %v6675 = vpack.c.b16 %v6499, %v6491
        %v6676 = vpack.c.b16 %v6500, %v6492
        %v6677 = vpack.c.b16 %v6501, %v6493
        %v6678 = vpack.c.b16 %v6502, %v6494
        %v6679 = vpack.c.b16 %v6511, %v6503
        %v6680 = vpack.c.b16 %v6512, %v6504
        %v6681 = vpack.c.b16 %v6513, %v6505
        %v6682 = vpack.c.b16 %v6514, %v6506
        %v6683 = vpack.c.b16 %v6515, %v6507
        %v6684 = vpack.c.b16 %v6516, %v6508
        %v6685 = vpack.c.b16 %v6517, %v6509
        %v6686 = vpack.c.b16 %v6518, %v6510
        %v6687 = vpack.c.b16 %v6527, %v6519
        %v6688 = vpack.c.b16 %v6528, %v6520
        %v6689 = vpack.c.b16 %v6529, %v6521
        %v6690 = vpack.c.b16 %v6530, %v6522
        %v6691 = vpack.c.b16 %v6531, %v6523
        %v6692 = vpack.c.b16 %v6532, %v6524
        %v6693 = vpack.c.b16 %v6533, %v6525
        %v6694 = vpack.c.b16 %v6534, %v6526
        %v6695 = vpack.c.b16 %v6543, %v6535
        %v6696 = vpack.c.b16 %v6544, %v6536
        %v6697 = vpack.c.b16 %v6545, %v6537
        %v6698 = vpack.c.b16 %v6546, %v6538
        %v6699 = vpack.c.b16 %v6547, %v6539
        %v6700 = vpack.c.b16 %v6548, %v6540
        %v6701 = vpack.c.b16 %v6549, %v6541
        %v6702 = vpack.c.b16 %v6550, %v6542
        %v6703 = vpack.c.b16 %v6559, %v6551
        %v6704 = vpack.c.b16 %v6560, %v6552
        %v6705 = vpack.c.b16 %v6561, %v6553
        %v6706 = vpack.c.b16 %v6562, %v6554
        %v6707 = vpack.c.b16 %v6563, %v6555
        %v6708 = vpack.c.b16 %v6564, %v6556
        %v6709 = vpack.c.b16 %v6565, %v6557
        %v6710 = vpack.c.b16 %v6566, %v6558
        %v6711 = vpack.c.b16 %v6575, %v6567
        %v6712 = vpack.c.b16 %v6576, %v6568
        %v6713 = vpack.c.b16 %v6577, %v6569
        %v6714 = vpack.c.b16 %v6578, %v6570
        %v6715 = vpack.c.b16 %v6579, %v6571
        %v6716 = vpack.c.b16 %v6580, %v6572
        %v6717 = vpack.c.b16 %v6581, %v6573
        %v6718 = vpack.c.b16 %v6582, %v6574
        %v6719 = vpack.c.b16 %v6591, %v6583
        %v6720 = vpack.c.b16 %v6592, %v6584
        %v6721 = vpack.c.b16 %v6593, %v6585
        %v6722 = vpack.c.b16 %v6594, %v6586
        %v6723 = vpack.c.b16 %v6595, %v6587
        %v6724 = vpack.c.b16 %v6596, %v6588
        %v6725 = vpack.c.b16 %v6597, %v6589
        %v6726 = vpack.c.b16 %v6598, %v6590
        %6855 = vmatprep.subr.bf16.mxu0 %v6600
        %6856 = vmatpush1.bf16.msra.mxu0 %v6599
        %6857 = vmatprep.subr.bf16.mxu0 %v6608
        %6858 = vmatpush1.bf16.msra.mxu0 %v6607
        %6859 = vmatprep.subr.bf16.mxu0 %v6616
        %6860 = vmatpush1.bf16.msra.mxu0 %v6615
        %6861 = vmatprep.subr.bf16.mxu0 %v6624
        %6862 = vmatpush1.bf16.msra.mxu0 %v6623
        %6863 = vmatprep.subr.bf16.mxu0 %v6632
        %6864 = vmatpush1.bf16.msra.mxu0 %v6631
        %6865 = vmatprep.subr.bf16.mxu0 %v6640
        %6866 = vmatpush1.bf16.msra.mxu0 %v6639
        %6867 = vmatprep.subr.bf16.mxu0 %v6648
        %6868 = vmatpush1.bf16.msra.mxu0 %v6647
        %6869 = vmatprep.subr.bf16.mxu0 %v6656
        %6870 = vmatpush1.bf16.msra.mxu0 %v6655
        %6871 = vmatprep.subr.bf16.mxu0 %v6664
        %6872 = vmatpush1.bf16.msra.mxu0 %v6663
        %6873 = vmatprep.subr.bf16.mxu0 %v6672
        %6874 = vmatpush1.bf16.msra.mxu0 %v6671
        %6875 = vmatprep.subr.bf16.mxu0 %v6680
        %6876 = vmatpush1.bf16.msra.mxu0 %v6679
        %6877 = vmatprep.subr.bf16.mxu0 %v6688
        %6878 = vmatpush1.bf16.msra.mxu0 %v6687
        %6879 = vmatprep.subr.bf16.mxu0 %v6696
        %6880 = vmatpush1.bf16.msra.mxu0 %v6695
        %6881 = vmatprep.subr.bf16.mxu0 %v6704
        %6882 = vmatpush1.bf16.msra.mxu0 %v6703
        %6883 = vmatprep.subr.bf16.mxu0 %v6712
        %6884 = vmatpush1.bf16.msra.mxu0 %v6711
        %6885 = vmatprep.subr.bf16.mxu0 %v6720
        %6886 = vmatpush1.bf16.msra.mxu0 %v6719
        %6887 = vmatprep.mubr.bf16.mxu0 %v6212
        %6888 = vmatmul.mubr.bf16.gmra.mrb[0].mxu0 %v6211
        %v6889 = vpop.f32.mrb[0].mxu0
        %v6890 = vadd.f32 %v4960, %v6889
        %v6891 = vpop.f32.mrb[0].mxu0
        %v6892 = vadd.f32 %v4964, %v6891
        %v6893 = vpop.f32.mrb[0].mxu0
        %v6894 = vpop.f32.mrb[0].mxu0
        %6895 = vdwg.mxu0
        %6896 = vmatprep.subr.bf16.mxu0 %v6602
        %6897 = vmatpush1.bf16.msra.mxu0 %v6601
        %6898 = vmatprep.subr.bf16.mxu0 %v6610
        %6899 = vmatpush1.bf16.msra.mxu0 %v6609
        %6900 = vmatprep.subr.bf16.mxu0 %v6618
        %6901 = vmatpush1.bf16.msra.mxu0 %v6617
        %6902 = vmatprep.subr.bf16.mxu0 %v6626
        %6903 = vmatpush1.bf16.msra.mxu0 %v6625
        %6904 = vmatprep.subr.bf16.mxu0 %v6634
        %6905 = vmatpush1.bf16.msra.mxu0 %v6633
        %6906 = vmatprep.subr.bf16.mxu0 %v6642
        %6907 = vmatpush1.bf16.msra.mxu0 %v6641
        %6908 = vmatprep.subr.bf16.mxu0 %v6650
        %6909 = vmatpush1.bf16.msra.mxu0 %v6649
        %6910 = vmatprep.subr.bf16.mxu0 %v6658
        %6911 = vmatpush1.bf16.msra.mxu0 %v6657
        %6912 = vmatprep.subr.bf16.mxu0 %v6666
        %6913 = vmatpush1.bf16.msra.mxu0 %v6665
        %6914 = vmatprep.subr.bf16.mxu0 %v6674
        %6915 = vmatpush1.bf16.msra.mxu0 %v6673
        %6916 = vmatprep.subr.bf16.mxu0 %v6682
        %6917 = vmatpush1.bf16.msra.mxu0 %v6681
        %6918 = vmatprep.subr.bf16.mxu0 %v6690
        %6919 = vmatpush1.bf16.msra.mxu0 %v6689
        %6920 = vmatprep.subr.bf16.mxu0 %v6698
        %6921 = vmatpush1.bf16.msra.mxu0 %v6697
        %6922 = vmatprep.subr.bf16.mxu0 %v6706
        %6923 = vmatpush1.bf16.msra.mxu0 %v6705
        %6924 = vmatprep.subr.bf16.mxu0 %v6714
        %6925 = vmatpush1.bf16.msra.mxu0 %v6713
        %6926 = vmatprep.subr.bf16.mxu0 %v6722
        %6927 = vmatpush1.bf16.msra.mxu0 %v6721
        %6928 = vmatprep.mubr.bf16.mxu0 %v6212
        %6929 = vmatmul.mubr.bf16.gmra.mrb[0].mxu0 %v6211
        %v6930 = vpop.f32.mrb[0].mxu0
        %v6931 = vadd.f32 %v4968, %v6930
        %v6932 = vpop.f32.mrb[0].mxu0
        %v6933 = vadd.f32 %v4972, %v6932
        %v6934 = vpop.f32.mrb[0].mxu0
        %v6935 = vpop.f32.mrb[0].mxu0
        %6936 = vdwg.mxu0
        %6937 = vmatprep.subr.bf16.mxu0 %v6604
        %6938 = vmatpush1.bf16.msra.mxu0 %v6603
        %6939 = vmatprep.subr.bf16.mxu0 %v6612
        %6940 = vmatpush1.bf16.msra.mxu0 %v6611
        %6941 = vmatprep.subr.bf16.mxu0 %v6620
        %6942 = vmatpush1.bf16.msra.mxu0 %v6619
        %6943 = vmatprep.subr.bf16.mxu0 %v6628
        %6944 = vmatpush1.bf16.msra.mxu0 %v6627
        %6945 = vmatprep.subr.bf16.mxu0 %v6636
        %6946 = vmatpush1.bf16.msra.mxu0 %v6635
        %6947 = vmatprep.subr.bf16.mxu0 %v6644
        %6948 = vmatpush1.bf16.msra.mxu0 %v6643
        %6949 = vmatprep.subr.bf16.mxu0 %v6652
        %6950 = vmatpush1.bf16.msra.mxu0 %v6651
        %6951 = vmatprep.subr.bf16.mxu0 %v6660
        %6952 = vmatpush1.bf16.msra.mxu0 %v6659
        %6953 = vmatprep.subr.bf16.mxu0 %v6668
        %6954 = vmatpush1.bf16.msra.mxu0 %v6667
        %6955 = vmatprep.subr.bf16.mxu0 %v6676
        %6956 = vmatpush1.bf16.msra.mxu0 %v6675
        %6957 = vmatprep.subr.bf16.mxu0 %v6684
        %6958 = vmatpush1.bf16.msra.mxu0 %v6683
        %6959 = vmatprep.subr.bf16.mxu0 %v6692
        %6960 = vmatpush1.bf16.msra.mxu0 %v6691
        %6961 = vmatprep.subr.bf16.mxu0 %v6700
        %6962 = vmatpush1.bf16.msra.mxu0 %v6699
        %6963 = vmatprep.subr.bf16.mxu0 %v6708
        %6964 = vmatpush1.bf16.msra.mxu0 %v6707
        %6965 = vmatprep.subr.bf16.mxu0 %v6716
        %6966 = vmatpush1.bf16.msra.mxu0 %v6715
        %6967 = vmatprep.subr.bf16.mxu0 %v6724
        %6968 = vmatpush1.bf16.msra.mxu0 %v6723
        %6969 = vmatprep.mubr.bf16.mxu0 %v6212
        %6970 = vmatmul.mubr.bf16.gmra.mrb[0].mxu0 %v6211
        %v6971 = vpop.f32.mrb[0].mxu0
        %v6972 = vadd.f32 %v4976, %v6971
        %v6973 = vpop.f32.mrb[0].mxu0
        %v6974 = vadd.f32 %v4980, %v6973
        %v6975 = vpop.f32.mrb[0].mxu0
        %v6976 = vpop.f32.mrb[0].mxu0
        %6977 = vdwg.mxu0
        %6978 = vmatprep.subr.bf16.mxu0 %v6606
        %6979 = vmatpush1.bf16.msra.mxu0 %v6605
        %6980 = vmatprep.subr.bf16.mxu0 %v6614
        %6981 = vmatpush1.bf16.msra.mxu0 %v6613
        %6982 = vmatprep.subr.bf16.mxu0 %v6622
        %6983 = vmatpush1.bf16.msra.mxu0 %v6621
        %6984 = vmatprep.subr.bf16.mxu0 %v6630
        %6985 = vmatpush1.bf16.msra.mxu0 %v6629
        %6986 = vmatprep.subr.bf16.mxu0 %v6638
        %6987 = vmatpush1.bf16.msra.mxu0 %v6637
        %6988 = vmatprep.subr.bf16.mxu0 %v6646
        %6989 = vmatpush1.bf16.msra.mxu0 %v6645
        %6990 = vmatprep.subr.bf16.mxu0 %v6654
        %6991 = vmatpush1.bf16.msra.mxu0 %v6653
        %6992 = vmatprep.subr.bf16.mxu0 %v6662
        %6993 = vmatpush1.bf16.msra.mxu0 %v6661
        %6994 = vmatprep.subr.bf16.mxu0 %v6670
        %6995 = vmatpush1.bf16.msra.mxu0 %v6669
        %6996 = vmatprep.subr.bf16.mxu0 %v6678
        %6997 = vmatpush1.bf16.msra.mxu0 %v6677
        %6998 = vmatprep.subr.bf16.mxu0 %v6686
        %6999 = vmatpush1.bf16.msra.mxu0 %v6685
        %7000 = vmatprep.subr.bf16.mxu0 %v6694
        %7001 = vmatpush1.bf16.msra.mxu0 %v6693
        %7002 = vmatprep.subr.bf16.mxu0 %v6702
        %7003 = vmatpush1.bf16.msra.mxu0 %v6701
        %7004 = vmatprep.subr.bf16.mxu0 %v6710
        %7005 = vmatpush1.bf16.msra.mxu0 %v6709
        %7006 = vmatprep.subr.bf16.mxu0 %v6718
        %7007 = vmatpush1.bf16.msra.mxu0 %v6717
        %7008 = vmatprep.subr.bf16.mxu0 %v6726
        %7009 = vmatpush1.bf16.msra.mxu0 %v6725
        %7010 = vmatprep.mubr.bf16.mxu0 %v6212
        %7011 = vmatmul.mubr.bf16.gmra.mrb[0].mxu0 %v6211
        %v7012 = vpop.f32.mrb[0].mxu0
        %v7013 = vadd.f32 %v4984, %v7012
        %v7014 = vpop.f32.mrb[0].mxu0
        %v7015 = vadd.f32 %v4988, %v7014
        %v7016 = vpop.f32.mrb[0].mxu0
        %v7017 = vpop.f32.mrb[0].mxu0
        %7018 = vdwg.mxu0
        %v7027 = vcombine.low %v6890, %v6892
        %v7028 = vcombine.low %v6931, %v6933
        %v7029 = vcombine.low %v6972, %v6974
        %v7030 = vcombine.low %v7013, %v7015
        %7035 = vst [vmem:[%s216] sm:$0xff] %v7027
        %7036 = vst [vmem:[%s216 + $0x8] sm:$0xff] %v7028
        %7037 = vst [vmem:[%s216 + $0x10] sm:$0xff] %v7029
        %7038 = vst [vmem:[%s216 + $0x18] sm:$0xff] %v7030
        %s7039 = sand.u32 %s97, 1
        %s7040 = scalar_lea.sflag [#allocation4], %s7039
        %s7041 = sand.u32 %s97, 1
        %s7042 = smul.addr %s7041, 32
        %s7043 = scalar_lea.vmem [#allocation8], %s7042
        // Predicated region
        $region45: #{tpu_custom_call.1} parent=31 // pred_check
          %p7044 = pneg %p107
        $region46: #{tpu_custom_call.1} parent=31 // pred_check_branch
          %7046 = sbr.rel (%p7044) target = $region48
        $region47: #{tpu_custom_call.1} parent=31 // pred_region
          %s7048 = ssub.s32 512, 512
          %7049 = vsyncadd %s7040, %s7048
          %s7050 = smul.addr %s21, 8
          %s7051 = smul.addr %s7050, 64
          %s7052 = scalar_lea.hbm %s3, %s7051
          %s7054 = sshll.u32 %s7043, 4
          %s7055 = int_to_ptr.vmem [resolvable:$true] %s7054
          %7057 = dma.vmem_to_hbm [thread:$0]  %s7055, 512, %s7052, %s7040
        $region48: #{tpu_custom_call.1} parent=31 // pred_fallthru
          _
      $region32: #{tpu_custom_call.1} parent=5 // pred_fallthru
        _
      %p7058 = scmp.le.s32.totalorder 2, %s16
      // Predicated region
      $region49: #{tpu_custom_call.1} parent=5 // pred_check
        %p7059 = pneg %p7058
      $region50: #{tpu_custom_call.1} parent=5 // pred_check_branch
        %7061 = sbr.rel (%p7059) target = $region52
      $region51: #{tpu_custom_call.1} parent=5 // pred_region
        %s7062 = ssub.s32 %s16, 2
        // Predicated region
        $region53: #{tpu_custom_call.1} parent=51 // pred_check
          %p7063 = pneg %p113
        $region54: #{tpu_custom_call.1} parent=51 // pred_check_branch
          %7065 = sbr.rel (%p7063) target = $region56
        $region55: #{tpu_custom_call.1} parent=51 // pred_region
          %s7066 = sand.u32 %s98, 1
          %s7067 = scalar_lea.sflag [#allocation4], %s7066
          %s7068 = sand.u32 %s98, 1
          %s7069 = smul.addr %s7068, 32
          %s7070 = scalar_lea.vmem [#allocation8], %s7069
          %7071 = dma.done %s7067, 512
        $region56: #{tpu_custom_call.1} parent=51 // pred_fallthru
          _
      $region52: #{tpu_custom_call.1} parent=5 // pred_fallthru
        _
    $region6: #{tpu_custom_call.1} parent=1 // loop_footer
      %s20 = sadd.s32 1, %s16
    $region7: #{tpu_custom_call.1} parent=1 // loop_footer_branch
      %15 = sbr.rel target = $region3
    $region8: #{tpu_custom_call.1} parent=1 // loop_exit
      _
    %7072 = vsyncpa [#allocation3], 1
    %s7073 = scalar_lea.sflag [#allocation3], 1
    %7074 = vsyncpa %s7073, 1
    %7075 = vsyncpa [#allocation6], 1
    %7076 = vsyncpa [#allocation4], 1
    %s7077 = scalar_lea.sflag [#allocation4], 1
    %7078 = vsyncpa %s7077, 1

</llo_original>
